<compile_context>
chip_gen: v7x
topology: tpu7x:2x2x1
jax: 0.10.0
libtpu: 0.0.40
codegen_flags: <defaults>
</compile_context>

<pallas_src>
import functools

import jax
import jax.numpy as jnp
from jax.experimental import pallas as pl
from jax.experimental.pallas import tpu as pltpu


# ----------------------------------------------------------------------------
# Fused FeedForward kernel: one (batch, row-strip) tile per grid step.
# ----------------------------------------------------------------------------
def ffn_fused_kernel(x_top_ref, x_mid_ref, x_bot_ref,
                     w_in_ref, b_in_ref, w_dw_ref, b_dw_ref,
                     w_out_ref, b_out_ref,
                     o_ref, hpad_ref,
                     *, TH, W, F, F2, RC, Wp, mm_dtype, approx_gelu):
    # x_top/x_bot: (1, 1, W, C)  halo rows (clamped at the image border, zeroed below)
    # x_mid:       (1, TH, W, C) strip of input rows
    # w_in:        (2F, C)   fused project_in weight (gate half 1 then half 2)
    # w_dw:        (3, 3, 2F) fused depthwise weights; w_out: (C, F)
    # o_ref:       (1, C, TH*W) NCHW-flat, lane-dense output block
    # hpad_ref:    (TH+2, Wp, 2F) persistent VMEM scratch holding the zero-padded dwconv input
    i = pl.program_id(1)
    nt = pl.num_programs(1)
    C = x_mid_ref.shape[-1]

    def mm(a, b):
        # contract last dims of both operands (no transposes), f32 accumulate on the MXU
        if mm_dtype is not None:
            a = a.astype(mm_dtype)
            b = b.astype(mm_dtype)
        return jax.lax.dot_general(a, b, (((1,), (1,)), ((), ())),
                                   preferred_element_type=jnp.float32)

    # ---- project_in: ONE matmul over strip + both halo rows ------------------
    x_all = jnp.concatenate([x_top_ref[0], x_mid_ref[0], x_bot_ref[0]], axis=0)  # (TH+2,W,C)
    h = mm(x_all.reshape((TH + 2) * W, C), w_in_ref[...]) + b_in_ref[0]
    h = h.reshape(TH + 2, W, F2)

    # ---- assemble zero-padded dwconv input in the VMEM scratch ----------------
    hpad_ref[:, 1:W + 1, :] = h
    zcol = jnp.zeros((TH + 2, 1, F2), jnp.float32)
    hpad_ref[:, 0:1, :] = zcol                 # left pad column
    hpad_ref[:, W + 1:W + 2, :] = zcol         # right pad column

    zrow = jnp.zeros((1, Wp, F2), jnp.float32)

    @pl.when(i == 0)                            # zero-pad above the image top
    def _():
        hpad_ref[0:1, :, :] = zrow

    @pl.when(i == nt - 1)                       # zero-pad below the image bottom
    def _():
        hpad_ref[TH + 1:TH + 2, :, :] = zrow

    # NOTE: padding is applied to the PROJECTED activations (post bias), exactly matching
    # Conv2d(padding=1) zero padding of the dwconv input.

    # ---- hoisted weight loads (JAX does not CSE per-tap broadcasts) -----------
    w_dw = w_dw_ref[...]                                       # (3, 3, 2F)
    w_taps = [w_dw[di, dj] for di in range(3) for dj in range(3)]
    w_out = w_out_ref[...]                                     # (C, F)
    b_out = b_out_ref[...]                                     # (C, 1)
    acc0 = jnp.zeros((RC, W, F2), jnp.float32) + b_dw_ref[0]   # dwconv bias, broadcast once

    inv_sqrt2 = 0.7071067811865476

    # ---- dwconv 3x3 + gated GELU + project_out, RC output rows per chunk ------
    for c in range(TH // RC):
        r0 = c * RC
        acc = acc0
        t = 0
        for di in range(3):
            for dj in range(3):
                acc = acc + hpad_ref[r0 + di:r0 + di + RC, dj:dj + W, :] * w_taps[t]
                t += 1
        x1 = acc[:, :, :F]                       # gate half to be GELU'd
        x2 = acc[:, :, F:]                       # linear gate half
        if approx_gelu:
            g = jax.nn.gelu(x1, approximate=True) * x2
        else:
            g = 0.5 * x1 * (1.0 + jax.lax.erf(x1 * inv_sqrt2)) * x2

        # project_out fused with the layout change to NCHW-flat: (C, RC*W), lane-dense.
        yt = mm(w_out, g.reshape(RC * W, F)) + b_out           # (C, RC*W)
        o_ref[0, :, r0 * W:(r0 + RC) * W] = yt.astype(o_ref.dtype)


# ----------------------------------------------------------------------------
# Tile / chunk selection
# ----------------------------------------------------------------------------
def _pick_row_tile(H, W, C, F2, B, target_tokens=1024,
                   vmem_budget_bytes=20 * 1024 * 1024):
    """Rows per grid strip: divisor of H, TH*W multiple of 128 (lane-dense output),
    ~target_tokens tokens per strip (amortize the 2-row halo recompute and per-step
    overhead), capped by a generation-safe per-step VMEM budget."""
    Wp = ((W + 2 + 7) // 8) * 8

    def step_bytes(t):
        inp = 3 * 2 * (t + 2) * W * C * 4        # 3 input blocks, double-buffered (upper bound)
        scr = (t + 2) * Wp * F2 * 4              # persistent padded-h scratch
        hval = (t + 2) * W * F2 * 4              # projected h value before the scratch store
        out = 2 * C * t * W * 4                  # double-buffered output block
        return inp + scr + hval + out

    valid = [t for t in range(1, H + 1)
             if H % t == 0 and ((t * W) % 128 == 0 or t == H)
             and step_bytes(t) <= vmem_budget_bytes]
    if not valid:
        return H
    pick = valid[-1]
    for t in valid:
        if t * W >= target_tokens:
            pick = t
            break
    # keep at least 2 grid steps overall so both v7x TensorCores get work
    if B * (H // pick) < 2:
        two_plus = [t for t in valid if H // t >= 2]
        if two_plus:
            pick = two_plus[-1]
    return pick


def _pick_row_chunk(TH, W, F2):
    """Rows per inner compute chunk: divisor of TH, accumulator <= ~16 vregs so the
    9-tap FMA loop stays in registers; prefer RC*W multiple of 128 for aligned stores."""
    vregs_per_row = ((W + 7) // 8) * ((F2 + 127) // 128)
    cands = [rc for rc in range(1, TH + 1)
             if TH % rc == 0 and rc * vregs_per_row <= 16]
    if not cands:
        return 1
    aligned = [rc for rc in cands if (rc * W) % 128 == 0]
    return max(aligned) if aligned else max(cands)


# ----------------------------------------------------------------------------
# Wrapper
# ----------------------------------------------------------------------------
def feed_forward(x_nchw, params, *, use_bf16_matmul=False, approx_gelu=False):
    """Restormer FeedForward forward pass.  x_nchw: (B, C, H, W) float32."""
    B, C, H, W = x_nchw.shape
    F = params["w_out"].shape[1]
    F2 = 2 * F
    TH = _pick_row_tile(H, W, C, F2, B)
    NT = H // TH
    RC = _pick_row_chunk(TH, W, F2)
    Wp = ((W + 2 + 7) // 8) * 8

    # Fuse the two gate halves into one 2F-channel parameter set (order matches
    # torch's chunk(2, dim=1): first F channels -> x1 (GELU'd), second F -> x2).
    w_in = jnp.concatenate([params["w_in1"], params["w_in2"]], axis=0)         # (2F, C)
    b_in = jnp.concatenate([params["b_in1"], params["b_in2"]], axis=0).reshape(1, F2)
    w_dw = jnp.concatenate([params["w_dw1"], params["w_dw2"]], axis=-1)        # (3,3,2F)
    b_dw = jnp.concatenate([params["b_dw1"], params["b_dw2"]], axis=0).reshape(1, F2)

    # single cheap layout change of the (small-channel) input; output needs none.
    x_cl = jnp.transpose(x_nchw, (0, 2, 3, 1))                                 # (B, H, W, C)

    const2 = lambda b, i: (0, 0)
    const3 = lambda b, i: (0, 0, 0)

    kernel = functools.partial(
        ffn_fused_kernel, TH=TH, W=W, F=F, F2=F2, RC=RC, Wp=Wp,
        mm_dtype=jnp.bfloat16 if use_bf16_matmul else None,
        approx_gelu=approx_gelu)

    out_flat = pl.pallas_call(
        kernel,
        out_shape=jax.ShapeDtypeStruct((B, C, H * W), x_nchw.dtype),
        grid=(B, NT),
        in_specs=[
            # top halo row (clamped; zeroed in-kernel when i == 0)
            pl.BlockSpec((1, 1, W, C),
                         lambda b, i: (b, jnp.maximum(i * TH - 1, 0), 0, 0)),
            # strip body
            pl.BlockSpec((1, TH, W, C), lambda b, i: (b, i, 0, 0)),
            # bottom halo row (clamped; zeroed in-kernel when i == NT-1)
            pl.BlockSpec((1, 1, W, C),
                         lambda b, i: (b, jnp.minimum(i * TH + TH, H - 1), 0, 0)),
            # weights / biases: constant index -> stay resident in VMEM
            pl.BlockSpec((F2, C), const2),
            pl.BlockSpec((1, F2), const2),
            pl.BlockSpec((3, 3, F2), const3),
            pl.BlockSpec((1, F2), const2),
            pl.BlockSpec((C, F), const2),
            pl.BlockSpec((C, 1), const2),
        ],
        out_specs=pl.BlockSpec((1, C, TH * W), lambda b, i: (b, 0, i)),
        scratch_shapes=[pltpu.VMEM((TH + 2, Wp, F2), jnp.float32)],
        compiler_params=pltpu.CompilerParams(
            dimension_semantics=("parallel", "parallel"),
            vmem_limit_bytes=32 * 1024 * 1024),
    )(x_cl, x_cl, x_cl, w_in, b_in, w_dw, b_dw,
      params["w_out"], params["b_out"].reshape(C, 1))

    return out_flat.reshape(B, C, H, W)


# ----------------------------------------------------------------------------
# Pure-JAX reference (mirrors the torch module) + synthetic parameters
# ----------------------------------------------------------------------------
def feed_forward_ref(x_nchw, params):
    B, C, H, W = x_nchw.shape
    F = params["w_out"].shape[1]
    x = jnp.transpose(x_nchw, (0, 2, 3, 1))                                   # (B,H,W,C)
    w_in = jnp.concatenate([params["w_in1"], params["w_in2"]], axis=0)        # (2F, C)
    b_in = jnp.concatenate([params["b_in1"], params["b_in2"]], axis=0)
    h = jnp.einsum("bhwc,fc->bhwf", x, w_in) + b_in                           # project_in
    hp = jnp.pad(h, ((0, 0), (1, 1), (1, 1), (0, 0)))
    w_dw = jnp.concatenate([params["w_dw1"], params["w_dw2"]], axis=-1)       # (3,3,2F)
    b_dw = jnp.concatenate([params["b_dw1"], params["b_dw2"]], axis=0)
    acc = jnp.zeros_like(h)
    for di in range(3):
        for dj in range(3):
            acc = acc + hp[:, di:di + H, dj:dj + W, :] * w_dw[di, dj]
    acc = acc + b_dw                                                          # dwconv
    x1, x2 = acc[..., :F], acc[..., F:]
    g = 0.5 * x1 * (1.0 + jax.lax.erf(x1 * 0.7071067811865476)) * x2          # gelu(x1)*x2
    y = jnp.einsum("bhwf,cf->bchw", g, params["w_out"])                       # project_out
    return y + params["b_out"][None, :, None, None]


def make_params(key, dim, ffn_expansion_factor):
    F = int(dim * ffn_expansion_factor)
    ks = jax.random.split(key, 10)
    s = 0.1
    f32 = jnp.float32
    return {
        "w_in1": s * jax.random.normal(ks[0], (F, dim), f32),
        "w_in2": s * jax.random.normal(ks[1], (F, dim), f32),
        "b_in1": s * jax.random.normal(ks[2], (F,), f32),
        "b_in2": s * jax.random.normal(ks[3], (F,), f32),
        "w_dw1": s * jax.random.normal(ks[4], (3, 3, F), f32),
        "w_dw2": s * jax.random.normal(ks[5], (3, 3, F), f32),
        "b_dw1": s * jax.random.normal(ks[6], (F,), f32),
        "b_dw2": s * jax.random.normal(ks[7], (F,), f32),
        "w_out": s * jax.random.normal(ks[8], (dim, F), f32),
        "b_out": s * jax.random.normal(ks[9], (dim,), f32),
    }


if __name__ == "__main__":
    # FeedForward(dim=16, ffn_expansion_factor=2, bias=True) on a 2x16x32x32 input.
    B, dim, H, W = 2, 16, 32, 32
    ffn_expansion_factor = 2.0

    key = jax.random.PRNGKey(0)
    k_x, k_p = jax.random.split(key)
    x = jax.random.normal(k_x, (B, dim, H, W), jnp.float32)       # NCHW like torch
    params = make_params(k_p, dim, ffn_expansion_factor)

    fwd = jax.jit(feed_forward)
    out = jax.block_until_ready(fwd(x, params))

    assert out.shape == (B, dim, H, W) and out.dtype == jnp.float32
    assert bool(jnp.all(jnp.isfinite(out)))
    ref = feed_forward_ref(x, params)
    max_err = float(jnp.max(jnp.abs(out - ref)))
    assert max_err < 1e-3, f"mismatch vs reference: max abs err = {max_err}"
    print("KERNEL_OK")
</pallas_src>

<mosaic_0001>
module attributes {stable_mosaic.version = 11 : i64} {
  func.func @ffn_fused_kernel(%arg0: i32, %arg1: i32, %arg2: memref<1x1x32x16xf32, #tpu.memory_space<vmem>>, %arg3: memref<1x32x32x16xf32, #tpu.memory_space<vmem>>, %arg4: memref<1x1x32x16xf32, #tpu.memory_space<vmem>>, %arg5: memref<64x16xf32, #tpu.memory_space<vmem>>, %arg6: memref<1x64xf32, #tpu.memory_space<vmem>>, %arg7: memref<3x3x64xf32, #tpu.memory_space<vmem>>, %arg8: memref<1x64xf32, #tpu.memory_space<vmem>>, %arg9: memref<16x32xf32, #tpu.memory_space<vmem>>, %arg10: memref<16x1xf32, #tpu.memory_space<vmem>>, %arg11: memref<1x16x1024xf32, #tpu.memory_space<vmem>>, %arg12: memref<34x40x64xf32, #tpu.memory_space<vmem>>) attributes {dimension_semantics = [#tpu.dimension_semantics<parallel>, #tpu.dimension_semantics<parallel>], iteration_bounds = array<i64: 2, 1>, scalar_prefetch = 0 : i64, scratch_operands = 1 : i64, tpu.core_type = #tpu.core_type<tc>, window_params = [{transform_indices = @transform_0, window_bounds = array<i64: 1, 1, 32, 16>}, {transform_indices = @transform_1, window_bounds = array<i64: 1, 32, 32, 16>}, {transform_indices = @transform_2, window_bounds = array<i64: 1, 1, 32, 16>}, {pipeline_mode = #tpu.pipeline_mode<synchronous>, transform_indices = @transform_3, window_bounds = array<i64: 64, 16>}, {pipeline_mode = #tpu.pipeline_mode<synchronous>, transform_indices = @transform_4, window_bounds = array<i64: 1, 64>}, {pipeline_mode = #tpu.pipeline_mode<synchronous>, transform_indices = @transform_5, window_bounds = array<i64: 3, 3, 64>}, {pipeline_mode = #tpu.pipeline_mode<synchronous>, transform_indices = @transform_6, window_bounds = array<i64: 1, 64>}, {pipeline_mode = #tpu.pipeline_mode<synchronous>, transform_indices = @transform_7, window_bounds = array<i64: 16, 32>}, {pipeline_mode = #tpu.pipeline_mode<synchronous>, transform_indices = @transform_8, window_bounds = array<i64: 16, 1>}, {transform_indices = @transform_9, window_bounds = array<i64: 1, 16, 1024>}]} {
    %c0 = arith.constant 0 : index
    %c0_0 = arith.constant 0 : index
    %c0_1 = arith.constant 0 : index
    %c0_2 = arith.constant 0 : index
    %0 = vector.load %arg2[%c0, %c0_0, %c0_1, %c0_2] : memref<1x1x32x16xf32, #tpu.memory_space<vmem>>, vector<1x1x32x16xf32>
    %1 = vector.shape_cast %0 : vector<1x1x32x16xf32> to vector<1x32x16xf32>
    %c0_3 = arith.constant 0 : index
    %c0_4 = arith.constant 0 : index
    %c0_5 = arith.constant 0 : index
    %c0_6 = arith.constant 0 : index
    %2 = vector.load %arg3[%c0_3, %c0_4, %c0_5, %c0_6] : memref<1x32x32x16xf32, #tpu.memory_space<vmem>>, vector<1x32x32x16xf32>
    %3 = vector.shape_cast %2 : vector<1x32x32x16xf32> to vector<32x32x16xf32>
    %c0_7 = arith.constant 0 : index
    %c0_8 = arith.constant 0 : index
    %c0_9 = arith.constant 0 : index
    %c0_10 = arith.constant 0 : index
    %4 = vector.load %arg4[%c0_7, %c0_8, %c0_9, %c0_10] : memref<1x1x32x16xf32, #tpu.memory_space<vmem>>, vector<1x1x32x16xf32>
    %5 = vector.shape_cast %4 : vector<1x1x32x16xf32> to vector<1x32x16xf32>
    %6 = tpu.concatenate %1, %3, %5 in 0 : vector<1x32x16xf32>, vector<32x32x16xf32>, vector<1x32x16xf32> -> vector<34x32x16xf32>
    %7 = vector.shape_cast %6 : vector<34x32x16xf32> to vector<1088x16xf32>
    %c0_11 = arith.constant 0 : index
    %c0_12 = arith.constant 0 : index
    %8 = vector.load %arg5[%c0_11, %c0_12] : memref<64x16xf32, #tpu.memory_space<vmem>>, vector<64x16xf32>
    %cst = arith.constant dense<0.000000e+00> : vector<1088x64xf32>
    %9 = tpu.matmul %7, %8, %cst {dimension_numbers = #tpu.dot_dimension_numbers<[1], [1], [0], [0], [0, 0, 1, 0], [], []>} : vector<1088x16xf32>, vector<64x16xf32>, vector<1088x64xf32> -> vector<1088x64xf32>
    %c0_13 = arith.constant 0 : index
    %c0_14 = arith.constant 0 : index
    %10 = vector.load %arg6[%c0_13, %c0_14] : memref<1x64xf32, #tpu.memory_space<vmem>>, vector<1x64xf32>
    %11 = vector.shape_cast %10 : vector<1x64xf32> to vector<64xf32>
    %12 = vector.shape_cast %11 : vector<64xf32> to vector<1x64xf32>
    %13 = vector.broadcast %12 : vector<1x64xf32> to vector<1088x64xf32>
    %14 = arith.addf %9, %13 : vector<1088x64xf32>
    %15 = vector.shape_cast %14 : vector<1088x64xf32> to vector<34x32x64xf32>
    %c0_15 = arith.constant 0 : index
    %c1 = arith.constant 1 : index
    %c0_16 = arith.constant 0 : index
    %16 = vector.load %arg12[%c0_15, %c1, %c0_16] : memref<34x40x64xf32, #tpu.memory_space<vmem>>, vector<34x32x64xf32>
    tpu.vector_store %arg12[%c0_15, %c1, %c0_16], %15 {strides = array<i32>} : memref<34x40x64xf32, #tpu.memory_space<vmem>>, vector<34x32x64xf32>,
    %cst_17 = arith.constant 0.000000e+00 : f32
    %17 = vector.broadcast %cst_17 : f32 to vector<34x1x64xf32>
    %c0_18 = arith.constant 0 : index
    %c0_19 = arith.constant 0 : index
    %c0_20 = arith.constant 0 : index
    %18 = vector.load %arg12[%c0_18, %c0_19, %c0_20] : memref<34x40x64xf32, #tpu.memory_space<vmem>>, vector<34x1x64xf32>
    tpu.vector_store %arg12[%c0_18, %c0_19, %c0_20], %17 {strides = array<i32>} : memref<34x40x64xf32, #tpu.memory_space<vmem>>, vector<34x1x64xf32>,
    %c0_21 = arith.constant 0 : index
    %c33 = arith.constant 33 : index
    %c0_22 = arith.constant 0 : index
    %19 = vector.load %arg12[%c0_21, %c33, %c0_22] : memref<34x40x64xf32, #tpu.memory_space<vmem>>, vector<34x1x64xf32>
    tpu.vector_store %arg12[%c0_21, %c33, %c0_22], %17 {strides = array<i32>} : memref<34x40x64xf32, #tpu.memory_space<vmem>>, vector<34x1x64xf32>,
    %cst_23 = arith.constant 0.000000e+00 : f32
    %20 = vector.broadcast %cst_23 : f32 to vector<1x40x64xf32>
    %c0_i32 = arith.constant 0 : i32
    %21 = arith.cmpi eq, %arg1, %c0_i32 : i32
    %22 = arith.extui %21 : i1 to i32
    %c0_i32_24 = arith.constant 0 : i32
    %23 = arith.cmpi ne, %22, %c0_i32_24 : i32
    scf.if %23 {
      %c0_280 = arith.constant 0 : index
      %c0_281 = arith.constant 0 : index
      %c0_282 = arith.constant 0 : index
      %558 = vector.load %arg12[%c0_280, %c0_281, %c0_282] : memref<34x40x64xf32, #tpu.memory_space<vmem>>, vector<1x40x64xf32>
      tpu.vector_store %arg12[%c0_280, %c0_281, %c0_282], %20 {strides = array<i32>} : memref<34x40x64xf32, #tpu.memory_space<vmem>>, vector<1x40x64xf32>,
    } else {
    }
    %c0_i32_25 = arith.constant 0 : i32
    %24 = arith.cmpi eq, %arg1, %c0_i32_25 : i32
    %25 = arith.extui %24 : i1 to i32
    %c0_i32_26 = arith.constant 0 : i32
    %26 = arith.cmpi ne, %25, %c0_i32_26 : i32
    scf.if %26 {
      %c33_280 = arith.constant 33 : index
      %c0_281 = arith.constant 0 : index
      %c0_282 = arith.constant 0 : index
      %558 = vector.load %arg12[%c33_280, %c0_281, %c0_282] : memref<34x40x64xf32, #tpu.memory_space<vmem>>, vector<1x40x64xf32>
      tpu.vector_store %arg12[%c33_280, %c0_281, %c0_282], %20 {strides = array<i32>} : memref<34x40x64xf32, #tpu.memory_space<vmem>>, vector<1x40x64xf32>,
    } else {
    }
    %c0_27 = arith.constant 0 : index
    %c0_28 = arith.constant 0 : index
    %c0_29 = arith.constant 0 : index
    %27 = vector.load %arg7[%c0_27, %c0_28, %c0_29] : memref<3x3x64xf32, #tpu.memory_space<vmem>>, vector<3x3x64xf32>
    %28 = vector.extract_strided_slice %27 {offsets = [0, 0, 0], sizes = [1, 1, 64], strides = [1, 1, 1]} : vector<3x3x64xf32> to vector<1x1x64xf32>
    %29 = vector.shape_cast %28 : vector<1x1x64xf32> to vector<64xf32>
    %30 = vector.extract_strided_slice %27 {offsets = [0, 1, 0], sizes = [1, 1, 64], strides = [1, 1, 1]} : vector<3x3x64xf32> to vector<1x1x64xf32>
    %31 = vector.shape_cast %30 : vector<1x1x64xf32> to vector<64xf32>
    %32 = vector.extract_strided_slice %27 {offsets = [0, 2, 0], sizes = [1, 1, 64], strides = [1, 1, 1]} : vector<3x3x64xf32> to vector<1x1x64xf32>
    %33 = vector.shape_cast %32 : vector<1x1x64xf32> to vector<64xf32>
    %34 = vector.extract_strided_slice %27 {offsets = [1, 0, 0], sizes = [1, 1, 64], strides = [1, 1, 1]} : vector<3x3x64xf32> to vector<1x1x64xf32>
    %35 = vector.shape_cast %34 : vector<1x1x64xf32> to vector<64xf32>
    %36 = vector.extract_strided_slice %27 {offsets = [1, 1, 0], sizes = [1, 1, 64], strides = [1, 1, 1]} : vector<3x3x64xf32> to vector<1x1x64xf32>
    %37 = vector.shape_cast %36 : vector<1x1x64xf32> to vector<64xf32>
    %38 = vector.extract_strided_slice %27 {offsets = [1, 2, 0], sizes = [1, 1, 64], strides = [1, 1, 1]} : vector<3x3x64xf32> to vector<1x1x64xf32>
    %39 = vector.shape_cast %38 : vector<1x1x64xf32> to vector<64xf32>
    %40 = vector.extract_strided_slice %27 {offsets = [2, 0, 0], sizes = [1, 1, 64], strides = [1, 1, 1]} : vector<3x3x64xf32> to vector<1x1x64xf32>
    %41 = vector.shape_cast %40 : vector<1x1x64xf32> to vector<64xf32>
    %42 = vector.extract_strided_slice %27 {offsets = [2, 1, 0], sizes = [1, 1, 64], strides = [1, 1, 1]} : vector<3x3x64xf32> to vector<1x1x64xf32>
    %43 = vector.shape_cast %42 : vector<1x1x64xf32> to vector<64xf32>
    %44 = vector.extract_strided_slice %27 {offsets = [2, 2, 0], sizes = [1, 1, 64], strides = [1, 1, 1]} : vector<3x3x64xf32> to vector<1x1x64xf32>
    %45 = vector.shape_cast %44 : vector<1x1x64xf32> to vector<64xf32>
    %c0_30 = arith.constant 0 : index
    %c0_31 = arith.constant 0 : index
    %46 = vector.load %arg9[%c0_30, %c0_31] : memref<16x32xf32, #tpu.memory_space<vmem>>, vector<16x32xf32>
    %c0_32 = arith.constant 0 : index
    %c0_33 = arith.constant 0 : index
    %47 = vector.load %arg10[%c0_32, %c0_33] : memref<16x1xf32, #tpu.memory_space<vmem>>, vector<16x1xf32>
    %cst_34 = arith.constant 0.000000e+00 : f32
    %48 = vector.broadcast %cst_34 : f32 to vector<4x32x64xf32>
    %c0_35 = arith.constant 0 : index
    %c0_36 = arith.constant 0 : index
    %49 = vector.load %arg8[%c0_35, %c0_36] : memref<1x64xf32, #tpu.memory_space<vmem>>, vector<1x64xf32>
    %50 = vector.shape_cast %49 : vector<1x64xf32> to vector<64xf32>
    %51 = vector.shape_cast %50 : vector<64xf32> to vector<1x1x64xf32>
    %52 = vector.broadcast %51 : vector<1x1x64xf32> to vector<4x32x64xf32>
    %53 = arith.addf %48, %52 : vector<4x32x64xf32>
    %c0_37 = arith.constant 0 : index
    %c0_38 = arith.constant 0 : index
    %c0_39 = arith.constant 0 : index
    %54 = vector.load %arg12[%c0_37, %c0_38, %c0_39] : memref<34x40x64xf32, #tpu.memory_space<vmem>>, vector<4x32x64xf32>
    %55 = vector.shape_cast %29 : vector<64xf32> to vector<1x1x64xf32>
    %56 = vector.broadcast %55 : vector<1x1x64xf32> to vector<4x32x64xf32>
    %57 = arith.mulf %54, %56 : vector<4x32x64xf32>
    %58 = arith.addf %53, %57 : vector<4x32x64xf32>
    %c0_40 = arith.constant 0 : index
    %c1_41 = arith.constant 1 : index
    %c0_42 = arith.constant 0 : index
    %59 = vector.load %arg12[%c0_40, %c1_41, %c0_42] : memref<34x40x64xf32, #tpu.memory_space<vmem>>, vector<4x32x64xf32>
    %60 = vector.shape_cast %31 : vector<64xf32> to vector<1x1x64xf32>
    %61 = vector.broadcast %60 : vector<1x1x64xf32> to vector<4x32x64xf32>
    %62 = arith.mulf %59, %61 : vector<4x32x64xf32>
    %63 = arith.addf %58, %62 : vector<4x32x64xf32>
    %c0_43 = arith.constant 0 : index
    %c2 = arith.constant 2 : index
    %c0_44 = arith.constant 0 : index
    %64 = vector.load %arg12[%c0_43, %c2, %c0_44] : memref<34x40x64xf32, #tpu.memory_space<vmem>>, vector<4x32x64xf32>
    %65 = vector.shape_cast %33 : vector<64xf32> to vector<1x1x64xf32>
    %66 = vector.broadcast %65 : vector<1x1x64xf32> to vector<4x32x64xf32>
    %67 = arith.mulf %64, %66 : vector<4x32x64xf32>
    %68 = arith.addf %63, %67 : vector<4x32x64xf32>
    %c1_45 = arith.constant 1 : index
    %c0_46 = arith.constant 0 : index
    %c0_47 = arith.constant 0 : index
    %69 = vector.load %arg12[%c1_45, %c0_46, %c0_47] : memref<34x40x64xf32, #tpu.memory_space<vmem>>, vector<4x32x64xf32>
    %70 = vector.shape_cast %35 : vector<64xf32> to vector<1x1x64xf32>
    %71 = vector.broadcast %70 : vector<1x1x64xf32> to vector<4x32x64xf32>
    %72 = arith.mulf %69, %71 : vector<4x32x64xf32>
    %73 = arith.addf %68, %72 : vector<4x32x64xf32>
    %c1_48 = arith.constant 1 : index
    %c1_49 = arith.constant 1 : index
    %c0_50 = arith.constant 0 : index
    %74 = vector.load %arg12[%c1_48, %c1_49, %c0_50] : memref<34x40x64xf32, #tpu.memory_space<vmem>>, vector<4x32x64xf32>
    %75 = vector.shape_cast %37 : vector<64xf32> to vector<1x1x64xf32>
    %76 = vector.broadcast %75 : vector<1x1x64xf32> to vector<4x32x64xf32>
    %77 = arith.mulf %74, %76 : vector<4x32x64xf32>
    %78 = arith.addf %73, %77 : vector<4x32x64xf32>
    %c1_51 = arith.constant 1 : index
    %c2_52 = arith.constant 2 : index
    %c0_53 = arith.constant 0 : index
    %79 = vector.load %arg12[%c1_51, %c2_52, %c0_53] : memref<34x40x64xf32, #tpu.memory_space<vmem>>, vector<4x32x64xf32>
    %80 = vector.shape_cast %39 : vector<64xf32> to vector<1x1x64xf32>
    %81 = vector.broadcast %80 : vector<1x1x64xf32> to vector<4x32x64xf32>
    %82 = arith.mulf %79, %81 : vector<4x32x64xf32>
    %83 = arith.addf %78, %82 : vector<4x32x64xf32>
    %c2_54 = arith.constant 2 : index
    %c0_55 = arith.constant 0 : index
    %c0_56 = arith.constant 0 : index
    %84 = vector.load %arg12[%c2_54, %c0_55, %c0_56] : memref<34x40x64xf32, #tpu.memory_space<vmem>>, vector<4x32x64xf32>
    %85 = vector.shape_cast %41 : vector<64xf32> to vector<1x1x64xf32>
    %86 = vector.broadcast %85 : vector<1x1x64xf32> to vector<4x32x64xf32>
    %87 = arith.mulf %84, %86 : vector<4x32x64xf32>
    %88 = arith.addf %83, %87 : vector<4x32x64xf32>
    %c2_57 = arith.constant 2 : index
    %c1_58 = arith.constant 1 : index
    %c0_59 = arith.constant 0 : index
    %89 = vector.load %arg12[%c2_57, %c1_58, %c0_59] : memref<34x40x64xf32, #tpu.memory_space<vmem>>, vector<4x32x64xf32>
    %90 = vector.shape_cast %43 : vector<64xf32> to vector<1x1x64xf32>
    %91 = vector.broadcast %90 : vector<1x1x64xf32> to vector<4x32x64xf32>
    %92 = arith.mulf %89, %91 : vector<4x32x64xf32>
    %93 = arith.addf %88, %92 : vector<4x32x64xf32>
    %c2_60 = arith.constant 2 : index
    %c2_61 = arith.constant 2 : index
    %c0_62 = arith.constant 0 : index
    %94 = vector.load %arg12[%c2_60, %c2_61, %c0_62] : memref<34x40x64xf32, #tpu.memory_space<vmem>>, vector<4x32x64xf32>
    %95 = vector.shape_cast %45 : vector<64xf32> to vector<1x1x64xf32>
    %96 = vector.broadcast %95 : vector<1x1x64xf32> to vector<4x32x64xf32>
    %97 = arith.mulf %94, %96 : vector<4x32x64xf32>
    %98 = arith.addf %93, %97 : vector<4x32x64xf32>
    %99 = vector.extract_strided_slice %98 {offsets = [0, 0, 0], sizes = [4, 32, 32], strides = [1, 1, 1]} : vector<4x32x64xf32> to vector<4x32x32xf32>
    %100 = vector.extract_strided_slice %98 {offsets = [0, 0, 32], sizes = [4, 32, 32], strides = [1, 1, 1]} : vector<4x32x64xf32> to vector<4x32x32xf32>
    %cst_63 = arith.constant 5.000000e-01 : f32
    %101 = vector.broadcast %cst_63 : f32 to vector<4x32x32xf32>
    %102 = arith.mulf %101, %99 : vector<4x32x32xf32>
    %cst_64 = arith.constant 0.707106769 : f32
    %103 = vector.broadcast %cst_64 : f32 to vector<4x32x32xf32>
    %104 = arith.mulf %99, %103 : vector<4x32x32xf32>
    %105 = math.erf %104 : vector<4x32x32xf32>
    %cst_65 = arith.constant 1.000000e+00 : f32
    %106 = vector.broadcast %cst_65 : f32 to vector<4x32x32xf32>
    %107 = arith.addf %106, %105 : vector<4x32x32xf32>
    %108 = arith.mulf %102, %107 : vector<4x32x32xf32>
    %109 = arith.mulf %108, %100 : vector<4x32x32xf32>
    %110 = vector.shape_cast %109 : vector<4x32x32xf32> to vector<128x32xf32>
    %cst_66 = arith.constant dense<0.000000e+00> : vector<16x128xf32>
    %111 = tpu.matmul %46, %110, %cst_66 {dimension_numbers = #tpu.dot_dimension_numbers<[1], [1], [0], [0], [0, 0, 1, 0], [], []>} : vector<16x32xf32>, vector<128x32xf32>, vector<16x128xf32> -> vector<16x128xf32>
    %112 = vector.broadcast %47 : vector<16x1xf32> to vector<16x128xf32>
    %113 = arith.addf %111, %112 : vector<16x128xf32>
    %c0_67 = arith.constant 0 : index
    %c0_68 = arith.constant 0 : index
    %c0_69 = arith.constant 0 : index
    %114 = vector.load %arg11[%c0_67, %c0_68, %c0_69] : memref<1x16x1024xf32, #tpu.memory_space<vmem>>, vector<1x16x128xf32>
    %115 = vector.shape_cast %114 : vector<1x16x128xf32> to vector<16x128xf32>
    %116 = vector.shape_cast %113 : vector<16x128xf32> to vector<1x16x128xf32>
    tpu.vector_store %arg11[%c0_67, %c0_68, %c0_69], %116 {strides = array<i32>} : memref<1x16x1024xf32, #tpu.memory_space<vmem>>, vector<1x16x128xf32>,
    %c4 = arith.constant 4 : index
    %c0_70 = arith.constant 0 : index
    %c0_71 = arith.constant 0 : index
    %117 = vector.load %arg12[%c4, %c0_70, %c0_71] : memref<34x40x64xf32, #tpu.memory_space<vmem>>, vector<4x32x64xf32>
    %118 = vector.shape_cast %29 : vector<64xf32> to vector<1x1x64xf32>
    %119 = vector.broadcast %118 : vector<1x1x64xf32> to vector<4x32x64xf32>
    %120 = arith.mulf %117, %119 : vector<4x32x64xf32>
    %121 = arith.addf %53, %120 : vector<4x32x64xf32>
    %c4_72 = arith.constant 4 : index
    %c1_73 = arith.constant 1 : index
    %c0_74 = arith.constant 0 : index
    %122 = vector.load %arg12[%c4_72, %c1_73, %c0_74] : memref<34x40x64xf32, #tpu.memory_space<vmem>>, vector<4x32x64xf32>
    %123 = vector.shape_cast %31 : vector<64xf32> to vector<1x1x64xf32>
    %124 = vector.broadcast %123 : vector<1x1x64xf32> to vector<4x32x64xf32>
    %125 = arith.mulf %122, %124 : vector<4x32x64xf32>
    %126 = arith.addf %121, %125 : vector<4x32x64xf32>
    %c4_75 = arith.constant 4 : index
    %c2_76 = arith.constant 2 : index
    %c0_77 = arith.constant 0 : index
    %127 = vector.load %arg12[%c4_75, %c2_76, %c0_77] : memref<34x40x64xf32, #tpu.memory_space<vmem>>, vector<4x32x64xf32>
    %128 = vector.shape_cast %33 : vector<64xf32> to vector<1x1x64xf32>
    %129 = vector.broadcast %128 : vector<1x1x64xf32> to vector<4x32x64xf32>
    %130 = arith.mulf %127, %129 : vector<4x32x64xf32>
    %131 = arith.addf %126, %130 : vector<4x32x64xf32>
    %c5 = arith.constant 5 : index
    %c0_78 = arith.constant 0 : index
    %c0_79 = arith.constant 0 : index
    %132 = vector.load %arg12[%c5, %c0_78, %c0_79] : memref<34x40x64xf32, #tpu.memory_space<vmem>>, vector<4x32x64xf32>
    %133 = vector.shape_cast %35 : vector<64xf32> to vector<1x1x64xf32>
    %134 = vector.broadcast %133 : vector<1x1x64xf32> to vector<4x32x64xf32>
    %135 = arith.mulf %132, %134 : vector<4x32x64xf32>
    %136 = arith.addf %131, %135 : vector<4x32x64xf32>
    %c5_80 = arith.constant 5 : index
    %c1_81 = arith.constant 1 : index
    %c0_82 = arith.constant 0 : index
    %137 = vector.load %arg12[%c5_80, %c1_81, %c0_82] : memref<34x40x64xf32, #tpu.memory_space<vmem>>, vector<4x32x64xf32>
    %138 = vector.shape_cast %37 : vector<64xf32> to vector<1x1x64xf32>
    %139 = vector.broadcast %138 : vector<1x1x64xf32> to vector<4x32x64xf32>
    %140 = arith.mulf %137, %139 : vector<4x32x64xf32>
    %141 = arith.addf %136, %140 : vector<4x32x64xf32>
    %c5_83 = arith.constant 5 : index
    %c2_84 = arith.constant 2 : index
    %c0_85 = arith.constant 0 : index
    %142 = vector.load %arg12[%c5_83, %c2_84, %c0_85] : memref<34x40x64xf32, #tpu.memory_space<vmem>>, vector<4x32x64xf32>
    %143 = vector.shape_cast %39 : vector<64xf32> to vector<1x1x64xf32>
    %144 = vector.broadcast %143 : vector<1x1x64xf32> to vector<4x32x64xf32>
    %145 = arith.mulf %142, %144 : vector<4x32x64xf32>
    %146 = arith.addf %141, %145 : vector<4x32x64xf32>
    %c6 = arith.constant 6 : index
    %c0_86 = arith.constant 0 : index
    %c0_87 = arith.constant 0 : index
    %147 = vector.load %arg12[%c6, %c0_86, %c0_87] : memref<34x40x64xf32, #tpu.memory_space<vmem>>, vector<4x32x64xf32>
    %148 = vector.shape_cast %41 : vector<64xf32> to vector<1x1x64xf32>
    %149 = vector.broadcast %148 : vector<1x1x64xf32> to vector<4x32x64xf32>
    %150 = arith.mulf %147, %149 : vector<4x32x64xf32>
    %151 = arith.addf %146, %150 : vector<4x32x64xf32>
    %c6_88 = arith.constant 6 : index
    %c1_89 = arith.constant 1 : index
    %c0_90 = arith.constant 0 : index
    %152 = vector.load %arg12[%c6_88, %c1_89, %c0_90] : memref<34x40x64xf32, #tpu.memory_space<vmem>>, vector<4x32x64xf32>
    %153 = vector.shape_cast %43 : vector<64xf32> to vector<1x1x64xf32>
    %154 = vector.broadcast %153 : vector<1x1x64xf32> to vector<4x32x64xf32>
    %155 = arith.mulf %152, %154 : vector<4x32x64xf32>
    %156 = arith.addf %151, %155 : vector<4x32x64xf32>
    %c6_91 = arith.constant 6 : index
    %c2_92 = arith.constant 2 : index
    %c0_93 = arith.constant 0 : index
    %157 = vector.load %arg12[%c6_91, %c2_92, %c0_93] : memref<34x40x64xf32, #tpu.memory_space<vmem>>, vector<4x32x64xf32>
    %158 = vector.shape_cast %45 : vector<64xf32> to vector<1x1x64xf32>
    %159 = vector.broadcast %158 : vector<1x1x64xf32> to vector<4x32x64xf32>
    %160 = arith.mulf %157, %159 : vector<4x32x64xf32>
    %161 = arith.addf %156, %160 : vector<4x32x64xf32>
    %162 = vector.extract_strided_slice %161 {offsets = [0, 0, 0], sizes = [4, 32, 32], strides = [1, 1, 1]} : vector<4x32x64xf32> to vector<4x32x32xf32>
    %163 = vector.extract_strided_slice %161 {offsets = [0, 0, 32], sizes = [4, 32, 32], strides = [1, 1, 1]} : vector<4x32x64xf32> to vector<4x32x32xf32>
    %cst_94 = arith.constant 5.000000e-01 : f32
    %164 = vector.broadcast %cst_94 : f32 to vector<4x32x32xf32>
    %165 = arith.mulf %164, %162 : vector<4x32x32xf32>
    %cst_95 = arith.constant 0.707106769 : f32
    %166 = vector.broadcast %cst_95 : f32 to vector<4x32x32xf32>
    %167 = arith.mulf %162, %166 : vector<4x32x32xf32>
    %168 = math.erf %167 : vector<4x32x32xf32>
    %cst_96 = arith.constant 1.000000e+00 : f32
    %169 = vector.broadcast %cst_96 : f32 to vector<4x32x32xf32>
    %170 = arith.addf %169, %168 : vector<4x32x32xf32>
    %171 = arith.mulf %165, %170 : vector<4x32x32xf32>
    %172 = arith.mulf %171, %163 : vector<4x32x32xf32>
    %173 = vector.shape_cast %172 : vector<4x32x32xf32> to vector<128x32xf32>
    %cst_97 = arith.constant dense<0.000000e+00> : vector<16x128xf32>
    %174 = tpu.matmul %46, %173, %cst_97 {dimension_numbers = #tpu.dot_dimension_numbers<[1], [1], [0], [0], [0, 0, 1, 0], [], []>} : vector<16x32xf32>, vector<128x32xf32>, vector<16x128xf32> -> vector<16x128xf32>
    %175 = vector.broadcast %47 : vector<16x1xf32> to vector<16x128xf32>
    %176 = arith.addf %174, %175 : vector<16x128xf32>
    %c0_98 = arith.constant 0 : index
    %c0_99 = arith.constant 0 : index
    %c128 = arith.constant 128 : index
    %177 = vector.load %arg11[%c0_98, %c0_99, %c128] : memref<1x16x1024xf32, #tpu.memory_space<vmem>>, vector<1x16x128xf32>
    %178 = vector.shape_cast %177 : vector<1x16x128xf32> to vector<16x128xf32>
    %179 = vector.shape_cast %176 : vector<16x128xf32> to vector<1x16x128xf32>
    tpu.vector_store %arg11[%c0_98, %c0_99, %c128], %179 {strides = array<i32>} : memref<1x16x1024xf32, #tpu.memory_space<vmem>>, vector<1x16x128xf32>,
    %c8 = arith.constant 8 : index
    %c0_100 = arith.constant 0 : index
    %c0_101 = arith.constant 0 : index
    %180 = vector.load %arg12[%c8, %c0_100, %c0_101] : memref<34x40x64xf32, #tpu.memory_space<vmem>>, vector<4x32x64xf32>
    %181 = vector.shape_cast %29 : vector<64xf32> to vector<1x1x64xf32>
    %182 = vector.broadcast %181 : vector<1x1x64xf32> to vector<4x32x64xf32>
    %183 = arith.mulf %180, %182 : vector<4x32x64xf32>
    %184 = arith.addf %53, %183 : vector<4x32x64xf32>
    %c8_102 = arith.constant 8 : index
    %c1_103 = arith.constant 1 : index
    %c0_104 = arith.constant 0 : index
    %185 = vector.load %arg12[%c8_102, %c1_103, %c0_104] : memref<34x40x64xf32, #tpu.memory_space<vmem>>, vector<4x32x64xf32>
    %186 = vector.shape_cast %31 : vector<64xf32> to vector<1x1x64xf32>
    %187 = vector.broadcast %186 : vector<1x1x64xf32> to vector<4x32x64xf32>
    %188 = arith.mulf %185, %187 : vector<4x32x64xf32>
    %189 = arith.addf %184, %188 : vector<4x32x64xf32>
    %c8_105 = arith.constant 8 : index
    %c2_106 = arith.constant 2 : index
    %c0_107 = arith.constant 0 : index
    %190 = vector.load %arg12[%c8_105, %c2_106, %c0_107] : memref<34x40x64xf32, #tpu.memory_space<vmem>>, vector<4x32x64xf32>
    %191 = vector.shape_cast %33 : vector<64xf32> to vector<1x1x64xf32>
    %192 = vector.broadcast %191 : vector<1x1x64xf32> to vector<4x32x64xf32>
    %193 = arith.mulf %190, %192 : vector<4x32x64xf32>
    %194 = arith.addf %189, %193 : vector<4x32x64xf32>
    %c9 = arith.constant 9 : index
    %c0_108 = arith.constant 0 : index
    %c0_109 = arith.constant 0 : index
    %195 = vector.load %arg12[%c9, %c0_108, %c0_109] : memref<34x40x64xf32, #tpu.memory_space<vmem>>, vector<4x32x64xf32>
    %196 = vector.shape_cast %35 : vector<64xf32> to vector<1x1x64xf32>
    %197 = vector.broadcast %196 : vector<1x1x64xf32> to vector<4x32x64xf32>
    %198 = arith.mulf %195, %197 : vector<4x32x64xf32>
    %199 = arith.addf %194, %198 : vector<4x32x64xf32>
    %c9_110 = arith.constant 9 : index
    %c1_111 = arith.constant 1 : index
    %c0_112 = arith.constant 0 : index
    %200 = vector.load %arg12[%c9_110, %c1_111, %c0_112] : memref<34x40x64xf32, #tpu.memory_space<vmem>>, vector<4x32x64xf32>
    %201 = vector.shape_cast %37 : vector<64xf32> to vector<1x1x64xf32>
    %202 = vector.broadcast %201 : vector<1x1x64xf32> to vector<4x32x64xf32>
    %203 = arith.mulf %200, %202 : vector<4x32x64xf32>
    %204 = arith.addf %199, %203 : vector<4x32x64xf32>
    %c9_113 = arith.constant 9 : index
    %c2_114 = arith.constant 2 : index
    %c0_115 = arith.constant 0 : index
    %205 = vector.load %arg12[%c9_113, %c2_114, %c0_115] : memref<34x40x64xf32, #tpu.memory_space<vmem>>, vector<4x32x64xf32>
    %206 = vector.shape_cast %39 : vector<64xf32> to vector<1x1x64xf32>
    %207 = vector.broadcast %206 : vector<1x1x64xf32> to vector<4x32x64xf32>
    %208 = arith.mulf %205, %207 : vector<4x32x64xf32>
    %209 = arith.addf %204, %208 : vector<4x32x64xf32>
    %c10 = arith.constant 10 : index
    %c0_116 = arith.constant 0 : index
    %c0_117 = arith.constant 0 : index
    %210 = vector.load %arg12[%c10, %c0_116, %c0_117] : memref<34x40x64xf32, #tpu.memory_space<vmem>>, vector<4x32x64xf32>
    %211 = vector.shape_cast %41 : vector<64xf32> to vector<1x1x64xf32>
    %212 = vector.broadcast %211 : vector<1x1x64xf32> to vector<4x32x64xf32>
    %213 = arith.mulf %210, %212 : vector<4x32x64xf32>
    %214 = arith.addf %209, %213 : vector<4x32x64xf32>
    %c10_118 = arith.constant 10 : index
    %c1_119 = arith.constant 1 : index
    %c0_120 = arith.constant 0 : index
    %215 = vector.load %arg12[%c10_118, %c1_119, %c0_120] : memref<34x40x64xf32, #tpu.memory_space<vmem>>, vector<4x32x64xf32>
    %216 = vector.shape_cast %43 : vector<64xf32> to vector<1x1x64xf32>
    %217 = vector.broadcast %216 : vector<1x1x64xf32> to vector<4x32x64xf32>
    %218 = arith.mulf %215, %217 : vector<4x32x64xf32>
    %219 = arith.addf %214, %218 : vector<4x32x64xf32>
    %c10_121 = arith.constant 10 : index
    %c2_122 = arith.constant 2 : index
    %c0_123 = arith.constant 0 : index
    %220 = vector.load %arg12[%c10_121, %c2_122, %c0_123] : memref<34x40x64xf32, #tpu.memory_space<vmem>>, vector<4x32x64xf32>
    %221 = vector.shape_cast %45 : vector<64xf32> to vector<1x1x64xf32>
    %222 = vector.broadcast %221 : vector<1x1x64xf32> to vector<4x32x64xf32>
    %223 = arith.mulf %220, %222 : vector<4x32x64xf32>
    %224 = arith.addf %219, %223 : vector<4x32x64xf32>
    %225 = vector.extract_strided_slice %224 {offsets = [0, 0, 0], sizes = [4, 32, 32], strides = [1, 1, 1]} : vector<4x32x64xf32> to vector<4x32x32xf32>
    %226 = vector.extract_strided_slice %224 {offsets = [0, 0, 32], sizes = [4, 32, 32], strides = [1, 1, 1]} : vector<4x32x64xf32> to vector<4x32x32xf32>
    %cst_124 = arith.constant 5.000000e-01 : f32
    %227 = vector.broadcast %cst_124 : f32 to vector<4x32x32xf32>
    %228 = arith.mulf %227, %225 : vector<4x32x32xf32>
    %cst_125 = arith.constant 0.707106769 : f32
    %229 = vector.broadcast %cst_125 : f32 to vector<4x32x32xf32>
    %230 = arith.mulf %225, %229 : vector<4x32x32xf32>
    %231 = math.erf %230 : vector<4x32x32xf32>
    %cst_126 = arith.constant 1.000000e+00 : f32
    %232 = vector.broadcast %cst_126 : f32 to vector<4x32x32xf32>
    %233 = arith.addf %232, %231 : vector<4x32x32xf32>
    %234 = arith.mulf %228, %233 : vector<4x32x32xf32>
    %235 = arith.mulf %234, %226 : vector<4x32x32xf32>
    %236 = vector.shape_cast %235 : vector<4x32x32xf32> to vector<128x32xf32>
    %cst_127 = arith.constant dense<0.000000e+00> : vector<16x128xf32>
    %237 = tpu.matmul %46, %236, %cst_127 {dimension_numbers = #tpu.dot_dimension_numbers<[1], [1], [0], [0], [0, 0, 1, 0], [], []>} : vector<16x32xf32>, vector<128x32xf32>, vector<16x128xf32> -> vector<16x128xf32>
    %238 = vector.broadcast %47 : vector<16x1xf32> to vector<16x128xf32>
    %239 = arith.addf %237, %238 : vector<16x128xf32>
    %c0_128 = arith.constant 0 : index
    %c0_129 = arith.constant 0 : index
    %c256 = arith.constant 256 : index
    %240 = vector.load %arg11[%c0_128, %c0_129, %c256] : memref<1x16x1024xf32, #tpu.memory_space<vmem>>, vector<1x16x128xf32>
    %241 = vector.shape_cast %240 : vector<1x16x128xf32> to vector<16x128xf32>
    %242 = vector.shape_cast %239 : vector<16x128xf32> to vector<1x16x128xf32>
    tpu.vector_store %arg11[%c0_128, %c0_129, %c256], %242 {strides = array<i32>} : memref<1x16x1024xf32, #tpu.memory_space<vmem>>, vector<1x16x128xf32>,
    %c12 = arith.constant 12 : index
    %c0_130 = arith.constant 0 : index
    %c0_131 = arith.constant 0 : index
    %243 = vector.load %arg12[%c12, %c0_130, %c0_131] : memref<34x40x64xf32, #tpu.memory_space<vmem>>, vector<4x32x64xf32>
    %244 = vector.shape_cast %29 : vector<64xf32> to vector<1x1x64xf32>
    %245 = vector.broadcast %244 : vector<1x1x64xf32> to vector<4x32x64xf32>
    %246 = arith.mulf %243, %245 : vector<4x32x64xf32>
    %247 = arith.addf %53, %246 : vector<4x32x64xf32>
    %c12_132 = arith.constant 12 : index
    %c1_133 = arith.constant 1 : index
    %c0_134 = arith.constant 0 : index
    %248 = vector.load %arg12[%c12_132, %c1_133, %c0_134] : memref<34x40x64xf32, #tpu.memory_space<vmem>>, vector<4x32x64xf32>
    %249 = vector.shape_cast %31 : vector<64xf32> to vector<1x1x64xf32>
    %250 = vector.broadcast %249 : vector<1x1x64xf32> to vector<4x32x64xf32>
    %251 = arith.mulf %248, %250 : vector<4x32x64xf32>
    %252 = arith.addf %247, %251 : vector<4x32x64xf32>
    %c12_135 = arith.constant 12 : index
    %c2_136 = arith.constant 2 : index
    %c0_137 = arith.constant 0 : index
    %253 = vector.load %arg12[%c12_135, %c2_136, %c0_137] : memref<34x40x64xf32, #tpu.memory_space<vmem>>, vector<4x32x64xf32>
    %254 = vector.shape_cast %33 : vector<64xf32> to vector<1x1x64xf32>
    %255 = vector.broadcast %254 : vector<1x1x64xf32> to vector<4x32x64xf32>
    %256 = arith.mulf %253, %255 : vector<4x32x64xf32>
    %257 = arith.addf %252, %256 : vector<4x32x64xf32>
    %c13 = arith.constant 13 : index
    %c0_138 = arith.constant 0 : index
    %c0_139 = arith.constant 0 : index
    %258 = vector.load %arg12[%c13, %c0_138, %c0_139] : memref<34x40x64xf32, #tpu.memory_space<vmem>>, vector<4x32x64xf32>
    %259 = vector.shape_cast %35 : vector<64xf32> to vector<1x1x64xf32>
    %260 = vector.broadcast %259 : vector<1x1x64xf32> to vector<4x32x64xf32>
    %261 = arith.mulf %258, %260 : vector<4x32x64xf32>
    %262 = arith.addf %257, %261 : vector<4x32x64xf32>
    %c13_140 = arith.constant 13 : index
    %c1_141 = arith.constant 1 : index
    %c0_142 = arith.constant 0 : index
    %263 = vector.load %arg12[%c13_140, %c1_141, %c0_142] : memref<34x40x64xf32, #tpu.memory_space<vmem>>, vector<4x32x64xf32>
    %264 = vector.shape_cast %37 : vector<64xf32> to vector<1x1x64xf32>
    %265 = vector.broadcast %264 : vector<1x1x64xf32> to vector<4x32x64xf32>
    %266 = arith.mulf %263, %265 : vector<4x32x64xf32>
    %267 = arith.addf %262, %266 : vector<4x32x64xf32>
    %c13_143 = arith.constant 13 : index
    %c2_144 = arith.constant 2 : index
    %c0_145 = arith.constant 0 : index
    %268 = vector.load %arg12[%c13_143, %c2_144, %c0_145] : memref<34x40x64xf32, #tpu.memory_space<vmem>>, vector<4x32x64xf32>
    %269 = vector.shape_cast %39 : vector<64xf32> to vector<1x1x64xf32>
    %270 = vector.broadcast %269 : vector<1x1x64xf32> to vector<4x32x64xf32>
    %271 = arith.mulf %268, %270 : vector<4x32x64xf32>
    %272 = arith.addf %267, %271 : vector<4x32x64xf32>
    %c14 = arith.constant 14 : index
    %c0_146 = arith.constant 0 : index
    %c0_147 = arith.constant 0 : index
    %273 = vector.load %arg12[%c14, %c0_146, %c0_147] : memref<34x40x64xf32, #tpu.memory_space<vmem>>, vector<4x32x64xf32>
    %274 = vector.shape_cast %41 : vector<64xf32> to vector<1x1x64xf32>
    %275 = vector.broadcast %274 : vector<1x1x64xf32> to vector<4x32x64xf32>
    %276 = arith.mulf %273, %275 : vector<4x32x64xf32>
    %277 = arith.addf %272, %276 : vector<4x32x64xf32>
    %c14_148 = arith.constant 14 : index
    %c1_149 = arith.constant 1 : index
    %c0_150 = arith.constant 0 : index
    %278 = vector.load %arg12[%c14_148, %c1_149, %c0_150] : memref<34x40x64xf32, #tpu.memory_space<vmem>>, vector<4x32x64xf32>
    %279 = vector.shape_cast %43 : vector<64xf32> to vector<1x1x64xf32>
    %280 = vector.broadcast %279 : vector<1x1x64xf32> to vector<4x32x64xf32>
    %281 = arith.mulf %278, %280 : vector<4x32x64xf32>
    %282 = arith.addf %277, %281 : vector<4x32x64xf32>
    %c14_151 = arith.constant 14 : index
    %c2_152 = arith.constant 2 : index
    %c0_153 = arith.constant 0 : index
    %283 = vector.load %arg12[%c14_151, %c2_152, %c0_153] : memref<34x40x64xf32, #tpu.memory_space<vmem>>, vector<4x32x64xf32>
    %284 = vector.shape_cast %45 : vector<64xf32> to vector<1x1x64xf32>
    %285 = vector.broadcast %284 : vector<1x1x64xf32> to vector<4x32x64xf32>
    %286 = arith.mulf %283, %285 : vector<4x32x64xf32>
    %287 = arith.addf %282, %286 : vector<4x32x64xf32>
    %288 = vector.extract_strided_slice %287 {offsets = [0, 0, 0], sizes = [4, 32, 32], strides = [1, 1, 1]} : vector<4x32x64xf32> to vector<4x32x32xf32>
    %289 = vector.extract_strided_slice %287 {offsets = [0, 0, 32], sizes = [4, 32, 32], strides = [1, 1, 1]} : vector<4x32x64xf32> to vector<4x32x32xf32>
    %cst_154 = arith.constant 5.000000e-01 : f32
    %290 = vector.broadcast %cst_154 : f32 to vector<4x32x32xf32>
    %291 = arith.mulf %290, %288 : vector<4x32x32xf32>
    %cst_155 = arith.constant 0.707106769 : f32
    %292 = vector.broadcast %cst_155 : f32 to vector<4x32x32xf32>
    %293 = arith.mulf %288, %292 : vector<4x32x32xf32>
    %294 = math.erf %293 : vector<4x32x32xf32>
    %cst_156 = arith.constant 1.000000e+00 : f32
    %295 = vector.broadcast %cst_156 : f32 to vector<4x32x32xf32>
    %296 = arith.addf %295, %294 : vector<4x32x32xf32>
    %297 = arith.mulf %291, %296 : vector<4x32x32xf32>
    %298 = arith.mulf %297, %289 : vector<4x32x32xf32>
    %299 = vector.shape_cast %298 : vector<4x32x32xf32> to vector<128x32xf32>
    %cst_157 = arith.constant dense<0.000000e+00> : vector<16x128xf32>
    %300 = tpu.matmul %46, %299, %cst_157 {dimension_numbers = #tpu.dot_dimension_numbers<[1], [1], [0], [0], [0, 0, 1, 0], [], []>} : vector<16x32xf32>, vector<128x32xf32>, vector<16x128xf32> -> vector<16x128xf32>
    %301 = vector.broadcast %47 : vector<16x1xf32> to vector<16x128xf32>
    %302 = arith.addf %300, %301 : vector<16x128xf32>
    %c0_158 = arith.constant 0 : index
    %c0_159 = arith.constant 0 : index
    %c384 = arith.constant 384 : index
    %303 = vector.load %arg11[%c0_158, %c0_159, %c384] : memref<1x16x1024xf32, #tpu.memory_space<vmem>>, vector<1x16x128xf32>
    %304 = vector.shape_cast %303 : vector<1x16x128xf32> to vector<16x128xf32>
    %305 = vector.shape_cast %302 : vector<16x128xf32> to vector<1x16x128xf32>
    tpu.vector_store %arg11[%c0_158, %c0_159, %c384], %305 {strides = array<i32>} : memref<1x16x1024xf32, #tpu.memory_space<vmem>>, vector<1x16x128xf32>,
    %c16 = arith.constant 16 : index
    %c0_160 = arith.constant 0 : index
    %c0_161 = arith.constant 0 : index
    %306 = vector.load %arg12[%c16, %c0_160, %c0_161] : memref<34x40x64xf32, #tpu.memory_space<vmem>>, vector<4x32x64xf32>
    %307 = vector.shape_cast %29 : vector<64xf32> to vector<1x1x64xf32>
    %308 = vector.broadcast %307 : vector<1x1x64xf32> to vector<4x32x64xf32>
    %309 = arith.mulf %306, %308 : vector<4x32x64xf32>
    %310 = arith.addf %53, %309 : vector<4x32x64xf32>
    %c16_162 = arith.constant 16 : index
    %c1_163 = arith.constant 1 : index
    %c0_164 = arith.constant 0 : index
    %311 = vector.load %arg12[%c16_162, %c1_163, %c0_164] : memref<34x40x64xf32, #tpu.memory_space<vmem>>, vector<4x32x64xf32>
    %312 = vector.shape_cast %31 : vector<64xf32> to vector<1x1x64xf32>
    %313 = vector.broadcast %312 : vector<1x1x64xf32> to vector<4x32x64xf32>
    %314 = arith.mulf %311, %313 : vector<4x32x64xf32>
    %315 = arith.addf %310, %314 : vector<4x32x64xf32>
    %c16_165 = arith.constant 16 : index
    %c2_166 = arith.constant 2 : index
    %c0_167 = arith.constant 0 : index
    %316 = vector.load %arg12[%c16_165, %c2_166, %c0_167] : memref<34x40x64xf32, #tpu.memory_space<vmem>>, vector<4x32x64xf32>
    %317 = vector.shape_cast %33 : vector<64xf32> to vector<1x1x64xf32>
    %318 = vector.broadcast %317 : vector<1x1x64xf32> to vector<4x32x64xf32>
    %319 = arith.mulf %316, %318 : vector<4x32x64xf32>
    %320 = arith.addf %315, %319 : vector<4x32x64xf32>
    %c17 = arith.constant 17 : index
    %c0_168 = arith.constant 0 : index
    %c0_169 = arith.constant 0 : index
    %321 = vector.load %arg12[%c17, %c0_168, %c0_169] : memref<34x40x64xf32, #tpu.memory_space<vmem>>, vector<4x32x64xf32>
    %322 = vector.shape_cast %35 : vector<64xf32> to vector<1x1x64xf32>
    %323 = vector.broadcast %322 : vector<1x1x64xf32> to vector<4x32x64xf32>
    %324 = arith.mulf %321, %323 : vector<4x32x64xf32>
    %325 = arith.addf %320, %324 : vector<4x32x64xf32>
    %c17_170 = arith.constant 17 : index
    %c1_171 = arith.constant 1 : index
    %c0_172 = arith.constant 0 : index
    %326 = vector.load %arg12[%c17_170, %c1_171, %c0_172] : memref<34x40x64xf32, #tpu.memory_space<vmem>>, vector<4x32x64xf32>
    %327 = vector.shape_cast %37 : vector<64xf32> to vector<1x1x64xf32>
    %328 = vector.broadcast %327 : vector<1x1x64xf32> to vector<4x32x64xf32>
    %329 = arith.mulf %326, %328 : vector<4x32x64xf32>
    %330 = arith.addf %325, %329 : vector<4x32x64xf32>
    %c17_173 = arith.constant 17 : index
    %c2_174 = arith.constant 2 : index
    %c0_175 = arith.constant 0 : index
    %331 = vector.load %arg12[%c17_173, %c2_174, %c0_175] : memref<34x40x64xf32, #tpu.memory_space<vmem>>, vector<4x32x64xf32>
    %332 = vector.shape_cast %39 : vector<64xf32> to vector<1x1x64xf32>
    %333 = vector.broadcast %332 : vector<1x1x64xf32> to vector<4x32x64xf32>
    %334 = arith.mulf %331, %333 : vector<4x32x64xf32>
    %335 = arith.addf %330, %334 : vector<4x32x64xf32>
    %c18 = arith.constant 18 : index
    %c0_176 = arith.constant 0 : index
    %c0_177 = arith.constant 0 : index
    %336 = vector.load %arg12[%c18, %c0_176, %c0_177] : memref<34x40x64xf32, #tpu.memory_space<vmem>>, vector<4x32x64xf32>
    %337 = vector.shape_cast %41 : vector<64xf32> to vector<1x1x64xf32>
    %338 = vector.broadcast %337 : vector<1x1x64xf32> to vector<4x32x64xf32>
    %339 = arith.mulf %336, %338 : vector<4x32x64xf32>
    %340 = arith.addf %335, %339 : vector<4x32x64xf32>
    %c18_178 = arith.constant 18 : index
    %c1_179 = arith.constant 1 : index
    %c0_180 = arith.constant 0 : index
    %341 = vector.load %arg12[%c18_178, %c1_179, %c0_180] : memref<34x40x64xf32, #tpu.memory_space<vmem>>, vector<4x32x64xf32>
    %342 = vector.shape_cast %43 : vector<64xf32> to vector<1x1x64xf32>
    %343 = vector.broadcast %342 : vector<1x1x64xf32> to vector<4x32x64xf32>
    %344 = arith.mulf %341, %343 : vector<4x32x64xf32>
    %345 = arith.addf %340, %344 : vector<4x32x64xf32>
    %c18_181 = arith.constant 18 : index
    %c2_182 = arith.constant 2 : index
    %c0_183 = arith.constant 0 : index
    %346 = vector.load %arg12[%c18_181, %c2_182, %c0_183] : memref<34x40x64xf32, #tpu.memory_space<vmem>>, vector<4x32x64xf32>
    %347 = vector.shape_cast %45 : vector<64xf32> to vector<1x1x64xf32>
    %348 = vector.broadcast %347 : vector<1x1x64xf32> to vector<4x32x64xf32>
    %349 = arith.mulf %346, %348 : vector<4x32x64xf32>
    %350 = arith.addf %345, %349 : vector<4x32x64xf32>
    %351 = vector.extract_strided_slice %350 {offsets = [0, 0, 0], sizes = [4, 32, 32], strides = [1, 1, 1]} : vector<4x32x64xf32> to vector<4x32x32xf32>
    %352 = vector.extract_strided_slice %350 {offsets = [0, 0, 32], sizes = [4, 32, 32], strides = [1, 1, 1]} : vector<4x32x64xf32> to vector<4x32x32xf32>
    %cst_184 = arith.constant 5.000000e-01 : f32
    %353 = vector.broadcast %cst_184 : f32 to vector<4x32x32xf32>
    %354 = arith.mulf %353, %351 : vector<4x32x32xf32>
    %cst_185 = arith.constant 0.707106769 : f32
    %355 = vector.broadcast %cst_185 : f32 to vector<4x32x32xf32>
    %356 = arith.mulf %351, %355 : vector<4x32x32xf32>
    %357 = math.erf %356 : vector<4x32x32xf32>
    %cst_186 = arith.constant 1.000000e+00 : f32
    %358 = vector.broadcast %cst_186 : f32 to vector<4x32x32xf32>
    %359 = arith.addf %358, %357 : vector<4x32x32xf32>
    %360 = arith.mulf %354, %359 : vector<4x32x32xf32>
    %361 = arith.mulf %360, %352 : vector<4x32x32xf32>
    %362 = vector.shape_cast %361 : vector<4x32x32xf32> to vector<128x32xf32>
    %cst_187 = arith.constant dense<0.000000e+00> : vector<16x128xf32>
    %363 = tpu.matmul %46, %362, %cst_187 {dimension_numbers = #tpu.dot_dimension_numbers<[1], [1], [0], [0], [0, 0, 1, 0], [], []>} : vector<16x32xf32>, vector<128x32xf32>, vector<16x128xf32> -> vector<16x128xf32>
    %364 = vector.broadcast %47 : vector<16x1xf32> to vector<16x128xf32>
    %365 = arith.addf %363, %364 : vector<16x128xf32>
    %c0_188 = arith.constant 0 : index
    %c0_189 = arith.constant 0 : index
    %c512 = arith.constant 512 : index
    %366 = vector.load %arg11[%c0_188, %c0_189, %c512] : memref<1x16x1024xf32, #tpu.memory_space<vmem>>, vector<1x16x128xf32>
    %367 = vector.shape_cast %366 : vector<1x16x128xf32> to vector<16x128xf32>
    %368 = vector.shape_cast %365 : vector<16x128xf32> to vector<1x16x128xf32>
    tpu.vector_store %arg11[%c0_188, %c0_189, %c512], %368 {strides = array<i32>} : memref<1x16x1024xf32, #tpu.memory_space<vmem>>, vector<1x16x128xf32>,
    %c20 = arith.constant 20 : index
    %c0_190 = arith.constant 0 : index
    %c0_191 = arith.constant 0 : index
    %369 = vector.load %arg12[%c20, %c0_190, %c0_191] : memref<34x40x64xf32, #tpu.memory_space<vmem>>, vector<4x32x64xf32>
    %370 = vector.shape_cast %29 : vector<64xf32> to vector<1x1x64xf32>
    %371 = vector.broadcast %370 : vector<1x1x64xf32> to vector<4x32x64xf32>
    %372 = arith.mulf %369, %371 : vector<4x32x64xf32>
    %373 = arith.addf %53, %372 : vector<4x32x64xf32>
    %c20_192 = arith.constant 20 : index
    %c1_193 = arith.constant 1 : index
    %c0_194 = arith.constant 0 : index
    %374 = vector.load %arg12[%c20_192, %c1_193, %c0_194] : memref<34x40x64xf32, #tpu.memory_space<vmem>>, vector<4x32x64xf32>
    %375 = vector.shape_cast %31 : vector<64xf32> to vector<1x1x64xf32>
    %376 = vector.broadcast %375 : vector<1x1x64xf32> to vector<4x32x64xf32>
    %377 = arith.mulf %374, %376 : vector<4x32x64xf32>
    %378 = arith.addf %373, %377 : vector<4x32x64xf32>
    %c20_195 = arith.constant 20 : index
    %c2_196 = arith.constant 2 : index
    %c0_197 = arith.constant 0 : index
    %379 = vector.load %arg12[%c20_195, %c2_196, %c0_197] : memref<34x40x64xf32, #tpu.memory_space<vmem>>, vector<4x32x64xf32>
    %380 = vector.shape_cast %33 : vector<64xf32> to vector<1x1x64xf32>
    %381 = vector.broadcast %380 : vector<1x1x64xf32> to vector<4x32x64xf32>
    %382 = arith.mulf %379, %381 : vector<4x32x64xf32>
    %383 = arith.addf %378, %382 : vector<4x32x64xf32>
    %c21 = arith.constant 21 : index
    %c0_198 = arith.constant 0 : index
    %c0_199 = arith.constant 0 : index
    %384 = vector.load %arg12[%c21, %c0_198, %c0_199] : memref<34x40x64xf32, #tpu.memory_space<vmem>>, vector<4x32x64xf32>
    %385 = vector.shape_cast %35 : vector<64xf32> to vector<1x1x64xf32>
    %386 = vector.broadcast %385 : vector<1x1x64xf32> to vector<4x32x64xf32>
    %387 = arith.mulf %384, %386 : vector<4x32x64xf32>
    %388 = arith.addf %383, %387 : vector<4x32x64xf32>
    %c21_200 = arith.constant 21 : index
    %c1_201 = arith.constant 1 : index
    %c0_202 = arith.constant 0 : index
    %389 = vector.load %arg12[%c21_200, %c1_201, %c0_202] : memref<34x40x64xf32, #tpu.memory_space<vmem>>, vector<4x32x64xf32>
    %390 = vector.shape_cast %37 : vector<64xf32> to vector<1x1x64xf32>
    %391 = vector.broadcast %390 : vector<1x1x64xf32> to vector<4x32x64xf32>
    %392 = arith.mulf %389, %391 : vector<4x32x64xf32>
    %393 = arith.addf %388, %392 : vector<4x32x64xf32>
    %c21_203 = arith.constant 21 : index
    %c2_204 = arith.constant 2 : index
    %c0_205 = arith.constant 0 : index
    %394 = vector.load %arg12[%c21_203, %c2_204, %c0_205] : memref<34x40x64xf32, #tpu.memory_space<vmem>>, vector<4x32x64xf32>
    %395 = vector.shape_cast %39 : vector<64xf32> to vector<1x1x64xf32>
    %396 = vector.broadcast %395 : vector<1x1x64xf32> to vector<4x32x64xf32>
    %397 = arith.mulf %394, %396 : vector<4x32x64xf32>
    %398 = arith.addf %393, %397 : vector<4x32x64xf32>
    %c22 = arith.constant 22 : index
    %c0_206 = arith.constant 0 : index
    %c0_207 = arith.constant 0 : index
    %399 = vector.load %arg12[%c22, %c0_206, %c0_207] : memref<34x40x64xf32, #tpu.memory_space<vmem>>, vector<4x32x64xf32>
    %400 = vector.shape_cast %41 : vector<64xf32> to vector<1x1x64xf32>
    %401 = vector.broadcast %400 : vector<1x1x64xf32> to vector<4x32x64xf32>
    %402 = arith.mulf %399, %401 : vector<4x32x64xf32>
    %403 = arith.addf %398, %402 : vector<4x32x64xf32>
    %c22_208 = arith.constant 22 : index
    %c1_209 = arith.constant 1 : index
    %c0_210 = arith.constant 0 : index
    %404 = vector.load %arg12[%c22_208, %c1_209, %c0_210] : memref<34x40x64xf32, #tpu.memory_space<vmem>>, vector<4x32x64xf32>
    %405 = vector.shape_cast %43 : vector<64xf32> to vector<1x1x64xf32>
    %406 = vector.broadcast %405 : vector<1x1x64xf32> to vector<4x32x64xf32>
    %407 = arith.mulf %404, %406 : vector<4x32x64xf32>
    %408 = arith.addf %403, %407 : vector<4x32x64xf32>
    %c22_211 = arith.constant 22 : index
    %c2_212 = arith.constant 2 : index
    %c0_213 = arith.constant 0 : index
    %409 = vector.load %arg12[%c22_211, %c2_212, %c0_213] : memref<34x40x64xf32, #tpu.memory_space<vmem>>, vector<4x32x64xf32>
    %410 = vector.shape_cast %45 : vector<64xf32> to vector<1x1x64xf32>
    %411 = vector.broadcast %410 : vector<1x1x64xf32> to vector<4x32x64xf32>
    %412 = arith.mulf %409, %411 : vector<4x32x64xf32>
    %413 = arith.addf %408, %412 : vector<4x32x64xf32>
    %414 = vector.extract_strided_slice %413 {offsets = [0, 0, 0], sizes = [4, 32, 32], strides = [1, 1, 1]} : vector<4x32x64xf32> to vector<4x32x32xf32>
    %415 = vector.extract_strided_slice %413 {offsets = [0, 0, 32], sizes = [4, 32, 32], strides = [1, 1, 1]} : vector<4x32x64xf32> to vector<4x32x32xf32>
    %cst_214 = arith.constant 5.000000e-01 : f32
    %416 = vector.broadcast %cst_214 : f32 to vector<4x32x32xf32>
    %417 = arith.mulf %416, %414 : vector<4x32x32xf32>
    %cst_215 = arith.constant 0.707106769 : f32
    %418 = vector.broadcast %cst_215 : f32 to vector<4x32x32xf32>
    %419 = arith.mulf %414, %418 : vector<4x32x32xf32>
    %420 = math.erf %419 : vector<4x32x32xf32>
    %cst_216 = arith.constant 1.000000e+00 : f32
    %421 = vector.broadcast %cst_216 : f32 to vector<4x32x32xf32>
    %422 = arith.addf %421, %420 : vector<4x32x32xf32>
    %423 = arith.mulf %417, %422 : vector<4x32x32xf32>
    %424 = arith.mulf %423, %415 : vector<4x32x32xf32>
    %425 = vector.shape_cast %424 : vector<4x32x32xf32> to vector<128x32xf32>
    %cst_217 = arith.constant dense<0.000000e+00> : vector<16x128xf32>
    %426 = tpu.matmul %46, %425, %cst_217 {dimension_numbers = #tpu.dot_dimension_numbers<[1], [1], [0], [0], [0, 0, 1, 0], [], []>} : vector<16x32xf32>, vector<128x32xf32>, vector<16x128xf32> -> vector<16x128xf32>
    %427 = vector.broadcast %47 : vector<16x1xf32> to vector<16x128xf32>
    %428 = arith.addf %426, %427 : vector<16x128xf32>
    %c0_218 = arith.constant 0 : index
    %c0_219 = arith.constant 0 : index
    %c640 = arith.constant 640 : index
    %429 = vector.load %arg11[%c0_218, %c0_219, %c640] : memref<1x16x1024xf32, #tpu.memory_space<vmem>>, vector<1x16x128xf32>
    %430 = vector.shape_cast %429 : vector<1x16x128xf32> to vector<16x128xf32>
    %431 = vector.shape_cast %428 : vector<16x128xf32> to vector<1x16x128xf32>
    tpu.vector_store %arg11[%c0_218, %c0_219, %c640], %431 {strides = array<i32>} : memref<1x16x1024xf32, #tpu.memory_space<vmem>>, vector<1x16x128xf32>,
    %c24 = arith.constant 24 : index
    %c0_220 = arith.constant 0 : index
    %c0_221 = arith.constant 0 : index
    %432 = vector.load %arg12[%c24, %c0_220, %c0_221] : memref<34x40x64xf32, #tpu.memory_space<vmem>>, vector<4x32x64xf32>
    %433 = vector.shape_cast %29 : vector<64xf32> to vector<1x1x64xf32>
    %434 = vector.broadcast %433 : vector<1x1x64xf32> to vector<4x32x64xf32>
    %435 = arith.mulf %432, %434 : vector<4x32x64xf32>
    %436 = arith.addf %53, %435 : vector<4x32x64xf32>
    %c24_222 = arith.constant 24 : index
    %c1_223 = arith.constant 1 : index
    %c0_224 = arith.constant 0 : index
    %437 = vector.load %arg12[%c24_222, %c1_223, %c0_224] : memref<34x40x64xf32, #tpu.memory_space<vmem>>, vector<4x32x64xf32>
    %438 = vector.shape_cast %31 : vector<64xf32> to vector<1x1x64xf32>
    %439 = vector.broadcast %438 : vector<1x1x64xf32> to vector<4x32x64xf32>
    %440 = arith.mulf %437, %439 : vector<4x32x64xf32>
    %441 = arith.addf %436, %440 : vector<4x32x64xf32>
    %c24_225 = arith.constant 24 : index
    %c2_226 = arith.constant 2 : index
    %c0_227 = arith.constant 0 : index
    %442 = vector.load %arg12[%c24_225, %c2_226, %c0_227] : memref<34x40x64xf32, #tpu.memory_space<vmem>>, vector<4x32x64xf32>
    %443 = vector.shape_cast %33 : vector<64xf32> to vector<1x1x64xf32>
    %444 = vector.broadcast %443 : vector<1x1x64xf32> to vector<4x32x64xf32>
    %445 = arith.mulf %442, %444 : vector<4x32x64xf32>
    %446 = arith.addf %441, %445 : vector<4x32x64xf32>
    %c25 = arith.constant 25 : index
    %c0_228 = arith.constant 0 : index
    %c0_229 = arith.constant 0 : index
    %447 = vector.load %arg12[%c25, %c0_228, %c0_229] : memref<34x40x64xf32, #tpu.memory_space<vmem>>, vector<4x32x64xf32>
    %448 = vector.shape_cast %35 : vector<64xf32> to vector<1x1x64xf32>
    %449 = vector.broadcast %448 : vector<1x1x64xf32> to vector<4x32x64xf32>
    %450 = arith.mulf %447, %449 : vector<4x32x64xf32>
    %451 = arith.addf %446, %450 : vector<4x32x64xf32>
    %c25_230 = arith.constant 25 : index
    %c1_231 = arith.constant 1 : index
    %c0_232 = arith.constant 0 : index
    %452 = vector.load %arg12[%c25_230, %c1_231, %c0_232] : memref<34x40x64xf32, #tpu.memory_space<vmem>>, vector<4x32x64xf32>
    %453 = vector.shape_cast %37 : vector<64xf32> to vector<1x1x64xf32>
    %454 = vector.broadcast %453 : vector<1x1x64xf32> to vector<4x32x64xf32>
    %455 = arith.mulf %452, %454 : vector<4x32x64xf32>
    %456 = arith.addf %451, %455 : vector<4x32x64xf32>
    %c25_233 = arith.constant 25 : index
    %c2_234 = arith.constant 2 : index
    %c0_235 = arith.constant 0 : index
    %457 = vector.load %arg12[%c25_233, %c2_234, %c0_235] : memref<34x40x64xf32, #tpu.memory_space<vmem>>, vector<4x32x64xf32>
    %458 = vector.shape_cast %39 : vector<64xf32> to vector<1x1x64xf32>
    %459 = vector.broadcast %458 : vector<1x1x64xf32> to vector<4x32x64xf32>
    %460 = arith.mulf %457, %459 : vector<4x32x64xf32>
    %461 = arith.addf %456, %460 : vector<4x32x64xf32>
    %c26 = arith.constant 26 : index
    %c0_236 = arith.constant 0 : index
    %c0_237 = arith.constant 0 : index
    %462 = vector.load %arg12[%c26, %c0_236, %c0_237] : memref<34x40x64xf32, #tpu.memory_space<vmem>>, vector<4x32x64xf32>
    %463 = vector.shape_cast %41 : vector<64xf32> to vector<1x1x64xf32>
    %464 = vector.broadcast %463 : vector<1x1x64xf32> to vector<4x32x64xf32>
    %465 = arith.mulf %462, %464 : vector<4x32x64xf32>
    %466 = arith.addf %461, %465 : vector<4x32x64xf32>
    %c26_238 = arith.constant 26 : index
    %c1_239 = arith.constant 1 : index
    %c0_240 = arith.constant 0 : index
    %467 = vector.load %arg12[%c26_238, %c1_239, %c0_240] : memref<34x40x64xf32, #tpu.memory_space<vmem>>, vector<4x32x64xf32>
    %468 = vector.shape_cast %43 : vector<64xf32> to vector<1x1x64xf32>
    %469 = vector.broadcast %468 : vector<1x1x64xf32> to vector<4x32x64xf32>
    %470 = arith.mulf %467, %469 : vector<4x32x64xf32>
    %471 = arith.addf %466, %470 : vector<4x32x64xf32>
    %c26_241 = arith.constant 26 : index
    %c2_242 = arith.constant 2 : index
    %c0_243 = arith.constant 0 : index
    %472 = vector.load %arg12[%c26_241, %c2_242, %c0_243] : memref<34x40x64xf32, #tpu.memory_space<vmem>>, vector<4x32x64xf32>
    %473 = vector.shape_cast %45 : vector<64xf32> to vector<1x1x64xf32>
    %474 = vector.broadcast %473 : vector<1x1x64xf32> to vector<4x32x64xf32>
    %475 = arith.mulf %472, %474 : vector<4x32x64xf32>
    %476 = arith.addf %471, %475 : vector<4x32x64xf32>
    %477 = vector.extract_strided_slice %476 {offsets = [0, 0, 0], sizes = [4, 32, 32], strides = [1, 1, 1]} : vector<4x32x64xf32> to vector<4x32x32xf32>
    %478 = vector.extract_strided_slice %476 {offsets = [0, 0, 32], sizes = [4, 32, 32], strides = [1, 1, 1]} : vector<4x32x64xf32> to vector<4x32x32xf32>
    %cst_244 = arith.constant 5.000000e-01 : f32
    %479 = vector.broadcast %cst_244 : f32 to vector<4x32x32xf32>
    %480 = arith.mulf %479, %477 : vector<4x32x32xf32>
    %cst_245 = arith.constant 0.707106769 : f32
    %481 = vector.broadcast %cst_245 : f32 to vector<4x32x32xf32>
    %482 = arith.mulf %477, %481 : vector<4x32x32xf32>
    %483 = math.erf %482 : vector<4x32x32xf32>
    %cst_246 = arith.constant 1.000000e+00 : f32
    %484 = vector.broadcast %cst_246 : f32 to vector<4x32x32xf32>
    %485 = arith.addf %484, %483 : vector<4x32x32xf32>
    %486 = arith.mulf %480, %485 : vector<4x32x32xf32>
    %487 = arith.mulf %486, %478 : vector<4x32x32xf32>
    %488 = vector.shape_cast %487 : vector<4x32x32xf32> to vector<128x32xf32>
    %cst_247 = arith.constant dense<0.000000e+00> : vector<16x128xf32>
    %489 = tpu.matmul %46, %488, %cst_247 {dimension_numbers = #tpu.dot_dimension_numbers<[1], [1], [0], [0], [0, 0, 1, 0], [], []>} : vector<16x32xf32>, vector<128x32xf32>, vector<16x128xf32> -> vector<16x128xf32>
    %490 = vector.broadcast %47 : vector<16x1xf32> to vector<16x128xf32>
    %491 = arith.addf %489, %490 : vector<16x128xf32>
    %c0_248 = arith.constant 0 : index
    %c0_249 = arith.constant 0 : index
    %c768 = arith.constant 768 : index
    %492 = vector.load %arg11[%c0_248, %c0_249, %c768] : memref<1x16x1024xf32, #tpu.memory_space<vmem>>, vector<1x16x128xf32>
    %493 = vector.shape_cast %492 : vector<1x16x128xf32> to vector<16x128xf32>
    %494 = vector.shape_cast %491 : vector<16x128xf32> to vector<1x16x128xf32>
    tpu.vector_store %arg11[%c0_248, %c0_249, %c768], %494 {strides = array<i32>} : memref<1x16x1024xf32, #tpu.memory_space<vmem>>, vector<1x16x128xf32>,
    %c28 = arith.constant 28 : index
    %c0_250 = arith.constant 0 : index
    %c0_251 = arith.constant 0 : index
    %495 = vector.load %arg12[%c28, %c0_250, %c0_251] : memref<34x40x64xf32, #tpu.memory_space<vmem>>, vector<4x32x64xf32>
    %496 = vector.shape_cast %29 : vector<64xf32> to vector<1x1x64xf32>
    %497 = vector.broadcast %496 : vector<1x1x64xf32> to vector<4x32x64xf32>
    %498 = arith.mulf %495, %497 : vector<4x32x64xf32>
    %499 = arith.addf %53, %498 : vector<4x32x64xf32>
    %c28_252 = arith.constant 28 : index
    %c1_253 = arith.constant 1 : index
    %c0_254 = arith.constant 0 : index
    %500 = vector.load %arg12[%c28_252, %c1_253, %c0_254] : memref<34x40x64xf32, #tpu.memory_space<vmem>>, vector<4x32x64xf32>
    %501 = vector.shape_cast %31 : vector<64xf32> to vector<1x1x64xf32>
    %502 = vector.broadcast %501 : vector<1x1x64xf32> to vector<4x32x64xf32>
    %503 = arith.mulf %500, %502 : vector<4x32x64xf32>
    %504 = arith.addf %499, %503 : vector<4x32x64xf32>
    %c28_255 = arith.constant 28 : index
    %c2_256 = arith.constant 2 : index
    %c0_257 = arith.constant 0 : index
    %505 = vector.load %arg12[%c28_255, %c2_256, %c0_257] : memref<34x40x64xf32, #tpu.memory_space<vmem>>, vector<4x32x64xf32>
    %506 = vector.shape_cast %33 : vector<64xf32> to vector<1x1x64xf32>
    %507 = vector.broadcast %506 : vector<1x1x64xf32> to vector<4x32x64xf32>
    %508 = arith.mulf %505, %507 : vector<4x32x64xf32>
    %509 = arith.addf %504, %508 : vector<4x32x64xf32>
    %c29 = arith.constant 29 : index
    %c0_258 = arith.constant 0 : index
    %c0_259 = arith.constant 0 : index
    %510 = vector.load %arg12[%c29, %c0_258, %c0_259] : memref<34x40x64xf32, #tpu.memory_space<vmem>>, vector<4x32x64xf32>
    %511 = vector.shape_cast %35 : vector<64xf32> to vector<1x1x64xf32>
    %512 = vector.broadcast %511 : vector<1x1x64xf32> to vector<4x32x64xf32>
    %513 = arith.mulf %510, %512 : vector<4x32x64xf32>
    %514 = arith.addf %509, %513 : vector<4x32x64xf32>
    %c29_260 = arith.constant 29 : index
    %c1_261 = arith.constant 1 : index
    %c0_262 = arith.constant 0 : index
    %515 = vector.load %arg12[%c29_260, %c1_261, %c0_262] : memref<34x40x64xf32, #tpu.memory_space<vmem>>, vector<4x32x64xf32>
    %516 = vector.shape_cast %37 : vector<64xf32> to vector<1x1x64xf32>
    %517 = vector.broadcast %516 : vector<1x1x64xf32> to vector<4x32x64xf32>
    %518 = arith.mulf %515, %517 : vector<4x32x64xf32>
    %519 = arith.addf %514, %518 : vector<4x32x64xf32>
    %c29_263 = arith.constant 29 : index
    %c2_264 = arith.constant 2 : index
    %c0_265 = arith.constant 0 : index
    %520 = vector.load %arg12[%c29_263, %c2_264, %c0_265] : memref<34x40x64xf32, #tpu.memory_space<vmem>>, vector<4x32x64xf32>
    %521 = vector.shape_cast %39 : vector<64xf32> to vector<1x1x64xf32>
    %522 = vector.broadcast %521 : vector<1x1x64xf32> to vector<4x32x64xf32>
    %523 = arith.mulf %520, %522 : vector<4x32x64xf32>
    %524 = arith.addf %519, %523 : vector<4x32x64xf32>
    %c30 = arith.constant 30 : index
    %c0_266 = arith.constant 0 : index
    %c0_267 = arith.constant 0 : index
    %525 = vector.load %arg12[%c30, %c0_266, %c0_267] : memref<34x40x64xf32, #tpu.memory_space<vmem>>, vector<4x32x64xf32>
    %526 = vector.shape_cast %41 : vector<64xf32> to vector<1x1x64xf32>
    %527 = vector.broadcast %526 : vector<1x1x64xf32> to vector<4x32x64xf32>
    %528 = arith.mulf %525, %527 : vector<4x32x64xf32>
    %529 = arith.addf %524, %528 : vector<4x32x64xf32>
    %c30_268 = arith.constant 30 : index
    %c1_269 = arith.constant 1 : index
    %c0_270 = arith.constant 0 : index
    %530 = vector.load %arg12[%c30_268, %c1_269, %c0_270] : memref<34x40x64xf32, #tpu.memory_space<vmem>>, vector<4x32x64xf32>
    %531 = vector.shape_cast %43 : vector<64xf32> to vector<1x1x64xf32>
    %532 = vector.broadcast %531 : vector<1x1x64xf32> to vector<4x32x64xf32>
    %533 = arith.mulf %530, %532 : vector<4x32x64xf32>
    %534 = arith.addf %529, %533 : vector<4x32x64xf32>
    %c30_271 = arith.constant 30 : index
    %c2_272 = arith.constant 2 : index
    %c0_273 = arith.constant 0 : index
    %535 = vector.load %arg12[%c30_271, %c2_272, %c0_273] : memref<34x40x64xf32, #tpu.memory_space<vmem>>, vector<4x32x64xf32>
    %536 = vector.shape_cast %45 : vector<64xf32> to vector<1x1x64xf32>
    %537 = vector.broadcast %536 : vector<1x1x64xf32> to vector<4x32x64xf32>
    %538 = arith.mulf %535, %537 : vector<4x32x64xf32>
    %539 = arith.addf %534, %538 : vector<4x32x64xf32>
    %540 = vector.extract_strided_slice %539 {offsets = [0, 0, 0], sizes = [4, 32, 32], strides = [1, 1, 1]} : vector<4x32x64xf32> to vector<4x32x32xf32>
    %541 = vector.extract_strided_slice %539 {offsets = [0, 0, 32], sizes = [4, 32, 32], strides = [1, 1, 1]} : vector<4x32x64xf32> to vector<4x32x32xf32>
    %cst_274 = arith.constant 5.000000e-01 : f32
    %542 = vector.broadcast %cst_274 : f32 to vector<4x32x32xf32>
    %543 = arith.mulf %542, %540 : vector<4x32x32xf32>
    %cst_275 = arith.constant 0.707106769 : f32
    %544 = vector.broadcast %cst_275 : f32 to vector<4x32x32xf32>
    %545 = arith.mulf %540, %544 : vector<4x32x32xf32>
    %546 = math.erf %545 : vector<4x32x32xf32>
    %cst_276 = arith.constant 1.000000e+00 : f32
    %547 = vector.broadcast %cst_276 : f32 to vector<4x32x32xf32>
    %548 = arith.addf %547, %546 : vector<4x32x32xf32>
    %549 = arith.mulf %543, %548 : vector<4x32x32xf32>
    %550 = arith.mulf %549, %541 : vector<4x32x32xf32>
    %551 = vector.shape_cast %550 : vector<4x32x32xf32> to vector<128x32xf32>
    %cst_277 = arith.constant dense<0.000000e+00> : vector<16x128xf32>
    %552 = tpu.matmul %46, %551, %cst_277 {dimension_numbers = #tpu.dot_dimension_numbers<[1], [1], [0], [0], [0, 0, 1, 0], [], []>} : vector<16x32xf32>, vector<128x32xf32>, vector<16x128xf32> -> vector<16x128xf32>
    %553 = vector.broadcast %47 : vector<16x1xf32> to vector<16x128xf32>
    %554 = arith.addf %552, %553 : vector<16x128xf32>
    %c0_278 = arith.constant 0 : index
    %c0_279 = arith.constant 0 : index
    %c896 = arith.constant 896 : index
    %555 = vector.load %arg11[%c0_278, %c0_279, %c896] : memref<1x16x1024xf32, #tpu.memory_space<vmem>>, vector<1x16x128xf32>
    %556 = vector.shape_cast %555 : vector<1x16x128xf32> to vector<16x128xf32>
    %557 = vector.shape_cast %554 : vector<16x128xf32> to vector<1x16x128xf32>
    tpu.vector_store %arg11[%c0_278, %c0_279, %c896], %557 {strides = array<i32>} : memref<1x16x1024xf32, #tpu.memory_space<vmem>>, vector<1x16x128xf32>,
    return
  }
  func.func @transform_0(%arg0: i32, %arg1: i32) -> (i32, i32, i32, i32) {
    %c32_i32 = arith.constant 32 : i32
    %0 = arith.muli %arg1, %c32_i32 : i32
    %c1_i32 = arith.constant 1 : i32
    %1 = arith.subi %0, %c1_i32 : i32
    %c0_i32 = arith.constant 0 : i32
    %2 = arith.maxsi %1, %c0_i32 : i32
    %c0_i32_0 = arith.constant 0 : i32
    %c0_i32_1 = arith.constant 0 : i32
    %c0_i32_2 = arith.constant 0 : i32
    return %arg0, %2, %c0_i32_0, %c0_i32_1 : i32, i32, i32, i32
  }
  func.func @transform_1(%arg0: i32, %arg1: i32) -> (i32, i32, i32, i32) {
    %c0_i32 = arith.constant 0 : i32
    %c0_i32_0 = arith.constant 0 : i32
    %c0_i32_1 = arith.constant 0 : i32
    return %arg0, %arg1, %c0_i32, %c0_i32_0 : i32, i32, i32, i32
  }
  func.func @transform_2(%arg0: i32, %arg1: i32) -> (i32, i32, i32, i32) {
    %c32_i32 = arith.constant 32 : i32
    %0 = arith.muli %arg1, %c32_i32 : i32
    %c32_i32_0 = arith.constant 32 : i32
    %1 = arith.addi %0, %c32_i32_0 : i32
    %c31_i32 = arith.constant 31 : i32
    %2 = arith.minsi %1, %c31_i32 : i32
    %c0_i32 = arith.constant 0 : i32
    %c0_i32_1 = arith.constant 0 : i32
    %c0_i32_2 = arith.constant 0 : i32
    return %arg0, %2, %c0_i32, %c0_i32_1 : i32, i32, i32, i32
  }
  func.func @transform_3(%arg0: i32, %arg1: i32) -> (i32, i32) {
    %c0_i32 = arith.constant 0 : i32
    %c0_i32_0 = arith.constant 0 : i32
    %c0_i32_1 = arith.constant 0 : i32
    return %c0_i32, %c0_i32_0 : i32, i32
  }
  func.func @transform_4(%arg0: i32, %arg1: i32) -> (i32, i32) {
    %c0_i32 = arith.constant 0 : i32
    %c0_i32_0 = arith.constant 0 : i32
    %c0_i32_1 = arith.constant 0 : i32
    return %c0_i32, %c0_i32_0 : i32, i32
  }
  func.func @transform_5(%arg0: i32, %arg1: i32) -> (i32, i32, i32) {
    %c0_i32 = arith.constant 0 : i32
    %c0_i32_0 = arith.constant 0 : i32
    %c0_i32_1 = arith.constant 0 : i32
    %c0_i32_2 = arith.constant 0 : i32
    return %c0_i32, %c0_i32_0, %c0_i32_1 : i32, i32, i32
  }
  func.func @transform_6(%arg0: i32, %arg1: i32) -> (i32, i32) {
    %c0_i32 = arith.constant 0 : i32
    %c0_i32_0 = arith.constant 0 : i32
    %c0_i32_1 = arith.constant 0 : i32
    return %c0_i32, %c0_i32_0 : i32, i32
  }
  func.func @transform_7(%arg0: i32, %arg1: i32) -> (i32, i32) {
    %c0_i32 = arith.constant 0 : i32
    %c0_i32_0 = arith.constant 0 : i32
    %c0_i32_1 = arith.constant 0 : i32
    return %c0_i32, %c0_i32_0 : i32, i32
  }
  func.func @transform_8(%arg0: i32, %arg1: i32) -> (i32, i32) {
    %c0_i32 = arith.constant 0 : i32
    %c0_i32_0 = arith.constant 0 : i32
    %c0_i32_1 = arith.constant 0 : i32
    return %c0_i32, %c0_i32_0 : i32, i32
  }
  func.func @transform_9(%arg0: i32, %arg1: i32) -> (i32, i32, i32) {
    %c0_i32 = arith.constant 0 : i32
    %c0_i32_0 = arith.constant 0 : i32
    return %arg0, %c0_i32, %arg1 : i32, i32, i32
  }
}

</mosaic_0001>

<llo_original>
// kernel: feed_forward.1
$region0: #{feed_forward.1}
  #allocation0 [shape = 'u32[]', space=smem, size = 0x4, offset = 0x4, fixed_abs, tag = 'smem constant byte address 0x4 - core index']
  #allocation1 [shape = 'u32[144,128]{1,0:T(1,128)}', space=vmem, size = 0x12000, scoped, tag = 'internal scratch']
  #allocation2 [shape = 'f32[34,40,64]{2,1,0:T(8,128)}', space=vmem, size = 0xaa000, scoped, tag = 'scratch operand']
  %s0 = inlined_call_operand.vmem [shape: f32[2,32,32,16], index: 0, kind: input, shape index: {}, may-alias: {0,1,2}]
  %s1 = inlined_call_operand.vmem [shape: f32[2,32,32,16], index: 1, kind: input, shape index: {}, may-alias: {0,1,2}]
  %s2 = inlined_call_operand.vmem [shape: f32[2,32,32,16], index: 2, kind: input, shape index: {}, may-alias: {0,1,2}]
  %s3 = inlined_call_operand.vmem [shape: f32[64,16], index: 3, kind: input, shape index: {}]
  %s4 = inlined_call_operand.vmem [shape: f32[1,64], index: 4, kind: input, shape index: {}]
  %s5 = inlined_call_operand.vmem [shape: f32[3,3,64], index: 5, kind: input, shape index: {}]
  %s6 = inlined_call_operand.vmem [shape: f32[1,64], index: 6, kind: input, shape index: {}]
  %s7 = inlined_call_operand.vmem [shape: f32[16,32], index: 7, kind: input, shape index: {}]
  %s8 = inlined_call_operand.vmem [shape: f32[16,1], index: 8, kind: input, shape index: {}]
  %s9 = inlined_call_operand.vmem [shape: f32[2,16,1024], index: 9, kind: output, shape index: {}]
  %s10 = sld [smem:[#allocation0]]
  $region73: #{feed_forward.1} parent=0
    _
  %s12 = ssub.s32 1, %s10
  %s13 = scalar_select 0, %s12, %s10
  loop: start=0, step=1, limit=4
  $region2: #{feed_forward.1} parent=0 // loop_pre_header
    _
  $region3: #{feed_forward.1} parent=0 // loop_header
    %s15 = sphi 0, %s19
    %p16 = scmp.ge.s32.totalorder %s15, 4
    %s22 = sphi 0, %s34
    %s23 = sphi 0, %s30
    %s24 = sphi 0, %s22
    %s25 = sphi 0, %s23
    %s26 = sphi 0, %s24
    %s27 = sphi 0, %s25
    %s47 = sphi 0, %s49
    %s50 = sphi 0, %s47
    %s51 = sphi 0, %s50
    %s67 = sphi 0, %s51
    %s75 = sphi 0, %s77
    %s78 = sphi 0, %s75
    %s79 = sphi 0, %s78
    %s95 = sphi 0, %s79
    %s111 = sphi 0, %s113
    %s114 = sphi 0, %s111
    %s115 = sphi 0, %s114
    %s131 = sphi 0, %s115
    %s135 = sphi 0, %s135
    %s137 = sphi 0, %s135
    %s138 = sphi 0, %s137
    %s152 = sphi 0, %s138
    %s156 = sphi 0, %s156
    %s158 = sphi 0, %s156
    %s159 = sphi 0, %s158
    %s173 = sphi 0, %s159
    %s177 = sphi 0, %s177
    %s179 = sphi 0, %s177
    %s180 = sphi 0, %s179
    %s194 = sphi 0, %s180
    %s198 = sphi 0, %s198
    %s200 = sphi 0, %s198
    %s201 = sphi 0, %s200
    %s215 = sphi 0, %s201
    %s219 = sphi 0, %s219
    %s221 = sphi 0, %s219
    %s222 = sphi 0, %s221
    %s236 = sphi 0, %s222
    %s240 = sphi 0, %s240
    %s242 = sphi 0, %s240
    %s243 = sphi 0, %s242
    %s257 = sphi 0, %s243
    %s265 = sphi 0, %s267
    %s268 = sphi 0, %s265
    %s269 = sphi 0, %s268
    %s285 = sphi 0, %s269
  $region4: #{feed_forward.1} parent=0 // loop_header_branch
    %18 = sbr.rel (%p16) target = $region8
  $region5: #{feed_forward.1} parent=0 // loop_body
    %s20 = ssub.s32 %s15, 1
    %s21 = ssub.s32 %s15, 2
    %s28 = sadd.s32 1, %s23
    %p29 = scmp.ge.s32.totalorder %s28, 1
    %s30 = scalar_select %p29, 0, %s28
    %s31 = sadd.s32 1, %s22
    %s32 = scalar_select %p29, %s31, %s22
    %p33 = scmp.ge.s32.totalorder %s32, 2
    %s34 = scalar_select %p33, 0, %s32
    %s35 = smul.u32 %s23, 32
    %s36 = ssub.s32 %s35, 1
    %p37 = scmp.gt.s32.totalorder %s36, 0
    %s38 = scalar_select %p37, %s36, 0
    %s39 = smul.u32 %s30, 32
    %s40 = ssub.s32 %s39, 1
    %p41 = scmp.gt.s32.totalorder %s40, 0
    %s42 = scalar_select %p41, %s40, 0
    %s43 = ssub.s32 %s22, %s34
    %s44 = ssub.s32 %s38, %s42
    %s45 = sor.u32 %s43, %s44
    %p46 = scmp.eq.s32.totalorder %s45, 0
    %s48 = sadd.s32 %s47, 1
    %s49 = scalar_select %p46, %s47, %s48
    %p52 = pneg %p46
    %p53 = scmp.eq.s32.totalorder %s15, 1
    %p54 = por %p52, %p53
    %p55 = scmp.ne.s32.totalorder %s47, %s50
    %p56 = scmp.eq.s32.totalorder %s15, 0
    %p57 = por %p55, %p56
    %p58 = scmp.ne.s32.totalorder %s47, %s50
    %p59 = scmp.eq.s32.totalorder %s20, 1
    %p60 = por %p58, %p59
    %p61 = scmp.ne.s32.totalorder %s50, %s51
    %p62 = scmp.eq.s32.totalorder %s20, 0
    %p63 = por %p61, %p62
    %p64 = scmp.ne.s32.totalorder %s50, %s51
    %p65 = scmp.eq.s32.totalorder %s21, 1
    %p66 = por %p64, %p65
    %p68 = scmp.ne.s32.totalorder %s51, %s67
    %p69 = scmp.eq.s32.totalorder %s21, 0
    %p70 = por %p68, %p69
    %s71 = ssub.s32 %s22, %s34
    %s72 = ssub.s32 %s23, %s30
    %s73 = sor.u32 %s71, %s72
    %p74 = scmp.eq.s32.totalorder %s73, 0
    %s76 = sadd.s32 %s75, 1
    %s77 = scalar_select %p74, %s75, %s76
    %p80 = pneg %p74
    %p81 = scmp.eq.s32.totalorder %s15, 1
    %p82 = por %p80, %p81
    %p83 = scmp.ne.s32.totalorder %s75, %s78
    %p84 = scmp.eq.s32.totalorder %s15, 0
    %p85 = por %p83, %p84
    %p86 = scmp.ne.s32.totalorder %s75, %s78
    %p87 = scmp.eq.s32.totalorder %s20, 1
    %p88 = por %p86, %p87
    %p89 = scmp.ne.s32.totalorder %s78, %s79
    %p90 = scmp.eq.s32.totalorder %s20, 0
    %p91 = por %p89, %p90
    %p92 = scmp.ne.s32.totalorder %s78, %s79
    %p93 = scmp.eq.s32.totalorder %s21, 1
    %p94 = por %p92, %p93
    %p96 = scmp.ne.s32.totalorder %s79, %s95
    %p97 = scmp.eq.s32.totalorder %s21, 0
    %p98 = por %p96, %p97
    %s99 = smul.u32 %s23, 32
    %s100 = sadd.s32 %s99, 32
    %p101 = scmp.lt.s32.totalorder %s100, 31
    %s102 = scalar_select %p101, %s100, 31
    %s103 = smul.u32 %s30, 32
    %s104 = sadd.s32 %s103, 32
    %p105 = scmp.lt.s32.totalorder %s104, 31
    %s106 = scalar_select %p105, %s104, 31
    %s107 = ssub.s32 %s22, %s34
    %s108 = ssub.s32 %s102, %s106
    %s109 = sor.u32 %s107, %s108
    %p110 = scmp.eq.s32.totalorder %s109, 0
    %s112 = sadd.s32 %s111, 1
    %s113 = scalar_select %p110, %s111, %s112
    %p116 = pneg %p110
    %p117 = scmp.eq.s32.totalorder %s15, 1
    %p118 = por %p116, %p117
    %p119 = scmp.ne.s32.totalorder %s111, %s114
    %p120 = scmp.eq.s32.totalorder %s15, 0
    %p121 = por %p119, %p120
    %p122 = scmp.ne.s32.totalorder %s111, %s114
    %p123 = scmp.eq.s32.totalorder %s20, 1
    %p124 = por %p122, %p123
    %p125 = scmp.ne.s32.totalorder %s114, %s115
    %p126 = scmp.eq.s32.totalorder %s20, 0
    %p127 = por %p125, %p126
    %p128 = scmp.ne.s32.totalorder %s114, %s115
    %p129 = scmp.eq.s32.totalorder %s21, 1
    %p130 = por %p128, %p129
    %p132 = scmp.ne.s32.totalorder %s115, %s131
    %p133 = scmp.eq.s32.totalorder %s21, 0
    %p134 = por %p132, %p133
    %s136 = sadd.s32 %s135, 1
    %p139 = scmp.eq.s32.totalorder %s15, 1
    %p140 = scmp.ne.s32.totalorder %s135, %s137
    %p141 = scmp.eq.s32.totalorder %s15, 0
    %p142 = por %p140, %p141
    %p143 = scmp.ne.s32.totalorder %s135, %s137
    %p144 = scmp.eq.s32.totalorder %s20, 1
    %p145 = por %p143, %p144
    %p146 = scmp.ne.s32.totalorder %s137, %s138
    %p147 = scmp.eq.s32.totalorder %s20, 0
    %p148 = por %p146, %p147
    %p149 = scmp.ne.s32.totalorder %s137, %s138
    %p150 = scmp.eq.s32.totalorder %s21, 1
    %p151 = por %p149, %p150
    %p153 = scmp.ne.s32.totalorder %s138, %s152
    %p154 = scmp.eq.s32.totalorder %s21, 0
    %p155 = por %p153, %p154
    %s157 = sadd.s32 %s156, 1
    %p160 = scmp.eq.s32.totalorder %s15, 1
    %p161 = scmp.ne.s32.totalorder %s156, %s158
    %p162 = scmp.eq.s32.totalorder %s15, 0
    %p163 = por %p161, %p162
    %p164 = scmp.ne.s32.totalorder %s156, %s158
    %p165 = scmp.eq.s32.totalorder %s20, 1
    %p166 = por %p164, %p165
    %p167 = scmp.ne.s32.totalorder %s158, %s159
    %p168 = scmp.eq.s32.totalorder %s20, 0
    %p169 = por %p167, %p168
    %p170 = scmp.ne.s32.totalorder %s158, %s159
    %p171 = scmp.eq.s32.totalorder %s21, 1
    %p172 = por %p170, %p171
    %p174 = scmp.ne.s32.totalorder %s159, %s173
    %p175 = scmp.eq.s32.totalorder %s21, 0
    %p176 = por %p174, %p175
    %s178 = sadd.s32 %s177, 1
    %p181 = scmp.eq.s32.totalorder %s15, 1
    %p182 = scmp.ne.s32.totalorder %s177, %s179
    %p183 = scmp.eq.s32.totalorder %s15, 0
    %p184 = por %p182, %p183
    %p185 = scmp.ne.s32.totalorder %s177, %s179
    %p186 = scmp.eq.s32.totalorder %s20, 1
    %p187 = por %p185, %p186
    %p188 = scmp.ne.s32.totalorder %s179, %s180
    %p189 = scmp.eq.s32.totalorder %s20, 0
    %p190 = por %p188, %p189
    %p191 = scmp.ne.s32.totalorder %s179, %s180
    %p192 = scmp.eq.s32.totalorder %s21, 1
    %p193 = por %p191, %p192
    %p195 = scmp.ne.s32.totalorder %s180, %s194
    %p196 = scmp.eq.s32.totalorder %s21, 0
    %p197 = por %p195, %p196
    %s199 = sadd.s32 %s198, 1
    %p202 = scmp.eq.s32.totalorder %s15, 1
    %p203 = scmp.ne.s32.totalorder %s198, %s200
    %p204 = scmp.eq.s32.totalorder %s15, 0
    %p205 = por %p203, %p204
    %p206 = scmp.ne.s32.totalorder %s198, %s200
    %p207 = scmp.eq.s32.totalorder %s20, 1
    %p208 = por %p206, %p207
    %p209 = scmp.ne.s32.totalorder %s200, %s201
    %p210 = scmp.eq.s32.totalorder %s20, 0
    %p211 = por %p209, %p210
    %p212 = scmp.ne.s32.totalorder %s200, %s201
    %p213 = scmp.eq.s32.totalorder %s21, 1
    %p214 = por %p212, %p213
    %p216 = scmp.ne.s32.totalorder %s201, %s215
    %p217 = scmp.eq.s32.totalorder %s21, 0
    %p218 = por %p216, %p217
    %s220 = sadd.s32 %s219, 1
    %p223 = scmp.eq.s32.totalorder %s15, 1
    %p224 = scmp.ne.s32.totalorder %s219, %s221
    %p225 = scmp.eq.s32.totalorder %s15, 0
    %p226 = por %p224, %p225
    %p227 = scmp.ne.s32.totalorder %s219, %s221
    %p228 = scmp.eq.s32.totalorder %s20, 1
    %p229 = por %p227, %p228
    %p230 = scmp.ne.s32.totalorder %s221, %s222
    %p231 = scmp.eq.s32.totalorder %s20, 0
    %p232 = por %p230, %p231
    %p233 = scmp.ne.s32.totalorder %s221, %s222
    %p234 = scmp.eq.s32.totalorder %s21, 1
    %p235 = por %p233, %p234
    %p237 = scmp.ne.s32.totalorder %s222, %s236
    %p238 = scmp.eq.s32.totalorder %s21, 0
    %p239 = por %p237, %p238
    %s241 = sadd.s32 %s240, 1
    %p244 = scmp.eq.s32.totalorder %s15, 1
    %p245 = scmp.ne.s32.totalorder %s240, %s242
    %p246 = scmp.eq.s32.totalorder %s15, 0
    %p247 = por %p245, %p246
    %p248 = scmp.ne.s32.totalorder %s240, %s242
    %p249 = scmp.eq.s32.totalorder %s20, 1
    %p250 = por %p248, %p249
    %p251 = scmp.ne.s32.totalorder %s242, %s243
    %p252 = scmp.eq.s32.totalorder %s20, 0
    %p253 = por %p251, %p252
    %p254 = scmp.ne.s32.totalorder %s242, %s243
    %p255 = scmp.eq.s32.totalorder %s21, 1
    %p256 = por %p254, %p255
    %p258 = scmp.ne.s32.totalorder %s243, %s257
    %p259 = scmp.eq.s32.totalorder %s21, 0
    %p260 = por %p258, %p259
    %s261 = ssub.s32 %s22, %s34
    %s262 = ssub.s32 %s23, %s30
    %s263 = sor.u32 %s261, %s262
    %p264 = scmp.eq.s32.totalorder %s263, 0
    %s266 = sadd.s32 %s265, 1
    %s267 = scalar_select %p264, %s265, %s266
    %p270 = pneg %p264
    %p271 = scmp.eq.s32.totalorder %s15, 1
    %p272 = por %p270, %p271
    %p273 = scmp.ne.s32.totalorder %s265, %s268
    %p274 = scmp.eq.s32.totalorder %s15, 0
    %p275 = por %p273, %p274
    %p276 = scmp.ne.s32.totalorder %s265, %s268
    %p277 = scmp.eq.s32.totalorder %s20, 1
    %p278 = por %p276, %p277
    %p279 = scmp.ne.s32.totalorder %s268, %s269
    %p280 = scmp.eq.s32.totalorder %s20, 0
    %p281 = por %p279, %p280
    %p282 = scmp.ne.s32.totalorder %s268, %s269
    %p283 = scmp.eq.s32.totalorder %s21, 1
    %p284 = por %p282, %p283
    %p286 = scmp.ne.s32.totalorder %s269, %s285
    %p287 = scmp.eq.s32.totalorder %s21, 0
    %p288 = por %p286, %p287
    %p289 = scmp.le.s32.totalorder 1, %s15
    %p290 = scmp.lt.s32.totalorder %s15, 3
    %p291 = pnand %p289, %p290
    %p292 = pneg %p291
    // Predicated region
    $region9: #{feed_forward.1} parent=5 // pred_check
      _
    $region10: #{feed_forward.1} parent=5 // pred_check_branch
      %294 = sbr.rel (%p291) target = $region12
    $region11: #{feed_forward.1} parent=5 // pred_region
      %s295 = ssub.s32 %s15, 1
      // Predicated region
      $region13: #{feed_forward.1} parent=11 // pred_check
        %p296 = pneg %p148
      $region14: #{feed_forward.1} parent=11 // pred_check_branch
        %298 = sbr.rel (%p296) target = $region16
      $region15: #{feed_forward.1} parent=11 // pred_region
        _
      $region16: #{feed_forward.1} parent=11 // pred_fallthru
        _
      // Predicated region
      $region17: #{feed_forward.1} parent=11 // pred_check
        %p299 = pneg %p169
      $region18: #{feed_forward.1} parent=11 // pred_check_branch
        %301 = sbr.rel (%p299) target = $region20
      $region19: #{feed_forward.1} parent=11 // pred_region
        _
      $region20: #{feed_forward.1} parent=11 // pred_fallthru
        _
      // Predicated region
      $region21: #{feed_forward.1} parent=11 // pred_check
        %p302 = pneg %p190
      $region22: #{feed_forward.1} parent=11 // pred_check_branch
        %304 = sbr.rel (%p302) target = $region24
      $region23: #{feed_forward.1} parent=11 // pred_region
        _
      $region24: #{feed_forward.1} parent=11 // pred_fallthru
        _
      // Predicated region
      $region25: #{feed_forward.1} parent=11 // pred_check
        %p305 = pneg %p211
      $region26: #{feed_forward.1} parent=11 // pred_check_branch
        %307 = sbr.rel (%p305) target = $region28
      $region27: #{feed_forward.1} parent=11 // pred_region
        _
      $region28: #{feed_forward.1} parent=11 // pred_fallthru
        _
      // Predicated region
      $region29: #{feed_forward.1} parent=11 // pred_check
        %p308 = pneg %p232
      $region30: #{feed_forward.1} parent=11 // pred_check_branch
        %310 = sbr.rel (%p308) target = $region32
      $region31: #{feed_forward.1} parent=11 // pred_region
        _
      $region32: #{feed_forward.1} parent=11 // pred_fallthru
        _
      // Predicated region
      $region33: #{feed_forward.1} parent=11 // pred_check
        %p311 = pneg %p253
      $region34: #{feed_forward.1} parent=11 // pred_check_branch
        %313 = sbr.rel (%p311) target = $region36
      $region35: #{feed_forward.1} parent=11 // pred_region
        _
      $region36: #{feed_forward.1} parent=11 // pred_fallthru
        _
    $region12: #{feed_forward.1} parent=5 // pred_fallthru
      _
    %p314 = scmp.lt.s32.totalorder %s15, 2
    // Predicated region
    $region37: #{feed_forward.1} parent=5 // pred_check
      %p315 = pneg %p314
    $region38: #{feed_forward.1} parent=5 // pred_check_branch
      %317 = sbr.rel (%p315) target = $region40
    $region39: #{feed_forward.1} parent=5 // pred_region
      // Predicated region
      $region41: #{feed_forward.1} parent=39 // pred_check
        %p318 = pneg %p57
      $region42: #{feed_forward.1} parent=39 // pred_check_branch
        %320 = sbr.rel (%p318) target = $region44
      $region43: #{feed_forward.1} parent=39 // pred_region
        %s321 = smul.u32 %s23, 32
        %s322 = ssub.s32 %s321, 1
        %p323 = scmp.gt.s32.totalorder %s322, 0
        %s324 = scalar_select %p323, %s322, 0
        %p325 = scmp.lt.s32.totalorder %s22, 1
        %s326 = scalar_select %p325, %s22, 1
        %p327 = scmp.lt.s32.totalorder %s324, 31
        %s328 = scalar_select %p327, %s324, 31
        %s329 = smul.addr %s328, 4
        %s330 = smul.addr %s326, 128
        %s331 = sadd.s32 %s329, %s330
        %s332 = smul.addr %s331, 8
        %s333 = scalar_lea.vmem %s0, %s332
        %s334 = smul.u32 %s23, 32
        %s335 = ssub.s32 %s334, 1
        %p336 = scmp.gt.s32.totalorder %s335, 0
        %s337 = scalar_select %p336, %s335, 0
      $region44: #{feed_forward.1} parent=39 // pred_fallthru
        _
      // Predicated region
      $region45: #{feed_forward.1} parent=39 // pred_check
        %p338 = pneg %p85
      $region46: #{feed_forward.1} parent=39 // pred_check_branch
        %340 = sbr.rel (%p338) target = $region48
      $region47: #{feed_forward.1} parent=39 // pred_region
        %s341 = smul.u32 32, %s23
        %p342 = scmp.lt.s32.totalorder %s22, 1
        %s343 = scalar_select %p342, %s22, 1
        %p344 = scmp.lt.s32.totalorder %s341, 31
        %s345 = scalar_select %p344, %s341, 31
        %s346 = smul.addr %s345, 4
        %s347 = smul.addr %s343, 128
        %s348 = sadd.s32 %s346, %s347
        %s349 = smul.addr %s348, 8
        %s350 = scalar_lea.vmem %s1, %s349
        %s351 = smul.u32 32, %s23
      $region48: #{feed_forward.1} parent=39 // pred_fallthru
        _
      // Predicated region
      $region49: #{feed_forward.1} parent=39 // pred_check
        %p352 = pneg %p121
      $region50: #{feed_forward.1} parent=39 // pred_check_branch
        %354 = sbr.rel (%p352) target = $region52
      $region51: #{feed_forward.1} parent=39 // pred_region
        %s355 = smul.u32 %s23, 32
        %s356 = sadd.s32 %s355, 32
        %p357 = scmp.lt.s32.totalorder %s356, 31
        %s358 = scalar_select %p357, %s356, 31
        %p359 = scmp.lt.s32.totalorder %s22, 1
        %s360 = scalar_select %p359, %s22, 1
        %p361 = scmp.lt.s32.totalorder %s358, 31
        %s362 = scalar_select %p361, %s358, 31
        %s363 = smul.addr %s362, 4
        %s364 = smul.addr %s360, 128
        %s365 = sadd.s32 %s363, %s364
        %s366 = smul.addr %s365, 8
        %s367 = scalar_lea.vmem %s2, %s366
        %s368 = smul.u32 %s23, 32
        %s369 = sadd.s32 %s368, 32
        %p370 = scmp.lt.s32.totalorder %s369, 31
        %s371 = scalar_select %p370, %s369, 31
      $region52: #{feed_forward.1} parent=39 // pred_fallthru
        _
    $region40: #{feed_forward.1} parent=5 // pred_fallthru
      _
    %p372 = scmp.le.s32.totalorder 1, %s15
    %p373 = scmp.lt.s32.totalorder %s15, 3
    %p374 = pnand %p372, %p373
    %p375 = pneg %p374
    // Predicated region
    $region53: #{feed_forward.1} parent=5 // pred_check
      _
    $region54: #{feed_forward.1} parent=5 // pred_check_branch
      %377 = sbr.rel (%p374) target = $region56
    $region55: #{feed_forward.1} parent=5 // pred_region
      %s378 = ssub.s32 %s15, 1
      %s379 = smul.u32 %s25, 32
      %s380 = ssub.s32 %s379, 1
      %p381 = scmp.gt.s32.totalorder %s380, 0
      %s382 = scalar_select %p381, %s380, 0
      %p383 = scmp.lt.s32.totalorder %s24, 1
      %s384 = scalar_select %p383, %s24, 1
      %p385 = scmp.lt.s32.totalorder %s382, 31
      %s386 = scalar_select %p385, %s382, 31
      %s387 = smul.addr %s386, 4
      %s388 = smul.addr %s384, 128
      %s389 = sadd.s32 %s387, %s388
      %s390 = smul.addr %s389, 8
      %s391 = scalar_lea.vmem %s0, %s390
      %p392 = pneg %p63
      %p393 = pneg %p60
      %s394 = smul.u32 32, %s25
      %p395 = scmp.lt.s32.totalorder %s24, 1
      %s396 = scalar_select %p395, %s24, 1
      %p397 = scmp.lt.s32.totalorder %s394, 31
      %s398 = scalar_select %p397, %s394, 31
      %s399 = smul.addr %s398, 4
      %s400 = smul.addr %s396, 128
      %s401 = sadd.s32 %s399, %s400
      %s402 = smul.addr %s401, 8
      %s403 = scalar_lea.vmem %s1, %s402
      %p404 = pneg %p91
      %p405 = pneg %p88
      %s406 = smul.u32 %s25, 32
      %s407 = sadd.s32 %s406, 32
      %p408 = scmp.lt.s32.totalorder %s407, 31
      %s409 = scalar_select %p408, %s407, 31
      %p410 = scmp.lt.s32.totalorder %s24, 1
      %s411 = scalar_select %p410, %s24, 1
      %p412 = scmp.lt.s32.totalorder %s409, 31
      %s413 = scalar_select %p412, %s409, 31
      %s414 = smul.addr %s413, 4
      %s415 = smul.addr %s411, 128
      %s416 = sadd.s32 %s414, %s415
      %s417 = smul.addr %s416, 8
      %s418 = scalar_lea.vmem %s2, %s417
      %p419 = pneg %p127
      %p420 = pneg %p124
      %p421 = pneg %p148
      %p422 = pneg %p145
      %p423 = pneg %p169
      %p424 = pneg %p166
      %p425 = pneg %p190
      %p426 = pneg %p187
      %p427 = pneg %p211
      %p428 = pneg %p208
      %p429 = pneg %p232
      %p430 = pneg %p229
      %p431 = pneg %p253
      %p432 = pneg %p250
      %p433 = pneg %p281
      %p434 = pneg %p278
      %s435 = smul.u32 8, %s25
      %p436 = scmp.lt.s32.totalorder %s24, 1
      %s437 = scalar_select %p436, %s24, 1
      %p438 = scmp.lt.s32.totalorder %s435, 7
      %s439 = scalar_select %p438, %s435, 7
      %s440 = smul.addr %s437, 16
      %s441 = sadd.s32 %s439, %s440
      %s442 = smul.addr %s441, 8
      %s443 = scalar_lea.vmem %s9, %s442
      %s444 = smul.u32 %s25, 32
      %s445 = ssub.s32 %s444, 1
      %p446 = scmp.gt.s32.totalorder %s445, 0
      %s447 = scalar_select %p446, %s445, 0
      %p448 = scmp.lt.s32.totalorder %s24, 1
      %s449 = scalar_select %p448, %s24, 1
      %p450 = scmp.lt.s32.totalorder %s447, 31
      %s451 = scalar_select %p450, %s447, 31
      %s452 = smul.addr %s451, 4
      %s453 = smul.addr %s449, 128
      %s454 = sadd.s32 %s452, %s453
      %s455 = smul.addr %s454, 8
      %s456 = scalar_lea.vmem %s0, %s455
      %s457 = smul.u32 %s25, 32
      %s458 = ssub.s32 %s457, 1
      %p459 = scmp.gt.s32.totalorder %s458, 0
      %s460 = scalar_select %p459, %s458, 0
      %s461 = smul.u32 32, %s25
      %p462 = scmp.lt.s32.totalorder %s24, 1
      %s463 = scalar_select %p462, %s24, 1
      %p464 = scmp.lt.s32.totalorder %s461, 31
      %s465 = scalar_select %p464, %s461, 31
      %s466 = smul.addr %s465, 4
      %s467 = smul.addr %s463, 128
      %s468 = sadd.s32 %s466, %s467
      %s469 = smul.addr %s468, 8
      %s470 = scalar_lea.vmem %s1, %s469
      %s471 = smul.u32 32, %s25
      %s472 = smul.u32 %s25, 32
      %s473 = sadd.s32 %s472, 32
      %p474 = scmp.lt.s32.totalorder %s473, 31
      %s475 = scalar_select %p474, %s473, 31
      %p476 = scmp.lt.s32.totalorder %s24, 1
      %s477 = scalar_select %p476, %s24, 1
      %p478 = scmp.lt.s32.totalorder %s475, 31
      %s479 = scalar_select %p478, %s475, 31
      %s480 = smul.addr %s479, 4
      %s481 = smul.addr %s477, 128
      %s482 = sadd.s32 %s480, %s481
      %s483 = smul.addr %s482, 8
      %s484 = scalar_lea.vmem %s2, %s483
      %s485 = smul.u32 %s25, 32
      %s486 = sadd.s32 %s485, 32
      %p487 = scmp.lt.s32.totalorder %s486, 31
      %s488 = scalar_select %p487, %s486, 31
      %s489 = smul.u32 8, %s25
      %p490 = scmp.lt.s32.totalorder %s24, 1
      %s491 = scalar_select %p490, %s24, 1
      %p492 = scmp.lt.s32.totalorder %s489, 7
      %s493 = scalar_select %p492, %s489, 7
      %s494 = smul.addr %s491, 16
      %s495 = sadd.s32 %s493, %s494
      %s496 = smul.addr %s495, 8
      %s497 = scalar_lea.vmem %s9, %s496
      %s498 = smul.u32 8, %s25
      %v499 = vld [vmem:[%s456] sm:$0xff]
      %v500 = vld [vmem:[%s456 + $0x8] sm:$0xff]
      %v501 = vld [vmem:[%s456 + $0x10] sm:$0xff]
      %v502 = vld [vmem:[%s456 + $0x18] sm:$0xff]
      %v503 = vld [vmem:[%s470] sm:$0xff]
      %v504 = vld [vmem:[%s470 + $0x8] sm:$0xff]
      %v505 = vld [vmem:[%s470 + $0x10] sm:$0xff]
      %v506 = vld [vmem:[%s470 + $0x18] sm:$0xff]
      %v507 = vld [vmem:[%s470 + $0x20] sm:$0xff]
      %v508 = vld [vmem:[%s470 + $0x28] sm:$0xff]
      %v509 = vld [vmem:[%s470 + $0x30] sm:$0xff]
      %v510 = vld [vmem:[%s470 + $0x38] sm:$0xff]
      %v511 = vld [vmem:[%s470 + $0x40] sm:$0xff]
      %v512 = vld [vmem:[%s470 + $0x48] sm:$0xff]
      %v513 = vld [vmem:[%s470 + $0x50] sm:$0xff]
      %v514 = vld [vmem:[%s470 + $0x58] sm:$0xff]
      %v515 = vld [vmem:[%s470 + $0x60] sm:$0xff]
      %v516 = vld [vmem:[%s470 + $0x68] sm:$0xff]
      %v517 = vld [vmem:[%s470 + $0x70] sm:$0xff]
      %v518 = vld [vmem:[%s470 + $0x78] sm:$0xff]
      %v519 = vld [vmem:[%s470 + $0x80] sm:$0xff]
      %v520 = vld [vmem:[%s470 + $0x88] sm:$0xff]
      %v521 = vld [vmem:[%s470 + $0x90] sm:$0xff]
      %v522 = vld [vmem:[%s470 + $0x98] sm:$0xff]
      %v523 = vld [vmem:[%s470 + $0xa0] sm:$0xff]
      %v524 = vld [vmem:[%s470 + $0xa8] sm:$0xff]
      %v525 = vld [vmem:[%s470 + $0xb0] sm:$0xff]
      %v526 = vld [vmem:[%s470 + $0xb8] sm:$0xff]
      %v527 = vld [vmem:[%s470 + $0xc0] sm:$0xff]
      %v528 = vld [vmem:[%s470 + $0xc8] sm:$0xff]
      %v529 = vld [vmem:[%s470 + $0xd0] sm:$0xff]
      %v530 = vld [vmem:[%s470 + $0xd8] sm:$0xff]
      %v531 = vld [vmem:[%s470 + $0xe0] sm:$0xff]
      %v532 = vld [vmem:[%s470 + $0xe8] sm:$0xff]
      %v533 = vld [vmem:[%s470 + $0xf0] sm:$0xff]
      %v534 = vld [vmem:[%s470 + $0xf8] sm:$0xff]
      %v535 = vld [vmem:[%s470 + $0x100] sm:$0xff]
      %v536 = vld [vmem:[%s470 + $0x108] sm:$0xff]
      %v537 = vld [vmem:[%s470 + $0x110] sm:$0xff]
      %v538 = vld [vmem:[%s470 + $0x118] sm:$0xff]
      %v539 = vld [vmem:[%s470 + $0x120] sm:$0xff]
      %v540 = vld [vmem:[%s470 + $0x128] sm:$0xff]
      %v541 = vld [vmem:[%s470 + $0x130] sm:$0xff]
      %v542 = vld [vmem:[%s470 + $0x138] sm:$0xff]
      %v543 = vld [vmem:[%s470 + $0x140] sm:$0xff]
      %v544 = vld [vmem:[%s470 + $0x148] sm:$0xff]
      %v545 = vld [vmem:[%s470 + $0x150] sm:$0xff]
      %v546 = vld [vmem:[%s470 + $0x158] sm:$0xff]
      %v547 = vld [vmem:[%s470 + $0x160] sm:$0xff]
      %v548 = vld [vmem:[%s470 + $0x168] sm:$0xff]
      %v549 = vld [vmem:[%s470 + $0x170] sm:$0xff]
      %v550 = vld [vmem:[%s470 + $0x178] sm:$0xff]
      %v551 = vld [vmem:[%s470 + $0x180] sm:$0xff]
      %v552 = vld [vmem:[%s470 + $0x188] sm:$0xff]
      %v553 = vld [vmem:[%s470 + $0x190] sm:$0xff]
      %v554 = vld [vmem:[%s470 + $0x198] sm:$0xff]
      %v555 = vld [vmem:[%s470 + $0x1a0] sm:$0xff]
      %v556 = vld [vmem:[%s470 + $0x1a8] sm:$0xff]
      %v557 = vld [vmem:[%s470 + $0x1b0] sm:$0xff]
      %v558 = vld [vmem:[%s470 + $0x1b8] sm:$0xff]
      %v559 = vld [vmem:[%s470 + $0x1c0] sm:$0xff]
      %v560 = vld [vmem:[%s470 + $0x1c8] sm:$0xff]
      %v561 = vld [vmem:[%s470 + $0x1d0] sm:$0xff]
      %v562 = vld [vmem:[%s470 + $0x1d8] sm:$0xff]
      %v563 = vld [vmem:[%s470 + $0x1e0] sm:$0xff]
      %v564 = vld [vmem:[%s470 + $0x1e8] sm:$0xff]
      %v565 = vld [vmem:[%s470 + $0x1f0] sm:$0xff]
      %v566 = vld [vmem:[%s470 + $0x1f8] sm:$0xff]
      %v567 = vld [vmem:[%s470 + $0x200] sm:$0xff]
      %v568 = vld [vmem:[%s470 + $0x208] sm:$0xff]
      %v569 = vld [vmem:[%s470 + $0x210] sm:$0xff]
      %v570 = vld [vmem:[%s470 + $0x218] sm:$0xff]
      %v571 = vld [vmem:[%s470 + $0x220] sm:$0xff]
      %v572 = vld [vmem:[%s470 + $0x228] sm:$0xff]
      %v573 = vld [vmem:[%s470 + $0x230] sm:$0xff]
      %v574 = vld [vmem:[%s470 + $0x238] sm:$0xff]
      %v575 = vld [vmem:[%s470 + $0x240] sm:$0xff]
      %v576 = vld [vmem:[%s470 + $0x248] sm:$0xff]
      %v577 = vld [vmem:[%s470 + $0x250] sm:$0xff]
      %v578 = vld [vmem:[%s470 + $0x258] sm:$0xff]
      %v579 = vld [vmem:[%s470 + $0x260] sm:$0xff]
      %v580 = vld [vmem:[%s470 + $0x268] sm:$0xff]
      %v581 = vld [vmem:[%s470 + $0x270] sm:$0xff]
      %v582 = vld [vmem:[%s470 + $0x278] sm:$0xff]
      %v583 = vld [vmem:[%s470 + $0x280] sm:$0xff]
      %v584 = vld [vmem:[%s470 + $0x288] sm:$0xff]
      %v585 = vld [vmem:[%s470 + $0x290] sm:$0xff]
      %v586 = vld [vmem:[%s470 + $0x298] sm:$0xff]
      %v587 = vld [vmem:[%s470 + $0x2a0] sm:$0xff]
      %v588 = vld [vmem:[%s470 + $0x2a8] sm:$0xff]
      %v589 = vld [vmem:[%s470 + $0x2b0] sm:$0xff]
      %v590 = vld [vmem:[%s470 + $0x2b8] sm:$0xff]
      %v591 = vld [vmem:[%s470 + $0x2c0] sm:$0xff]
      %v592 = vld [vmem:[%s470 + $0x2c8] sm:$0xff]
      %v593 = vld [vmem:[%s470 + $0x2d0] sm:$0xff]
      %v594 = vld [vmem:[%s470 + $0x2d8] sm:$0xff]
      %v595 = vld [vmem:[%s470 + $0x2e0] sm:$0xff]
      %v596 = vld [vmem:[%s470 + $0x2e8] sm:$0xff]
      %v597 = vld [vmem:[%s470 + $0x2f0] sm:$0xff]
      %v598 = vld [vmem:[%s470 + $0x2f8] sm:$0xff]
      %v599 = vld [vmem:[%s470 + $0x300] sm:$0xff]
      %v600 = vld [vmem:[%s470 + $0x308] sm:$0xff]
      %v601 = vld [vmem:[%s470 + $0x310] sm:$0xff]
      %v602 = vld [vmem:[%s470 + $0x318] sm:$0xff]
      %v603 = vld [vmem:[%s470 + $0x320] sm:$0xff]
      %v604 = vld [vmem:[%s470 + $0x328] sm:$0xff]
      %v605 = vld [vmem:[%s470 + $0x330] sm:$0xff]
      %v606 = vld [vmem:[%s470 + $0x338] sm:$0xff]
      %v607 = vld [vmem:[%s470 + $0x340] sm:$0xff]
      %v608 = vld [vmem:[%s470 + $0x348] sm:$0xff]
      %v609 = vld [vmem:[%s470 + $0x350] sm:$0xff]
      %v610 = vld [vmem:[%s470 + $0x358] sm:$0xff]
      %v611 = vld [vmem:[%s470 + $0x360] sm:$0xff]
      %v612 = vld [vmem:[%s470 + $0x368] sm:$0xff]
      %v613 = vld [vmem:[%s470 + $0x370] sm:$0xff]
      %v614 = vld [vmem:[%s470 + $0x378] sm:$0xff]
      %v615 = vld [vmem:[%s470 + $0x380] sm:$0xff]
      %v616 = vld [vmem:[%s470 + $0x388] sm:$0xff]
      %v617 = vld [vmem:[%s470 + $0x390] sm:$0xff]
      %v618 = vld [vmem:[%s470 + $0x398] sm:$0xff]
      %v619 = vld [vmem:[%s470 + $0x3a0] sm:$0xff]
      %v620 = vld [vmem:[%s470 + $0x3a8] sm:$0xff]
      %v621 = vld [vmem:[%s470 + $0x3b0] sm:$0xff]
      %v622 = vld [vmem:[%s470 + $0x3b8] sm:$0xff]
      %v623 = vld [vmem:[%s470 + $0x3c0] sm:$0xff]
      %v624 = vld [vmem:[%s470 + $0x3c8] sm:$0xff]
      %v625 = vld [vmem:[%s470 + $0x3d0] sm:$0xff]
      %v626 = vld [vmem:[%s470 + $0x3d8] sm:$0xff]
      %v627 = vld [vmem:[%s470 + $0x3e0] sm:$0xff]
      %v628 = vld [vmem:[%s470 + $0x3e8] sm:$0xff]
      %v629 = vld [vmem:[%s470 + $0x3f0] sm:$0xff]
      %v630 = vld [vmem:[%s470 + $0x3f8] sm:$0xff]
      %v631 = vld [vmem:[%s484] sm:$0xff]
      %v632 = vld [vmem:[%s484 + $0x8] sm:$0xff]
      %v633 = vld [vmem:[%s484 + $0x10] sm:$0xff]
      %v634 = vld [vmem:[%s484 + $0x18] sm:$0xff]
      %v635 = vld [vmem:[%s3] sm:$0xff]
      %v636 = vld [vmem:[%s3 + $0x8] sm:$0xff]
      %v637 = vld [vmem:[%s3 + $0x10] sm:$0xff]
      %v638 = vld [vmem:[%s3 + $0x18] sm:$0xff]
      %v639 = vld [vmem:[%s3 + $0x20] sm:$0xff]
      %v640 = vld [vmem:[%s3 + $0x28] sm:$0xff]
      %v641 = vld [vmem:[%s3 + $0x30] sm:$0xff]
      %v642 = vld [vmem:[%s3 + $0x38] sm:$0xff]
      %v643 = vld [vmem:[%s4] sm:$0x1]
      %v645 = vlaneseq
      %v646 = vshrl.u32 %v645, 7
      %v647 = vsub.s32 0, %v646
      %v648 = vrot.slane %v643, %v647
      %vm650 = vcmask 130048
      %v652 = vsel %vm650, %v499, 0
      %v655 = vsel %vm650, %v500, 0
      %v658 = vsel %vm650, %v501, 0
      %v661 = vsel %vm650, %v502, 0
      %v664 = vsel %vm650, %v503, 0
      %v667 = vsel %vm650, %v504, 0
      %v670 = vsel %vm650, %v505, 0
      %v673 = vsel %vm650, %v506, 0
      %v676 = vsel %vm650, %v507, 0
      %v679 = vsel %vm650, %v508, 0
      %v682 = vsel %vm650, %v509, 0
      %v685 = vsel %vm650, %v510, 0
      %v688 = vsel %vm650, %v511, 0
      %v691 = vsel %vm650, %v512, 0
      %v694 = vsel %vm650, %v513, 0
      %v697 = vsel %vm650, %v514, 0
      %v700 = vsel %vm650, %v515, 0
      %v703 = vsel %vm650, %v516, 0
      %v706 = vsel %vm650, %v517, 0
      %v709 = vsel %vm650, %v518, 0
      %v712 = vsel %vm650, %v519, 0
      %v715 = vsel %vm650, %v520, 0
      %v718 = vsel %vm650, %v521, 0
      %v721 = vsel %vm650, %v522, 0
      %v724 = vsel %vm650, %v523, 0
      %v727 = vsel %vm650, %v524, 0
      %v730 = vsel %vm650, %v525, 0
      %v733 = vsel %vm650, %v526, 0
      %v736 = vsel %vm650, %v527, 0
      %v739 = vsel %vm650, %v528, 0
      %v742 = vsel %vm650, %v529, 0
      %v745 = vsel %vm650, %v530, 0
      %v748 = vsel %vm650, %v531, 0
      %v751 = vsel %vm650, %v532, 0
      %v754 = vsel %vm650, %v533, 0
      %v757 = vsel %vm650, %v534, 0
      %v760 = vsel %vm650, %v535, 0
      %v763 = vsel %vm650, %v536, 0
      %v766 = vsel %vm650, %v537, 0
      %v769 = vsel %vm650, %v538, 0
      %v772 = vsel %vm650, %v539, 0
      %v775 = vsel %vm650, %v540, 0
      %v778 = vsel %vm650, %v541, 0
      %v781 = vsel %vm650, %v542, 0
      %v784 = vsel %vm650, %v543, 0
      %v787 = vsel %vm650, %v544, 0
      %v790 = vsel %vm650, %v545, 0
      %v793 = vsel %vm650, %v546, 0
      %v796 = vsel %vm650, %v547, 0
      %v799 = vsel %vm650, %v548, 0
      %v802 = vsel %vm650, %v549, 0
      %v805 = vsel %vm650, %v550, 0
      %v808 = vsel %vm650, %v551, 0
      %v811 = vsel %vm650, %v552, 0
      %v814 = vsel %vm650, %v553, 0
      %v817 = vsel %vm650, %v554, 0
      %v820 = vsel %vm650, %v555, 0
      %v823 = vsel %vm650, %v556, 0
      %v826 = vsel %vm650, %v557, 0
      %v829 = vsel %vm650, %v558, 0
      %v832 = vsel %vm650, %v559, 0
      %v835 = vsel %vm650, %v560, 0
      %v838 = vsel %vm650, %v561, 0
      %v841 = vsel %vm650, %v562, 0
      %v844 = vsel %vm650, %v563, 0
      %v847 = vsel %vm650, %v564, 0
      %v850 = vsel %vm650, %v565, 0
      %v853 = vsel %vm650, %v566, 0
      %v856 = vsel %vm650, %v567, 0
      %v859 = vsel %vm650, %v568, 0
      %v862 = vsel %vm650, %v569, 0
      %v865 = vsel %vm650, %v570, 0
      %v868 = vsel %vm650, %v571, 0
      %v871 = vsel %vm650, %v572, 0
      %v874 = vsel %vm650, %v573, 0
      %v877 = vsel %vm650, %v574, 0
      %v880 = vsel %vm650, %v575, 0
      %v883 = vsel %vm650, %v576, 0
      %v886 = vsel %vm650, %v577, 0
      %v889 = vsel %vm650, %v578, 0
      %v892 = vsel %vm650, %v579, 0
      %v895 = vsel %vm650, %v580, 0
      %v898 = vsel %vm650, %v581, 0
      %v901 = vsel %vm650, %v582, 0
      %v904 = vsel %vm650, %v583, 0
      %v907 = vsel %vm650, %v584, 0
      %v910 = vsel %vm650, %v585, 0
      %v913 = vsel %vm650, %v586, 0
      %v916 = vsel %vm650, %v587, 0
      %v919 = vsel %vm650, %v588, 0
      %v922 = vsel %vm650, %v589, 0
      %v925 = vsel %vm650, %v590, 0
      %v928 = vsel %vm650, %v591, 0
      %v931 = vsel %vm650, %v592, 0
      %v934 = vsel %vm650, %v593, 0
      %v937 = vsel %vm650, %v594, 0
      %v940 = vsel %vm650, %v595, 0
      %v943 = vsel %vm650, %v596, 0
      %v946 = vsel %vm650, %v597, 0
      %v949 = vsel %vm650, %v598, 0
      %v952 = vsel %vm650, %v599, 0
      %v955 = vsel %vm650, %v600, 0
      %v958 = vsel %vm650, %v601, 0
      %v961 = vsel %vm650, %v602, 0
      %v964 = vsel %vm650, %v603, 0
      %v967 = vsel %vm650, %v604, 0
      %v970 = vsel %vm650, %v605, 0
      %v973 = vsel %vm650, %v606, 0
      %v976 = vsel %vm650, %v607, 0
      %v979 = vsel %vm650, %v608, 0
      %v982 = vsel %vm650, %v609, 0
      %v985 = vsel %vm650, %v610, 0
      %v988 = vsel %vm650, %v611, 0
      %v991 = vsel %vm650, %v612, 0
      %v994 = vsel %vm650, %v613, 0
      %v997 = vsel %vm650, %v614, 0
      %v1000 = vsel %vm650, %v615, 0
      %v1003 = vsel %vm650, %v616, 0
      %v1006 = vsel %vm650, %v617, 0
      %v1009 = vsel %vm650, %v618, 0
      %v1012 = vsel %vm650, %v619, 0
      %v1015 = vsel %vm650, %v620, 0
      %v1018 = vsel %vm650, %v621, 0
      %v1021 = vsel %vm650, %v622, 0
      %v1024 = vsel %vm650, %v623, 0
      %v1027 = vsel %vm650, %v624, 0
      %v1030 = vsel %vm650, %v625, 0
      %v1033 = vsel %vm650, %v626, 0
      %v1036 = vsel %vm650, %v627, 0
      %v1039 = vsel %vm650, %v628, 0
      %v1042 = vsel %vm650, %v629, 0
      %v1045 = vsel %vm650, %v630, 0
      %v1048 = vsel %vm650, %v631, 0
      %v1051 = vsel %vm650, %v632, 0
      %v1054 = vsel %vm650, %v633, 0
      %v1057 = vsel %vm650, %v634, 0
      %v1060 = vsel %vm650, %v635, 0
      %v1063 = vsel %vm650, %v636, 0
      %v1066 = vsel %vm650, %v637, 0
      %v1069 = vsel %vm650, %v638, 0
      %v1072 = vsel %vm650, %v639, 0
      %v1075 = vsel %vm650, %v640, 0
      %v1078 = vsel %vm650, %v641, 0
      %v1081 = vsel %vm650, %v642, 0
      %1083 = vmatprep.subr.mxu0 0.0
      %1084 = vmatpush1.xpose.msra.mxu0 %v1060
      %1085 = vmatprep.subr.mxu0 0.0
      %1086 = vmatpush1.xpose.msra.mxu0 %v1063
      %1087 = vmatprep.subr.mxu0 0.0
      %1088 = vmatpush1.xpose.msra.mxu0 %v1066
      %1089 = vmatprep.subr.mxu0 0.0
      %1090 = vmatpush1.xpose.msra.mxu0 %v1069
      %1091 = vmatprep.subr.mxu0 0.0
      %1092 = vmatpush1.xpose.msra.mxu0 %v1072
      %1093 = vmatprep.subr.mxu0 0.0
      %1094 = vmatpush1.xpose.msra.mxu0 %v1075
      %1095 = vmatprep.subr.mxu0 0.0
      %1096 = vmatpush1.xpose.msra.mxu0 %v1078
      %1097 = vmatprep.subr.mxu0 0.0
      %1098 = vmatpush1.xpose.msra.mxu0 %v1081
      %1099 = vmatprep.subr.mxu0 0.0
      %1100 = vmatpush1.xpose.msra.mxu0 0.0
      %1101 = vmatprep.subr.mxu0 0.0
      %1102 = vmatpush1.xpose.msra.mxu0 0.0
      %1103 = vmatprep.subr.mxu0 0.0
      %1104 = vmatpush1.xpose.msra.mxu0 0.0
      %1105 = vmatprep.subr.mxu0 0.0
      %1106 = vmatpush1.xpose.msra.mxu0 0.0
      %1107 = vmatprep.subr.mxu0 0.0
      %1108 = vmatpush1.xpose.msra.mxu0 0.0
      %1109 = vmatprep.subr.mxu0 0.0
      %1110 = vmatpush1.xpose.msra.mxu0 0.0
      %1111 = vmatprep.subr.mxu0 0.0
      %1112 = vmatpush1.xpose.msra.mxu0 0.0
      %1113 = vmatprep.subr.mxu0 0.0
      %1114 = vmatpush1.xpose.msra.mxu0 0.0
      %1115 = vmatprep.subr.mxu0 0.0
      %1116 = vmatpush1.xpose.msra.mxu0 0.0
      %1117 = vmatprep.subr.mxu0 0.0
      %1118 = vmatpush1.xpose.msra.mxu0 0.0
      %1119 = vmatprep.subr.mxu0 0.0
      %1120 = vmatpush1.xpose.msra.mxu0 0.0
      %1121 = vmatprep.subr.mxu0 0.0
      %1122 = vmatpush1.xpose.msra.mxu0 0.0
      %1123 = vmatprep.subr.mxu0 0.0
      %1124 = vmatpush1.xpose.msra.mxu0 0.0
      %1125 = vmatprep.subr.mxu0 0.0
      %1126 = vmatpush1.xpose.msra.mxu0 0.0
      %1127 = vmatprep.subr.mxu0 0.0
      %1128 = vmatpush1.xpose.msra.mxu0 0.0
      %1129 = vmatprep.subr.mxu0 0.0
      %1130 = vmatpush1.xpose.msra.mxu0 0.0
      %1131 = vmatprep.subr.mxu0 0.0
      %1132 = vmatpush1.xpose.msra.mxu0 0.0
      %1133 = vmatprep.subr.mxu0 0.0
      %1134 = vmatpush1.xpose.msra.mxu0 0.0
      %1135 = vmatprep.subr.mxu0 0.0
      %1136 = vmatpush1.xpose.msra.mxu0 0.0
      %1137 = vmatprep.subr.mxu0 0.0
      %1138 = vmatpush1.xpose.msra.mxu0 0.0
      %1139 = vmatprep.subr.mxu0 0.0
      %1140 = vmatpush1.xpose.msra.mxu0 0.0
      %1141 = vmatprep.subr.mxu0 0.0
      %1142 = vmatpush1.xpose.msra.mxu0 0.0
      %1143 = vmatprep.subr.mxu0 0.0
      %1144 = vmatpush1.xpose.msra.mxu0 0.0
      %1145 = vmatprep.subr.mxu0 0.0
      %1146 = vmatpush1.xpose.msra.mxu0 0.0
      %1147 = vmatprep.mubr.f32.mxu0 0.0
      %1148 = vmatmul.mubr.f32.gmra.mrb[0].mxu0 %v652
      %v1149 = vpop.f32.mrb[0].mxu0
      %v1150 = vadd.f32 %v648, %v1149
      %v1151 = vpop.f32.mrb[0].mxu0
      %1152 = vmatprep.mubr.f32.mxu0 0.0
      %1153 = vmatmul.mubr.f32.gmra.mrb[0].mxu0 %v655
      %v1154 = vpop.f32.mrb[0].mxu0
      %v1155 = vadd.f32 %v648, %v1154
      %v1156 = vpop.f32.mrb[0].mxu0
      %1157 = vmatprep.mubr.f32.mxu0 0.0
      %1158 = vmatmul.mubr.f32.gmra.mrb[0].mxu0 %v658
      %v1159 = vpop.f32.mrb[0].mxu0
      %v1160 = vadd.f32 %v648, %v1159
      %v1161 = vpop.f32.mrb[0].mxu0
      %1162 = vmatprep.mubr.f32.mxu0 0.0
      %1163 = vmatmul.mubr.f32.gmra.mrb[0].mxu0 %v661
      %v1164 = vpop.f32.mrb[0].mxu0
      %v1165 = vadd.f32 %v648, %v1164
      %v1166 = vpop.f32.mrb[0].mxu0
      %1167 = vmatprep.mubr.f32.mxu0 0.0
      %1168 = vmatmul.mubr.f32.gmra.mrb[0].mxu0 %v664
      %v1169 = vpop.f32.mrb[0].mxu0
      %v1170 = vadd.f32 %v648, %v1169
      %v1171 = vpop.f32.mrb[0].mxu0
      %1172 = vmatprep.mubr.f32.mxu0 0.0
      %1173 = vmatmul.mubr.f32.gmra.mrb[0].mxu0 %v667
      %v1174 = vpop.f32.mrb[0].mxu0
      %v1175 = vadd.f32 %v648, %v1174
      %v1176 = vpop.f32.mrb[0].mxu0
      %1177 = vmatprep.mubr.f32.mxu0 0.0
      %1178 = vmatmul.mubr.f32.gmra.mrb[0].mxu0 %v670
      %v1179 = vpop.f32.mrb[0].mxu0
      %v1180 = vadd.f32 %v648, %v1179
      %v1181 = vpop.f32.mrb[0].mxu0
      %1182 = vmatprep.mubr.f32.mxu0 0.0
      %1183 = vmatmul.mubr.f32.gmra.mrb[0].mxu0 %v673
      %v1184 = vpop.f32.mrb[0].mxu0
      %v1185 = vadd.f32 %v648, %v1184
      %v1186 = vpop.f32.mrb[0].mxu0
      %1187 = vmatprep.mubr.f32.mxu0 0.0
      %1188 = vmatmul.mubr.f32.gmra.mrb[0].mxu0 %v676
      %v1189 = vpop.f32.mrb[0].mxu0
      %v1190 = vadd.f32 %v648, %v1189
      %v1191 = vpop.f32.mrb[0].mxu0
      %1192 = vmatprep.mubr.f32.mxu0 0.0
      %1193 = vmatmul.mubr.f32.gmra.mrb[0].mxu0 %v679
      %v1194 = vpop.f32.mrb[0].mxu0
      %v1195 = vadd.f32 %v648, %v1194
      %v1196 = vpop.f32.mrb[0].mxu0
      %1197 = vmatprep.mubr.f32.mxu0 0.0
      %1198 = vmatmul.mubr.f32.gmra.mrb[0].mxu0 %v682
      %v1199 = vpop.f32.mrb[0].mxu0
      %v1200 = vadd.f32 %v648, %v1199
      %v1201 = vpop.f32.mrb[0].mxu0
      %1202 = vmatprep.mubr.f32.mxu0 0.0
      %1203 = vmatmul.mubr.f32.gmra.mrb[0].mxu0 %v685
      %v1204 = vpop.f32.mrb[0].mxu0
      %v1205 = vadd.f32 %v648, %v1204
      %v1206 = vpop.f32.mrb[0].mxu0
      %1207 = vmatprep.mubr.f32.mxu0 0.0
      %1208 = vmatmul.mubr.f32.gmra.mrb[0].mxu0 %v688
      %v1209 = vpop.f32.mrb[0].mxu0
      %v1210 = vadd.f32 %v648, %v1209
      %v1211 = vpop.f32.mrb[0].mxu0
      %1212 = vmatprep.mubr.f32.mxu0 0.0
      %1213 = vmatmul.mubr.f32.gmra.mrb[0].mxu0 %v691
      %v1214 = vpop.f32.mrb[0].mxu0
      %v1215 = vadd.f32 %v648, %v1214
      %v1216 = vpop.f32.mrb[0].mxu0
      %1217 = vmatprep.mubr.f32.mxu0 0.0
      %1218 = vmatmul.mubr.f32.gmra.mrb[0].mxu0 %v694
      %v1219 = vpop.f32.mrb[0].mxu0
      %v1220 = vadd.f32 %v648, %v1219
      %v1221 = vpop.f32.mrb[0].mxu0
      %1222 = vmatprep.mubr.f32.mxu0 0.0
      %1223 = vmatmul.mubr.f32.gmra.mrb[0].mxu0 %v697
      %v1224 = vpop.f32.mrb[0].mxu0
      %v1225 = vadd.f32 %v648, %v1224
      %v1226 = vpop.f32.mrb[0].mxu0
      %1227 = vmatprep.mubr.f32.mxu0 0.0
      %1228 = vmatmul.mubr.f32.gmra.mrb[0].mxu0 %v700
      %v1229 = vpop.f32.mrb[0].mxu0
      %v1230 = vadd.f32 %v648, %v1229
      %v1231 = vpop.f32.mrb[0].mxu0
      %1232 = vmatprep.mubr.f32.mxu0 0.0
      %1233 = vmatmul.mubr.f32.gmra.mrb[0].mxu0 %v703
      %v1234 = vpop.f32.mrb[0].mxu0
      %v1235 = vadd.f32 %v648, %v1234
      %v1236 = vpop.f32.mrb[0].mxu0
      %1237 = vmatprep.mubr.f32.mxu0 0.0
      %1238 = vmatmul.mubr.f32.gmra.mrb[0].mxu0 %v706
      %v1239 = vpop.f32.mrb[0].mxu0
      %v1240 = vadd.f32 %v648, %v1239
      %v1241 = vpop.f32.mrb[0].mxu0
      %1242 = vmatprep.mubr.f32.mxu0 0.0
      %1243 = vmatmul.mubr.f32.gmra.mrb[0].mxu0 %v709
      %v1244 = vpop.f32.mrb[0].mxu0
      %v1245 = vadd.f32 %v648, %v1244
      %v1246 = vpop.f32.mrb[0].mxu0
      %1247 = vmatprep.mubr.f32.mxu0 0.0
      %1248 = vmatmul.mubr.f32.gmra.mrb[0].mxu0 %v712
      %v1249 = vpop.f32.mrb[0].mxu0
      %v1250 = vadd.f32 %v648, %v1249
      %v1251 = vpop.f32.mrb[0].mxu0
      %1252 = vmatprep.mubr.f32.mxu0 0.0
      %1253 = vmatmul.mubr.f32.gmra.mrb[0].mxu0 %v715
      %v1254 = vpop.f32.mrb[0].mxu0
      %v1255 = vadd.f32 %v648, %v1254
      %v1256 = vpop.f32.mrb[0].mxu0
      %1257 = vmatprep.mubr.f32.mxu0 0.0
      %1258 = vmatmul.mubr.f32.gmra.mrb[0].mxu0 %v718
      %v1259 = vpop.f32.mrb[0].mxu0
      %v1260 = vadd.f32 %v648, %v1259
      %v1261 = vpop.f32.mrb[0].mxu0
      %1262 = vmatprep.mubr.f32.mxu0 0.0
      %1263 = vmatmul.mubr.f32.gmra.mrb[0].mxu0 %v721
      %v1264 = vpop.f32.mrb[0].mxu0
      %v1265 = vadd.f32 %v648, %v1264
      %v1266 = vpop.f32.mrb[0].mxu0
      %1267 = vmatprep.mubr.f32.mxu0 0.0
      %1268 = vmatmul.mubr.f32.gmra.mrb[0].mxu0 %v724
      %v1269 = vpop.f32.mrb[0].mxu0
      %v1270 = vadd.f32 %v648, %v1269
      %v1271 = vpop.f32.mrb[0].mxu0
      %1272 = vmatprep.mubr.f32.mxu0 0.0
      %1273 = vmatmul.mubr.f32.gmra.mrb[0].mxu0 %v727
      %v1274 = vpop.f32.mrb[0].mxu0
      %v1275 = vadd.f32 %v648, %v1274
      %v1276 = vpop.f32.mrb[0].mxu0
      %1277 = vmatprep.mubr.f32.mxu0 0.0
      %1278 = vmatmul.mubr.f32.gmra.mrb[0].mxu0 %v730
      %v1279 = vpop.f32.mrb[0].mxu0
      %v1280 = vadd.f32 %v648, %v1279
      %v1281 = vpop.f32.mrb[0].mxu0
      %1282 = vmatprep.mubr.f32.mxu0 0.0
      %1283 = vmatmul.mubr.f32.gmra.mrb[0].mxu0 %v733
      %v1284 = vpop.f32.mrb[0].mxu0
      %v1285 = vadd.f32 %v648, %v1284
      %v1286 = vpop.f32.mrb[0].mxu0
      %1287 = vmatprep.mubr.f32.mxu0 0.0
      %1288 = vmatmul.mubr.f32.gmra.mrb[0].mxu0 %v736
      %v1289 = vpop.f32.mrb[0].mxu0
      %v1290 = vadd.f32 %v648, %v1289
      %v1291 = vpop.f32.mrb[0].mxu0
      %1292 = vmatprep.mubr.f32.mxu0 0.0
      %1293 = vmatmul.mubr.f32.gmra.mrb[0].mxu0 %v739
      %v1294 = vpop.f32.mrb[0].mxu0
      %v1295 = vadd.f32 %v648, %v1294
      %v1296 = vpop.f32.mrb[0].mxu0
      %1297 = vmatprep.mubr.f32.mxu0 0.0
      %1298 = vmatmul.mubr.f32.gmra.mrb[0].mxu0 %v742
      %v1299 = vpop.f32.mrb[0].mxu0
      %v1300 = vadd.f32 %v648, %v1299
      %v1301 = vpop.f32.mrb[0].mxu0
      %1302 = vmatprep.mubr.f32.mxu0 0.0
      %1303 = vmatmul.mubr.f32.gmra.mrb[0].mxu0 %v745
      %v1304 = vpop.f32.mrb[0].mxu0
      %v1305 = vadd.f32 %v648, %v1304
      %v1306 = vpop.f32.mrb[0].mxu0
      %1307 = vmatprep.mubr.f32.mxu0 0.0
      %1308 = vmatmul.mubr.f32.gmra.mrb[0].mxu0 %v748
      %v1309 = vpop.f32.mrb[0].mxu0
      %v1310 = vadd.f32 %v648, %v1309
      %v1311 = vpop.f32.mrb[0].mxu0
      %1312 = vmatprep.mubr.f32.mxu0 0.0
      %1313 = vmatmul.mubr.f32.gmra.mrb[0].mxu0 %v751
      %v1314 = vpop.f32.mrb[0].mxu0
      %v1315 = vadd.f32 %v648, %v1314
      %v1316 = vpop.f32.mrb[0].mxu0
      %1317 = vmatprep.mubr.f32.mxu0 0.0
      %1318 = vmatmul.mubr.f32.gmra.mrb[0].mxu0 %v754
      %v1319 = vpop.f32.mrb[0].mxu0
      %v1320 = vadd.f32 %v648, %v1319
      %v1321 = vpop.f32.mrb[0].mxu0
      %1322 = vmatprep.mubr.f32.mxu0 0.0
      %1323 = vmatmul.mubr.f32.gmra.mrb[0].mxu0 %v757
      %v1324 = vpop.f32.mrb[0].mxu0
      %v1325 = vadd.f32 %v648, %v1324
      %v1326 = vpop.f32.mrb[0].mxu0
      %1327 = vmatprep.mubr.f32.mxu0 0.0
      %1328 = vmatmul.mubr.f32.gmra.mrb[0].mxu0 %v760
      %v1329 = vpop.f32.mrb[0].mxu0
      %v1330 = vadd.f32 %v648, %v1329
      %v1331 = vpop.f32.mrb[0].mxu0
      %1332 = vmatprep.mubr.f32.mxu0 0.0
      %1333 = vmatmul.mubr.f32.gmra.mrb[0].mxu0 %v763
      %v1334 = vpop.f32.mrb[0].mxu0
      %v1335 = vadd.f32 %v648, %v1334
      %v1336 = vpop.f32.mrb[0].mxu0
      %1337 = vmatprep.mubr.f32.mxu0 0.0
      %1338 = vmatmul.mubr.f32.gmra.mrb[0].mxu0 %v766
      %v1339 = vpop.f32.mrb[0].mxu0
      %v1340 = vadd.f32 %v648, %v1339
      %v1341 = vpop.f32.mrb[0].mxu0
      %1342 = vmatprep.mubr.f32.mxu0 0.0
      %1343 = vmatmul.mubr.f32.gmra.mrb[0].mxu0 %v769
      %v1344 = vpop.f32.mrb[0].mxu0
      %v1345 = vadd.f32 %v648, %v1344
      %v1346 = vpop.f32.mrb[0].mxu0
      %1347 = vmatprep.mubr.f32.mxu0 0.0
      %1348 = vmatmul.mubr.f32.gmra.mrb[0].mxu0 %v772
      %v1349 = vpop.f32.mrb[0].mxu0
      %v1350 = vadd.f32 %v648, %v1349
      %v1351 = vpop.f32.mrb[0].mxu0
      %1352 = vmatprep.mubr.f32.mxu0 0.0
      %1353 = vmatmul.mubr.f32.gmra.mrb[0].mxu0 %v775
      %v1354 = vpop.f32.mrb[0].mxu0
      %v1355 = vadd.f32 %v648, %v1354
      %v1356 = vpop.f32.mrb[0].mxu0
      %1357 = vmatprep.mubr.f32.mxu0 0.0
      %1358 = vmatmul.mubr.f32.gmra.mrb[0].mxu0 %v778
      %v1359 = vpop.f32.mrb[0].mxu0
      %v1360 = vadd.f32 %v648, %v1359
      %v1361 = vpop.f32.mrb[0].mxu0
      %1362 = vmatprep.mubr.f32.mxu0 0.0
      %1363 = vmatmul.mubr.f32.gmra.mrb[0].mxu0 %v781
      %v1364 = vpop.f32.mrb[0].mxu0
      %v1365 = vadd.f32 %v648, %v1364
      %v1366 = vpop.f32.mrb[0].mxu0
      %1367 = vmatprep.mubr.f32.mxu0 0.0
      %1368 = vmatmul.mubr.f32.gmra.mrb[0].mxu0 %v784
      %v1369 = vpop.f32.mrb[0].mxu0
      %v1370 = vadd.f32 %v648, %v1369
      %v1371 = vpop.f32.mrb[0].mxu0
      %1372 = vmatprep.mubr.f32.mxu0 0.0
      %1373 = vmatmul.mubr.f32.gmra.mrb[0].mxu0 %v787
      %v1374 = vpop.f32.mrb[0].mxu0
      %v1375 = vadd.f32 %v648, %v1374
      %v1376 = vpop.f32.mrb[0].mxu0
      %1377 = vmatprep.mubr.f32.mxu0 0.0
      %1378 = vmatmul.mubr.f32.gmra.mrb[0].mxu0 %v790
      %v1379 = vpop.f32.mrb[0].mxu0
      %v1380 = vadd.f32 %v648, %v1379
      %v1381 = vpop.f32.mrb[0].mxu0
      %1382 = vmatprep.mubr.f32.mxu0 0.0
      %1383 = vmatmul.mubr.f32.gmra.mrb[0].mxu0 %v793
      %v1384 = vpop.f32.mrb[0].mxu0
      %v1385 = vadd.f32 %v648, %v1384
      %v1386 = vpop.f32.mrb[0].mxu0
      %1387 = vmatprep.mubr.f32.mxu0 0.0
      %1388 = vmatmul.mubr.f32.gmra.mrb[0].mxu0 %v796
      %v1389 = vpop.f32.mrb[0].mxu0
      %v1390 = vadd.f32 %v648, %v1389
      %v1391 = vpop.f32.mrb[0].mxu0
      %1392 = vmatprep.mubr.f32.mxu0 0.0
      %1393 = vmatmul.mubr.f32.gmra.mrb[0].mxu0 %v799
      %v1394 = vpop.f32.mrb[0].mxu0
      %v1395 = vadd.f32 %v648, %v1394
      %v1396 = vpop.f32.mrb[0].mxu0
      %1397 = vmatprep.mubr.f32.mxu0 0.0
      %1398 = vmatmul.mubr.f32.gmra.mrb[0].mxu0 %v802
      %v1399 = vpop.f32.mrb[0].mxu0
      %v1400 = vadd.f32 %v648, %v1399
      %v1401 = vpop.f32.mrb[0].mxu0
      %1402 = vmatprep.mubr.f32.mxu0 0.0
      %1403 = vmatmul.mubr.f32.gmra.mrb[0].mxu0 %v805
      %v1404 = vpop.f32.mrb[0].mxu0
      %v1405 = vadd.f32 %v648, %v1404
      %v1406 = vpop.f32.mrb[0].mxu0
      %1407 = vmatprep.mubr.f32.mxu0 0.0
      %1408 = vmatmul.mubr.f32.gmra.mrb[0].mxu0 %v808
      %v1409 = vpop.f32.mrb[0].mxu0
      %v1410 = vadd.f32 %v648, %v1409
      %v1411 = vpop.f32.mrb[0].mxu0
      %1412 = vmatprep.mubr.f32.mxu0 0.0
      %1413 = vmatmul.mubr.f32.gmra.mrb[0].mxu0 %v811
      %v1414 = vpop.f32.mrb[0].mxu0
      %v1415 = vadd.f32 %v648, %v1414
      %v1416 = vpop.f32.mrb[0].mxu0
      %1417 = vmatprep.mubr.f32.mxu0 0.0
      %1418 = vmatmul.mubr.f32.gmra.mrb[0].mxu0 %v814
      %v1419 = vpop.f32.mrb[0].mxu0
      %v1420 = vadd.f32 %v648, %v1419
      %v1421 = vpop.f32.mrb[0].mxu0
      %1422 = vmatprep.mubr.f32.mxu0 0.0
      %1423 = vmatmul.mubr.f32.gmra.mrb[0].mxu0 %v817
      %v1424 = vpop.f32.mrb[0].mxu0
      %v1425 = vadd.f32 %v648, %v1424
      %v1426 = vpop.f32.mrb[0].mxu0
      %1427 = vmatprep.mubr.f32.mxu0 0.0
      %1428 = vmatmul.mubr.f32.gmra.mrb[0].mxu0 %v820
      %v1429 = vpop.f32.mrb[0].mxu0
      %v1430 = vadd.f32 %v648, %v1429
      %v1431 = vpop.f32.mrb[0].mxu0
      %1432 = vmatprep.mubr.f32.mxu0 0.0
      %1433 = vmatmul.mubr.f32.gmra.mrb[0].mxu0 %v823
      %v1434 = vpop.f32.mrb[0].mxu0
      %v1435 = vadd.f32 %v648, %v1434
      %v1436 = vpop.f32.mrb[0].mxu0
      %1437 = vmatprep.mubr.f32.mxu0 0.0
      %1438 = vmatmul.mubr.f32.gmra.mrb[0].mxu0 %v826
      %v1439 = vpop.f32.mrb[0].mxu0
      %v1440 = vadd.f32 %v648, %v1439
      %v1441 = vpop.f32.mrb[0].mxu0
      %1442 = vmatprep.mubr.f32.mxu0 0.0
      %1443 = vmatmul.mubr.f32.gmra.mrb[0].mxu0 %v829
      %v1444 = vpop.f32.mrb[0].mxu0
      %v1445 = vadd.f32 %v648, %v1444
      %v1446 = vpop.f32.mrb[0].mxu0
      %1447 = vmatprep.mubr.f32.mxu0 0.0
      %1448 = vmatmul.mubr.f32.gmra.mrb[0].mxu0 %v832
      %v1449 = vpop.f32.mrb[0].mxu0
      %v1450 = vadd.f32 %v648, %v1449
      %v1451 = vpop.f32.mrb[0].mxu0
      %1452 = vmatprep.mubr.f32.mxu0 0.0
      %1453 = vmatmul.mubr.f32.gmra.mrb[0].mxu0 %v835
      %v1454 = vpop.f32.mrb[0].mxu0
      %v1455 = vadd.f32 %v648, %v1454
      %v1456 = vpop.f32.mrb[0].mxu0
      %1457 = vmatprep.mubr.f32.mxu0 0.0
      %1458 = vmatmul.mubr.f32.gmra.mrb[0].mxu0 %v838
      %v1459 = vpop.f32.mrb[0].mxu0
      %v1460 = vadd.f32 %v648, %v1459
      %v1461 = vpop.f32.mrb[0].mxu0
      %1462 = vmatprep.mubr.f32.mxu0 0.0
      %1463 = vmatmul.mubr.f32.gmra.mrb[0].mxu0 %v841
      %v1464 = vpop.f32.mrb[0].mxu0
      %v1465 = vadd.f32 %v648, %v1464
      %v1466 = vpop.f32.mrb[0].mxu0
      %1467 = vmatprep.mubr.f32.mxu0 0.0
      %1468 = vmatmul.mubr.f32.gmra.mrb[0].mxu0 %v844
      %v1469 = vpop.f32.mrb[0].mxu0
      %v1470 = vadd.f32 %v648, %v1469
      %v1471 = vpop.f32.mrb[0].mxu0
      %1472 = vmatprep.mubr.f32.mxu0 0.0
      %1473 = vmatmul.mubr.f32.gmra.mrb[0].mxu0 %v847
      %v1474 = vpop.f32.mrb[0].mxu0
      %v1475 = vadd.f32 %v648, %v1474
      %v1476 = vpop.f32.mrb[0].mxu0
      %1477 = vmatprep.mubr.f32.mxu0 0.0
      %1478 = vmatmul.mubr.f32.gmra.mrb[0].mxu0 %v850
      %v1479 = vpop.f32.mrb[0].mxu0
      %v1480 = vadd.f32 %v648, %v1479
      %v1481 = vpop.f32.mrb[0].mxu0
      %1482 = vmatprep.mubr.f32.mxu0 0.0
      %1483 = vmatmul.mubr.f32.gmra.mrb[0].mxu0 %v853
      %v1484 = vpop.f32.mrb[0].mxu0
      %v1485 = vadd.f32 %v648, %v1484
      %v1486 = vpop.f32.mrb[0].mxu0
      %1487 = vmatprep.mubr.f32.mxu0 0.0
      %1488 = vmatmul.mubr.f32.gmra.mrb[0].mxu0 %v856
      %v1489 = vpop.f32.mrb[0].mxu0
      %v1490 = vadd.f32 %v648, %v1489
      %v1491 = vpop.f32.mrb[0].mxu0
      %1492 = vmatprep.mubr.f32.mxu0 0.0
      %1493 = vmatmul.mubr.f32.gmra.mrb[0].mxu0 %v859
      %v1494 = vpop.f32.mrb[0].mxu0
      %v1495 = vadd.f32 %v648, %v1494
      %v1496 = vpop.f32.mrb[0].mxu0
      %1497 = vmatprep.mubr.f32.mxu0 0.0
      %1498 = vmatmul.mubr.f32.gmra.mrb[0].mxu0 %v862
      %v1499 = vpop.f32.mrb[0].mxu0
      %v1500 = vadd.f32 %v648, %v1499
      %v1501 = vpop.f32.mrb[0].mxu0
      %1502 = vmatprep.mubr.f32.mxu0 0.0
      %1503 = vmatmul.mubr.f32.gmra.mrb[0].mxu0 %v865
      %v1504 = vpop.f32.mrb[0].mxu0
      %v1505 = vadd.f32 %v648, %v1504
      %v1506 = vpop.f32.mrb[0].mxu0
      %1507 = vmatprep.mubr.f32.mxu0 0.0
      %1508 = vmatmul.mubr.f32.gmra.mrb[0].mxu0 %v868
      %v1509 = vpop.f32.mrb[0].mxu0
      %v1510 = vadd.f32 %v648, %v1509
      %v1511 = vpop.f32.mrb[0].mxu0
      %1512 = vmatprep.mubr.f32.mxu0 0.0
      %1513 = vmatmul.mubr.f32.gmra.mrb[0].mxu0 %v871
      %v1514 = vpop.f32.mrb[0].mxu0
      %v1515 = vadd.f32 %v648, %v1514
      %v1516 = vpop.f32.mrb[0].mxu0
      %1517 = vmatprep.mubr.f32.mxu0 0.0
      %1518 = vmatmul.mubr.f32.gmra.mrb[0].mxu0 %v874
      %v1519 = vpop.f32.mrb[0].mxu0
      %v1520 = vadd.f32 %v648, %v1519
      %v1521 = vpop.f32.mrb[0].mxu0
      %1522 = vmatprep.mubr.f32.mxu0 0.0
      %1523 = vmatmul.mubr.f32.gmra.mrb[0].mxu0 %v877
      %v1524 = vpop.f32.mrb[0].mxu0
      %v1525 = vadd.f32 %v648, %v1524
      %v1526 = vpop.f32.mrb[0].mxu0
      %1527 = vmatprep.mubr.f32.mxu0 0.0
      %1528 = vmatmul.mubr.f32.gmra.mrb[0].mxu0 %v880
      %v1529 = vpop.f32.mrb[0].mxu0
      %v1530 = vadd.f32 %v648, %v1529
      %v1531 = vpop.f32.mrb[0].mxu0
      %1532 = vmatprep.mubr.f32.mxu0 0.0
      %1533 = vmatmul.mubr.f32.gmra.mrb[0].mxu0 %v883
      %v1534 = vpop.f32.mrb[0].mxu0
      %v1535 = vadd.f32 %v648, %v1534
      %v1536 = vpop.f32.mrb[0].mxu0
      %1537 = vmatprep.mubr.f32.mxu0 0.0
      %1538 = vmatmul.mubr.f32.gmra.mrb[0].mxu0 %v886
      %v1539 = vpop.f32.mrb[0].mxu0
      %v1540 = vadd.f32 %v648, %v1539
      %v1541 = vpop.f32.mrb[0].mxu0
      %1542 = vmatprep.mubr.f32.mxu0 0.0
      %1543 = vmatmul.mubr.f32.gmra.mrb[0].mxu0 %v889
      %v1544 = vpop.f32.mrb[0].mxu0
      %v1545 = vadd.f32 %v648, %v1544
      %v1546 = vpop.f32.mrb[0].mxu0
      %1547 = vmatprep.mubr.f32.mxu0 0.0
      %1548 = vmatmul.mubr.f32.gmra.mrb[0].mxu0 %v892
      %v1549 = vpop.f32.mrb[0].mxu0
      %v1550 = vadd.f32 %v648, %v1549
      %v1551 = vpop.f32.mrb[0].mxu0
      %1552 = vmatprep.mubr.f32.mxu0 0.0
      %1553 = vmatmul.mubr.f32.gmra.mrb[0].mxu0 %v895
      %v1554 = vpop.f32.mrb[0].mxu0
      %v1555 = vadd.f32 %v648, %v1554
      %v1556 = vpop.f32.mrb[0].mxu0
      %1557 = vmatprep.mubr.f32.mxu0 0.0
      %1558 = vmatmul.mubr.f32.gmra.mrb[0].mxu0 %v898
      %v1559 = vpop.f32.mrb[0].mxu0
      %v1560 = vadd.f32 %v648, %v1559
      %v1561 = vpop.f32.mrb[0].mxu0
      %1562 = vmatprep.mubr.f32.mxu0 0.0
      %1563 = vmatmul.mubr.f32.gmra.mrb[0].mxu0 %v901
      %v1564 = vpop.f32.mrb[0].mxu0
      %v1565 = vadd.f32 %v648, %v1564
      %v1566 = vpop.f32.mrb[0].mxu0
      %1567 = vmatprep.mubr.f32.mxu0 0.0
      %1568 = vmatmul.mubr.f32.gmra.mrb[0].mxu0 %v904
      %v1569 = vpop.f32.mrb[0].mxu0
      %v1570 = vadd.f32 %v648, %v1569
      %v1571 = vpop.f32.mrb[0].mxu0
      %1572 = vmatprep.mubr.f32.mxu0 0.0
      %1573 = vmatmul.mubr.f32.gmra.mrb[0].mxu0 %v907
      %v1574 = vpop.f32.mrb[0].mxu0
      %v1575 = vadd.f32 %v648, %v1574
      %v1576 = vpop.f32.mrb[0].mxu0
      %1577 = vmatprep.mubr.f32.mxu0 0.0
      %1578 = vmatmul.mubr.f32.gmra.mrb[0].mxu0 %v910
      %v1579 = vpop.f32.mrb[0].mxu0
      %v1580 = vadd.f32 %v648, %v1579
      %v1581 = vpop.f32.mrb[0].mxu0
      %1582 = vmatprep.mubr.f32.mxu0 0.0
      %1583 = vmatmul.mubr.f32.gmra.mrb[0].mxu0 %v913
      %v1584 = vpop.f32.mrb[0].mxu0
      %v1585 = vadd.f32 %v648, %v1584
      %v1586 = vpop.f32.mrb[0].mxu0
      %1587 = vmatprep.mubr.f32.mxu0 0.0
      %1588 = vmatmul.mubr.f32.gmra.mrb[0].mxu0 %v916
      %v1589 = vpop.f32.mrb[0].mxu0
      %v1590 = vadd.f32 %v648, %v1589
      %v1591 = vpop.f32.mrb[0].mxu0
      %1592 = vmatprep.mubr.f32.mxu0 0.0
      %1593 = vmatmul.mubr.f32.gmra.mrb[0].mxu0 %v919
      %v1594 = vpop.f32.mrb[0].mxu0
      %v1595 = vadd.f32 %v648, %v1594
      %v1596 = vpop.f32.mrb[0].mxu0
      %1597 = vmatprep.mubr.f32.mxu0 0.0
      %1598 = vmatmul.mubr.f32.gmra.mrb[0].mxu0 %v922
      %v1599 = vpop.f32.mrb[0].mxu0
      %v1600 = vadd.f32 %v648, %v1599
      %v1601 = vpop.f32.mrb[0].mxu0
      %1602 = vmatprep.mubr.f32.mxu0 0.0
      %1603 = vmatmul.mubr.f32.gmra.mrb[0].mxu0 %v925
      %v1604 = vpop.f32.mrb[0].mxu0
      %v1605 = vadd.f32 %v648, %v1604
      %v1606 = vpop.f32.mrb[0].mxu0
      %1607 = vmatprep.mubr.f32.mxu0 0.0
      %1608 = vmatmul.mubr.f32.gmra.mrb[0].mxu0 %v928
      %v1609 = vpop.f32.mrb[0].mxu0
      %v1610 = vadd.f32 %v648, %v1609
      %v1611 = vpop.f32.mrb[0].mxu0
      %1612 = vmatprep.mubr.f32.mxu0 0.0
      %1613 = vmatmul.mubr.f32.gmra.mrb[0].mxu0 %v931
      %v1614 = vpop.f32.mrb[0].mxu0
      %v1615 = vadd.f32 %v648, %v1614
      %v1616 = vpop.f32.mrb[0].mxu0
      %1617 = vmatprep.mubr.f32.mxu0 0.0
      %1618 = vmatmul.mubr.f32.gmra.mrb[0].mxu0 %v934
      %v1619 = vpop.f32.mrb[0].mxu0
      %v1620 = vadd.f32 %v648, %v1619
      %v1621 = vpop.f32.mrb[0].mxu0
      %1622 = vmatprep.mubr.f32.mxu0 0.0
      %1623 = vmatmul.mubr.f32.gmra.mrb[0].mxu0 %v937
      %v1624 = vpop.f32.mrb[0].mxu0
      %v1625 = vadd.f32 %v648, %v1624
      %v1626 = vpop.f32.mrb[0].mxu0
      %1627 = vmatprep.mubr.f32.mxu0 0.0
      %1628 = vmatmul.mubr.f32.gmra.mrb[0].mxu0 %v940
      %v1629 = vpop.f32.mrb[0].mxu0
      %v1630 = vadd.f32 %v648, %v1629
      %v1631 = vpop.f32.mrb[0].mxu0
      %1632 = vmatprep.mubr.f32.mxu0 0.0
      %1633 = vmatmul.mubr.f32.gmra.mrb[0].mxu0 %v943
      %v1634 = vpop.f32.mrb[0].mxu0
      %v1635 = vadd.f32 %v648, %v1634
      %v1636 = vpop.f32.mrb[0].mxu0
      %1637 = vmatprep.mubr.f32.mxu0 0.0
      %1638 = vmatmul.mubr.f32.gmra.mrb[0].mxu0 %v946
      %v1639 = vpop.f32.mrb[0].mxu0
      %v1640 = vadd.f32 %v648, %v1639
      %v1641 = vpop.f32.mrb[0].mxu0
      %1642 = vmatprep.mubr.f32.mxu0 0.0
      %1643 = vmatmul.mubr.f32.gmra.mrb[0].mxu0 %v949
      %v1644 = vpop.f32.mrb[0].mxu0
      %v1645 = vadd.f32 %v648, %v1644
      %v1646 = vpop.f32.mrb[0].mxu0
      %1647 = vmatprep.mubr.f32.mxu0 0.0
      %1648 = vmatmul.mubr.f32.gmra.mrb[0].mxu0 %v952
      %v1649 = vpop.f32.mrb[0].mxu0
      %v1650 = vadd.f32 %v648, %v1649
      %v1651 = vpop.f32.mrb[0].mxu0
      %1652 = vmatprep.mubr.f32.mxu0 0.0
      %1653 = vmatmul.mubr.f32.gmra.mrb[0].mxu0 %v955
      %v1654 = vpop.f32.mrb[0].mxu0
      %v1655 = vadd.f32 %v648, %v1654
      %v1656 = vpop.f32.mrb[0].mxu0
      %1657 = vmatprep.mubr.f32.mxu0 0.0
      %1658 = vmatmul.mubr.f32.gmra.mrb[0].mxu0 %v958
      %v1659 = vpop.f32.mrb[0].mxu0
      %v1660 = vadd.f32 %v648, %v1659
      %v1661 = vpop.f32.mrb[0].mxu0
      %1662 = vmatprep.mubr.f32.mxu0 0.0
      %1663 = vmatmul.mubr.f32.gmra.mrb[0].mxu0 %v961
      %v1664 = vpop.f32.mrb[0].mxu0
      %v1665 = vadd.f32 %v648, %v1664
      %v1666 = vpop.f32.mrb[0].mxu0
      %1667 = vmatprep.mubr.f32.mxu0 0.0
      %1668 = vmatmul.mubr.f32.gmra.mrb[0].mxu0 %v964
      %v1669 = vpop.f32.mrb[0].mxu0
      %v1670 = vadd.f32 %v648, %v1669
      %v1671 = vpop.f32.mrb[0].mxu0
      %1672 = vmatprep.mubr.f32.mxu0 0.0
      %1673 = vmatmul.mubr.f32.gmra.mrb[0].mxu0 %v967
      %v1674 = vpop.f32.mrb[0].mxu0
      %v1675 = vadd.f32 %v648, %v1674
      %v1676 = vpop.f32.mrb[0].mxu0
      %1677 = vmatprep.mubr.f32.mxu0 0.0
      %1678 = vmatmul.mubr.f32.gmra.mrb[0].mxu0 %v970
      %v1679 = vpop.f32.mrb[0].mxu0
      %v1680 = vadd.f32 %v648, %v1679
      %v1681 = vpop.f32.mrb[0].mxu0
      %1682 = vmatprep.mubr.f32.mxu0 0.0
      %1683 = vmatmul.mubr.f32.gmra.mrb[0].mxu0 %v973
      %v1684 = vpop.f32.mrb[0].mxu0
      %v1685 = vadd.f32 %v648, %v1684
      %v1686 = vpop.f32.mrb[0].mxu0
      %1687 = vmatprep.mubr.f32.mxu0 0.0
      %1688 = vmatmul.mubr.f32.gmra.mrb[0].mxu0 %v976
      %v1689 = vpop.f32.mrb[0].mxu0
      %v1690 = vadd.f32 %v648, %v1689
      %v1691 = vpop.f32.mrb[0].mxu0
      %1692 = vmatprep.mubr.f32.mxu0 0.0
      %1693 = vmatmul.mubr.f32.gmra.mrb[0].mxu0 %v979
      %v1694 = vpop.f32.mrb[0].mxu0
      %v1695 = vadd.f32 %v648, %v1694
      %v1696 = vpop.f32.mrb[0].mxu0
      %1697 = vmatprep.mubr.f32.mxu0 0.0
      %1698 = vmatmul.mubr.f32.gmra.mrb[0].mxu0 %v982
      %v1699 = vpop.f32.mrb[0].mxu0
      %v1700 = vadd.f32 %v648, %v1699
      %v1701 = vpop.f32.mrb[0].mxu0
      %1702 = vmatprep.mubr.f32.mxu0 0.0
      %1703 = vmatmul.mubr.f32.gmra.mrb[0].mxu0 %v985
      %v1704 = vpop.f32.mrb[0].mxu0
      %v1705 = vadd.f32 %v648, %v1704
      %v1706 = vpop.f32.mrb[0].mxu0
      %1707 = vmatprep.mubr.f32.mxu0 0.0
      %1708 = vmatmul.mubr.f32.gmra.mrb[0].mxu0 %v988
      %v1709 = vpop.f32.mrb[0].mxu0
      %v1710 = vadd.f32 %v648, %v1709
      %v1711 = vpop.f32.mrb[0].mxu0
      %1712 = vmatprep.mubr.f32.mxu0 0.0
      %1713 = vmatmul.mubr.f32.gmra.mrb[0].mxu0 %v991
      %v1714 = vpop.f32.mrb[0].mxu0
      %v1715 = vadd.f32 %v648, %v1714
      %v1716 = vpop.f32.mrb[0].mxu0
      %1717 = vmatprep.mubr.f32.mxu0 0.0
      %1718 = vmatmul.mubr.f32.gmra.mrb[0].mxu0 %v994
      %v1719 = vpop.f32.mrb[0].mxu0
      %v1720 = vadd.f32 %v648, %v1719
      %v1721 = vpop.f32.mrb[0].mxu0
      %1722 = vmatprep.mubr.f32.mxu0 0.0
      %1723 = vmatmul.mubr.f32.gmra.mrb[0].mxu0 %v997
      %v1724 = vpop.f32.mrb[0].mxu0
      %v1725 = vadd.f32 %v648, %v1724
      %v1726 = vpop.f32.mrb[0].mxu0
      %1727 = vmatprep.mubr.f32.mxu0 0.0
      %1728 = vmatmul.mubr.f32.gmra.mrb[0].mxu0 %v1000
      %v1729 = vpop.f32.mrb[0].mxu0
      %v1730 = vadd.f32 %v648, %v1729
      %v1731 = vpop.f32.mrb[0].mxu0
      %1732 = vmatprep.mubr.f32.mxu0 0.0
      %1733 = vmatmul.mubr.f32.gmra.mrb[0].mxu0 %v1003
      %v1734 = vpop.f32.mrb[0].mxu0
      %v1735 = vadd.f32 %v648, %v1734
      %v1736 = vpop.f32.mrb[0].mxu0
      %1737 = vmatprep.mubr.f32.mxu0 0.0
      %1738 = vmatmul.mubr.f32.gmra.mrb[0].mxu0 %v1006
      %v1739 = vpop.f32.mrb[0].mxu0
      %v1740 = vadd.f32 %v648, %v1739
      %v1741 = vpop.f32.mrb[0].mxu0
      %1742 = vmatprep.mubr.f32.mxu0 0.0
      %1743 = vmatmul.mubr.f32.gmra.mrb[0].mxu0 %v1009
      %v1744 = vpop.f32.mrb[0].mxu0
      %v1745 = vadd.f32 %v648, %v1744
      %v1746 = vpop.f32.mrb[0].mxu0
      %1747 = vmatprep.mubr.f32.mxu0 0.0
      %1748 = vmatmul.mubr.f32.gmra.mrb[0].mxu0 %v1012
      %v1749 = vpop.f32.mrb[0].mxu0
      %v1750 = vadd.f32 %v648, %v1749
      %v1751 = vpop.f32.mrb[0].mxu0
      %1752 = vmatprep.mubr.f32.mxu0 0.0
      %1753 = vmatmul.mubr.f32.gmra.mrb[0].mxu0 %v1015
      %v1754 = vpop.f32.mrb[0].mxu0
      %v1755 = vadd.f32 %v648, %v1754
      %v1756 = vpop.f32.mrb[0].mxu0
      %1757 = vmatprep.mubr.f32.mxu0 0.0
      %1758 = vmatmul.mubr.f32.gmra.mrb[0].mxu0 %v1018
      %v1759 = vpop.f32.mrb[0].mxu0
      %v1760 = vadd.f32 %v648, %v1759
      %v1761 = vpop.f32.mrb[0].mxu0
      %1762 = vmatprep.mubr.f32.mxu0 0.0
      %1763 = vmatmul.mubr.f32.gmra.mrb[0].mxu0 %v1021
      %v1764 = vpop.f32.mrb[0].mxu0
      %v1765 = vadd.f32 %v648, %v1764
      %v1766 = vpop.f32.mrb[0].mxu0
      %1767 = vmatprep.mubr.f32.mxu0 0.0
      %1768 = vmatmul.mubr.f32.gmra.mrb[0].mxu0 %v1024
      %v1769 = vpop.f32.mrb[0].mxu0
      %v1770 = vadd.f32 %v648, %v1769
      %v1771 = vpop.f32.mrb[0].mxu0
      %1772 = vmatprep.mubr.f32.mxu0 0.0
      %1773 = vmatmul.mubr.f32.gmra.mrb[0].mxu0 %v1027
      %v1774 = vpop.f32.mrb[0].mxu0
      %v1775 = vadd.f32 %v648, %v1774
      %v1776 = vpop.f32.mrb[0].mxu0
      %1777 = vmatprep.mubr.f32.mxu0 0.0
      %1778 = vmatmul.mubr.f32.gmra.mrb[0].mxu0 %v1030
      %v1779 = vpop.f32.mrb[0].mxu0
      %v1780 = vadd.f32 %v648, %v1779
      %v1781 = vpop.f32.mrb[0].mxu0
      %1782 = vmatprep.mubr.f32.mxu0 0.0
      %1783 = vmatmul.mubr.f32.gmra.mrb[0].mxu0 %v1033
      %v1784 = vpop.f32.mrb[0].mxu0
      %v1785 = vadd.f32 %v648, %v1784
      %v1786 = vpop.f32.mrb[0].mxu0
      %1787 = vmatprep.mubr.f32.mxu0 0.0
      %1788 = vmatmul.mubr.f32.gmra.mrb[0].mxu0 %v1036
      %v1789 = vpop.f32.mrb[0].mxu0
      %v1790 = vadd.f32 %v648, %v1789
      %v1791 = vpop.f32.mrb[0].mxu0
      %1792 = vmatprep.mubr.f32.mxu0 0.0
      %1793 = vmatmul.mubr.f32.gmra.mrb[0].mxu0 %v1039
      %v1794 = vpop.f32.mrb[0].mxu0
      %v1795 = vadd.f32 %v648, %v1794
      %v1796 = vpop.f32.mrb[0].mxu0
      %1797 = vmatprep.mubr.f32.mxu0 0.0
      %1798 = vmatmul.mubr.f32.gmra.mrb[0].mxu0 %v1042
      %v1799 = vpop.f32.mrb[0].mxu0
      %v1800 = vadd.f32 %v648, %v1799
      %v1801 = vpop.f32.mrb[0].mxu0
      %1802 = vmatprep.mubr.f32.mxu0 0.0
      %1803 = vmatmul.mubr.f32.gmra.mrb[0].mxu0 %v1045
      %v1804 = vpop.f32.mrb[0].mxu0
      %v1805 = vadd.f32 %v648, %v1804
      %v1806 = vpop.f32.mrb[0].mxu0
      %1807 = vmatprep.mubr.f32.mxu0 0.0
      %1808 = vmatmul.mubr.f32.gmra.mrb[0].mxu0 %v1048
      %v1809 = vpop.f32.mrb[0].mxu0
      %v1810 = vadd.f32 %v648, %v1809
      %v1811 = vpop.f32.mrb[0].mxu0
      %1812 = vmatprep.mubr.f32.mxu0 0.0
      %1813 = vmatmul.mubr.f32.gmra.mrb[0].mxu0 %v1051
      %v1814 = vpop.f32.mrb[0].mxu0
      %v1815 = vadd.f32 %v648, %v1814
      %v1816 = vpop.f32.mrb[0].mxu0
      %1817 = vmatprep.mubr.f32.mxu0 0.0
      %1818 = vmatmul.mubr.f32.gmra.mrb[0].mxu0 %v1054
      %v1819 = vpop.f32.mrb[0].mxu0
      %v1820 = vadd.f32 %v648, %v1819
      %v1821 = vpop.f32.mrb[0].mxu0
      %1822 = vmatprep.mubr.f32.mxu0 0.0
      %1823 = vmatmul.mubr.f32.gmra.mrb[0].mxu0 %v1057
      %v1824 = vpop.f32.mrb[0].mxu0
      %v1825 = vadd.f32 %v648, %v1824
      %v1826 = vpop.f32.mrb[0].mxu0
      %1827 = vdwg.mxu0
      %vm1828 = vcmask 523264
      %1829 = vst.msk [vmem:[#allocation2 + $0x1] sm:$0xff] %vm1828, %v1150
      %1830 = vst.msk [vmem:[#allocation2 + $0x9] sm:$0xff] %vm1828, %v1155
      %1831 = vst.msk [vmem:[#allocation2 + $0x11] sm:$0xff] %vm1828, %v1160
      %1832 = vst.msk [vmem:[#allocation2 + $0x19] sm:$0xff] %vm1828, %v1165
      %1833 = vst.msk [vmem:[#allocation2 + $0x29] sm:$0xff] %vm1828, %v1170
      %1834 = vst.msk [vmem:[#allocation2 + $0x31] sm:$0xff] %vm1828, %v1175
      %1835 = vst.msk [vmem:[#allocation2 + $0x39] sm:$0xff] %vm1828, %v1180
      %1836 = vst.msk [vmem:[#allocation2 + $0x41] sm:$0xff] %vm1828, %v1185
      %1837 = vst.msk [vmem:[#allocation2 + $0x51] sm:$0xff] %vm1828, %v1190
      %1838 = vst.msk [vmem:[#allocation2 + $0x59] sm:$0xff] %vm1828, %v1195
      %1839 = vst.msk [vmem:[#allocation2 + $0x61] sm:$0xff] %vm1828, %v1200
      %1840 = vst.msk [vmem:[#allocation2 + $0x69] sm:$0xff] %vm1828, %v1205
      %1841 = vst.msk [vmem:[#allocation2 + $0x79] sm:$0xff] %vm1828, %v1210
      %1842 = vst.msk [vmem:[#allocation2 + $0x81] sm:$0xff] %vm1828, %v1215
      %1843 = vst.msk [vmem:[#allocation2 + $0x89] sm:$0xff] %vm1828, %v1220
      %1844 = vst.msk [vmem:[#allocation2 + $0x91] sm:$0xff] %vm1828, %v1225
      %1845 = vst.msk [vmem:[#allocation2 + $0xa1] sm:$0xff] %vm1828, %v1230
      %1846 = vst.msk [vmem:[#allocation2 + $0xa9] sm:$0xff] %vm1828, %v1235
      %1847 = vst.msk [vmem:[#allocation2 + $0xb1] sm:$0xff] %vm1828, %v1240
      %1848 = vst.msk [vmem:[#allocation2 + $0xb9] sm:$0xff] %vm1828, %v1245
      %1849 = vst.msk [vmem:[#allocation2 + $0xc9] sm:$0xff] %vm1828, %v1250
      %1850 = vst.msk [vmem:[#allocation2 + $0xd1] sm:$0xff] %vm1828, %v1255
      %1851 = vst.msk [vmem:[#allocation2 + $0xd9] sm:$0xff] %vm1828, %v1260
      %1852 = vst.msk [vmem:[#allocation2 + $0xe1] sm:$0xff] %vm1828, %v1265
      %1853 = vst.msk [vmem:[#allocation2 + $0xf1] sm:$0xff] %vm1828, %v1270
      %1854 = vst.msk [vmem:[#allocation2 + $0xf9] sm:$0xff] %vm1828, %v1275
      %1855 = vst.msk [vmem:[#allocation2 + $0x101] sm:$0xff] %vm1828, %v1280
      %1856 = vst.msk [vmem:[#allocation2 + $0x109] sm:$0xff] %vm1828, %v1285
      %1857 = vst.msk [vmem:[#allocation2 + $0x119] sm:$0xff] %vm1828, %v1290
      %1858 = vst.msk [vmem:[#allocation2 + $0x121] sm:$0xff] %vm1828, %v1295
      %1859 = vst.msk [vmem:[#allocation2 + $0x129] sm:$0xff] %vm1828, %v1300
      %1860 = vst.msk [vmem:[#allocation2 + $0x131] sm:$0xff] %vm1828, %v1305
      %1861 = vst.msk [vmem:[#allocation2 + $0x141] sm:$0xff] %vm1828, %v1310
      %1862 = vst.msk [vmem:[#allocation2 + $0x149] sm:$0xff] %vm1828, %v1315
      %1863 = vst.msk [vmem:[#allocation2 + $0x151] sm:$0xff] %vm1828, %v1320
      %1864 = vst.msk [vmem:[#allocation2 + $0x159] sm:$0xff] %vm1828, %v1325
      %1865 = vst.msk [vmem:[#allocation2 + $0x169] sm:$0xff] %vm1828, %v1330
      %1866 = vst.msk [vmem:[#allocation2 + $0x171] sm:$0xff] %vm1828, %v1335
      %1867 = vst.msk [vmem:[#allocation2 + $0x179] sm:$0xff] %vm1828, %v1340
      %1868 = vst.msk [vmem:[#allocation2 + $0x181] sm:$0xff] %vm1828, %v1345
      %1869 = vst.msk [vmem:[#allocation2 + $0x191] sm:$0xff] %vm1828, %v1350
      %1870 = vst.msk [vmem:[#allocation2 + $0x199] sm:$0xff] %vm1828, %v1355
      %1871 = vst.msk [vmem:[#allocation2 + $0x1a1] sm:$0xff] %vm1828, %v1360
      %1872 = vst.msk [vmem:[#allocation2 + $0x1a9] sm:$0xff] %vm1828, %v1365
      %1873 = vst.msk [vmem:[#allocation2 + $0x1b9] sm:$0xff] %vm1828, %v1370
      %1874 = vst.msk [vmem:[#allocation2 + $0x1c1] sm:$0xff] %vm1828, %v1375
      %1875 = vst.msk [vmem:[#allocation2 + $0x1c9] sm:$0xff] %vm1828, %v1380
      %1876 = vst.msk [vmem:[#allocation2 + $0x1d1] sm:$0xff] %vm1828, %v1385
      %1877 = vst.msk [vmem:[#allocation2 + $0x1e1] sm:$0xff] %vm1828, %v1390
      %1878 = vst.msk [vmem:[#allocation2 + $0x1e9] sm:$0xff] %vm1828, %v1395
      %1879 = vst.msk [vmem:[#allocation2 + $0x1f1] sm:$0xff] %vm1828, %v1400
      %1880 = vst.msk [vmem:[#allocation2 + $0x1f9] sm:$0xff] %vm1828, %v1405
      %1881 = vst.msk [vmem:[#allocation2 + $0x209] sm:$0xff] %vm1828, %v1410
      %1882 = vst.msk [vmem:[#allocation2 + $0x211] sm:$0xff] %vm1828, %v1415
      %1883 = vst.msk [vmem:[#allocation2 + $0x219] sm:$0xff] %vm1828, %v1420
      %1884 = vst.msk [vmem:[#allocation2 + $0x221] sm:$0xff] %vm1828, %v1425
      %1885 = vst.msk [vmem:[#allocation2 + $0x231] sm:$0xff] %vm1828, %v1430
      %1886 = vst.msk [vmem:[#allocation2 + $0x239] sm:$0xff] %vm1828, %v1435
      %1887 = vst.msk [vmem:[#allocation2 + $0x241] sm:$0xff] %vm1828, %v1440
      %1888 = vst.msk [vmem:[#allocation2 + $0x249] sm:$0xff] %vm1828, %v1445
      %1889 = vst.msk [vmem:[#allocation2 + $0x259] sm:$0xff] %vm1828, %v1450
      %1890 = vst.msk [vmem:[#allocation2 + $0x261] sm:$0xff] %vm1828, %v1455
      %1891 = vst.msk [vmem:[#allocation2 + $0x269] sm:$0xff] %vm1828, %v1460
      %1892 = vst.msk [vmem:[#allocation2 + $0x271] sm:$0xff] %vm1828, %v1465
      %1893 = vst.msk [vmem:[#allocation2 + $0x281] sm:$0xff] %vm1828, %v1470
      %1894 = vst.msk [vmem:[#allocation2 + $0x289] sm:$0xff] %vm1828, %v1475
      %1895 = vst.msk [vmem:[#allocation2 + $0x291] sm:$0xff] %vm1828, %v1480
      %1896 = vst.msk [vmem:[#allocation2 + $0x299] sm:$0xff] %vm1828, %v1485
      %1897 = vst.msk [vmem:[#allocation2 + $0x2a9] sm:$0xff] %vm1828, %v1490
      %1898 = vst.msk [vmem:[#allocation2 + $0x2b1] sm:$0xff] %vm1828, %v1495
      %1899 = vst.msk [vmem:[#allocation2 + $0x2b9] sm:$0xff] %vm1828, %v1500
      %1900 = vst.msk [vmem:[#allocation2 + $0x2c1] sm:$0xff] %vm1828, %v1505
      %1901 = vst.msk [vmem:[#allocation2 + $0x2d1] sm:$0xff] %vm1828, %v1510
      %1902 = vst.msk [vmem:[#allocation2 + $0x2d9] sm:$0xff] %vm1828, %v1515
      %1903 = vst.msk [vmem:[#allocation2 + $0x2e1] sm:$0xff] %vm1828, %v1520
      %1904 = vst.msk [vmem:[#allocation2 + $0x2e9] sm:$0xff] %vm1828, %v1525
      %1905 = vst.msk [vmem:[#allocation2 + $0x2f9] sm:$0xff] %vm1828, %v1530
      %1906 = vst.msk [vmem:[#allocation2 + $0x301] sm:$0xff] %vm1828, %v1535
      %1907 = vst.msk [vmem:[#allocation2 + $0x309] sm:$0xff] %vm1828, %v1540
      %1908 = vst.msk [vmem:[#allocation2 + $0x311] sm:$0xff] %vm1828, %v1545
      %1909 = vst.msk [vmem:[#allocation2 + $0x321] sm:$0xff] %vm1828, %v1550
      %1910 = vst.msk [vmem:[#allocation2 + $0x329] sm:$0xff] %vm1828, %v1555
      %1911 = vst.msk [vmem:[#allocation2 + $0x331] sm:$0xff] %vm1828, %v1560
      %1912 = vst.msk [vmem:[#allocation2 + $0x339] sm:$0xff] %vm1828, %v1565
      %1913 = vst.msk [vmem:[#allocation2 + $0x349] sm:$0xff] %vm1828, %v1570
      %1914 = vst.msk [vmem:[#allocation2 + $0x351] sm:$0xff] %vm1828, %v1575
      %1915 = vst.msk [vmem:[#allocation2 + $0x359] sm:$0xff] %vm1828, %v1580
      %1916 = vst.msk [vmem:[#allocation2 + $0x361] sm:$0xff] %vm1828, %v1585
      %1917 = vst.msk [vmem:[#allocation2 + $0x371] sm:$0xff] %vm1828, %v1590
      %1918 = vst.msk [vmem:[#allocation2 + $0x379] sm:$0xff] %vm1828, %v1595
      %1919 = vst.msk [vmem:[#allocation2 + $0x381] sm:$0xff] %vm1828, %v1600
      %1920 = vst.msk [vmem:[#allocation2 + $0x389] sm:$0xff] %vm1828, %v1605
      %1921 = vst.msk [vmem:[#allocation2 + $0x399] sm:$0xff] %vm1828, %v1610
      %1922 = vst.msk [vmem:[#allocation2 + $0x3a1] sm:$0xff] %vm1828, %v1615
      %1923 = vst.msk [vmem:[#allocation2 + $0x3a9] sm:$0xff] %vm1828, %v1620
      %1924 = vst.msk [vmem:[#allocation2 + $0x3b1] sm:$0xff] %vm1828, %v1625
      %1925 = vst.msk [vmem:[#allocation2 + $0x3c1] sm:$0xff] %vm1828, %v1630
      %1926 = vst.msk [vmem:[#allocation2 + $0x3c9] sm:$0xff] %vm1828, %v1635
      %1927 = vst.msk [vmem:[#allocation2 + $0x3d1] sm:$0xff] %vm1828, %v1640
      %1928 = vst.msk [vmem:[#allocation2 + $0x3d9] sm:$0xff] %vm1828, %v1645
      %1929 = vst.msk [vmem:[#allocation2 + $0x3e9] sm:$0xff] %vm1828, %v1650
      %1930 = vst.msk [vmem:[#allocation2 + $0x3f1] sm:$0xff] %vm1828, %v1655
      %1931 = vst.msk [vmem:[#allocation2 + $0x3f9] sm:$0xff] %vm1828, %v1660
      %1932 = vst.msk [vmem:[#allocation2 + $0x401] sm:$0xff] %vm1828, %v1665
      %1933 = vst.msk [vmem:[#allocation2 + $0x411] sm:$0xff] %vm1828, %v1670
      %1934 = vst.msk [vmem:[#allocation2 + $0x419] sm:$0xff] %vm1828, %v1675
      %1935 = vst.msk [vmem:[#allocation2 + $0x421] sm:$0xff] %vm1828, %v1680
      %1936 = vst.msk [vmem:[#allocation2 + $0x429] sm:$0xff] %vm1828, %v1685
      %1937 = vst.msk [vmem:[#allocation2 + $0x439] sm:$0xff] %vm1828, %v1690
      %1938 = vst.msk [vmem:[#allocation2 + $0x441] sm:$0xff] %vm1828, %v1695
      %1939 = vst.msk [vmem:[#allocation2 + $0x449] sm:$0xff] %vm1828, %v1700
      %1940 = vst.msk [vmem:[#allocation2 + $0x451] sm:$0xff] %vm1828, %v1705
      %1941 = vst.msk [vmem:[#allocation2 + $0x461] sm:$0xff] %vm1828, %v1710
      %1942 = vst.msk [vmem:[#allocation2 + $0x469] sm:$0xff] %vm1828, %v1715
      %1943 = vst.msk [vmem:[#allocation2 + $0x471] sm:$0xff] %vm1828, %v1720
      %1944 = vst.msk [vmem:[#allocation2 + $0x479] sm:$0xff] %vm1828, %v1725
      %1945 = vst.msk [vmem:[#allocation2 + $0x489] sm:$0xff] %vm1828, %v1730
      %1946 = vst.msk [vmem:[#allocation2 + $0x491] sm:$0xff] %vm1828, %v1735
      %1947 = vst.msk [vmem:[#allocation2 + $0x499] sm:$0xff] %vm1828, %v1740
      %1948 = vst.msk [vmem:[#allocation2 + $0x4a1] sm:$0xff] %vm1828, %v1745
      %1949 = vst.msk [vmem:[#allocation2 + $0x4b1] sm:$0xff] %vm1828, %v1750
      %1950 = vst.msk [vmem:[#allocation2 + $0x4b9] sm:$0xff] %vm1828, %v1755
      %1951 = vst.msk [vmem:[#allocation2 + $0x4c1] sm:$0xff] %vm1828, %v1760
      %1952 = vst.msk [vmem:[#allocation2 + $0x4c9] sm:$0xff] %vm1828, %v1765
      %1953 = vst.msk [vmem:[#allocation2 + $0x4d9] sm:$0xff] %vm1828, %v1770
      %1954 = vst.msk [vmem:[#allocation2 + $0x4e1] sm:$0xff] %vm1828, %v1775
      %1955 = vst.msk [vmem:[#allocation2 + $0x4e9] sm:$0xff] %vm1828, %v1780
      %1956 = vst.msk [vmem:[#allocation2 + $0x4f1] sm:$0xff] %vm1828, %v1785
      %1957 = vst.msk [vmem:[#allocation2 + $0x501] sm:$0xff] %vm1828, %v1790
      %1958 = vst.msk [vmem:[#allocation2 + $0x509] sm:$0xff] %vm1828, %v1795
      %1959 = vst.msk [vmem:[#allocation2 + $0x511] sm:$0xff] %vm1828, %v1800
      %1960 = vst.msk [vmem:[#allocation2 + $0x519] sm:$0xff] %vm1828, %v1805
      %1961 = vst.msk [vmem:[#allocation2 + $0x529] sm:$0xff] %vm1828, %v1810
      %1962 = vst.msk [vmem:[#allocation2 + $0x531] sm:$0xff] %vm1828, %v1815
      %1963 = vst.msk [vmem:[#allocation2 + $0x539] sm:$0xff] %vm1828, %v1820
      %1964 = vst.msk [vmem:[#allocation2 + $0x541] sm:$0xff] %vm1828, %v1825
      %vm1965 = vcmask 516096
      %1966 = vst.msk [vmem:[#allocation2] sm:$0x1] %vm1965, 0.0
      %1967 = vst.msk [vmem:[#allocation2 + $0x28] sm:$0x1] %vm1965, 0.0
      %1968 = vst.msk [vmem:[#allocation2 + $0x50] sm:$0x1] %vm1965, 0.0
      %1969 = vst.msk [vmem:[#allocation2 + $0x78] sm:$0x1] %vm1965, 0.0
      %1970 = vst.msk [vmem:[#allocation2 + $0xa0] sm:$0x1] %vm1965, 0.0
      %1971 = vst.msk [vmem:[#allocation2 + $0xc8] sm:$0x1] %vm1965, 0.0
      %1972 = vst.msk [vmem:[#allocation2 + $0xf0] sm:$0x1] %vm1965, 0.0
      %1973 = vst.msk [vmem:[#allocation2 + $0x118] sm:$0x1] %vm1965, 0.0
      %1974 = vst.msk [vmem:[#allocation2 + $0x140] sm:$0x1] %vm1965, 0.0
      %1975 = vst.msk [vmem:[#allocation2 + $0x168] sm:$0x1] %vm1965, 0.0
      %1976 = vst.msk [vmem:[#allocation2 + $0x190] sm:$0x1] %vm1965, 0.0
      %1977 = vst.msk [vmem:[#allocation2 + $0x1b8] sm:$0x1] %vm1965, 0.0
      %1978 = vst.msk [vmem:[#allocation2 + $0x1e0] sm:$0x1] %vm1965, 0.0
      %1979 = vst.msk [vmem:[#allocation2 + $0x208] sm:$0x1] %vm1965, 0.0
      %1980 = vst.msk [vmem:[#allocation2 + $0x230] sm:$0x1] %vm1965, 0.0
      %1981 = vst.msk [vmem:[#allocation2 + $0x258] sm:$0x1] %vm1965, 0.0
      %1982 = vst.msk [vmem:[#allocation2 + $0x280] sm:$0x1] %vm1965, 0.0
      %1983 = vst.msk [vmem:[#allocation2 + $0x2a8] sm:$0x1] %vm1965, 0.0
      %1984 = vst.msk [vmem:[#allocation2 + $0x2d0] sm:$0x1] %vm1965, 0.0
      %1985 = vst.msk [vmem:[#allocation2 + $0x2f8] sm:$0x1] %vm1965, 0.0
      %1986 = vst.msk [vmem:[#allocation2 + $0x320] sm:$0x1] %vm1965, 0.0
      %1987 = vst.msk [vmem:[#allocation2 + $0x348] sm:$0x1] %vm1965, 0.0
      %1988 = vst.msk [vmem:[#allocation2 + $0x370] sm:$0x1] %vm1965, 0.0
      %1989 = vst.msk [vmem:[#allocation2 + $0x398] sm:$0x1] %vm1965, 0.0
      %1990 = vst.msk [vmem:[#allocation2 + $0x3c0] sm:$0x1] %vm1965, 0.0
      %1991 = vst.msk [vmem:[#allocation2 + $0x3e8] sm:$0x1] %vm1965, 0.0
      %1992 = vst.msk [vmem:[#allocation2 + $0x410] sm:$0x1] %vm1965, 0.0
      %1993 = vst.msk [vmem:[#allocation2 + $0x438] sm:$0x1] %vm1965, 0.0
      %1994 = vst.msk [vmem:[#allocation2 + $0x460] sm:$0x1] %vm1965, 0.0
      %1995 = vst.msk [vmem:[#allocation2 + $0x488] sm:$0x1] %vm1965, 0.0
      %1996 = vst.msk [vmem:[#allocation2 + $0x4b0] sm:$0x1] %vm1965, 0.0
      %1997 = vst.msk [vmem:[#allocation2 + $0x4d8] sm:$0x1] %vm1965, 0.0
      %1998 = vst.msk [vmem:[#allocation2 + $0x500] sm:$0x1] %vm1965, 0.0
      %1999 = vst.msk [vmem:[#allocation2 + $0x528] sm:$0x1] %vm1965, 0.0
      %2000 = vst.msk [vmem:[#allocation2 + $0x21] sm:$0x1] %vm1965, 0.0
      %2001 = vst.msk [vmem:[#allocation2 + $0x49] sm:$0x1] %vm1965, 0.0
      %2002 = vst.msk [vmem:[#allocation2 + $0x71] sm:$0x1] %vm1965, 0.0
      %2003 = vst.msk [vmem:[#allocation2 + $0x99] sm:$0x1] %vm1965, 0.0
      %2004 = vst.msk [vmem:[#allocation2 + $0xc1] sm:$0x1] %vm1965, 0.0
      %2005 = vst.msk [vmem:[#allocation2 + $0xe9] sm:$0x1] %vm1965, 0.0
      %2006 = vst.msk [vmem:[#allocation2 + $0x111] sm:$0x1] %vm1965, 0.0
      %2007 = vst.msk [vmem:[#allocation2 + $0x139] sm:$0x1] %vm1965, 0.0
      %2008 = vst.msk [vmem:[#allocation2 + $0x161] sm:$0x1] %vm1965, 0.0
      %2009 = vst.msk [vmem:[#allocation2 + $0x189] sm:$0x1] %vm1965, 0.0
      %2010 = vst.msk [vmem:[#allocation2 + $0x1b1] sm:$0x1] %vm1965, 0.0
      %2011 = vst.msk [vmem:[#allocation2 + $0x1d9] sm:$0x1] %vm1965, 0.0
      %2012 = vst.msk [vmem:[#allocation2 + $0x201] sm:$0x1] %vm1965, 0.0
      %2013 = vst.msk [vmem:[#allocation2 + $0x229] sm:$0x1] %vm1965, 0.0
      %2014 = vst.msk [vmem:[#allocation2 + $0x251] sm:$0x1] %vm1965, 0.0
      %2015 = vst.msk [vmem:[#allocation2 + $0x279] sm:$0x1] %vm1965, 0.0
      %2016 = vst.msk [vmem:[#allocation2 + $0x2a1] sm:$0x1] %vm1965, 0.0
      %2017 = vst.msk [vmem:[#allocation2 + $0x2c9] sm:$0x1] %vm1965, 0.0
      %2018 = vst.msk [vmem:[#allocation2 + $0x2f1] sm:$0x1] %vm1965, 0.0
      %2019 = vst.msk [vmem:[#allocation2 + $0x319] sm:$0x1] %vm1965, 0.0
      %2020 = vst.msk [vmem:[#allocation2 + $0x341] sm:$0x1] %vm1965, 0.0
      %2021 = vst.msk [vmem:[#allocation2 + $0x369] sm:$0x1] %vm1965, 0.0
      %2022 = vst.msk [vmem:[#allocation2 + $0x391] sm:$0x1] %vm1965, 0.0
      %2023 = vst.msk [vmem:[#allocation2 + $0x3b9] sm:$0x1] %vm1965, 0.0
      %2024 = vst.msk [vmem:[#allocation2 + $0x3e1] sm:$0x1] %vm1965, 0.0
      %2025 = vst.msk [vmem:[#allocation2 + $0x409] sm:$0x1] %vm1965, 0.0
      %2026 = vst.msk [vmem:[#allocation2 + $0x431] sm:$0x1] %vm1965, 0.0
      %2027 = vst.msk [vmem:[#allocation2 + $0x459] sm:$0x1] %vm1965, 0.0
      %2028 = vst.msk [vmem:[#allocation2 + $0x481] sm:$0x1] %vm1965, 0.0
      %2029 = vst.msk [vmem:[#allocation2 + $0x4a9] sm:$0x1] %vm1965, 0.0
      %2030 = vst.msk [vmem:[#allocation2 + $0x4d1] sm:$0x1] %vm1965, 0.0
      %2031 = vst.msk [vmem:[#allocation2 + $0x4f9] sm:$0x1] %vm1965, 0.0
      %2032 = vst.msk [vmem:[#allocation2 + $0x521] sm:$0x1] %vm1965, 0.0
      %2033 = vst.msk [vmem:[#allocation2 + $0x549] sm:$0x1] %vm1965, 0.0
      %p2034 = scmp.eq.s32.totalorder %s25, 0
      // Predicated region
      $region57: #{feed_forward.1} parent=55 // pred_check
        %p2035 = pneg %p2034
      $region58: #{feed_forward.1} parent=55 // pred_check_branch
        %2037 = sbr.rel (%p2035) target = $region60
      $region59: #{feed_forward.1} parent=55 // pred_region
        %2038 = vst.msk [vmem:[#allocation2] sm:$0xff] %vm1828, 0.0
        %2039 = vst.msk [vmem:[#allocation2 + $0x8] sm:$0xff] %vm1828, 0.0
        %2040 = vst.msk [vmem:[#allocation2 + $0x10] sm:$0xff] %vm1828, 0.0
        %2041 = vst.msk [vmem:[#allocation2 + $0x18] sm:$0xff] %vm1828, 0.0
        %2042 = vst.msk [vmem:[#allocation2 + $0x20] sm:$0xff] %vm1828, 0.0
        %s2043 = scalar_lea.vmem [#allocation2], 1320
        %2044 = vst.msk [vmem:[%s2043] sm:$0xff] %vm1828, 0.0
        %2045 = vst.msk [vmem:[%s2043 + $0x8] sm:$0xff] %vm1828, 0.0
        %2046 = vst.msk [vmem:[%s2043 + $0x10] sm:$0xff] %vm1828, 0.0
        %2047 = vst.msk [vmem:[%s2043 + $0x18] sm:$0xff] %vm1828, 0.0
        %2048 = vst.msk [vmem:[%s2043 + $0x20] sm:$0xff] %vm1828, 0.0
      $region60: #{feed_forward.1} parent=55 // pred_fallthru
        _
      %v2049 = vld [vmem:[%s5] sm:$0x7]
      %v2050 = vld [vmem:[%s5 + $0x4] sm:$0x7]
      %v2051 = vld [vmem:[%s5 + $0x8] sm:$0x7]
      %v2052 = vld [vmem:[%s7] sm:$0xff]
      %v2053 = vld [vmem:[%s7 + $0x8] sm:$0xff]
      %v2054 = vld [vmem:[%s8] sm:$0xff]
      %v2055 = vld [vmem:[%s8 + $0x8] sm:$0xff]
      %v2056 = vld [vmem:[%s6] sm:$0x1]
      %v2058 = vlaneseq
      %v2059 = vshrl.u32 %v2058, 7
      %v2060 = vsub.s32 0, %v2059
      %v2061 = vrot.slane %v2056, %v2060
      %v2063 = vadd.f32 %v2061, 0.0
      %v2064 = vld [vmem:[#allocation2] sm:$0xff]
      %v2065 = vld [vmem:[#allocation2 + $0x8] sm:$0xff]
      %v2066 = vld [vmem:[#allocation2 + $0x10] sm:$0xff]
      %v2067 = vld [vmem:[#allocation2 + $0x18] sm:$0xff]
      %v2068 = vld [vmem:[#allocation2 + $0x28] sm:$0xff]
      %v2069 = vld [vmem:[#allocation2 + $0x30] sm:$0xff]
      %v2070 = vld [vmem:[#allocation2 + $0x38] sm:$0xff]
      %v2071 = vld [vmem:[#allocation2 + $0x40] sm:$0xff]
      %v2072 = vld [vmem:[#allocation2 + $0x50] sm:$0xff]
      %v2073 = vld [vmem:[#allocation2 + $0x58] sm:$0xff]
      %v2074 = vld [vmem:[#allocation2 + $0x60] sm:$0xff]
      %v2075 = vld [vmem:[#allocation2 + $0x68] sm:$0xff]
      %v2076 = vld [vmem:[#allocation2 + $0x78] sm:$0xff]
      %v2077 = vld [vmem:[#allocation2 + $0x80] sm:$0xff]
      %v2078 = vld [vmem:[#allocation2 + $0x88] sm:$0xff]
      %v2079 = vld [vmem:[#allocation2 + $0x90] sm:$0xff]
      %v2080 = vlaneseq
      %v2081 = vshrl.u32 %v2080, 7
      %v2082 = vsub.s32 0, %v2081
      %v2083 = vrot.slane %v2049, %v2082
      %v2084 = vmul.f32 %v2064, %v2083
      %v2085 = vmul.f32 %v2065, %v2083
      %v2086 = vmul.f32 %v2066, %v2083
      %v2087 = vmul.f32 %v2067, %v2083
      %v2088 = vmul.f32 %v2068, %v2083
      %v2089 = vmul.f32 %v2069, %v2083
      %v2090 = vmul.f32 %v2070, %v2083
      %v2091 = vmul.f32 %v2071, %v2083
      %v2092 = vmul.f32 %v2072, %v2083
      %v2093 = vmul.f32 %v2073, %v2083
      %v2094 = vmul.f32 %v2074, %v2083
      %v2095 = vmul.f32 %v2075, %v2083
      %v2096 = vmul.f32 %v2076, %v2083
      %v2097 = vmul.f32 %v2077, %v2083
      %v2098 = vmul.f32 %v2078, %v2083
      %v2099 = vmul.f32 %v2079, %v2083
      %v2100 = vadd.f32 %v2063, %v2084
      %v2101 = vadd.f32 %v2063, %v2085
      %v2102 = vadd.f32 %v2063, %v2086
      %v2103 = vadd.f32 %v2063, %v2087
      %v2104 = vadd.f32 %v2063, %v2088
      %v2105 = vadd.f32 %v2063, %v2089
      %v2106 = vadd.f32 %v2063, %v2090
      %v2107 = vadd.f32 %v2063, %v2091
      %v2108 = vadd.f32 %v2063, %v2092
      %v2109 = vadd.f32 %v2063, %v2093
      %v2110 = vadd.f32 %v2063, %v2094
      %v2111 = vadd.f32 %v2063, %v2095
      %v2112 = vadd.f32 %v2063, %v2096
      %v2113 = vadd.f32 %v2063, %v2097
      %v2114 = vadd.f32 %v2063, %v2098
      %v2115 = vadd.f32 %v2063, %v2099
      %v2116 = vld [vmem:[#allocation2 + $0x1] sm:$0xff]
      %v2117 = vld [vmem:[#allocation2 + $0x9] sm:$0xff]
      %v2118 = vld [vmem:[#allocation2 + $0x11] sm:$0xff]
      %v2119 = vld [vmem:[#allocation2 + $0x19] sm:$0xff]
      %v2120 = vld [vmem:[#allocation2 + $0x29] sm:$0xff]
      %v2121 = vld [vmem:[#allocation2 + $0x31] sm:$0xff]
      %v2122 = vld [vmem:[#allocation2 + $0x39] sm:$0xff]
      %v2123 = vld [vmem:[#allocation2 + $0x41] sm:$0xff]
      %v2124 = vld [vmem:[#allocation2 + $0x51] sm:$0xff]
      %v2125 = vld [vmem:[#allocation2 + $0x59] sm:$0xff]
      %v2126 = vld [vmem:[#allocation2 + $0x61] sm:$0xff]
      %v2127 = vld [vmem:[#allocation2 + $0x69] sm:$0xff]
      %v2128 = vld [vmem:[#allocation2 + $0x79] sm:$0xff]
      %v2129 = vld [vmem:[#allocation2 + $0x81] sm:$0xff]
      %v2130 = vld [vmem:[#allocation2 + $0x89] sm:$0xff]
      %v2131 = vld [vmem:[#allocation2 + $0x91] sm:$0xff]
      %v2132 = vlaneseq
      %v2133 = vshrl.u32 %v2132, 7
      %v2134 = vsub.s32 1, %v2133
      %v2135 = vrot.slane %v2049, %v2134
      %v2136 = vmul.f32 %v2116, %v2135
      %v2137 = vmul.f32 %v2117, %v2135
      %v2138 = vmul.f32 %v2118, %v2135
      %v2139 = vmul.f32 %v2119, %v2135
      %v2140 = vmul.f32 %v2120, %v2135
      %v2141 = vmul.f32 %v2121, %v2135
      %v2142 = vmul.f32 %v2122, %v2135
      %v2143 = vmul.f32 %v2123, %v2135
      %v2144 = vmul.f32 %v2124, %v2135
      %v2145 = vmul.f32 %v2125, %v2135
      %v2146 = vmul.f32 %v2126, %v2135
      %v2147 = vmul.f32 %v2127, %v2135
      %v2148 = vmul.f32 %v2128, %v2135
      %v2149 = vmul.f32 %v2129, %v2135
      %v2150 = vmul.f32 %v2130, %v2135
      %v2151 = vmul.f32 %v2131, %v2135
      %v2152 = vadd.f32 %v2100, %v2136
      %v2153 = vadd.f32 %v2101, %v2137
      %v2154 = vadd.f32 %v2102, %v2138
      %v2155 = vadd.f32 %v2103, %v2139
      %v2156 = vadd.f32 %v2104, %v2140
      %v2157 = vadd.f32 %v2105, %v2141
      %v2158 = vadd.f32 %v2106, %v2142
      %v2159 = vadd.f32 %v2107, %v2143
      %v2160 = vadd.f32 %v2108, %v2144
      %v2161 = vadd.f32 %v2109, %v2145
      %v2162 = vadd.f32 %v2110, %v2146
      %v2163 = vadd.f32 %v2111, %v2147
      %v2164 = vadd.f32 %v2112, %v2148
      %v2165 = vadd.f32 %v2113, %v2149
      %v2166 = vadd.f32 %v2114, %v2150
      %v2167 = vadd.f32 %v2115, %v2151
      %v2168 = vld [vmem:[#allocation2 + $0x2] sm:$0xff]
      %v2169 = vld [vmem:[#allocation2 + $0xa] sm:$0xff]
      %v2170 = vld [vmem:[#allocation2 + $0x12] sm:$0xff]
      %v2171 = vld [vmem:[#allocation2 + $0x1a] sm:$0xff]
      %v2172 = vld [vmem:[#allocation2 + $0x2a] sm:$0xff]
      %v2173 = vld [vmem:[#allocation2 + $0x32] sm:$0xff]
      %v2174 = vld [vmem:[#allocation2 + $0x3a] sm:$0xff]
      %v2175 = vld [vmem:[#allocation2 + $0x42] sm:$0xff]
      %v2176 = vld [vmem:[#allocation2 + $0x52] sm:$0xff]
      %v2177 = vld [vmem:[#allocation2 + $0x5a] sm:$0xff]
      %v2178 = vld [vmem:[#allocation2 + $0x62] sm:$0xff]
      %v2179 = vld [vmem:[#allocation2 + $0x6a] sm:$0xff]
      %v2180 = vld [vmem:[#allocation2 + $0x7a] sm:$0xff]
      %v2181 = vld [vmem:[#allocation2 + $0x82] sm:$0xff]
      %v2182 = vld [vmem:[#allocation2 + $0x8a] sm:$0xff]
      %v2183 = vld [vmem:[#allocation2 + $0x92] sm:$0xff]
      %v2184 = vlaneseq
      %v2185 = vshrl.u32 %v2184, 7
      %v2186 = vsub.s32 2, %v2185
      %v2187 = vrot.slane %v2049, %v2186
      %v2188 = vmul.f32 %v2168, %v2187
      %v2189 = vmul.f32 %v2169, %v2187
      %v2190 = vmul.f32 %v2170, %v2187
      %v2191 = vmul.f32 %v2171, %v2187
      %v2192 = vmul.f32 %v2172, %v2187
      %v2193 = vmul.f32 %v2173, %v2187
      %v2194 = vmul.f32 %v2174, %v2187
      %v2195 = vmul.f32 %v2175, %v2187
      %v2196 = vmul.f32 %v2176, %v2187
      %v2197 = vmul.f32 %v2177, %v2187
      %v2198 = vmul.f32 %v2178, %v2187
      %v2199 = vmul.f32 %v2179, %v2187
      %v2200 = vmul.f32 %v2180, %v2187
      %v2201 = vmul.f32 %v2181, %v2187
      %v2202 = vmul.f32 %v2182, %v2187
      %v2203 = vmul.f32 %v2183, %v2187
      %v2204 = vadd.f32 %v2152, %v2188
      %v2205 = vadd.f32 %v2153, %v2189
      %v2206 = vadd.f32 %v2154, %v2190
      %v2207 = vadd.f32 %v2155, %v2191
      %v2208 = vadd.f32 %v2156, %v2192
      %v2209 = vadd.f32 %v2157, %v2193
      %v2210 = vadd.f32 %v2158, %v2194
      %v2211 = vadd.f32 %v2159, %v2195
      %v2212 = vadd.f32 %v2160, %v2196
      %v2213 = vadd.f32 %v2161, %v2197
      %v2214 = vadd.f32 %v2162, %v2198
      %v2215 = vadd.f32 %v2163, %v2199
      %v2216 = vadd.f32 %v2164, %v2200
      %v2217 = vadd.f32 %v2165, %v2201
      %v2218 = vadd.f32 %v2166, %v2202
      %v2219 = vadd.f32 %v2167, %v2203
      %s2220 = scalar_lea.vmem [#allocation2], 40
      %v2221 = vld [vmem:[%s2220] sm:$0xff]
      %v2222 = vld [vmem:[%s2220 + $0x8] sm:$0xff]
      %v2223 = vld [vmem:[%s2220 + $0x10] sm:$0xff]
      %v2224 = vld [vmem:[%s2220 + $0x18] sm:$0xff]
      %v2225 = vld [vmem:[%s2220 + $0x28] sm:$0xff]
      %v2226 = vld [vmem:[%s2220 + $0x30] sm:$0xff]
      %v2227 = vld [vmem:[%s2220 + $0x38] sm:$0xff]
      %v2228 = vld [vmem:[%s2220 + $0x40] sm:$0xff]
      %v2229 = vld [vmem:[%s2220 + $0x50] sm:$0xff]
      %v2230 = vld [vmem:[%s2220 + $0x58] sm:$0xff]
      %v2231 = vld [vmem:[%s2220 + $0x60] sm:$0xff]
      %v2232 = vld [vmem:[%s2220 + $0x68] sm:$0xff]
      %v2233 = vld [vmem:[%s2220 + $0x78] sm:$0xff]
      %v2234 = vld [vmem:[%s2220 + $0x80] sm:$0xff]
      %v2235 = vld [vmem:[%s2220 + $0x88] sm:$0xff]
      %v2236 = vld [vmem:[%s2220 + $0x90] sm:$0xff]
      %v2237 = vlaneseq
      %v2238 = vshrl.u32 %v2237, 7
      %v2239 = vsub.s32 0, %v2238
      %v2240 = vrot.slane %v2050, %v2239
      %v2241 = vmul.f32 %v2221, %v2240
      %v2242 = vmul.f32 %v2222, %v2240
      %v2243 = vmul.f32 %v2223, %v2240
      %v2244 = vmul.f32 %v2224, %v2240
      %v2245 = vmul.f32 %v2225, %v2240
      %v2246 = vmul.f32 %v2226, %v2240
      %v2247 = vmul.f32 %v2227, %v2240
      %v2248 = vmul.f32 %v2228, %v2240
      %v2249 = vmul.f32 %v2229, %v2240
      %v2250 = vmul.f32 %v2230, %v2240
      %v2251 = vmul.f32 %v2231, %v2240
      %v2252 = vmul.f32 %v2232, %v2240
      %v2253 = vmul.f32 %v2233, %v2240
      %v2254 = vmul.f32 %v2234, %v2240
      %v2255 = vmul.f32 %v2235, %v2240
      %v2256 = vmul.f32 %v2236, %v2240
      %v2257 = vadd.f32 %v2204, %v2241
      %v2258 = vadd.f32 %v2205, %v2242
      %v2259 = vadd.f32 %v2206, %v2243
      %v2260 = vadd.f32 %v2207, %v2244
      %v2261 = vadd.f32 %v2208, %v2245
      %v2262 = vadd.f32 %v2209, %v2246
      %v2263 = vadd.f32 %v2210, %v2247
      %v2264 = vadd.f32 %v2211, %v2248
      %v2265 = vadd.f32 %v2212, %v2249
      %v2266 = vadd.f32 %v2213, %v2250
      %v2267 = vadd.f32 %v2214, %v2251
      %v2268 = vadd.f32 %v2215, %v2252
      %v2269 = vadd.f32 %v2216, %v2253
      %v2270 = vadd.f32 %v2217, %v2254
      %v2271 = vadd.f32 %v2218, %v2255
      %v2272 = vadd.f32 %v2219, %v2256
      %v2273 = vld [vmem:[%s2220 + $0x1] sm:$0xff]
      %v2274 = vld [vmem:[%s2220 + $0x9] sm:$0xff]
      %v2275 = vld [vmem:[%s2220 + $0x11] sm:$0xff]
      %v2276 = vld [vmem:[%s2220 + $0x19] sm:$0xff]
      %v2277 = vld [vmem:[%s2220 + $0x29] sm:$0xff]
      %v2278 = vld [vmem:[%s2220 + $0x31] sm:$0xff]
      %v2279 = vld [vmem:[%s2220 + $0x39] sm:$0xff]
      %v2280 = vld [vmem:[%s2220 + $0x41] sm:$0xff]
      %v2281 = vld [vmem:[%s2220 + $0x51] sm:$0xff]
      %v2282 = vld [vmem:[%s2220 + $0x59] sm:$0xff]
      %v2283 = vld [vmem:[%s2220 + $0x61] sm:$0xff]
      %v2284 = vld [vmem:[%s2220 + $0x69] sm:$0xff]
      %v2285 = vld [vmem:[%s2220 + $0x79] sm:$0xff]
      %v2286 = vld [vmem:[%s2220 + $0x81] sm:$0xff]
      %v2287 = vld [vmem:[%s2220 + $0x89] sm:$0xff]
      %v2288 = vld [vmem:[%s2220 + $0x91] sm:$0xff]
      %v2289 = vlaneseq
      %v2290 = vshrl.u32 %v2289, 7
      %v2291 = vsub.s32 1, %v2290
      %v2292 = vrot.slane %v2050, %v2291
      %v2293 = vmul.f32 %v2273, %v2292
      %v2294 = vmul.f32 %v2274, %v2292
      %v2295 = vmul.f32 %v2275, %v2292
      %v2296 = vmul.f32 %v2276, %v2292
      %v2297 = vmul.f32 %v2277, %v2292
      %v2298 = vmul.f32 %v2278, %v2292
      %v2299 = vmul.f32 %v2279, %v2292
      %v2300 = vmul.f32 %v2280, %v2292
      %v2301 = vmul.f32 %v2281, %v2292
      %v2302 = vmul.f32 %v2282, %v2292
      %v2303 = vmul.f32 %v2283, %v2292
      %v2304 = vmul.f32 %v2284, %v2292
      %v2305 = vmul.f32 %v2285, %v2292
      %v2306 = vmul.f32 %v2286, %v2292
      %v2307 = vmul.f32 %v2287, %v2292
      %v2308 = vmul.f32 %v2288, %v2292
      %v2309 = vadd.f32 %v2257, %v2293
      %v2310 = vadd.f32 %v2258, %v2294
      %v2311 = vadd.f32 %v2259, %v2295
      %v2312 = vadd.f32 %v2260, %v2296
      %v2313 = vadd.f32 %v2261, %v2297
      %v2314 = vadd.f32 %v2262, %v2298
      %v2315 = vadd.f32 %v2263, %v2299
      %v2316 = vadd.f32 %v2264, %v2300
      %v2317 = vadd.f32 %v2265, %v2301
      %v2318 = vadd.f32 %v2266, %v2302
      %v2319 = vadd.f32 %v2267, %v2303
      %v2320 = vadd.f32 %v2268, %v2304
      %v2321 = vadd.f32 %v2269, %v2305
      %v2322 = vadd.f32 %v2270, %v2306
      %v2323 = vadd.f32 %v2271, %v2307
      %v2324 = vadd.f32 %v2272, %v2308
      %v2325 = vld [vmem:[%s2220 + $0x2] sm:$0xff]
      %v2326 = vld [vmem:[%s2220 + $0xa] sm:$0xff]
      %v2327 = vld [vmem:[%s2220 + $0x12] sm:$0xff]
      %v2328 = vld [vmem:[%s2220 + $0x1a] sm:$0xff]
      %v2329 = vld [vmem:[%s2220 + $0x2a] sm:$0xff]
      %v2330 = vld [vmem:[%s2220 + $0x32] sm:$0xff]
      %v2331 = vld [vmem:[%s2220 + $0x3a] sm:$0xff]
      %v2332 = vld [vmem:[%s2220 + $0x42] sm:$0xff]
      %v2333 = vld [vmem:[%s2220 + $0x52] sm:$0xff]
      %v2334 = vld [vmem:[%s2220 + $0x5a] sm:$0xff]
      %v2335 = vld [vmem:[%s2220 + $0x62] sm:$0xff]
      %v2336 = vld [vmem:[%s2220 + $0x6a] sm:$0xff]
      %v2337 = vld [vmem:[%s2220 + $0x7a] sm:$0xff]
      %v2338 = vld [vmem:[%s2220 + $0x82] sm:$0xff]
      %v2339 = vld [vmem:[%s2220 + $0x8a] sm:$0xff]
      %v2340 = vld [vmem:[%s2220 + $0x92] sm:$0xff]
      %v2341 = vlaneseq
      %v2342 = vshrl.u32 %v2341, 7
      %v2343 = vsub.s32 2, %v2342
      %v2344 = vrot.slane %v2050, %v2343
      %v2345 = vmul.f32 %v2325, %v2344
      %v2346 = vmul.f32 %v2326, %v2344
      %v2347 = vmul.f32 %v2327, %v2344
      %v2348 = vmul.f32 %v2328, %v2344
      %v2349 = vmul.f32 %v2329, %v2344
      %v2350 = vmul.f32 %v2330, %v2344
      %v2351 = vmul.f32 %v2331, %v2344
      %v2352 = vmul.f32 %v2332, %v2344
      %v2353 = vmul.f32 %v2333, %v2344
      %v2354 = vmul.f32 %v2334, %v2344
      %v2355 = vmul.f32 %v2335, %v2344
      %v2356 = vmul.f32 %v2336, %v2344
      %v2357 = vmul.f32 %v2337, %v2344
      %v2358 = vmul.f32 %v2338, %v2344
      %v2359 = vmul.f32 %v2339, %v2344
      %v2360 = vmul.f32 %v2340, %v2344
      %v2361 = vadd.f32 %v2309, %v2345
      %v2362 = vadd.f32 %v2310, %v2346
      %v2363 = vadd.f32 %v2311, %v2347
      %v2364 = vadd.f32 %v2312, %v2348
      %v2365 = vadd.f32 %v2313, %v2349
      %v2366 = vadd.f32 %v2314, %v2350
      %v2367 = vadd.f32 %v2315, %v2351
      %v2368 = vadd.f32 %v2316, %v2352
      %v2369 = vadd.f32 %v2317, %v2353
      %v2370 = vadd.f32 %v2318, %v2354
      %v2371 = vadd.f32 %v2319, %v2355
      %v2372 = vadd.f32 %v2320, %v2356
      %v2373 = vadd.f32 %v2321, %v2357
      %v2374 = vadd.f32 %v2322, %v2358
      %v2375 = vadd.f32 %v2323, %v2359
      %v2376 = vadd.f32 %v2324, %v2360
      %s2377 = scalar_lea.vmem [#allocation2], 80
      %v2378 = vld [vmem:[%s2377] sm:$0xff]
      %v2379 = vld [vmem:[%s2377 + $0x8] sm:$0xff]
      %v2380 = vld [vmem:[%s2377 + $0x10] sm:$0xff]
      %v2381 = vld [vmem:[%s2377 + $0x18] sm:$0xff]
      %v2382 = vld [vmem:[%s2377 + $0x28] sm:$0xff]
      %v2383 = vld [vmem:[%s2377 + $0x30] sm:$0xff]
      %v2384 = vld [vmem:[%s2377 + $0x38] sm:$0xff]
      %v2385 = vld [vmem:[%s2377 + $0x40] sm:$0xff]
      %v2386 = vld [vmem:[%s2377 + $0x50] sm:$0xff]
      %v2387 = vld [vmem:[%s2377 + $0x58] sm:$0xff]
      %v2388 = vld [vmem:[%s2377 + $0x60] sm:$0xff]
      %v2389 = vld [vmem:[%s2377 + $0x68] sm:$0xff]
      %v2390 = vld [vmem:[%s2377 + $0x78] sm:$0xff]
      %v2391 = vld [vmem:[%s2377 + $0x80] sm:$0xff]
      %v2392 = vld [vmem:[%s2377 + $0x88] sm:$0xff]
      %v2393 = vld [vmem:[%s2377 + $0x90] sm:$0xff]
      %v2394 = vlaneseq
      %v2395 = vshrl.u32 %v2394, 7
      %v2396 = vsub.s32 0, %v2395
      %v2397 = vrot.slane %v2051, %v2396
      %v2398 = vmul.f32 %v2378, %v2397
      %v2399 = vmul.f32 %v2379, %v2397
      %v2400 = vmul.f32 %v2380, %v2397
      %v2401 = vmul.f32 %v2381, %v2397
      %v2402 = vmul.f32 %v2382, %v2397
      %v2403 = vmul.f32 %v2383, %v2397
      %v2404 = vmul.f32 %v2384, %v2397
      %v2405 = vmul.f32 %v2385, %v2397
      %v2406 = vmul.f32 %v2386, %v2397
      %v2407 = vmul.f32 %v2387, %v2397
      %v2408 = vmul.f32 %v2388, %v2397
      %v2409 = vmul.f32 %v2389, %v2397
      %v2410 = vmul.f32 %v2390, %v2397
      %v2411 = vmul.f32 %v2391, %v2397
      %v2412 = vmul.f32 %v2392, %v2397
      %v2413 = vmul.f32 %v2393, %v2397
      %v2414 = vadd.f32 %v2361, %v2398
      %v2415 = vadd.f32 %v2362, %v2399
      %v2416 = vadd.f32 %v2363, %v2400
      %v2417 = vadd.f32 %v2364, %v2401
      %v2418 = vadd.f32 %v2365, %v2402
      %v2419 = vadd.f32 %v2366, %v2403
      %v2420 = vadd.f32 %v2367, %v2404
      %v2421 = vadd.f32 %v2368, %v2405
      %v2422 = vadd.f32 %v2369, %v2406
      %v2423 = vadd.f32 %v2370, %v2407
      %v2424 = vadd.f32 %v2371, %v2408
      %v2425 = vadd.f32 %v2372, %v2409
      %v2426 = vadd.f32 %v2373, %v2410
      %v2427 = vadd.f32 %v2374, %v2411
      %v2428 = vadd.f32 %v2375, %v2412
      %v2429 = vadd.f32 %v2376, %v2413
      %v2430 = vld [vmem:[%s2377 + $0x1] sm:$0xff]
      %v2431 = vld [vmem:[%s2377 + $0x9] sm:$0xff]
      %v2432 = vld [vmem:[%s2377 + $0x11] sm:$0xff]
      %v2433 = vld [vmem:[%s2377 + $0x19] sm:$0xff]
      %v2434 = vld [vmem:[%s2377 + $0x29] sm:$0xff]
      %v2435 = vld [vmem:[%s2377 + $0x31] sm:$0xff]
      %v2436 = vld [vmem:[%s2377 + $0x39] sm:$0xff]
      %v2437 = vld [vmem:[%s2377 + $0x41] sm:$0xff]
      %v2438 = vld [vmem:[%s2377 + $0x51] sm:$0xff]
      %v2439 = vld [vmem:[%s2377 + $0x59] sm:$0xff]
      %v2440 = vld [vmem:[%s2377 + $0x61] sm:$0xff]
      %v2441 = vld [vmem:[%s2377 + $0x69] sm:$0xff]
      %v2442 = vld [vmem:[%s2377 + $0x79] sm:$0xff]
      %v2443 = vld [vmem:[%s2377 + $0x81] sm:$0xff]
      %v2444 = vld [vmem:[%s2377 + $0x89] sm:$0xff]
      %v2445 = vld [vmem:[%s2377 + $0x91] sm:$0xff]
      %v2446 = vlaneseq
      %v2447 = vshrl.u32 %v2446, 7
      %v2448 = vsub.s32 1, %v2447
      %v2449 = vrot.slane %v2051, %v2448
      %v2450 = vmul.f32 %v2430, %v2449
      %v2451 = vmul.f32 %v2431, %v2449
      %v2452 = vmul.f32 %v2432, %v2449
      %v2453 = vmul.f32 %v2433, %v2449
      %v2454 = vmul.f32 %v2434, %v2449
      %v2455 = vmul.f32 %v2435, %v2449
      %v2456 = vmul.f32 %v2436, %v2449
      %v2457 = vmul.f32 %v2437, %v2449
      %v2458 = vmul.f32 %v2438, %v2449
      %v2459 = vmul.f32 %v2439, %v2449
      %v2460 = vmul.f32 %v2440, %v2449
      %v2461 = vmul.f32 %v2441, %v2449
      %v2462 = vmul.f32 %v2442, %v2449
      %v2463 = vmul.f32 %v2443, %v2449
      %v2464 = vmul.f32 %v2444, %v2449
      %v2465 = vmul.f32 %v2445, %v2449
      %v2466 = vadd.f32 %v2414, %v2450
      %v2467 = vadd.f32 %v2415, %v2451
      %v2468 = vadd.f32 %v2416, %v2452
      %v2469 = vadd.f32 %v2417, %v2453
      %v2470 = vadd.f32 %v2418, %v2454
      %v2471 = vadd.f32 %v2419, %v2455
      %v2472 = vadd.f32 %v2420, %v2456
      %v2473 = vadd.f32 %v2421, %v2457
      %v2474 = vadd.f32 %v2422, %v2458
      %v2475 = vadd.f32 %v2423, %v2459
      %v2476 = vadd.f32 %v2424, %v2460
      %v2477 = vadd.f32 %v2425, %v2461
      %v2478 = vadd.f32 %v2426, %v2462
      %v2479 = vadd.f32 %v2427, %v2463
      %v2480 = vadd.f32 %v2428, %v2464
      %v2481 = vadd.f32 %v2429, %v2465
      %v2482 = vld [vmem:[%s2377 + $0x2] sm:$0xff]
      %v2483 = vld [vmem:[%s2377 + $0xa] sm:$0xff]
      %v2484 = vld [vmem:[%s2377 + $0x12] sm:$0xff]
      %v2485 = vld [vmem:[%s2377 + $0x1a] sm:$0xff]
      %v2486 = vld [vmem:[%s2377 + $0x2a] sm:$0xff]
      %v2487 = vld [vmem:[%s2377 + $0x32] sm:$0xff]
      %v2488 = vld [vmem:[%s2377 + $0x3a] sm:$0xff]
      %v2489 = vld [vmem:[%s2377 + $0x42] sm:$0xff]
      %v2490 = vld [vmem:[%s2377 + $0x52] sm:$0xff]
      %v2491 = vld [vmem:[%s2377 + $0x5a] sm:$0xff]
      %v2492 = vld [vmem:[%s2377 + $0x62] sm:$0xff]
      %v2493 = vld [vmem:[%s2377 + $0x6a] sm:$0xff]
      %v2494 = vld [vmem:[%s2377 + $0x7a] sm:$0xff]
      %v2495 = vld [vmem:[%s2377 + $0x82] sm:$0xff]
      %v2496 = vld [vmem:[%s2377 + $0x8a] sm:$0xff]
      %v2497 = vld [vmem:[%s2377 + $0x92] sm:$0xff]
      %v2498 = vlaneseq
      %v2499 = vshrl.u32 %v2498, 7
      %v2500 = vsub.s32 2, %v2499
      %v2501 = vrot.slane %v2051, %v2500
      %v2502 = vmul.f32 %v2482, %v2501
      %v2503 = vmul.f32 %v2483, %v2501
      %v2504 = vmul.f32 %v2484, %v2501
      %v2505 = vmul.f32 %v2485, %v2501
      %v2506 = vmul.f32 %v2486, %v2501
      %v2507 = vmul.f32 %v2487, %v2501
      %v2508 = vmul.f32 %v2488, %v2501
      %v2509 = vmul.f32 %v2489, %v2501
      %v2510 = vmul.f32 %v2490, %v2501
      %v2511 = vmul.f32 %v2491, %v2501
      %v2512 = vmul.f32 %v2492, %v2501
      %v2513 = vmul.f32 %v2493, %v2501
      %v2514 = vmul.f32 %v2494, %v2501
      %v2515 = vmul.f32 %v2495, %v2501
      %v2516 = vmul.f32 %v2496, %v2501
      %v2517 = vmul.f32 %v2497, %v2501
      %v2518 = vadd.f32 %v2466, %v2502
      %v2519 = vadd.f32 %v2467, %v2503
      %v2520 = vadd.f32 %v2468, %v2504
      %v2521 = vadd.f32 %v2469, %v2505
      %v2522 = vadd.f32 %v2470, %v2506
      %v2523 = vadd.f32 %v2471, %v2507
      %v2524 = vadd.f32 %v2472, %v2508
      %v2525 = vadd.f32 %v2473, %v2509
      %v2526 = vadd.f32 %v2474, %v2510
      %v2527 = vadd.f32 %v2475, %v2511
      %v2528 = vadd.f32 %v2476, %v2512
      %v2529 = vadd.f32 %v2477, %v2513
      %v2530 = vadd.f32 %v2478, %v2514
      %v2531 = vadd.f32 %v2479, %v2515
      %v2532 = vadd.f32 %v2480, %v2516
      %v2533 = vadd.f32 %v2481, %v2517
      %v2534 = vmul.f32 %v2518, 0.5
      %v2535 = vmul.f32 %v2519, 0.5
      %v2536 = vmul.f32 %v2520, 0.5
      %v2537 = vmul.f32 %v2521, 0.5
      %v2538 = vmul.f32 %v2522, 0.5
      %v2539 = vmul.f32 %v2523, 0.5
      %v2540 = vmul.f32 %v2524, 0.5
      %v2541 = vmul.f32 %v2525, 0.5
      %v2542 = vmul.f32 %v2526, 0.5
      %v2543 = vmul.f32 %v2527, 0.5
      %v2544 = vmul.f32 %v2528, 0.5
      %v2545 = vmul.f32 %v2529, 0.5
      %v2546 = vmul.f32 %v2530, 0.5
      %v2547 = vmul.f32 %v2531, 0.5
      %v2548 = vmul.f32 %v2532, 0.5
      %v2549 = vmul.f32 %v2533, 0.5
      %v2550 = vmul.f32 %v2518, 0.70710677
      %v2551 = vmul.f32 %v2519, 0.70710677
      %v2552 = vmul.f32 %v2520, 0.70710677
      %v2553 = vmul.f32 %v2521, 0.70710677
      %v2554 = vmul.f32 %v2522, 0.70710677
      %v2555 = vmul.f32 %v2523, 0.70710677
      %v2556 = vmul.f32 %v2524, 0.70710677
      %v2557 = vmul.f32 %v2525, 0.70710677
      %v2558 = vmul.f32 %v2526, 0.70710677
      %v2559 = vmul.f32 %v2527, 0.70710677
      %v2560 = vmul.f32 %v2528, 0.70710677
      %v2561 = vmul.f32 %v2529, 0.70710677
      %v2562 = vmul.f32 %v2530, 0.70710677
      %v2563 = vmul.f32 %v2531, 0.70710677
      %v2564 = vmul.f32 %v2532, 0.70710677
      %v2565 = vmul.f32 %v2533, 0.70710677
      %v2566 = verf.f32.pop %v2550
      %v2567 = verf.f32.pop %v2551
      %v2568 = verf.f32.pop %v2552
      %v2569 = verf.f32.pop %v2553
      %v2570 = verf.f32.pop %v2554
      %v2571 = verf.f32.pop %v2555
      %v2572 = verf.f32.pop %v2556
      %v2573 = verf.f32.pop %v2557
      %v2574 = verf.f32.pop %v2558
      %v2575 = verf.f32.pop %v2559
      %v2576 = verf.f32.pop %v2560
      %v2577 = verf.f32.pop %v2561
      %v2578 = verf.f32.pop %v2562
      %v2579 = verf.f32.pop %v2563
      %v2580 = verf.f32.pop %v2564
      %v2581 = verf.f32.pop %v2565
      %v2582 = vadd.f32 %v2566, 1.0
      %v2583 = vadd.f32 %v2567, 1.0
      %v2584 = vadd.f32 %v2568, 1.0
      %v2585 = vadd.f32 %v2569, 1.0
      %v2586 = vadd.f32 %v2570, 1.0
      %v2587 = vadd.f32 %v2571, 1.0
      %v2588 = vadd.f32 %v2572, 1.0
      %v2589 = vadd.f32 %v2573, 1.0
      %v2590 = vadd.f32 %v2574, 1.0
      %v2591 = vadd.f32 %v2575, 1.0
      %v2592 = vadd.f32 %v2576, 1.0
      %v2593 = vadd.f32 %v2577, 1.0
      %v2594 = vadd.f32 %v2578, 1.0
      %v2595 = vadd.f32 %v2579, 1.0
      %v2596 = vadd.f32 %v2580, 1.0
      %v2597 = vadd.f32 %v2581, 1.0
      %v2598 = vmul.f32 %v2534, %v2582
      %v2599 = vmul.f32 %v2535, %v2583
      %v2600 = vmul.f32 %v2536, %v2584
      %v2601 = vmul.f32 %v2537, %v2585
      %v2602 = vmul.f32 %v2538, %v2586
      %v2603 = vmul.f32 %v2539, %v2587
      %v2604 = vmul.f32 %v2540, %v2588
      %v2605 = vmul.f32 %v2541, %v2589
      %v2606 = vmul.f32 %v2542, %v2590
      %v2607 = vmul.f32 %v2543, %v2591
      %v2608 = vmul.f32 %v2544, %v2592
      %v2609 = vmul.f32 %v2545, %v2593
      %v2610 = vmul.f32 %v2546, %v2594
      %v2611 = vmul.f32 %v2547, %v2595
      %v2612 = vmul.f32 %v2548, %v2596
      %v2613 = vmul.f32 %v2549, %v2597
      %2630 = vrot.lane.b32.xlu0 %v2518, 96
      %v2631 = vpop.permute.xlu0 %2630
      %2632 = vrot.lane.b32.xlu0 %v2519, 96
      %v2633 = vpop.permute.xlu0 %2632
      %2634 = vrot.lane.b32.xlu0 %v2520, 96
      %v2635 = vpop.permute.xlu0 %2634
      %2636 = vrot.lane.b32.xlu0 %v2521, 96
      %v2637 = vpop.permute.xlu0 %2636
      %2638 = vrot.lane.b32.xlu0 %v2522, 96
      %v2639 = vpop.permute.xlu0 %2638
      %2640 = vrot.lane.b32.xlu0 %v2523, 96
      %v2641 = vpop.permute.xlu0 %2640
      %2642 = vrot.lane.b32.xlu0 %v2524, 96
      %v2643 = vpop.permute.xlu0 %2642
      %2644 = vrot.lane.b32.xlu0 %v2525, 96
      %v2645 = vpop.permute.xlu0 %2644
      %2646 = vrot.lane.b32.xlu0 %v2526, 96
      %v2647 = vpop.permute.xlu0 %2646
      %2648 = vrot.lane.b32.xlu0 %v2527, 96
      %v2649 = vpop.permute.xlu0 %2648
      %2650 = vrot.lane.b32.xlu0 %v2528, 96
      %v2651 = vpop.permute.xlu0 %2650
      %2652 = vrot.lane.b32.xlu0 %v2529, 96
      %v2653 = vpop.permute.xlu0 %2652
      %2654 = vrot.lane.b32.xlu0 %v2530, 96
      %v2655 = vpop.permute.xlu0 %2654
      %2656 = vrot.lane.b32.xlu0 %v2531, 96
      %v2657 = vpop.permute.xlu0 %2656
      %2658 = vrot.lane.b32.xlu0 %v2532, 96
      %v2659 = vpop.permute.xlu0 %2658
      %2660 = vrot.lane.b32.xlu0 %v2533, 96
      %v2661 = vpop.permute.xlu0 %2660
      %v2678 = vmul.f32 %v2598, %v2631
      %v2679 = vmul.f32 %v2599, %v2633
      %v2680 = vmul.f32 %v2600, %v2635
      %v2681 = vmul.f32 %v2601, %v2637
      %v2682 = vmul.f32 %v2602, %v2639
      %v2683 = vmul.f32 %v2603, %v2641
      %v2684 = vmul.f32 %v2604, %v2643
      %v2685 = vmul.f32 %v2605, %v2645
      %v2686 = vmul.f32 %v2606, %v2647
      %v2687 = vmul.f32 %v2607, %v2649
      %v2688 = vmul.f32 %v2608, %v2651
      %v2689 = vmul.f32 %v2609, %v2653
      %v2690 = vmul.f32 %v2610, %v2655
      %v2691 = vmul.f32 %v2611, %v2657
      %v2692 = vmul.f32 %v2612, %v2659
      %v2693 = vmul.f32 %v2613, %v2661
      %2695 = vset.pattern.permute.xlu0 0
      %2696 = vperm.xlu0 %2695, %v2054
      %v2697 = vpop.permute.xlu0 %2696
      %2700 = vset.pattern.permute.xlu0 0
      %2701 = vperm.xlu0 %2700, %v2055
      %v2702 = vpop.permute.xlu0 %2701
      %vm2704 = vcmask 261120
      %v2706 = vsel %vm2704, %v2052, 0
      %v2709 = vsel %vm2704, %v2053, 0
      %v2712 = vsel %vm2704, %v2678, 0
      %v2715 = vsel %vm2704, %v2679, 0
      %v2718 = vsel %vm2704, %v2680, 0
      %v2721 = vsel %vm2704, %v2681, 0
      %v2724 = vsel %vm2704, %v2682, 0
      %v2727 = vsel %vm2704, %v2683, 0
      %v2730 = vsel %vm2704, %v2684, 0
      %v2733 = vsel %vm2704, %v2685, 0
      %v2736 = vsel %vm2704, %v2686, 0
      %v2739 = vsel %vm2704, %v2687, 0
      %v2742 = vsel %vm2704, %v2688, 0
      %v2745 = vsel %vm2704, %v2689, 0
      %v2748 = vsel %vm2704, %v2690, 0
      %v2751 = vsel %vm2704, %v2691, 0
      %v2754 = vsel %vm2704, %v2692, 0
      %v2757 = vsel %vm2704, %v2693, 0
      %2759 = vmatprep.subr.mxu0 0.0
      %2760 = vmatpush1.xpose.msra.mxu0 %v2712
      %2761 = vmatprep.subr.mxu0 0.0
      %2762 = vmatpush1.xpose.msra.mxu0 %v2715
      %2763 = vmatprep.subr.mxu0 0.0
      %2764 = vmatpush1.xpose.msra.mxu0 %v2718
      %2765 = vmatprep.subr.mxu0 0.0
      %2766 = vmatpush1.xpose.msra.mxu0 %v2721
      %2767 = vmatprep.subr.mxu0 0.0
      %2768 = vmatpush1.xpose.msra.mxu0 %v2724
      %2769 = vmatprep.subr.mxu0 0.0
      %2770 = vmatpush1.xpose.msra.mxu0 %v2727
      %2771 = vmatprep.subr.mxu0 0.0
      %2772 = vmatpush1.xpose.msra.mxu0 %v2730
      %2773 = vmatprep.subr.mxu0 0.0
      %2774 = vmatpush1.xpose.msra.mxu0 %v2733
      %2775 = vmatprep.subr.mxu0 0.0
      %2776 = vmatpush1.xpose.msra.mxu0 %v2736
      %2777 = vmatprep.subr.mxu0 0.0
      %2778 = vmatpush1.xpose.msra.mxu0 %v2739
      %2779 = vmatprep.subr.mxu0 0.0
      %2780 = vmatpush1.xpose.msra.mxu0 %v2742
      %2781 = vmatprep.subr.mxu0 0.0
      %2782 = vmatpush1.xpose.msra.mxu0 %v2745
      %2783 = vmatprep.subr.mxu0 0.0
      %2784 = vmatpush1.xpose.msra.mxu0 %v2748
      %2785 = vmatprep.subr.mxu0 0.0
      %2786 = vmatpush1.xpose.msra.mxu0 %v2751
      %2787 = vmatprep.subr.mxu0 0.0
      %2788 = vmatpush1.xpose.msra.mxu0 %v2754
      %2789 = vmatprep.subr.mxu0 0.0
      %2790 = vmatpush1.xpose.msra.mxu0 %v2757
      %2791 = vmatprep.subr.mxu0 0.0
      %2792 = vmatpush1.xpose.msra.mxu0 0.0
      %2793 = vmatprep.subr.mxu0 0.0
      %2794 = vmatpush1.xpose.msra.mxu0 0.0
      %2795 = vmatprep.subr.mxu0 0.0
      %2796 = vmatpush1.xpose.msra.mxu0 0.0
      %2797 = vmatprep.subr.mxu0 0.0
      %2798 = vmatpush1.xpose.msra.mxu0 0.0
      %2799 = vmatprep.subr.mxu0 0.0
      %2800 = vmatpush1.xpose.msra.mxu0 0.0
      %2801 = vmatprep.subr.mxu0 0.0
      %2802 = vmatpush1.xpose.msra.mxu0 0.0
      %2803 = vmatprep.subr.mxu0 0.0
      %2804 = vmatpush1.xpose.msra.mxu0 0.0
      %2805 = vmatprep.subr.mxu0 0.0
      %2806 = vmatpush1.xpose.msra.mxu0 0.0
      %2807 = vmatprep.subr.mxu0 0.0
      %2808 = vmatpush1.xpose.msra.mxu0 0.0
      %2809 = vmatprep.subr.mxu0 0.0
      %2810 = vmatpush1.xpose.msra.mxu0 0.0
      %2811 = vmatprep.subr.mxu0 0.0
      %2812 = vmatpush1.xpose.msra.mxu0 0.0
      %2813 = vmatprep.subr.mxu0 0.0
      %2814 = vmatpush1.xpose.msra.mxu0 0.0
      %2815 = vmatprep.subr.mxu0 0.0
      %2816 = vmatpush1.xpose.msra.mxu0 0.0
      %2817 = vmatprep.subr.mxu0 0.0
      %2818 = vmatpush1.xpose.msra.mxu0 0.0
      %2819 = vmatprep.subr.mxu0 0.0
      %2820 = vmatpush1.xpose.msra.mxu0 0.0
      %2821 = vmatprep.subr.mxu0 0.0
      %2822 = vmatpush1.xpose.msra.mxu0 0.0
      %2823 = vmatprep.mubr.f32.mxu0 0.0
      %2824 = vmatmul.mubr.f32.gmra.mrb[0].mxu0 %v2706
      %v2825 = vpop.f32.mrb[0].mxu0
      %v2826 = vadd.f32 %v2697, %v2825
      %v2827 = vpop.f32.mrb[0].mxu0
      %2828 = vmatprep.mubr.f32.mxu0 0.0
      %2829 = vmatmul.mubr.f32.gmra.mrb[0].mxu0 %v2709
      %v2830 = vpop.f32.mrb[0].mxu0
      %v2831 = vadd.f32 %v2702, %v2830
      %v2832 = vpop.f32.mrb[0].mxu0
      %2833 = vdwg.mxu0
      %2834 = vst [vmem:[%s497] sm:$0xff] %v2826
      %2835 = vst [vmem:[%s497 + $0x40] sm:$0xff] %v2831
      %s2836 = scalar_lea.vmem [#allocation2], 160
      %v2837 = vld [vmem:[%s2836] sm:$0xff]
      %v2838 = vld [vmem:[%s2836 + $0x8] sm:$0xff]
      %v2839 = vld [vmem:[%s2836 + $0x10] sm:$0xff]
      %v2840 = vld [vmem:[%s2836 + $0x18] sm:$0xff]
      %v2841 = vld [vmem:[%s2836 + $0x28] sm:$0xff]
      %v2842 = vld [vmem:[%s2836 + $0x30] sm:$0xff]
      %v2843 = vld [vmem:[%s2836 + $0x38] sm:$0xff]
      %v2844 = vld [vmem:[%s2836 + $0x40] sm:$0xff]
      %v2845 = vld [vmem:[%s2836 + $0x50] sm:$0xff]
      %v2846 = vld [vmem:[%s2836 + $0x58] sm:$0xff]
      %v2847 = vld [vmem:[%s2836 + $0x60] sm:$0xff]
      %v2848 = vld [vmem:[%s2836 + $0x68] sm:$0xff]
      %v2849 = vld [vmem:[%s2836 + $0x78] sm:$0xff]
      %v2850 = vld [vmem:[%s2836 + $0x80] sm:$0xff]
      %v2851 = vld [vmem:[%s2836 + $0x88] sm:$0xff]
      %v2852 = vld [vmem:[%s2836 + $0x90] sm:$0xff]
      %v2853 = vmul.f32 %v2837, %v2083
      %v2854 = vmul.f32 %v2838, %v2083
      %v2855 = vmul.f32 %v2839, %v2083
      %v2856 = vmul.f32 %v2840, %v2083
      %v2857 = vmul.f32 %v2841, %v2083
      %v2858 = vmul.f32 %v2842, %v2083
      %v2859 = vmul.f32 %v2843, %v2083
      %v2860 = vmul.f32 %v2844, %v2083
      %v2861 = vmul.f32 %v2845, %v2083
      %v2862 = vmul.f32 %v2846, %v2083
      %v2863 = vmul.f32 %v2847, %v2083
      %v2864 = vmul.f32 %v2848, %v2083
      %v2865 = vmul.f32 %v2849, %v2083
      %v2866 = vmul.f32 %v2850, %v2083
      %v2867 = vmul.f32 %v2851, %v2083
      %v2868 = vmul.f32 %v2852, %v2083
      %v2869 = vadd.f32 %v2063, %v2853
      %v2870 = vadd.f32 %v2063, %v2854
      %v2871 = vadd.f32 %v2063, %v2855
      %v2872 = vadd.f32 %v2063, %v2856
      %v2873 = vadd.f32 %v2063, %v2857
      %v2874 = vadd.f32 %v2063, %v2858
      %v2875 = vadd.f32 %v2063, %v2859
      %v2876 = vadd.f32 %v2063, %v2860
      %v2877 = vadd.f32 %v2063, %v2861
      %v2878 = vadd.f32 %v2063, %v2862
      %v2879 = vadd.f32 %v2063, %v2863
      %v2880 = vadd.f32 %v2063, %v2864
      %v2881 = vadd.f32 %v2063, %v2865
      %v2882 = vadd.f32 %v2063, %v2866
      %v2883 = vadd.f32 %v2063, %v2867
      %v2884 = vadd.f32 %v2063, %v2868
      %v2885 = vld [vmem:[%s2836 + $0x1] sm:$0xff]
      %v2886 = vld [vmem:[%s2836 + $0x9] sm:$0xff]
      %v2887 = vld [vmem:[%s2836 + $0x11] sm:$0xff]
      %v2888 = vld [vmem:[%s2836 + $0x19] sm:$0xff]
      %v2889 = vld [vmem:[%s2836 + $0x29] sm:$0xff]
      %v2890 = vld [vmem:[%s2836 + $0x31] sm:$0xff]
      %v2891 = vld [vmem:[%s2836 + $0x39] sm:$0xff]
      %v2892 = vld [vmem:[%s2836 + $0x41] sm:$0xff]
      %v2893 = vld [vmem:[%s2836 + $0x51] sm:$0xff]
      %v2894 = vld [vmem:[%s2836 + $0x59] sm:$0xff]
      %v2895 = vld [vmem:[%s2836 + $0x61] sm:$0xff]
      %v2896 = vld [vmem:[%s2836 + $0x69] sm:$0xff]
      %v2897 = vld [vmem:[%s2836 + $0x79] sm:$0xff]
      %v2898 = vld [vmem:[%s2836 + $0x81] sm:$0xff]
      %v2899 = vld [vmem:[%s2836 + $0x89] sm:$0xff]
      %v2900 = vld [vmem:[%s2836 + $0x91] sm:$0xff]
      %v2901 = vmul.f32 %v2885, %v2135
      %v2902 = vmul.f32 %v2886, %v2135
      %v2903 = vmul.f32 %v2887, %v2135
      %v2904 = vmul.f32 %v2888, %v2135
      %v2905 = vmul.f32 %v2889, %v2135
      %v2906 = vmul.f32 %v2890, %v2135
      %v2907 = vmul.f32 %v2891, %v2135
      %v2908 = vmul.f32 %v2892, %v2135
      %v2909 = vmul.f32 %v2893, %v2135
      %v2910 = vmul.f32 %v2894, %v2135
      %v2911 = vmul.f32 %v2895, %v2135
      %v2912 = vmul.f32 %v2896, %v2135
      %v2913 = vmul.f32 %v2897, %v2135
      %v2914 = vmul.f32 %v2898, %v2135
      %v2915 = vmul.f32 %v2899, %v2135
      %v2916 = vmul.f32 %v2900, %v2135
      %v2917 = vadd.f32 %v2869, %v2901
      %v2918 = vadd.f32 %v2870, %v2902
      %v2919 = vadd.f32 %v2871, %v2903
      %v2920 = vadd.f32 %v2872, %v2904
      %v2921 = vadd.f32 %v2873, %v2905
      %v2922 = vadd.f32 %v2874, %v2906
      %v2923 = vadd.f32 %v2875, %v2907
      %v2924 = vadd.f32 %v2876, %v2908
      %v2925 = vadd.f32 %v2877, %v2909
      %v2926 = vadd.f32 %v2878, %v2910
      %v2927 = vadd.f32 %v2879, %v2911
      %v2928 = vadd.f32 %v2880, %v2912
      %v2929 = vadd.f32 %v2881, %v2913
      %v2930 = vadd.f32 %v2882, %v2914
      %v2931 = vadd.f32 %v2883, %v2915
      %v2932 = vadd.f32 %v2884, %v2916
      %v2933 = vld [vmem:[%s2836 + $0x2] sm:$0xff]
      %v2934 = vld [vmem:[%s2836 + $0xa] sm:$0xff]
      %v2935 = vld [vmem:[%s2836 + $0x12] sm:$0xff]
      %v2936 = vld [vmem:[%s2836 + $0x1a] sm:$0xff]
      %v2937 = vld [vmem:[%s2836 + $0x2a] sm:$0xff]
      %v2938 = vld [vmem:[%s2836 + $0x32] sm:$0xff]
      %v2939 = vld [vmem:[%s2836 + $0x3a] sm:$0xff]
      %v2940 = vld [vmem:[%s2836 + $0x42] sm:$0xff]
      %v2941 = vld [vmem:[%s2836 + $0x52] sm:$0xff]
      %v2942 = vld [vmem:[%s2836 + $0x5a] sm:$0xff]
      %v2943 = vld [vmem:[%s2836 + $0x62] sm:$0xff]
      %v2944 = vld [vmem:[%s2836 + $0x6a] sm:$0xff]
      %v2945 = vld [vmem:[%s2836 + $0x7a] sm:$0xff]
      %v2946 = vld [vmem:[%s2836 + $0x82] sm:$0xff]
      %v2947 = vld [vmem:[%s2836 + $0x8a] sm:$0xff]
      %v2948 = vld [vmem:[%s2836 + $0x92] sm:$0xff]
      %v2949 = vmul.f32 %v2933, %v2187
      %v2950 = vmul.f32 %v2934, %v2187
      %v2951 = vmul.f32 %v2935, %v2187
      %v2952 = vmul.f32 %v2936, %v2187
      %v2953 = vmul.f32 %v2937, %v2187
      %v2954 = vmul.f32 %v2938, %v2187
      %v2955 = vmul.f32 %v2939, %v2187
      %v2956 = vmul.f32 %v2940, %v2187
      %v2957 = vmul.f32 %v2941, %v2187
      %v2958 = vmul.f32 %v2942, %v2187
      %v2959 = vmul.f32 %v2943, %v2187
      %v2960 = vmul.f32 %v2944, %v2187
      %v2961 = vmul.f32 %v2945, %v2187
      %v2962 = vmul.f32 %v2946, %v2187
      %v2963 = vmul.f32 %v2947, %v2187
      %v2964 = vmul.f32 %v2948, %v2187
      %v2965 = vadd.f32 %v2917, %v2949
      %v2966 = vadd.f32 %v2918, %v2950
      %v2967 = vadd.f32 %v2919, %v2951
      %v2968 = vadd.f32 %v2920, %v2952
      %v2969 = vadd.f32 %v2921, %v2953
      %v2970 = vadd.f32 %v2922, %v2954
      %v2971 = vadd.f32 %v2923, %v2955
      %v2972 = vadd.f32 %v2924, %v2956
      %v2973 = vadd.f32 %v2925, %v2957
      %v2974 = vadd.f32 %v2926, %v2958
      %v2975 = vadd.f32 %v2927, %v2959
      %v2976 = vadd.f32 %v2928, %v2960
      %v2977 = vadd.f32 %v2929, %v2961
      %v2978 = vadd.f32 %v2930, %v2962
      %v2979 = vadd.f32 %v2931, %v2963
      %v2980 = vadd.f32 %v2932, %v2964
      %s2981 = scalar_lea.vmem [#allocation2], 200
      %v2982 = vld [vmem:[%s2981] sm:$0xff]
      %v2983 = vld [vmem:[%s2981 + $0x8] sm:$0xff]
      %v2984 = vld [vmem:[%s2981 + $0x10] sm:$0xff]
      %v2985 = vld [vmem:[%s2981 + $0x18] sm:$0xff]
      %v2986 = vld [vmem:[%s2981 + $0x28] sm:$0xff]
      %v2987 = vld [vmem:[%s2981 + $0x30] sm:$0xff]
      %v2988 = vld [vmem:[%s2981 + $0x38] sm:$0xff]
      %v2989 = vld [vmem:[%s2981 + $0x40] sm:$0xff]
      %v2990 = vld [vmem:[%s2981 + $0x50] sm:$0xff]
      %v2991 = vld [vmem:[%s2981 + $0x58] sm:$0xff]
      %v2992 = vld [vmem:[%s2981 + $0x60] sm:$0xff]
      %v2993 = vld [vmem:[%s2981 + $0x68] sm:$0xff]
      %v2994 = vld [vmem:[%s2981 + $0x78] sm:$0xff]
      %v2995 = vld [vmem:[%s2981 + $0x80] sm:$0xff]
      %v2996 = vld [vmem:[%s2981 + $0x88] sm:$0xff]
      %v2997 = vld [vmem:[%s2981 + $0x90] sm:$0xff]
      %v2998 = vmul.f32 %v2982, %v2240
      %v2999 = vmul.f32 %v2983, %v2240
      %v3000 = vmul.f32 %v2984, %v2240
      %v3001 = vmul.f32 %v2985, %v2240
      %v3002 = vmul.f32 %v2986, %v2240
      %v3003 = vmul.f32 %v2987, %v2240
      %v3004 = vmul.f32 %v2988, %v2240
      %v3005 = vmul.f32 %v2989, %v2240
      %v3006 = vmul.f32 %v2990, %v2240
      %v3007 = vmul.f32 %v2991, %v2240
      %v3008 = vmul.f32 %v2992, %v2240
      %v3009 = vmul.f32 %v2993, %v2240
      %v3010 = vmul.f32 %v2994, %v2240
      %v3011 = vmul.f32 %v2995, %v2240
      %v3012 = vmul.f32 %v2996, %v2240
      %v3013 = vmul.f32 %v2997, %v2240
      %v3014 = vadd.f32 %v2965, %v2998
      %v3015 = vadd.f32 %v2966, %v2999
      %v3016 = vadd.f32 %v2967, %v3000
      %v3017 = vadd.f32 %v2968, %v3001
      %v3018 = vadd.f32 %v2969, %v3002
      %v3019 = vadd.f32 %v2970, %v3003
      %v3020 = vadd.f32 %v2971, %v3004
      %v3021 = vadd.f32 %v2972, %v3005
      %v3022 = vadd.f32 %v2973, %v3006
      %v3023 = vadd.f32 %v2974, %v3007
      %v3024 = vadd.f32 %v2975, %v3008
      %v3025 = vadd.f32 %v2976, %v3009
      %v3026 = vadd.f32 %v2977, %v3010
      %v3027 = vadd.f32 %v2978, %v3011
      %v3028 = vadd.f32 %v2979, %v3012
      %v3029 = vadd.f32 %v2980, %v3013
      %v3030 = vld [vmem:[%s2981 + $0x1] sm:$0xff]
      %v3031 = vld [vmem:[%s2981 + $0x9] sm:$0xff]
      %v3032 = vld [vmem:[%s2981 + $0x11] sm:$0xff]
      %v3033 = vld [vmem:[%s2981 + $0x19] sm:$0xff]
      %v3034 = vld [vmem:[%s2981 + $0x29] sm:$0xff]
      %v3035 = vld [vmem:[%s2981 + $0x31] sm:$0xff]
      %v3036 = vld [vmem:[%s2981 + $0x39] sm:$0xff]
      %v3037 = vld [vmem:[%s2981 + $0x41] sm:$0xff]
      %v3038 = vld [vmem:[%s2981 + $0x51] sm:$0xff]
      %v3039 = vld [vmem:[%s2981 + $0x59] sm:$0xff]
      %v3040 = vld [vmem:[%s2981 + $0x61] sm:$0xff]
      %v3041 = vld [vmem:[%s2981 + $0x69] sm:$0xff]
      %v3042 = vld [vmem:[%s2981 + $0x79] sm:$0xff]
      %v3043 = vld [vmem:[%s2981 + $0x81] sm:$0xff]
      %v3044 = vld [vmem:[%s2981 + $0x89] sm:$0xff]
      %v3045 = vld [vmem:[%s2981 + $0x91] sm:$0xff]
      %v3046 = vmul.f32 %v3030, %v2292
      %v3047 = vmul.f32 %v3031, %v2292
      %v3048 = vmul.f32 %v3032, %v2292
      %v3049 = vmul.f32 %v3033, %v2292
      %v3050 = vmul.f32 %v3034, %v2292
      %v3051 = vmul.f32 %v3035, %v2292
      %v3052 = vmul.f32 %v3036, %v2292
      %v3053 = vmul.f32 %v3037, %v2292
      %v3054 = vmul.f32 %v3038, %v2292
      %v3055 = vmul.f32 %v3039, %v2292
      %v3056 = vmul.f32 %v3040, %v2292
      %v3057 = vmul.f32 %v3041, %v2292
      %v3058 = vmul.f32 %v3042, %v2292
      %v3059 = vmul.f32 %v3043, %v2292
      %v3060 = vmul.f32 %v3044, %v2292
      %v3061 = vmul.f32 %v3045, %v2292
      %v3062 = vadd.f32 %v3014, %v3046
      %v3063 = vadd.f32 %v3015, %v3047
      %v3064 = vadd.f32 %v3016, %v3048
      %v3065 = vadd.f32 %v3017, %v3049
      %v3066 = vadd.f32 %v3018, %v3050
      %v3067 = vadd.f32 %v3019, %v3051
      %v3068 = vadd.f32 %v3020, %v3052
      %v3069 = vadd.f32 %v3021, %v3053
      %v3070 = vadd.f32 %v3022, %v3054
      %v3071 = vadd.f32 %v3023, %v3055
      %v3072 = vadd.f32 %v3024, %v3056
      %v3073 = vadd.f32 %v3025, %v3057
      %v3074 = vadd.f32 %v3026, %v3058
      %v3075 = vadd.f32 %v3027, %v3059
      %v3076 = vadd.f32 %v3028, %v3060
      %v3077 = vadd.f32 %v3029, %v3061
      %v3078 = vld [vmem:[%s2981 + $0x2] sm:$0xff]
      %v3079 = vld [vmem:[%s2981 + $0xa] sm:$0xff]
      %v3080 = vld [vmem:[%s2981 + $0x12] sm:$0xff]
      %v3081 = vld [vmem:[%s2981 + $0x1a] sm:$0xff]
      %v3082 = vld [vmem:[%s2981 + $0x2a] sm:$0xff]
      %v3083 = vld [vmem:[%s2981 + $0x32] sm:$0xff]
      %v3084 = vld [vmem:[%s2981 + $0x3a] sm:$0xff]
      %v3085 = vld [vmem:[%s2981 + $0x42] sm:$0xff]
      %v3086 = vld [vmem:[%s2981 + $0x52] sm:$0xff]
      %v3087 = vld [vmem:[%s2981 + $0x5a] sm:$0xff]
      %v3088 = vld [vmem:[%s2981 + $0x62] sm:$0xff]
      %v3089 = vld [vmem:[%s2981 + $0x6a] sm:$0xff]
      %v3090 = vld [vmem:[%s2981 + $0x7a] sm:$0xff]
      %v3091 = vld [vmem:[%s2981 + $0x82] sm:$0xff]
      %v3092 = vld [vmem:[%s2981 + $0x8a] sm:$0xff]
      %v3093 = vld [vmem:[%s2981 + $0x92] sm:$0xff]
      %v3094 = vmul.f32 %v3078, %v2344
      %v3095 = vmul.f32 %v3079, %v2344
      %v3096 = vmul.f32 %v3080, %v2344
      %v3097 = vmul.f32 %v3081, %v2344
      %v3098 = vmul.f32 %v3082, %v2344
      %v3099 = vmul.f32 %v3083, %v2344
      %v3100 = vmul.f32 %v3084, %v2344
      %v3101 = vmul.f32 %v3085, %v2344
      %v3102 = vmul.f32 %v3086, %v2344
      %v3103 = vmul.f32 %v3087, %v2344
      %v3104 = vmul.f32 %v3088, %v2344
      %v3105 = vmul.f32 %v3089, %v2344
      %v3106 = vmul.f32 %v3090, %v2344
      %v3107 = vmul.f32 %v3091, %v2344
      %v3108 = vmul.f32 %v3092, %v2344
      %v3109 = vmul.f32 %v3093, %v2344
      %v3110 = vadd.f32 %v3062, %v3094
      %v3111 = vadd.f32 %v3063, %v3095
      %v3112 = vadd.f32 %v3064, %v3096
      %v3113 = vadd.f32 %v3065, %v3097
      %v3114 = vadd.f32 %v3066, %v3098
      %v3115 = vadd.f32 %v3067, %v3099
      %v3116 = vadd.f32 %v3068, %v3100
      %v3117 = vadd.f32 %v3069, %v3101
      %v3118 = vadd.f32 %v3070, %v3102
      %v3119 = vadd.f32 %v3071, %v3103
      %v3120 = vadd.f32 %v3072, %v3104
      %v3121 = vadd.f32 %v3073, %v3105
      %v3122 = vadd.f32 %v3074, %v3106
      %v3123 = vadd.f32 %v3075, %v3107
      %v3124 = vadd.f32 %v3076, %v3108
      %v3125 = vadd.f32 %v3077, %v3109
      %s3126 = scalar_lea.vmem [#allocation2], 240
      %v3127 = vld [vmem:[%s3126] sm:$0xff]
      %v3128 = vld [vmem:[%s3126 + $0x8] sm:$0xff]
      %v3129 = vld [vmem:[%s3126 + $0x10] sm:$0xff]
      %v3130 = vld [vmem:[%s3126 + $0x18] sm:$0xff]
      %v3131 = vld [vmem:[%s3126 + $0x28] sm:$0xff]
      %v3132 = vld [vmem:[%s3126 + $0x30] sm:$0xff]
      %v3133 = vld [vmem:[%s3126 + $0x38] sm:$0xff]
      %v3134 = vld [vmem:[%s3126 + $0x40] sm:$0xff]
      %v3135 = vld [vmem:[%s3126 + $0x50] sm:$0xff]
      %v3136 = vld [vmem:[%s3126 + $0x58] sm:$0xff]
      %v3137 = vld [vmem:[%s3126 + $0x60] sm:$0xff]
      %v3138 = vld [vmem:[%s3126 + $0x68] sm:$0xff]
      %v3139 = vld [vmem:[%s3126 + $0x78] sm:$0xff]
      %v3140 = vld [vmem:[%s3126 + $0x80] sm:$0xff]
      %v3141 = vld [vmem:[%s3126 + $0x88] sm:$0xff]
      %v3142 = vld [vmem:[%s3126 + $0x90] sm:$0xff]
      %v3143 = vmul.f32 %v3127, %v2397
      %v3144 = vmul.f32 %v3128, %v2397
      %v3145 = vmul.f32 %v3129, %v2397
      %v3146 = vmul.f32 %v3130, %v2397
      %v3147 = vmul.f32 %v3131, %v2397
      %v3148 = vmul.f32 %v3132, %v2397
      %v3149 = vmul.f32 %v3133, %v2397
      %v3150 = vmul.f32 %v3134, %v2397
      %v3151 = vmul.f32 %v3135, %v2397
      %v3152 = vmul.f32 %v3136, %v2397
      %v3153 = vmul.f32 %v3137, %v2397
      %v3154 = vmul.f32 %v3138, %v2397
      %v3155 = vmul.f32 %v3139, %v2397
      %v3156 = vmul.f32 %v3140, %v2397
      %v3157 = vmul.f32 %v3141, %v2397
      %v3158 = vmul.f32 %v3142, %v2397
      %v3159 = vadd.f32 %v3110, %v3143
      %v3160 = vadd.f32 %v3111, %v3144
      %v3161 = vadd.f32 %v3112, %v3145
      %v3162 = vadd.f32 %v3113, %v3146
      %v3163 = vadd.f32 %v3114, %v3147
      %v3164 = vadd.f32 %v3115, %v3148
      %v3165 = vadd.f32 %v3116, %v3149
      %v3166 = vadd.f32 %v3117, %v3150
      %v3167 = vadd.f32 %v3118, %v3151
      %v3168 = vadd.f32 %v3119, %v3152
      %v3169 = vadd.f32 %v3120, %v3153
      %v3170 = vadd.f32 %v3121, %v3154
      %v3171 = vadd.f32 %v3122, %v3155
      %v3172 = vadd.f32 %v3123, %v3156
      %v3173 = vadd.f32 %v3124, %v3157
      %v3174 = vadd.f32 %v3125, %v3158
      %v3175 = vld [vmem:[%s3126 + $0x1] sm:$0xff]
      %v3176 = vld [vmem:[%s3126 + $0x9] sm:$0xff]
      %v3177 = vld [vmem:[%s3126 + $0x11] sm:$0xff]
      %v3178 = vld [vmem:[%s3126 + $0x19] sm:$0xff]
      %v3179 = vld [vmem:[%s3126 + $0x29] sm:$0xff]
      %v3180 = vld [vmem:[%s3126 + $0x31] sm:$0xff]
      %v3181 = vld [vmem:[%s3126 + $0x39] sm:$0xff]
      %v3182 = vld [vmem:[%s3126 + $0x41] sm:$0xff]
      %v3183 = vld [vmem:[%s3126 + $0x51] sm:$0xff]
      %v3184 = vld [vmem:[%s3126 + $0x59] sm:$0xff]
      %v3185 = vld [vmem:[%s3126 + $0x61] sm:$0xff]
      %v3186 = vld [vmem:[%s3126 + $0x69] sm:$0xff]
      %v3187 = vld [vmem:[%s3126 + $0x79] sm:$0xff]
      %v3188 = vld [vmem:[%s3126 + $0x81] sm:$0xff]
      %v3189 = vld [vmem:[%s3126 + $0x89] sm:$0xff]
      %v3190 = vld [vmem:[%s3126 + $0x91] sm:$0xff]
      %v3191 = vmul.f32 %v3175, %v2449
      %v3192 = vmul.f32 %v3176, %v2449
      %v3193 = vmul.f32 %v3177, %v2449
      %v3194 = vmul.f32 %v3178, %v2449
      %v3195 = vmul.f32 %v3179, %v2449
      %v3196 = vmul.f32 %v3180, %v2449
      %v3197 = vmul.f32 %v3181, %v2449
      %v3198 = vmul.f32 %v3182, %v2449
      %v3199 = vmul.f32 %v3183, %v2449
      %v3200 = vmul.f32 %v3184, %v2449
      %v3201 = vmul.f32 %v3185, %v2449
      %v3202 = vmul.f32 %v3186, %v2449
      %v3203 = vmul.f32 %v3187, %v2449
      %v3204 = vmul.f32 %v3188, %v2449
      %v3205 = vmul.f32 %v3189, %v2449
      %v3206 = vmul.f32 %v3190, %v2449
      %v3207 = vadd.f32 %v3159, %v3191
      %v3208 = vadd.f32 %v3160, %v3192
      %v3209 = vadd.f32 %v3161, %v3193
      %v3210 = vadd.f32 %v3162, %v3194
      %v3211 = vadd.f32 %v3163, %v3195
      %v3212 = vadd.f32 %v3164, %v3196
      %v3213 = vadd.f32 %v3165, %v3197
      %v3214 = vadd.f32 %v3166, %v3198
      %v3215 = vadd.f32 %v3167, %v3199
      %v3216 = vadd.f32 %v3168, %v3200
      %v3217 = vadd.f32 %v3169, %v3201
      %v3218 = vadd.f32 %v3170, %v3202
      %v3219 = vadd.f32 %v3171, %v3203
      %v3220 = vadd.f32 %v3172, %v3204
      %v3221 = vadd.f32 %v3173, %v3205
      %v3222 = vadd.f32 %v3174, %v3206
      %v3223 = vld [vmem:[%s3126 + $0x2] sm:$0xff]
      %v3224 = vld [vmem:[%s3126 + $0xa] sm:$0xff]
      %v3225 = vld [vmem:[%s3126 + $0x12] sm:$0xff]
      %v3226 = vld [vmem:[%s3126 + $0x1a] sm:$0xff]
      %v3227 = vld [vmem:[%s3126 + $0x2a] sm:$0xff]
      %v3228 = vld [vmem:[%s3126 + $0x32] sm:$0xff]
      %v3229 = vld [vmem:[%s3126 + $0x3a] sm:$0xff]
      %v3230 = vld [vmem:[%s3126 + $0x42] sm:$0xff]
      %v3231 = vld [vmem:[%s3126 + $0x52] sm:$0xff]
      %v3232 = vld [vmem:[%s3126 + $0x5a] sm:$0xff]
      %v3233 = vld [vmem:[%s3126 + $0x62] sm:$0xff]
      %v3234 = vld [vmem:[%s3126 + $0x6a] sm:$0xff]
      %v3235 = vld [vmem:[%s3126 + $0x7a] sm:$0xff]
      %v3236 = vld [vmem:[%s3126 + $0x82] sm:$0xff]
      %v3237 = vld [vmem:[%s3126 + $0x8a] sm:$0xff]
      %v3238 = vld [vmem:[%s3126 + $0x92] sm:$0xff]
      %v3239 = vmul.f32 %v3223, %v2501
      %v3240 = vmul.f32 %v3224, %v2501
      %v3241 = vmul.f32 %v3225, %v2501
      %v3242 = vmul.f32 %v3226, %v2501
      %v3243 = vmul.f32 %v3227, %v2501
      %v3244 = vmul.f32 %v3228, %v2501
      %v3245 = vmul.f32 %v3229, %v2501
      %v3246 = vmul.f32 %v3230, %v2501
      %v3247 = vmul.f32 %v3231, %v2501
      %v3248 = vmul.f32 %v3232, %v2501
      %v3249 = vmul.f32 %v3233, %v2501
      %v3250 = vmul.f32 %v3234, %v2501
      %v3251 = vmul.f32 %v3235, %v2501
      %v3252 = vmul.f32 %v3236, %v2501
      %v3253 = vmul.f32 %v3237, %v2501
      %v3254 = vmul.f32 %v3238, %v2501
      %v3255 = vadd.f32 %v3207, %v3239
      %v3256 = vadd.f32 %v3208, %v3240
      %v3257 = vadd.f32 %v3209, %v3241
      %v3258 = vadd.f32 %v3210, %v3242
      %v3259 = vadd.f32 %v3211, %v3243
      %v3260 = vadd.f32 %v3212, %v3244
      %v3261 = vadd.f32 %v3213, %v3245
      %v3262 = vadd.f32 %v3214, %v3246
      %v3263 = vadd.f32 %v3215, %v3247
      %v3264 = vadd.f32 %v3216, %v3248
      %v3265 = vadd.f32 %v3217, %v3249
      %v3266 = vadd.f32 %v3218, %v3250
      %v3267 = vadd.f32 %v3219, %v3251
      %v3268 = vadd.f32 %v3220, %v3252
      %v3269 = vadd.f32 %v3221, %v3253
      %v3270 = vadd.f32 %v3222, %v3254
      %v3271 = vmul.f32 %v3255, 0.5
      %v3272 = vmul.f32 %v3256, 0.5
      %v3273 = vmul.f32 %v3257, 0.5
      %v3274 = vmul.f32 %v3258, 0.5
      %v3275 = vmul.f32 %v3259, 0.5
      %v3276 = vmul.f32 %v3260, 0.5
      %v3277 = vmul.f32 %v3261, 0.5
      %v3278 = vmul.f32 %v3262, 0.5
      %v3279 = vmul.f32 %v3263, 0.5
      %v3280 = vmul.f32 %v3264, 0.5
      %v3281 = vmul.f32 %v3265, 0.5
      %v3282 = vmul.f32 %v3266, 0.5
      %v3283 = vmul.f32 %v3267, 0.5
      %v3284 = vmul.f32 %v3268, 0.5
      %v3285 = vmul.f32 %v3269, 0.5
      %v3286 = vmul.f32 %v3270, 0.5
      %v3287 = vmul.f32 %v3255, 0.70710677
      %v3288 = vmul.f32 %v3256, 0.70710677
      %v3289 = vmul.f32 %v3257, 0.70710677
      %v3290 = vmul.f32 %v3258, 0.70710677
      %v3291 = vmul.f32 %v3259, 0.70710677
      %v3292 = vmul.f32 %v3260, 0.70710677
      %v3293 = vmul.f32 %v3261, 0.70710677
      %v3294 = vmul.f32 %v3262, 0.70710677
      %v3295 = vmul.f32 %v3263, 0.70710677
      %v3296 = vmul.f32 %v3264, 0.70710677
      %v3297 = vmul.f32 %v3265, 0.70710677
      %v3298 = vmul.f32 %v3266, 0.70710677
      %v3299 = vmul.f32 %v3267, 0.70710677
      %v3300 = vmul.f32 %v3268, 0.70710677
      %v3301 = vmul.f32 %v3269, 0.70710677
      %v3302 = vmul.f32 %v3270, 0.70710677
      %v3303 = verf.f32.pop %v3287
      %v3304 = verf.f32.pop %v3288
      %v3305 = verf.f32.pop %v3289
      %v3306 = verf.f32.pop %v3290
      %v3307 = verf.f32.pop %v3291
      %v3308 = verf.f32.pop %v3292
      %v3309 = verf.f32.pop %v3293
      %v3310 = verf.f32.pop %v3294
      %v3311 = verf.f32.pop %v3295
      %v3312 = verf.f32.pop %v3296
      %v3313 = verf.f32.pop %v3297
      %v3314 = verf.f32.pop %v3298
      %v3315 = verf.f32.pop %v3299
      %v3316 = verf.f32.pop %v3300
      %v3317 = verf.f32.pop %v3301
      %v3318 = verf.f32.pop %v3302
      %v3319 = vadd.f32 %v3303, 1.0
      %v3320 = vadd.f32 %v3304, 1.0
      %v3321 = vadd.f32 %v3305, 1.0
      %v3322 = vadd.f32 %v3306, 1.0
      %v3323 = vadd.f32 %v3307, 1.0
      %v3324 = vadd.f32 %v3308, 1.0
      %v3325 = vadd.f32 %v3309, 1.0
      %v3326 = vadd.f32 %v3310, 1.0
      %v3327 = vadd.f32 %v3311, 1.0
      %v3328 = vadd.f32 %v3312, 1.0
      %v3329 = vadd.f32 %v3313, 1.0
      %v3330 = vadd.f32 %v3314, 1.0
      %v3331 = vadd.f32 %v3315, 1.0
      %v3332 = vadd.f32 %v3316, 1.0
      %v3333 = vadd.f32 %v3317, 1.0
      %v3334 = vadd.f32 %v3318, 1.0
      %v3335 = vmul.f32 %v3271, %v3319
      %v3336 = vmul.f32 %v3272, %v3320
      %v3337 = vmul.f32 %v3273, %v3321
      %v3338 = vmul.f32 %v3274, %v3322
      %v3339 = vmul.f32 %v3275, %v3323
      %v3340 = vmul.f32 %v3276, %v3324
      %v3341 = vmul.f32 %v3277, %v3325
      %v3342 = vmul.f32 %v3278, %v3326
      %v3343 = vmul.f32 %v3279, %v3327
      %v3344 = vmul.f32 %v3280, %v3328
      %v3345 = vmul.f32 %v3281, %v3329
      %v3346 = vmul.f32 %v3282, %v3330
      %v3347 = vmul.f32 %v3283, %v3331
      %v3348 = vmul.f32 %v3284, %v3332
      %v3349 = vmul.f32 %v3285, %v3333
      %v3350 = vmul.f32 %v3286, %v3334
      %3367 = vrot.lane.b32.xlu0 %v3255, 96
      %v3368 = vpop.permute.xlu0 %3367
      %3369 = vrot.lane.b32.xlu0 %v3256, 96
      %v3370 = vpop.permute.xlu0 %3369
      %3371 = vrot.lane.b32.xlu0 %v3257, 96
      %v3372 = vpop.permute.xlu0 %3371
      %3373 = vrot.lane.b32.xlu0 %v3258, 96
      %v3374 = vpop.permute.xlu0 %3373
      %3375 = vrot.lane.b32.xlu0 %v3259, 96
      %v3376 = vpop.permute.xlu0 %3375
      %3377 = vrot.lane.b32.xlu0 %v3260, 96
      %v3378 = vpop.permute.xlu0 %3377
      %3379 = vrot.lane.b32.xlu0 %v3261, 96
      %v3380 = vpop.permute.xlu0 %3379
      %3381 = vrot.lane.b32.xlu0 %v3262, 96
      %v3382 = vpop.permute.xlu0 %3381
      %3383 = vrot.lane.b32.xlu0 %v3263, 96
      %v3384 = vpop.permute.xlu0 %3383
      %3385 = vrot.lane.b32.xlu0 %v3264, 96
      %v3386 = vpop.permute.xlu0 %3385
      %3387 = vrot.lane.b32.xlu0 %v3265, 96
      %v3388 = vpop.permute.xlu0 %3387
      %3389 = vrot.lane.b32.xlu0 %v3266, 96
      %v3390 = vpop.permute.xlu0 %3389
      %3391 = vrot.lane.b32.xlu0 %v3267, 96
      %v3392 = vpop.permute.xlu0 %3391
      %3393 = vrot.lane.b32.xlu0 %v3268, 96
      %v3394 = vpop.permute.xlu0 %3393
      %3395 = vrot.lane.b32.xlu0 %v3269, 96
      %v3396 = vpop.permute.xlu0 %3395
      %3397 = vrot.lane.b32.xlu0 %v3270, 96
      %v3398 = vpop.permute.xlu0 %3397
      %v3415 = vmul.f32 %v3335, %v3368
      %v3416 = vmul.f32 %v3336, %v3370
      %v3417 = vmul.f32 %v3337, %v3372
      %v3418 = vmul.f32 %v3338, %v3374
      %v3419 = vmul.f32 %v3339, %v3376
      %v3420 = vmul.f32 %v3340, %v3378
      %v3421 = vmul.f32 %v3341, %v3380
      %v3422 = vmul.f32 %v3342, %v3382
      %v3423 = vmul.f32 %v3343, %v3384
      %v3424 = vmul.f32 %v3344, %v3386
      %v3425 = vmul.f32 %v3345, %v3388
      %v3426 = vmul.f32 %v3346, %v3390
      %v3427 = vmul.f32 %v3347, %v3392
      %v3428 = vmul.f32 %v3348, %v3394
      %v3429 = vmul.f32 %v3349, %v3396
      %v3430 = vmul.f32 %v3350, %v3398
      %v3432 = vsel %vm2704, %v3415, 0
      %v3435 = vsel %vm2704, %v3416, 0
      %v3438 = vsel %vm2704, %v3417, 0
      %v3441 = vsel %vm2704, %v3418, 0
      %v3444 = vsel %vm2704, %v3419, 0
      %v3447 = vsel %vm2704, %v3420, 0
      %v3450 = vsel %vm2704, %v3421, 0
      %v3453 = vsel %vm2704, %v3422, 0
      %v3456 = vsel %vm2704, %v3423, 0
      %v3459 = vsel %vm2704, %v3424, 0
      %v3462 = vsel %vm2704, %v3425, 0
      %v3465 = vsel %vm2704, %v3426, 0
      %v3468 = vsel %vm2704, %v3427, 0
      %v3471 = vsel %vm2704, %v3428, 0
      %v3474 = vsel %vm2704, %v3429, 0
      %v3477 = vsel %vm2704, %v3430, 0
      %3479 = vmatprep.subr.mxu0 0.0
      %3480 = vmatpush1.xpose.msra.mxu0 %v3432
      %3481 = vmatprep.subr.mxu0 0.0
      %3482 = vmatpush1.xpose.msra.mxu0 %v3435
      %3483 = vmatprep.subr.mxu0 0.0
      %3484 = vmatpush1.xpose.msra.mxu0 %v3438
      %3485 = vmatprep.subr.mxu0 0.0
      %3486 = vmatpush1.xpose.msra.mxu0 %v3441
      %3487 = vmatprep.subr.mxu0 0.0
      %3488 = vmatpush1.xpose.msra.mxu0 %v3444
      %3489 = vmatprep.subr.mxu0 0.0
      %3490 = vmatpush1.xpose.msra.mxu0 %v3447
      %3491 = vmatprep.subr.mxu0 0.0
      %3492 = vmatpush1.xpose.msra.mxu0 %v3450
      %3493 = vmatprep.subr.mxu0 0.0
      %3494 = vmatpush1.xpose.msra.mxu0 %v3453
      %3495 = vmatprep.subr.mxu0 0.0
      %3496 = vmatpush1.xpose.msra.mxu0 %v3456
      %3497 = vmatprep.subr.mxu0 0.0
      %3498 = vmatpush1.xpose.msra.mxu0 %v3459
      %3499 = vmatprep.subr.mxu0 0.0
      %3500 = vmatpush1.xpose.msra.mxu0 %v3462
      %3501 = vmatprep.subr.mxu0 0.0
      %3502 = vmatpush1.xpose.msra.mxu0 %v3465
      %3503 = vmatprep.subr.mxu0 0.0
      %3504 = vmatpush1.xpose.msra.mxu0 %v3468
      %3505 = vmatprep.subr.mxu0 0.0
      %3506 = vmatpush1.xpose.msra.mxu0 %v3471
      %3507 = vmatprep.subr.mxu0 0.0
      %3508 = vmatpush1.xpose.msra.mxu0 %v3474
      %3509 = vmatprep.subr.mxu0 0.0
      %3510 = vmatpush1.xpose.msra.mxu0 %v3477
      %3511 = vmatprep.subr.mxu0 0.0
      %3512 = vmatpush1.xpose.msra.mxu0 0.0
      %3513 = vmatprep.subr.mxu0 0.0
      %3514 = vmatpush1.xpose.msra.mxu0 0.0
      %3515 = vmatprep.subr.mxu0 0.0
      %3516 = vmatpush1.xpose.msra.mxu0 0.0
      %3517 = vmatprep.subr.mxu0 0.0
      %3518 = vmatpush1.xpose.msra.mxu0 0.0
      %3519 = vmatprep.subr.mxu0 0.0
      %3520 = vmatpush1.xpose.msra.mxu0 0.0
      %3521 = vmatprep.subr.mxu0 0.0
      %3522 = vmatpush1.xpose.msra.mxu0 0.0
      %3523 = vmatprep.subr.mxu0 0.0
      %3524 = vmatpush1.xpose.msra.mxu0 0.0
      %3525 = vmatprep.subr.mxu0 0.0
      %3526 = vmatpush1.xpose.msra.mxu0 0.0
      %3527 = vmatprep.subr.mxu0 0.0
      %3528 = vmatpush1.xpose.msra.mxu0 0.0
      %3529 = vmatprep.subr.mxu0 0.0
      %3530 = vmatpush1.xpose.msra.mxu0 0.0
      %3531 = vmatprep.subr.mxu0 0.0
      %3532 = vmatpush1.xpose.msra.mxu0 0.0
      %3533 = vmatprep.subr.mxu0 0.0
      %3534 = vmatpush1.xpose.msra.mxu0 0.0
      %3535 = vmatprep.subr.mxu0 0.0
      %3536 = vmatpush1.xpose.msra.mxu0 0.0
      %3537 = vmatprep.subr.mxu0 0.0
      %3538 = vmatpush1.xpose.msra.mxu0 0.0
      %3539 = vmatprep.subr.mxu0 0.0
      %3540 = vmatpush1.xpose.msra.mxu0 0.0
      %3541 = vmatprep.subr.mxu0 0.0
      %3542 = vmatpush1.xpose.msra.mxu0 0.0
      %3543 = vmatprep.mubr.f32.mxu0 0.0
      %3544 = vmatmul.mubr.f32.gmra.mrb[0].mxu0 %v2706
      %v3545 = vpop.f32.mrb[0].mxu0
      %v3546 = vadd.f32 %v2697, %v3545
      %v3547 = vpop.f32.mrb[0].mxu0
      %3548 = vmatprep.mubr.f32.mxu0 0.0
      %3549 = vmatmul.mubr.f32.gmra.mrb[0].mxu0 %v2709
      %v3550 = vpop.f32.mrb[0].mxu0
      %v3551 = vadd.f32 %v2702, %v3550
      %v3552 = vpop.f32.mrb[0].mxu0
      %3553 = vdwg.mxu0
      %3554 = vst [vmem:[%s497 + $0x8] sm:$0xff] %v3546
      %3555 = vst [vmem:[%s497 + $0x48] sm:$0xff] %v3551
      %s3556 = scalar_lea.vmem [#allocation2], 320
      %v3557 = vld [vmem:[%s3556] sm:$0xff]
      %v3558 = vld [vmem:[%s3556 + $0x8] sm:$0xff]
      %v3559 = vld [vmem:[%s3556 + $0x10] sm:$0xff]
      %v3560 = vld [vmem:[%s3556 + $0x18] sm:$0xff]
      %v3561 = vld [vmem:[%s3556 + $0x28] sm:$0xff]
      %v3562 = vld [vmem:[%s3556 + $0x30] sm:$0xff]
      %v3563 = vld [vmem:[%s3556 + $0x38] sm:$0xff]
      %v3564 = vld [vmem:[%s3556 + $0x40] sm:$0xff]
      %v3565 = vld [vmem:[%s3556 + $0x50] sm:$0xff]
      %v3566 = vld [vmem:[%s3556 + $0x58] sm:$0xff]
      %v3567 = vld [vmem:[%s3556 + $0x60] sm:$0xff]
      %v3568 = vld [vmem:[%s3556 + $0x68] sm:$0xff]
      %v3569 = vld [vmem:[%s3556 + $0x78] sm:$0xff]
      %v3570 = vld [vmem:[%s3556 + $0x80] sm:$0xff]
      %v3571 = vld [vmem:[%s3556 + $0x88] sm:$0xff]
      %v3572 = vld [vmem:[%s3556 + $0x90] sm:$0xff]
      %v3573 = vmul.f32 %v3557, %v2083
      %v3574 = vmul.f32 %v3558, %v2083
      %v3575 = vmul.f32 %v3559, %v2083
      %v3576 = vmul.f32 %v3560, %v2083
      %v3577 = vmul.f32 %v3561, %v2083
      %v3578 = vmul.f32 %v3562, %v2083
      %v3579 = vmul.f32 %v3563, %v2083
      %v3580 = vmul.f32 %v3564, %v2083
      %v3581 = vmul.f32 %v3565, %v2083
      %v3582 = vmul.f32 %v3566, %v2083
      %v3583 = vmul.f32 %v3567, %v2083
      %v3584 = vmul.f32 %v3568, %v2083
      %v3585 = vmul.f32 %v3569, %v2083
      %v3586 = vmul.f32 %v3570, %v2083
      %v3587 = vmul.f32 %v3571, %v2083
      %v3588 = vmul.f32 %v3572, %v2083
      %v3589 = vadd.f32 %v2063, %v3573
      %v3590 = vadd.f32 %v2063, %v3574
      %v3591 = vadd.f32 %v2063, %v3575
      %v3592 = vadd.f32 %v2063, %v3576
      %v3593 = vadd.f32 %v2063, %v3577
      %v3594 = vadd.f32 %v2063, %v3578
      %v3595 = vadd.f32 %v2063, %v3579
      %v3596 = vadd.f32 %v2063, %v3580
      %v3597 = vadd.f32 %v2063, %v3581
      %v3598 = vadd.f32 %v2063, %v3582
      %v3599 = vadd.f32 %v2063, %v3583
      %v3600 = vadd.f32 %v2063, %v3584
      %v3601 = vadd.f32 %v2063, %v3585
      %v3602 = vadd.f32 %v2063, %v3586
      %v3603 = vadd.f32 %v2063, %v3587
      %v3604 = vadd.f32 %v2063, %v3588
      %v3605 = vld [vmem:[%s3556 + $0x1] sm:$0xff]
      %v3606 = vld [vmem:[%s3556 + $0x9] sm:$0xff]
      %v3607 = vld [vmem:[%s3556 + $0x11] sm:$0xff]
      %v3608 = vld [vmem:[%s3556 + $0x19] sm:$0xff]
      %v3609 = vld [vmem:[%s3556 + $0x29] sm:$0xff]
      %v3610 = vld [vmem:[%s3556 + $0x31] sm:$0xff]
      %v3611 = vld [vmem:[%s3556 + $0x39] sm:$0xff]
      %v3612 = vld [vmem:[%s3556 + $0x41] sm:$0xff]
      %v3613 = vld [vmem:[%s3556 + $0x51] sm:$0xff]
      %v3614 = vld [vmem:[%s3556 + $0x59] sm:$0xff]
      %v3615 = vld [vmem:[%s3556 + $0x61] sm:$0xff]
      %v3616 = vld [vmem:[%s3556 + $0x69] sm:$0xff]
      %v3617 = vld [vmem:[%s3556 + $0x79] sm:$0xff]
      %v3618 = vld [vmem:[%s3556 + $0x81] sm:$0xff]
      %v3619 = vld [vmem:[%s3556 + $0x89] sm:$0xff]
      %v3620 = vld [vmem:[%s3556 + $0x91] sm:$0xff]
      %v3621 = vmul.f32 %v3605, %v2135
      %v3622 = vmul.f32 %v3606, %v2135
      %v3623 = vmul.f32 %v3607, %v2135
      %v3624 = vmul.f32 %v3608, %v2135
      %v3625 = vmul.f32 %v3609, %v2135
      %v3626 = vmul.f32 %v3610, %v2135
      %v3627 = vmul.f32 %v3611, %v2135
      %v3628 = vmul.f32 %v3612, %v2135
      %v3629 = vmul.f32 %v3613, %v2135
      %v3630 = vmul.f32 %v3614, %v2135
      %v3631 = vmul.f32 %v3615, %v2135
      %v3632 = vmul.f32 %v3616, %v2135
      %v3633 = vmul.f32 %v3617, %v2135
      %v3634 = vmul.f32 %v3618, %v2135
      %v3635 = vmul.f32 %v3619, %v2135
      %v3636 = vmul.f32 %v3620, %v2135
      %v3637 = vadd.f32 %v3589, %v3621
      %v3638 = vadd.f32 %v3590, %v3622
      %v3639 = vadd.f32 %v3591, %v3623
      %v3640 = vadd.f32 %v3592, %v3624
      %v3641 = vadd.f32 %v3593, %v3625
      %v3642 = vadd.f32 %v3594, %v3626
      %v3643 = vadd.f32 %v3595, %v3627
      %v3644 = vadd.f32 %v3596, %v3628
      %v3645 = vadd.f32 %v3597, %v3629
      %v3646 = vadd.f32 %v3598, %v3630
      %v3647 = vadd.f32 %v3599, %v3631
      %v3648 = vadd.f32 %v3600, %v3632
      %v3649 = vadd.f32 %v3601, %v3633
      %v3650 = vadd.f32 %v3602, %v3634
      %v3651 = vadd.f32 %v3603, %v3635
      %v3652 = vadd.f32 %v3604, %v3636
      %v3653 = vld [vmem:[%s3556 + $0x2] sm:$0xff]
      %v3654 = vld [vmem:[%s3556 + $0xa] sm:$0xff]
      %v3655 = vld [vmem:[%s3556 + $0x12] sm:$0xff]
      %v3656 = vld [vmem:[%s3556 + $0x1a] sm:$0xff]
      %v3657 = vld [vmem:[%s3556 + $0x2a] sm:$0xff]
      %v3658 = vld [vmem:[%s3556 + $0x32] sm:$0xff]
      %v3659 = vld [vmem:[%s3556 + $0x3a] sm:$0xff]
      %v3660 = vld [vmem:[%s3556 + $0x42] sm:$0xff]
      %v3661 = vld [vmem:[%s3556 + $0x52] sm:$0xff]
      %v3662 = vld [vmem:[%s3556 + $0x5a] sm:$0xff]
      %v3663 = vld [vmem:[%s3556 + $0x62] sm:$0xff]
      %v3664 = vld [vmem:[%s3556 + $0x6a] sm:$0xff]
      %v3665 = vld [vmem:[%s3556 + $0x7a] sm:$0xff]
      %v3666 = vld [vmem:[%s3556 + $0x82] sm:$0xff]
      %v3667 = vld [vmem:[%s3556 + $0x8a] sm:$0xff]
      %v3668 = vld [vmem:[%s3556 + $0x92] sm:$0xff]
      %v3669 = vmul.f32 %v3653, %v2187
      %v3670 = vmul.f32 %v3654, %v2187
      %v3671 = vmul.f32 %v3655, %v2187
      %v3672 = vmul.f32 %v3656, %v2187
      %v3673 = vmul.f32 %v3657, %v2187
      %v3674 = vmul.f32 %v3658, %v2187
      %v3675 = vmul.f32 %v3659, %v2187
      %v3676 = vmul.f32 %v3660, %v2187
      %v3677 = vmul.f32 %v3661, %v2187
      %v3678 = vmul.f32 %v3662, %v2187
      %v3679 = vmul.f32 %v3663, %v2187
      %v3680 = vmul.f32 %v3664, %v2187
      %v3681 = vmul.f32 %v3665, %v2187
      %v3682 = vmul.f32 %v3666, %v2187
      %v3683 = vmul.f32 %v3667, %v2187
      %v3684 = vmul.f32 %v3668, %v2187
      %v3685 = vadd.f32 %v3637, %v3669
      %v3686 = vadd.f32 %v3638, %v3670
      %v3687 = vadd.f32 %v3639, %v3671
      %v3688 = vadd.f32 %v3640, %v3672
      %v3689 = vadd.f32 %v3641, %v3673
      %v3690 = vadd.f32 %v3642, %v3674
      %v3691 = vadd.f32 %v3643, %v3675
      %v3692 = vadd.f32 %v3644, %v3676
      %v3693 = vadd.f32 %v3645, %v3677
      %v3694 = vadd.f32 %v3646, %v3678
      %v3695 = vadd.f32 %v3647, %v3679
      %v3696 = vadd.f32 %v3648, %v3680
      %v3697 = vadd.f32 %v3649, %v3681
      %v3698 = vadd.f32 %v3650, %v3682
      %v3699 = vadd.f32 %v3651, %v3683
      %v3700 = vadd.f32 %v3652, %v3684
      %s3701 = scalar_lea.vmem [#allocation2], 360
      %v3702 = vld [vmem:[%s3701] sm:$0xff]
      %v3703 = vld [vmem:[%s3701 + $0x8] sm:$0xff]
      %v3704 = vld [vmem:[%s3701 + $0x10] sm:$0xff]
      %v3705 = vld [vmem:[%s3701 + $0x18] sm:$0xff]
      %v3706 = vld [vmem:[%s3701 + $0x28] sm:$0xff]
      %v3707 = vld [vmem:[%s3701 + $0x30] sm:$0xff]
      %v3708 = vld [vmem:[%s3701 + $0x38] sm:$0xff]
      %v3709 = vld [vmem:[%s3701 + $0x40] sm:$0xff]
      %v3710 = vld [vmem:[%s3701 + $0x50] sm:$0xff]
      %v3711 = vld [vmem:[%s3701 + $0x58] sm:$0xff]
      %v3712 = vld [vmem:[%s3701 + $0x60] sm:$0xff]
      %v3713 = vld [vmem:[%s3701 + $0x68] sm:$0xff]
      %v3714 = vld [vmem:[%s3701 + $0x78] sm:$0xff]
      %v3715 = vld [vmem:[%s3701 + $0x80] sm:$0xff]
      %v3716 = vld [vmem:[%s3701 + $0x88] sm:$0xff]
      %v3717 = vld [vmem:[%s3701 + $0x90] sm:$0xff]
      %v3718 = vmul.f32 %v3702, %v2240
      %v3719 = vmul.f32 %v3703, %v2240
      %v3720 = vmul.f32 %v3704, %v2240
      %v3721 = vmul.f32 %v3705, %v2240
      %v3722 = vmul.f32 %v3706, %v2240
      %v3723 = vmul.f32 %v3707, %v2240
      %v3724 = vmul.f32 %v3708, %v2240
      %v3725 = vmul.f32 %v3709, %v2240
      %v3726 = vmul.f32 %v3710, %v2240
      %v3727 = vmul.f32 %v3711, %v2240
      %v3728 = vmul.f32 %v3712, %v2240
      %v3729 = vmul.f32 %v3713, %v2240
      %v3730 = vmul.f32 %v3714, %v2240
      %v3731 = vmul.f32 %v3715, %v2240
      %v3732 = vmul.f32 %v3716, %v2240
      %v3733 = vmul.f32 %v3717, %v2240
      %v3734 = vadd.f32 %v3685, %v3718
      %v3735 = vadd.f32 %v3686, %v3719
      %v3736 = vadd.f32 %v3687, %v3720
      %v3737 = vadd.f32 %v3688, %v3721
      %v3738 = vadd.f32 %v3689, %v3722
      %v3739 = vadd.f32 %v3690, %v3723
      %v3740 = vadd.f32 %v3691, %v3724
      %v3741 = vadd.f32 %v3692, %v3725
      %v3742 = vadd.f32 %v3693, %v3726
      %v3743 = vadd.f32 %v3694, %v3727
      %v3744 = vadd.f32 %v3695, %v3728
      %v3745 = vadd.f32 %v3696, %v3729
      %v3746 = vadd.f32 %v3697, %v3730
      %v3747 = vadd.f32 %v3698, %v3731
      %v3748 = vadd.f32 %v3699, %v3732
      %v3749 = vadd.f32 %v3700, %v3733
      %v3750 = vld [vmem:[%s3701 + $0x1] sm:$0xff]
      %v3751 = vld [vmem:[%s3701 + $0x9] sm:$0xff]
      %v3752 = vld [vmem:[%s3701 + $0x11] sm:$0xff]
      %v3753 = vld [vmem:[%s3701 + $0x19] sm:$0xff]
      %v3754 = vld [vmem:[%s3701 + $0x29] sm:$0xff]
      %v3755 = vld [vmem:[%s3701 + $0x31] sm:$0xff]
      %v3756 = vld [vmem:[%s3701 + $0x39] sm:$0xff]
      %v3757 = vld [vmem:[%s3701 + $0x41] sm:$0xff]
      %v3758 = vld [vmem:[%s3701 + $0x51] sm:$0xff]
      %v3759 = vld [vmem:[%s3701 + $0x59] sm:$0xff]
      %v3760 = vld [vmem:[%s3701 + $0x61] sm:$0xff]
      %v3761 = vld [vmem:[%s3701 + $0x69] sm:$0xff]
      %v3762 = vld [vmem:[%s3701 + $0x79] sm:$0xff]
      %v3763 = vld [vmem:[%s3701 + $0x81] sm:$0xff]
      %v3764 = vld [vmem:[%s3701 + $0x89] sm:$0xff]
      %v3765 = vld [vmem:[%s3701 + $0x91] sm:$0xff]
      %v3766 = vmul.f32 %v3750, %v2292
      %v3767 = vmul.f32 %v3751, %v2292
      %v3768 = vmul.f32 %v3752, %v2292
      %v3769 = vmul.f32 %v3753, %v2292
      %v3770 = vmul.f32 %v3754, %v2292
      %v3771 = vmul.f32 %v3755, %v2292
      %v3772 = vmul.f32 %v3756, %v2292
      %v3773 = vmul.f32 %v3757, %v2292
      %v3774 = vmul.f32 %v3758, %v2292
      %v3775 = vmul.f32 %v3759, %v2292
      %v3776 = vmul.f32 %v3760, %v2292
      %v3777 = vmul.f32 %v3761, %v2292
      %v3778 = vmul.f32 %v3762, %v2292
      %v3779 = vmul.f32 %v3763, %v2292
      %v3780 = vmul.f32 %v3764, %v2292
      %v3781 = vmul.f32 %v3765, %v2292
      %v3782 = vadd.f32 %v3734, %v3766
      %v3783 = vadd.f32 %v3735, %v3767
      %v3784 = vadd.f32 %v3736, %v3768
      %v3785 = vadd.f32 %v3737, %v3769
      %v3786 = vadd.f32 %v3738, %v3770
      %v3787 = vadd.f32 %v3739, %v3771
      %v3788 = vadd.f32 %v3740, %v3772
      %v3789 = vadd.f32 %v3741, %v3773
      %v3790 = vadd.f32 %v3742, %v3774
      %v3791 = vadd.f32 %v3743, %v3775
      %v3792 = vadd.f32 %v3744, %v3776
      %v3793 = vadd.f32 %v3745, %v3777
      %v3794 = vadd.f32 %v3746, %v3778
      %v3795 = vadd.f32 %v3747, %v3779
      %v3796 = vadd.f32 %v3748, %v3780
      %v3797 = vadd.f32 %v3749, %v3781
      %v3798 = vld [vmem:[%s3701 + $0x2] sm:$0xff]
      %v3799 = vld [vmem:[%s3701 + $0xa] sm:$0xff]
      %v3800 = vld [vmem:[%s3701 + $0x12] sm:$0xff]
      %v3801 = vld [vmem:[%s3701 + $0x1a] sm:$0xff]
      %v3802 = vld [vmem:[%s3701 + $0x2a] sm:$0xff]
      %v3803 = vld [vmem:[%s3701 + $0x32] sm:$0xff]
      %v3804 = vld [vmem:[%s3701 + $0x3a] sm:$0xff]
      %v3805 = vld [vmem:[%s3701 + $0x42] sm:$0xff]
      %v3806 = vld [vmem:[%s3701 + $0x52] sm:$0xff]
      %v3807 = vld [vmem:[%s3701 + $0x5a] sm:$0xff]
      %v3808 = vld [vmem:[%s3701 + $0x62] sm:$0xff]
      %v3809 = vld [vmem:[%s3701 + $0x6a] sm:$0xff]
      %v3810 = vld [vmem:[%s3701 + $0x7a] sm:$0xff]
      %v3811 = vld [vmem:[%s3701 + $0x82] sm:$0xff]
      %v3812 = vld [vmem:[%s3701 + $0x8a] sm:$0xff]
      %v3813 = vld [vmem:[%s3701 + $0x92] sm:$0xff]
      %v3814 = vmul.f32 %v3798, %v2344
      %v3815 = vmul.f32 %v3799, %v2344
      %v3816 = vmul.f32 %v3800, %v2344
      %v3817 = vmul.f32 %v3801, %v2344
      %v3818 = vmul.f32 %v3802, %v2344
      %v3819 = vmul.f32 %v3803, %v2344
      %v3820 = vmul.f32 %v3804, %v2344
      %v3821 = vmul.f32 %v3805, %v2344
      %v3822 = vmul.f32 %v3806, %v2344
      %v3823 = vmul.f32 %v3807, %v2344
      %v3824 = vmul.f32 %v3808, %v2344
      %v3825 = vmul.f32 %v3809, %v2344
      %v3826 = vmul.f32 %v3810, %v2344
      %v3827 = vmul.f32 %v3811, %v2344
      %v3828 = vmul.f32 %v3812, %v2344
      %v3829 = vmul.f32 %v3813, %v2344
      %v3830 = vadd.f32 %v3782, %v3814
      %v3831 = vadd.f32 %v3783, %v3815
      %v3832 = vadd.f32 %v3784, %v3816
      %v3833 = vadd.f32 %v3785, %v3817
      %v3834 = vadd.f32 %v3786, %v3818
      %v3835 = vadd.f32 %v3787, %v3819
      %v3836 = vadd.f32 %v3788, %v3820
      %v3837 = vadd.f32 %v3789, %v3821
      %v3838 = vadd.f32 %v3790, %v3822
      %v3839 = vadd.f32 %v3791, %v3823
      %v3840 = vadd.f32 %v3792, %v3824
      %v3841 = vadd.f32 %v3793, %v3825
      %v3842 = vadd.f32 %v3794, %v3826
      %v3843 = vadd.f32 %v3795, %v3827
      %v3844 = vadd.f32 %v3796, %v3828
      %v3845 = vadd.f32 %v3797, %v3829
      %s3846 = scalar_lea.vmem [#allocation2], 400
      %v3847 = vld [vmem:[%s3846] sm:$0xff]
      %v3848 = vld [vmem:[%s3846 + $0x8] sm:$0xff]
      %v3849 = vld [vmem:[%s3846 + $0x10] sm:$0xff]
      %v3850 = vld [vmem:[%s3846 + $0x18] sm:$0xff]
      %v3851 = vld [vmem:[%s3846 + $0x28] sm:$0xff]
      %v3852 = vld [vmem:[%s3846 + $0x30] sm:$0xff]
      %v3853 = vld [vmem:[%s3846 + $0x38] sm:$0xff]
      %v3854 = vld [vmem:[%s3846 + $0x40] sm:$0xff]
      %v3855 = vld [vmem:[%s3846 + $0x50] sm:$0xff]
      %v3856 = vld [vmem:[%s3846 + $0x58] sm:$0xff]
      %v3857 = vld [vmem:[%s3846 + $0x60] sm:$0xff]
      %v3858 = vld [vmem:[%s3846 + $0x68] sm:$0xff]
      %v3859 = vld [vmem:[%s3846 + $0x78] sm:$0xff]
      %v3860 = vld [vmem:[%s3846 + $0x80] sm:$0xff]
      %v3861 = vld [vmem:[%s3846 + $0x88] sm:$0xff]
      %v3862 = vld [vmem:[%s3846 + $0x90] sm:$0xff]
      %v3863 = vmul.f32 %v3847, %v2397
      %v3864 = vmul.f32 %v3848, %v2397
      %v3865 = vmul.f32 %v3849, %v2397
      %v3866 = vmul.f32 %v3850, %v2397
      %v3867 = vmul.f32 %v3851, %v2397
      %v3868 = vmul.f32 %v3852, %v2397
      %v3869 = vmul.f32 %v3853, %v2397
      %v3870 = vmul.f32 %v3854, %v2397
      %v3871 = vmul.f32 %v3855, %v2397
      %v3872 = vmul.f32 %v3856, %v2397
      %v3873 = vmul.f32 %v3857, %v2397
      %v3874 = vmul.f32 %v3858, %v2397
      %v3875 = vmul.f32 %v3859, %v2397
      %v3876 = vmul.f32 %v3860, %v2397
      %v3877 = vmul.f32 %v3861, %v2397
      %v3878 = vmul.f32 %v3862, %v2397
      %v3879 = vadd.f32 %v3830, %v3863
      %v3880 = vadd.f32 %v3831, %v3864
      %v3881 = vadd.f32 %v3832, %v3865
      %v3882 = vadd.f32 %v3833, %v3866
      %v3883 = vadd.f32 %v3834, %v3867
      %v3884 = vadd.f32 %v3835, %v3868
      %v3885 = vadd.f32 %v3836, %v3869
      %v3886 = vadd.f32 %v3837, %v3870
      %v3887 = vadd.f32 %v3838, %v3871
      %v3888 = vadd.f32 %v3839, %v3872
      %v3889 = vadd.f32 %v3840, %v3873
      %v3890 = vadd.f32 %v3841, %v3874
      %v3891 = vadd.f32 %v3842, %v3875
      %v3892 = vadd.f32 %v3843, %v3876
      %v3893 = vadd.f32 %v3844, %v3877
      %v3894 = vadd.f32 %v3845, %v3878
      %v3895 = vld [vmem:[%s3846 + $0x1] sm:$0xff]
      %v3896 = vld [vmem:[%s3846 + $0x9] sm:$0xff]
      %v3897 = vld [vmem:[%s3846 + $0x11] sm:$0xff]
      %v3898 = vld [vmem:[%s3846 + $0x19] sm:$0xff]
      %v3899 = vld [vmem:[%s3846 + $0x29] sm:$0xff]
      %v3900 = vld [vmem:[%s3846 + $0x31] sm:$0xff]
      %v3901 = vld [vmem:[%s3846 + $0x39] sm:$0xff]
      %v3902 = vld [vmem:[%s3846 + $0x41] sm:$0xff]
      %v3903 = vld [vmem:[%s3846 + $0x51] sm:$0xff]
      %v3904 = vld [vmem:[%s3846 + $0x59] sm:$0xff]
      %v3905 = vld [vmem:[%s3846 + $0x61] sm:$0xff]
      %v3906 = vld [vmem:[%s3846 + $0x69] sm:$0xff]
      %v3907 = vld [vmem:[%s3846 + $0x79] sm:$0xff]
      %v3908 = vld [vmem:[%s3846 + $0x81] sm:$0xff]
      %v3909 = vld [vmem:[%s3846 + $0x89] sm:$0xff]
      %v3910 = vld [vmem:[%s3846 + $0x91] sm:$0xff]
      %v3911 = vmul.f32 %v3895, %v2449
      %v3912 = vmul.f32 %v3896, %v2449
      %v3913 = vmul.f32 %v3897, %v2449
      %v3914 = vmul.f32 %v3898, %v2449
      %v3915 = vmul.f32 %v3899, %v2449
      %v3916 = vmul.f32 %v3900, %v2449
      %v3917 = vmul.f32 %v3901, %v2449
      %v3918 = vmul.f32 %v3902, %v2449
      %v3919 = vmul.f32 %v3903, %v2449
      %v3920 = vmul.f32 %v3904, %v2449
      %v3921 = vmul.f32 %v3905, %v2449
      %v3922 = vmul.f32 %v3906, %v2449
      %v3923 = vmul.f32 %v3907, %v2449
      %v3924 = vmul.f32 %v3908, %v2449
      %v3925 = vmul.f32 %v3909, %v2449
      %v3926 = vmul.f32 %v3910, %v2449
      %v3927 = vadd.f32 %v3879, %v3911
      %v3928 = vadd.f32 %v3880, %v3912
      %v3929 = vadd.f32 %v3881, %v3913
      %v3930 = vadd.f32 %v3882, %v3914
      %v3931 = vadd.f32 %v3883, %v3915
      %v3932 = vadd.f32 %v3884, %v3916
      %v3933 = vadd.f32 %v3885, %v3917
      %v3934 = vadd.f32 %v3886, %v3918
      %v3935 = vadd.f32 %v3887, %v3919
      %v3936 = vadd.f32 %v3888, %v3920
      %v3937 = vadd.f32 %v3889, %v3921
      %v3938 = vadd.f32 %v3890, %v3922
      %v3939 = vadd.f32 %v3891, %v3923
      %v3940 = vadd.f32 %v3892, %v3924
      %v3941 = vadd.f32 %v3893, %v3925
      %v3942 = vadd.f32 %v3894, %v3926
      %v3943 = vld [vmem:[%s3846 + $0x2] sm:$0xff]
      %v3944 = vld [vmem:[%s3846 + $0xa] sm:$0xff]
      %v3945 = vld [vmem:[%s3846 + $0x12] sm:$0xff]
      %v3946 = vld [vmem:[%s3846 + $0x1a] sm:$0xff]
      %v3947 = vld [vmem:[%s3846 + $0x2a] sm:$0xff]
      %v3948 = vld [vmem:[%s3846 + $0x32] sm:$0xff]
      %v3949 = vld [vmem:[%s3846 + $0x3a] sm:$0xff]
      %v3950 = vld [vmem:[%s3846 + $0x42] sm:$0xff]
      %v3951 = vld [vmem:[%s3846 + $0x52] sm:$0xff]
      %v3952 = vld [vmem:[%s3846 + $0x5a] sm:$0xff]
      %v3953 = vld [vmem:[%s3846 + $0x62] sm:$0xff]
      %v3954 = vld [vmem:[%s3846 + $0x6a] sm:$0xff]
      %v3955 = vld [vmem:[%s3846 + $0x7a] sm:$0xff]
      %v3956 = vld [vmem:[%s3846 + $0x82] sm:$0xff]
      %v3957 = vld [vmem:[%s3846 + $0x8a] sm:$0xff]
      %v3958 = vld [vmem:[%s3846 + $0x92] sm:$0xff]
      %v3959 = vmul.f32 %v3943, %v2501
      %v3960 = vmul.f32 %v3944, %v2501
      %v3961 = vmul.f32 %v3945, %v2501
      %v3962 = vmul.f32 %v3946, %v2501
      %v3963 = vmul.f32 %v3947, %v2501
      %v3964 = vmul.f32 %v3948, %v2501
      %v3965 = vmul.f32 %v3949, %v2501
      %v3966 = vmul.f32 %v3950, %v2501
      %v3967 = vmul.f32 %v3951, %v2501
      %v3968 = vmul.f32 %v3952, %v2501
      %v3969 = vmul.f32 %v3953, %v2501
      %v3970 = vmul.f32 %v3954, %v2501
      %v3971 = vmul.f32 %v3955, %v2501
      %v3972 = vmul.f32 %v3956, %v2501
      %v3973 = vmul.f32 %v3957, %v2501
      %v3974 = vmul.f32 %v3958, %v2501
      %v3975 = vadd.f32 %v3927, %v3959
      %v3976 = vadd.f32 %v3928, %v3960
      %v3977 = vadd.f32 %v3929, %v3961
      %v3978 = vadd.f32 %v3930, %v3962
      %v3979 = vadd.f32 %v3931, %v3963
      %v3980 = vadd.f32 %v3932, %v3964
      %v3981 = vadd.f32 %v3933, %v3965
      %v3982 = vadd.f32 %v3934, %v3966
      %v3983 = vadd.f32 %v3935, %v3967
      %v3984 = vadd.f32 %v3936, %v3968
      %v3985 = vadd.f32 %v3937, %v3969
      %v3986 = vadd.f32 %v3938, %v3970
      %v3987 = vadd.f32 %v3939, %v3971
      %v3988 = vadd.f32 %v3940, %v3972
      %v3989 = vadd.f32 %v3941, %v3973
      %v3990 = vadd.f32 %v3942, %v3974
      %v3991 = vmul.f32 %v3975, 0.5
      %v3992 = vmul.f32 %v3976, 0.5
      %v3993 = vmul.f32 %v3977, 0.5
      %v3994 = vmul.f32 %v3978, 0.5
      %v3995 = vmul.f32 %v3979, 0.5
      %v3996 = vmul.f32 %v3980, 0.5
      %v3997 = vmul.f32 %v3981, 0.5
      %v3998 = vmul.f32 %v3982, 0.5
      %v3999 = vmul.f32 %v3983, 0.5
      %v4000 = vmul.f32 %v3984, 0.5
      %v4001 = vmul.f32 %v3985, 0.5
      %v4002 = vmul.f32 %v3986, 0.5
      %v4003 = vmul.f32 %v3987, 0.5
      %v4004 = vmul.f32 %v3988, 0.5
      %v4005 = vmul.f32 %v3989, 0.5
      %v4006 = vmul.f32 %v3990, 0.5
      %v4007 = vmul.f32 %v3975, 0.70710677
      %v4008 = vmul.f32 %v3976, 0.70710677
      %v4009 = vmul.f32 %v3977, 0.70710677
      %v4010 = vmul.f32 %v3978, 0.70710677
      %v4011 = vmul.f32 %v3979, 0.70710677
      %v4012 = vmul.f32 %v3980, 0.70710677
      %v4013 = vmul.f32 %v3981, 0.70710677
      %v4014 = vmul.f32 %v3982, 0.70710677
      %v4015 = vmul.f32 %v3983, 0.70710677
      %v4016 = vmul.f32 %v3984, 0.70710677
      %v4017 = vmul.f32 %v3985, 0.70710677
      %v4018 = vmul.f32 %v3986, 0.70710677
      %v4019 = vmul.f32 %v3987, 0.70710677
      %v4020 = vmul.f32 %v3988, 0.70710677
      %v4021 = vmul.f32 %v3989, 0.70710677
      %v4022 = vmul.f32 %v3990, 0.70710677
      %v4023 = verf.f32.pop %v4007
      %v4024 = verf.f32.pop %v4008
      %v4025 = verf.f32.pop %v4009
      %v4026 = verf.f32.pop %v4010
      %v4027 = verf.f32.pop %v4011
      %v4028 = verf.f32.pop %v4012
      %v4029 = verf.f32.pop %v4013
      %v4030 = verf.f32.pop %v4014
      %v4031 = verf.f32.pop %v4015
      %v4032 = verf.f32.pop %v4016
      %v4033 = verf.f32.pop %v4017
      %v4034 = verf.f32.pop %v4018
      %v4035 = verf.f32.pop %v4019
      %v4036 = verf.f32.pop %v4020
      %v4037 = verf.f32.pop %v4021
      %v4038 = verf.f32.pop %v4022
      %v4039 = vadd.f32 %v4023, 1.0
      %v4040 = vadd.f32 %v4024, 1.0
      %v4041 = vadd.f32 %v4025, 1.0
      %v4042 = vadd.f32 %v4026, 1.0
      %v4043 = vadd.f32 %v4027, 1.0
      %v4044 = vadd.f32 %v4028, 1.0
      %v4045 = vadd.f32 %v4029, 1.0
      %v4046 = vadd.f32 %v4030, 1.0
      %v4047 = vadd.f32 %v4031, 1.0
      %v4048 = vadd.f32 %v4032, 1.0
      %v4049 = vadd.f32 %v4033, 1.0
      %v4050 = vadd.f32 %v4034, 1.0
      %v4051 = vadd.f32 %v4035, 1.0
      %v4052 = vadd.f32 %v4036, 1.0
      %v4053 = vadd.f32 %v4037, 1.0
      %v4054 = vadd.f32 %v4038, 1.0
      %v4055 = vmul.f32 %v3991, %v4039
      %v4056 = vmul.f32 %v3992, %v4040
      %v4057 = vmul.f32 %v3993, %v4041
      %v4058 = vmul.f32 %v3994, %v4042
      %v4059 = vmul.f32 %v3995, %v4043
      %v4060 = vmul.f32 %v3996, %v4044
      %v4061 = vmul.f32 %v3997, %v4045
      %v4062 = vmul.f32 %v3998, %v4046
      %v4063 = vmul.f32 %v3999, %v4047
      %v4064 = vmul.f32 %v4000, %v4048
      %v4065 = vmul.f32 %v4001, %v4049
      %v4066 = vmul.f32 %v4002, %v4050
      %v4067 = vmul.f32 %v4003, %v4051
      %v4068 = vmul.f32 %v4004, %v4052
      %v4069 = vmul.f32 %v4005, %v4053
      %v4070 = vmul.f32 %v4006, %v4054
      %4087 = vrot.lane.b32.xlu0 %v3975, 96
      %v4088 = vpop.permute.xlu0 %4087
      %4089 = vrot.lane.b32.xlu0 %v3976, 96
      %v4090 = vpop.permute.xlu0 %4089
      %4091 = vrot.lane.b32.xlu0 %v3977, 96
      %v4092 = vpop.permute.xlu0 %4091
      %4093 = vrot.lane.b32.xlu0 %v3978, 96
      %v4094 = vpop.permute.xlu0 %4093
      %4095 = vrot.lane.b32.xlu0 %v3979, 96
      %v4096 = vpop.permute.xlu0 %4095
      %4097 = vrot.lane.b32.xlu0 %v3980, 96
      %v4098 = vpop.permute.xlu0 %4097
      %4099 = vrot.lane.b32.xlu0 %v3981, 96
      %v4100 = vpop.permute.xlu0 %4099
      %4101 = vrot.lane.b32.xlu0 %v3982, 96
      %v4102 = vpop.permute.xlu0 %4101
      %4103 = vrot.lane.b32.xlu0 %v3983, 96
      %v4104 = vpop.permute.xlu0 %4103
      %4105 = vrot.lane.b32.xlu0 %v3984, 96
      %v4106 = vpop.permute.xlu0 %4105
      %4107 = vrot.lane.b32.xlu0 %v3985, 96
      %v4108 = vpop.permute.xlu0 %4107
      %4109 = vrot.lane.b32.xlu0 %v3986, 96
      %v4110 = vpop.permute.xlu0 %4109
      %4111 = vrot.lane.b32.xlu0 %v3987, 96
      %v4112 = vpop.permute.xlu0 %4111
      %4113 = vrot.lane.b32.xlu0 %v3988, 96
      %v4114 = vpop.permute.xlu0 %4113
      %4115 = vrot.lane.b32.xlu0 %v3989, 96
      %v4116 = vpop.permute.xlu0 %4115
      %4117 = vrot.lane.b32.xlu0 %v3990, 96
      %v4118 = vpop.permute.xlu0 %4117
      %v4135 = vmul.f32 %v4055, %v4088
      %v4136 = vmul.f32 %v4056, %v4090
      %v4137 = vmul.f32 %v4057, %v4092
      %v4138 = vmul.f32 %v4058, %v4094
      %v4139 = vmul.f32 %v4059, %v4096
      %v4140 = vmul.f32 %v4060, %v4098
      %v4141 = vmul.f32 %v4061, %v4100
      %v4142 = vmul.f32 %v4062, %v4102
      %v4143 = vmul.f32 %v4063, %v4104
      %v4144 = vmul.f32 %v4064, %v4106
      %v4145 = vmul.f32 %v4065, %v4108
      %v4146 = vmul.f32 %v4066, %v4110
      %v4147 = vmul.f32 %v4067, %v4112
      %v4148 = vmul.f32 %v4068, %v4114
      %v4149 = vmul.f32 %v4069, %v4116
      %v4150 = vmul.f32 %v4070, %v4118
      %v4152 = vsel %vm2704, %v4135, 0
      %v4155 = vsel %vm2704, %v4136, 0
      %v4158 = vsel %vm2704, %v4137, 0
      %v4161 = vsel %vm2704, %v4138, 0
      %v4164 = vsel %vm2704, %v4139, 0
      %v4167 = vsel %vm2704, %v4140, 0
      %v4170 = vsel %vm2704, %v4141, 0
      %v4173 = vsel %vm2704, %v4142, 0
      %v4176 = vsel %vm2704, %v4143, 0
      %v4179 = vsel %vm2704, %v4144, 0
      %v4182 = vsel %vm2704, %v4145, 0
      %v4185 = vsel %vm2704, %v4146, 0
      %v4188 = vsel %vm2704, %v4147, 0
      %v4191 = vsel %vm2704, %v4148, 0
      %v4194 = vsel %vm2704, %v4149, 0
      %v4197 = vsel %vm2704, %v4150, 0
      %4199 = vmatprep.subr.mxu0 0.0
      %4200 = vmatpush1.xpose.msra.mxu0 %v4152
      %4201 = vmatprep.subr.mxu0 0.0
      %4202 = vmatpush1.xpose.msra.mxu0 %v4155
      %4203 = vmatprep.subr.mxu0 0.0
      %4204 = vmatpush1.xpose.msra.mxu0 %v4158
      %4205 = vmatprep.subr.mxu0 0.0
      %4206 = vmatpush1.xpose.msra.mxu0 %v4161
      %4207 = vmatprep.subr.mxu0 0.0
      %4208 = vmatpush1.xpose.msra.mxu0 %v4164
      %4209 = vmatprep.subr.mxu0 0.0
      %4210 = vmatpush1.xpose.msra.mxu0 %v4167
      %4211 = vmatprep.subr.mxu0 0.0
      %4212 = vmatpush1.xpose.msra.mxu0 %v4170
      %4213 = vmatprep.subr.mxu0 0.0
      %4214 = vmatpush1.xpose.msra.mxu0 %v4173
      %4215 = vmatprep.subr.mxu0 0.0
      %4216 = vmatpush1.xpose.msra.mxu0 %v4176
      %4217 = vmatprep.subr.mxu0 0.0
      %4218 = vmatpush1.xpose.msra.mxu0 %v4179
      %4219 = vmatprep.subr.mxu0 0.0
      %4220 = vmatpush1.xpose.msra.mxu0 %v4182
      %4221 = vmatprep.subr.mxu0 0.0
      %4222 = vmatpush1.xpose.msra.mxu0 %v4185
      %4223 = vmatprep.subr.mxu0 0.0
      %4224 = vmatpush1.xpose.msra.mxu0 %v4188
      %4225 = vmatprep.subr.mxu0 0.0
      %4226 = vmatpush1.xpose.msra.mxu0 %v4191
      %4227 = vmatprep.subr.mxu0 0.0
      %4228 = vmatpush1.xpose.msra.mxu0 %v4194
      %4229 = vmatprep.subr.mxu0 0.0
      %4230 = vmatpush1.xpose.msra.mxu0 %v4197
      %4231 = vmatprep.subr.mxu0 0.0
      %4232 = vmatpush1.xpose.msra.mxu0 0.0
      %4233 = vmatprep.subr.mxu0 0.0
      %4234 = vmatpush1.xpose.msra.mxu0 0.0
      %4235 = vmatprep.subr.mxu0 0.0
      %4236 = vmatpush1.xpose.msra.mxu0 0.0
      %4237 = vmatprep.subr.mxu0 0.0
      %4238 = vmatpush1.xpose.msra.mxu0 0.0
      %4239 = vmatprep.subr.mxu0 0.0
      %4240 = vmatpush1.xpose.msra.mxu0 0.0
      %4241 = vmatprep.subr.mxu0 0.0
      %4242 = vmatpush1.xpose.msra.mxu0 0.0
      %4243 = vmatprep.subr.mxu0 0.0
      %4244 = vmatpush1.xpose.msra.mxu0 0.0
      %4245 = vmatprep.subr.mxu0 0.0
      %4246 = vmatpush1.xpose.msra.mxu0 0.0
      %4247 = vmatprep.subr.mxu0 0.0
      %4248 = vmatpush1.xpose.msra.mxu0 0.0
      %4249 = vmatprep.subr.mxu0 0.0
      %4250 = vmatpush1.xpose.msra.mxu0 0.0
      %4251 = vmatprep.subr.mxu0 0.0
      %4252 = vmatpush1.xpose.msra.mxu0 0.0
      %4253 = vmatprep.subr.mxu0 0.0
      %4254 = vmatpush1.xpose.msra.mxu0 0.0
      %4255 = vmatprep.subr.mxu0 0.0
      %4256 = vmatpush1.xpose.msra.mxu0 0.0
      %4257 = vmatprep.subr.mxu0 0.0
      %4258 = vmatpush1.xpose.msra.mxu0 0.0
      %4259 = vmatprep.subr.mxu0 0.0
      %4260 = vmatpush1.xpose.msra.mxu0 0.0
      %4261 = vmatprep.subr.mxu0 0.0
      %4262 = vmatpush1.xpose.msra.mxu0 0.0
      %4263 = vmatprep.mubr.f32.mxu0 0.0
      %4264 = vmatmul.mubr.f32.gmra.mrb[0].mxu0 %v2706
      %v4265 = vpop.f32.mrb[0].mxu0
      %v4266 = vadd.f32 %v2697, %v4265
      %v4267 = vpop.f32.mrb[0].mxu0
      %4268 = vmatprep.mubr.f32.mxu0 0.0
      %4269 = vmatmul.mubr.f32.gmra.mrb[0].mxu0 %v2709
      %v4270 = vpop.f32.mrb[0].mxu0
      %v4271 = vadd.f32 %v2702, %v4270
      %v4272 = vpop.f32.mrb[0].mxu0
      %4273 = vdwg.mxu0
      %4274 = vst [vmem:[%s497 + $0x10] sm:$0xff] %v4266
      %4275 = vst [vmem:[%s497 + $0x50] sm:$0xff] %v4271
      %s4276 = scalar_lea.vmem [#allocation2], 480
      %v4277 = vld [vmem:[%s4276] sm:$0xff]
      %v4278 = vld [vmem:[%s4276 + $0x8] sm:$0xff]
      %v4279 = vld [vmem:[%s4276 + $0x10] sm:$0xff]
      %v4280 = vld [vmem:[%s4276 + $0x18] sm:$0xff]
      %v4281 = vld [vmem:[%s4276 + $0x28] sm:$0xff]
      %v4282 = vld [vmem:[%s4276 + $0x30] sm:$0xff]
      %v4283 = vld [vmem:[%s4276 + $0x38] sm:$0xff]
      %v4284 = vld [vmem:[%s4276 + $0x40] sm:$0xff]
      %v4285 = vld [vmem:[%s4276 + $0x50] sm:$0xff]
      %v4286 = vld [vmem:[%s4276 + $0x58] sm:$0xff]
      %v4287 = vld [vmem:[%s4276 + $0x60] sm:$0xff]
      %v4288 = vld [vmem:[%s4276 + $0x68] sm:$0xff]
      %v4289 = vld [vmem:[%s4276 + $0x78] sm:$0xff]
      %v4290 = vld [vmem:[%s4276 + $0x80] sm:$0xff]
      %v4291 = vld [vmem:[%s4276 + $0x88] sm:$0xff]
      %v4292 = vld [vmem:[%s4276 + $0x90] sm:$0xff]
      %v4293 = vmul.f32 %v4277, %v2083
      %v4294 = vmul.f32 %v4278, %v2083
      %v4295 = vmul.f32 %v4279, %v2083
      %v4296 = vmul.f32 %v4280, %v2083
      %v4297 = vmul.f32 %v4281, %v2083
      %v4298 = vmul.f32 %v4282, %v2083
      %v4299 = vmul.f32 %v4283, %v2083
      %v4300 = vmul.f32 %v4284, %v2083
      %v4301 = vmul.f32 %v4285, %v2083
      %v4302 = vmul.f32 %v4286, %v2083
      %v4303 = vmul.f32 %v4287, %v2083
      %v4304 = vmul.f32 %v4288, %v2083
      %v4305 = vmul.f32 %v4289, %v2083
      %v4306 = vmul.f32 %v4290, %v2083
      %v4307 = vmul.f32 %v4291, %v2083
      %v4308 = vmul.f32 %v4292, %v2083
      %v4309 = vadd.f32 %v2063, %v4293
      %v4310 = vadd.f32 %v2063, %v4294
      %v4311 = vadd.f32 %v2063, %v4295
      %v4312 = vadd.f32 %v2063, %v4296
      %v4313 = vadd.f32 %v2063, %v4297
      %v4314 = vadd.f32 %v2063, %v4298
      %v4315 = vadd.f32 %v2063, %v4299
      %v4316 = vadd.f32 %v2063, %v4300
      %v4317 = vadd.f32 %v2063, %v4301
      %v4318 = vadd.f32 %v2063, %v4302
      %v4319 = vadd.f32 %v2063, %v4303
      %v4320 = vadd.f32 %v2063, %v4304
      %v4321 = vadd.f32 %v2063, %v4305
      %v4322 = vadd.f32 %v2063, %v4306
      %v4323 = vadd.f32 %v2063, %v4307
      %v4324 = vadd.f32 %v2063, %v4308
      %v4325 = vld [vmem:[%s4276 + $0x1] sm:$0xff]
      %v4326 = vld [vmem:[%s4276 + $0x9] sm:$0xff]
      %v4327 = vld [vmem:[%s4276 + $0x11] sm:$0xff]
      %v4328 = vld [vmem:[%s4276 + $0x19] sm:$0xff]
      %v4329 = vld [vmem:[%s4276 + $0x29] sm:$0xff]
      %v4330 = vld [vmem:[%s4276 + $0x31] sm:$0xff]
      %v4331 = vld [vmem:[%s4276 + $0x39] sm:$0xff]
      %v4332 = vld [vmem:[%s4276 + $0x41] sm:$0xff]
      %v4333 = vld [vmem:[%s4276 + $0x51] sm:$0xff]
      %v4334 = vld [vmem:[%s4276 + $0x59] sm:$0xff]
      %v4335 = vld [vmem:[%s4276 + $0x61] sm:$0xff]
      %v4336 = vld [vmem:[%s4276 + $0x69] sm:$0xff]
      %v4337 = vld [vmem:[%s4276 + $0x79] sm:$0xff]
      %v4338 = vld [vmem:[%s4276 + $0x81] sm:$0xff]
      %v4339 = vld [vmem:[%s4276 + $0x89] sm:$0xff]
      %v4340 = vld [vmem:[%s4276 + $0x91] sm:$0xff]
      %v4341 = vmul.f32 %v4325, %v2135
      %v4342 = vmul.f32 %v4326, %v2135
      %v4343 = vmul.f32 %v4327, %v2135
      %v4344 = vmul.f32 %v4328, %v2135
      %v4345 = vmul.f32 %v4329, %v2135
      %v4346 = vmul.f32 %v4330, %v2135
      %v4347 = vmul.f32 %v4331, %v2135
      %v4348 = vmul.f32 %v4332, %v2135
      %v4349 = vmul.f32 %v4333, %v2135
      %v4350 = vmul.f32 %v4334, %v2135
      %v4351 = vmul.f32 %v4335, %v2135
      %v4352 = vmul.f32 %v4336, %v2135
      %v4353 = vmul.f32 %v4337, %v2135
      %v4354 = vmul.f32 %v4338, %v2135
      %v4355 = vmul.f32 %v4339, %v2135
      %v4356 = vmul.f32 %v4340, %v2135
      %v4357 = vadd.f32 %v4309, %v4341
      %v4358 = vadd.f32 %v4310, %v4342
      %v4359 = vadd.f32 %v4311, %v4343
      %v4360 = vadd.f32 %v4312, %v4344
      %v4361 = vadd.f32 %v4313, %v4345
      %v4362 = vadd.f32 %v4314, %v4346
      %v4363 = vadd.f32 %v4315, %v4347
      %v4364 = vadd.f32 %v4316, %v4348
      %v4365 = vadd.f32 %v4317, %v4349
      %v4366 = vadd.f32 %v4318, %v4350
      %v4367 = vadd.f32 %v4319, %v4351
      %v4368 = vadd.f32 %v4320, %v4352
      %v4369 = vadd.f32 %v4321, %v4353
      %v4370 = vadd.f32 %v4322, %v4354
      %v4371 = vadd.f32 %v4323, %v4355
      %v4372 = vadd.f32 %v4324, %v4356
      %v4373 = vld [vmem:[%s4276 + $0x2] sm:$0xff]
      %v4374 = vld [vmem:[%s4276 + $0xa] sm:$0xff]
      %v4375 = vld [vmem:[%s4276 + $0x12] sm:$0xff]
      %v4376 = vld [vmem:[%s4276 + $0x1a] sm:$0xff]
      %v4377 = vld [vmem:[%s4276 + $0x2a] sm:$0xff]
      %v4378 = vld [vmem:[%s4276 + $0x32] sm:$0xff]
      %v4379 = vld [vmem:[%s4276 + $0x3a] sm:$0xff]
      %v4380 = vld [vmem:[%s4276 + $0x42] sm:$0xff]
      %v4381 = vld [vmem:[%s4276 + $0x52] sm:$0xff]
      %v4382 = vld [vmem:[%s4276 + $0x5a] sm:$0xff]
      %v4383 = vld [vmem:[%s4276 + $0x62] sm:$0xff]
      %v4384 = vld [vmem:[%s4276 + $0x6a] sm:$0xff]
      %v4385 = vld [vmem:[%s4276 + $0x7a] sm:$0xff]
      %v4386 = vld [vmem:[%s4276 + $0x82] sm:$0xff]
      %v4387 = vld [vmem:[%s4276 + $0x8a] sm:$0xff]
      %v4388 = vld [vmem:[%s4276 + $0x92] sm:$0xff]
      %v4389 = vmul.f32 %v4373, %v2187
      %v4390 = vmul.f32 %v4374, %v2187
      %v4391 = vmul.f32 %v4375, %v2187
      %v4392 = vmul.f32 %v4376, %v2187
      %v4393 = vmul.f32 %v4377, %v2187
      %v4394 = vmul.f32 %v4378, %v2187
      %v4395 = vmul.f32 %v4379, %v2187
      %v4396 = vmul.f32 %v4380, %v2187
      %v4397 = vmul.f32 %v4381, %v2187
      %v4398 = vmul.f32 %v4382, %v2187
      %v4399 = vmul.f32 %v4383, %v2187
      %v4400 = vmul.f32 %v4384, %v2187
      %v4401 = vmul.f32 %v4385, %v2187
      %v4402 = vmul.f32 %v4386, %v2187
      %v4403 = vmul.f32 %v4387, %v2187
      %v4404 = vmul.f32 %v4388, %v2187
      %v4405 = vadd.f32 %v4357, %v4389
      %v4406 = vadd.f32 %v4358, %v4390
      %v4407 = vadd.f32 %v4359, %v4391
      %v4408 = vadd.f32 %v4360, %v4392
      %v4409 = vadd.f32 %v4361, %v4393
      %v4410 = vadd.f32 %v4362, %v4394
      %v4411 = vadd.f32 %v4363, %v4395
      %v4412 = vadd.f32 %v4364, %v4396
      %v4413 = vadd.f32 %v4365, %v4397
      %v4414 = vadd.f32 %v4366, %v4398
      %v4415 = vadd.f32 %v4367, %v4399
      %v4416 = vadd.f32 %v4368, %v4400
      %v4417 = vadd.f32 %v4369, %v4401
      %v4418 = vadd.f32 %v4370, %v4402
      %v4419 = vadd.f32 %v4371, %v4403
      %v4420 = vadd.f32 %v4372, %v4404
      %s4421 = scalar_lea.vmem [#allocation2], 520
      %v4422 = vld [vmem:[%s4421] sm:$0xff]
      %v4423 = vld [vmem:[%s4421 + $0x8] sm:$0xff]
      %v4424 = vld [vmem:[%s4421 + $0x10] sm:$0xff]
      %v4425 = vld [vmem:[%s4421 + $0x18] sm:$0xff]
      %v4426 = vld [vmem:[%s4421 + $0x28] sm:$0xff]
      %v4427 = vld [vmem:[%s4421 + $0x30] sm:$0xff]
      %v4428 = vld [vmem:[%s4421 + $0x38] sm:$0xff]
      %v4429 = vld [vmem:[%s4421 + $0x40] sm:$0xff]
      %v4430 = vld [vmem:[%s4421 + $0x50] sm:$0xff]
      %v4431 = vld [vmem:[%s4421 + $0x58] sm:$0xff]
      %v4432 = vld [vmem:[%s4421 + $0x60] sm:$0xff]
      %v4433 = vld [vmem:[%s4421 + $0x68] sm:$0xff]
      %v4434 = vld [vmem:[%s4421 + $0x78] sm:$0xff]
      %v4435 = vld [vmem:[%s4421 + $0x80] sm:$0xff]
      %v4436 = vld [vmem:[%s4421 + $0x88] sm:$0xff]
      %v4437 = vld [vmem:[%s4421 + $0x90] sm:$0xff]
      %v4438 = vmul.f32 %v4422, %v2240
      %v4439 = vmul.f32 %v4423, %v2240
      %v4440 = vmul.f32 %v4424, %v2240
      %v4441 = vmul.f32 %v4425, %v2240
      %v4442 = vmul.f32 %v4426, %v2240
      %v4443 = vmul.f32 %v4427, %v2240
      %v4444 = vmul.f32 %v4428, %v2240
      %v4445 = vmul.f32 %v4429, %v2240
      %v4446 = vmul.f32 %v4430, %v2240
      %v4447 = vmul.f32 %v4431, %v2240
      %v4448 = vmul.f32 %v4432, %v2240
      %v4449 = vmul.f32 %v4433, %v2240
      %v4450 = vmul.f32 %v4434, %v2240
      %v4451 = vmul.f32 %v4435, %v2240
      %v4452 = vmul.f32 %v4436, %v2240
      %v4453 = vmul.f32 %v4437, %v2240
      %v4454 = vadd.f32 %v4405, %v4438
      %v4455 = vadd.f32 %v4406, %v4439
      %v4456 = vadd.f32 %v4407, %v4440
      %v4457 = vadd.f32 %v4408, %v4441
      %v4458 = vadd.f32 %v4409, %v4442
      %v4459 = vadd.f32 %v4410, %v4443
      %v4460 = vadd.f32 %v4411, %v4444
      %v4461 = vadd.f32 %v4412, %v4445
      %v4462 = vadd.f32 %v4413, %v4446
      %v4463 = vadd.f32 %v4414, %v4447
      %v4464 = vadd.f32 %v4415, %v4448
      %v4465 = vadd.f32 %v4416, %v4449
      %v4466 = vadd.f32 %v4417, %v4450
      %v4467 = vadd.f32 %v4418, %v4451
      %v4468 = vadd.f32 %v4419, %v4452
      %v4469 = vadd.f32 %v4420, %v4453
      %v4470 = vld [vmem:[%s4421 + $0x1] sm:$0xff]
      %v4471 = vld [vmem:[%s4421 + $0x9] sm:$0xff]
      %v4472 = vld [vmem:[%s4421 + $0x11] sm:$0xff]
      %v4473 = vld [vmem:[%s4421 + $0x19] sm:$0xff]
      %v4474 = vld [vmem:[%s4421 + $0x29] sm:$0xff]
      %v4475 = vld [vmem:[%s4421 + $0x31] sm:$0xff]
      %v4476 = vld [vmem:[%s4421 + $0x39] sm:$0xff]
      %v4477 = vld [vmem:[%s4421 + $0x41] sm:$0xff]
      %v4478 = vld [vmem:[%s4421 + $0x51] sm:$0xff]
      %v4479 = vld [vmem:[%s4421 + $0x59] sm:$0xff]
      %v4480 = vld [vmem:[%s4421 + $0x61] sm:$0xff]
      %v4481 = vld [vmem:[%s4421 + $0x69] sm:$0xff]
      %v4482 = vld [vmem:[%s4421 + $0x79] sm:$0xff]
      %v4483 = vld [vmem:[%s4421 + $0x81] sm:$0xff]
      %v4484 = vld [vmem:[%s4421 + $0x89] sm:$0xff]
      %v4485 = vld [vmem:[%s4421 + $0x91] sm:$0xff]
      %v4486 = vmul.f32 %v4470, %v2292
      %v4487 = vmul.f32 %v4471, %v2292
      %v4488 = vmul.f32 %v4472, %v2292
      %v4489 = vmul.f32 %v4473, %v2292
      %v4490 = vmul.f32 %v4474, %v2292
      %v4491 = vmul.f32 %v4475, %v2292
      %v4492 = vmul.f32 %v4476, %v2292
      %v4493 = vmul.f32 %v4477, %v2292
      %v4494 = vmul.f32 %v4478, %v2292
      %v4495 = vmul.f32 %v4479, %v2292
      %v4496 = vmul.f32 %v4480, %v2292
      %v4497 = vmul.f32 %v4481, %v2292
      %v4498 = vmul.f32 %v4482, %v2292
      %v4499 = vmul.f32 %v4483, %v2292
      %v4500 = vmul.f32 %v4484, %v2292
      %v4501 = vmul.f32 %v4485, %v2292
      %v4502 = vadd.f32 %v4454, %v4486
      %v4503 = vadd.f32 %v4455, %v4487
      %v4504 = vadd.f32 %v4456, %v4488
      %v4505 = vadd.f32 %v4457, %v4489
      %v4506 = vadd.f32 %v4458, %v4490
      %v4507 = vadd.f32 %v4459, %v4491
      %v4508 = vadd.f32 %v4460, %v4492
      %v4509 = vadd.f32 %v4461, %v4493
      %v4510 = vadd.f32 %v4462, %v4494
      %v4511 = vadd.f32 %v4463, %v4495
      %v4512 = vadd.f32 %v4464, %v4496
      %v4513 = vadd.f32 %v4465, %v4497
      %v4514 = vadd.f32 %v4466, %v4498
      %v4515 = vadd.f32 %v4467, %v4499
      %v4516 = vadd.f32 %v4468, %v4500
      %v4517 = vadd.f32 %v4469, %v4501
      %v4518 = vld [vmem:[%s4421 + $0x2] sm:$0xff]
      %v4519 = vld [vmem:[%s4421 + $0xa] sm:$0xff]
      %v4520 = vld [vmem:[%s4421 + $0x12] sm:$0xff]
      %v4521 = vld [vmem:[%s4421 + $0x1a] sm:$0xff]
      %v4522 = vld [vmem:[%s4421 + $0x2a] sm:$0xff]
      %v4523 = vld [vmem:[%s4421 + $0x32] sm:$0xff]
      %v4524 = vld [vmem:[%s4421 + $0x3a] sm:$0xff]
      %v4525 = vld [vmem:[%s4421 + $0x42] sm:$0xff]
      %v4526 = vld [vmem:[%s4421 + $0x52] sm:$0xff]
      %v4527 = vld [vmem:[%s4421 + $0x5a] sm:$0xff]
      %v4528 = vld [vmem:[%s4421 + $0x62] sm:$0xff]
      %v4529 = vld [vmem:[%s4421 + $0x6a] sm:$0xff]
      %v4530 = vld [vmem:[%s4421 + $0x7a] sm:$0xff]
      %v4531 = vld [vmem:[%s4421 + $0x82] sm:$0xff]
      %v4532 = vld [vmem:[%s4421 + $0x8a] sm:$0xff]
      %v4533 = vld [vmem:[%s4421 + $0x92] sm:$0xff]
      %v4534 = vmul.f32 %v4518, %v2344
      %v4535 = vmul.f32 %v4519, %v2344
      %v4536 = vmul.f32 %v4520, %v2344
      %v4537 = vmul.f32 %v4521, %v2344
      %v4538 = vmul.f32 %v4522, %v2344
      %v4539 = vmul.f32 %v4523, %v2344
      %v4540 = vmul.f32 %v4524, %v2344
      %v4541 = vmul.f32 %v4525, %v2344
      %v4542 = vmul.f32 %v4526, %v2344
      %v4543 = vmul.f32 %v4527, %v2344
      %v4544 = vmul.f32 %v4528, %v2344
      %v4545 = vmul.f32 %v4529, %v2344
      %v4546 = vmul.f32 %v4530, %v2344
      %v4547 = vmul.f32 %v4531, %v2344
      %v4548 = vmul.f32 %v4532, %v2344
      %v4549 = vmul.f32 %v4533, %v2344
      %v4550 = vadd.f32 %v4502, %v4534
      %v4551 = vadd.f32 %v4503, %v4535
      %v4552 = vadd.f32 %v4504, %v4536
      %v4553 = vadd.f32 %v4505, %v4537
      %v4554 = vadd.f32 %v4506, %v4538
      %v4555 = vadd.f32 %v4507, %v4539
      %v4556 = vadd.f32 %v4508, %v4540
      %v4557 = vadd.f32 %v4509, %v4541
      %v4558 = vadd.f32 %v4510, %v4542
      %v4559 = vadd.f32 %v4511, %v4543
      %v4560 = vadd.f32 %v4512, %v4544
      %v4561 = vadd.f32 %v4513, %v4545
      %v4562 = vadd.f32 %v4514, %v4546
      %v4563 = vadd.f32 %v4515, %v4547
      %v4564 = vadd.f32 %v4516, %v4548
      %v4565 = vadd.f32 %v4517, %v4549
      %s4566 = scalar_lea.vmem [#allocation2], 560
      %v4567 = vld [vmem:[%s4566] sm:$0xff]
      %v4568 = vld [vmem:[%s4566 + $0x8] sm:$0xff]
      %v4569 = vld [vmem:[%s4566 + $0x10] sm:$0xff]
      %v4570 = vld [vmem:[%s4566 + $0x18] sm:$0xff]
      %v4571 = vld [vmem:[%s4566 + $0x28] sm:$0xff]
      %v4572 = vld [vmem:[%s4566 + $0x30] sm:$0xff]
      %v4573 = vld [vmem:[%s4566 + $0x38] sm:$0xff]
      %v4574 = vld [vmem:[%s4566 + $0x40] sm:$0xff]
      %v4575 = vld [vmem:[%s4566 + $0x50] sm:$0xff]
      %v4576 = vld [vmem:[%s4566 + $0x58] sm:$0xff]
      %v4577 = vld [vmem:[%s4566 + $0x60] sm:$0xff]
      %v4578 = vld [vmem:[%s4566 + $0x68] sm:$0xff]
      %v4579 = vld [vmem:[%s4566 + $0x78] sm:$0xff]
      %v4580 = vld [vmem:[%s4566 + $0x80] sm:$0xff]
      %v4581 = vld [vmem:[%s4566 + $0x88] sm:$0xff]
      %v4582 = vld [vmem:[%s4566 + $0x90] sm:$0xff]
      %v4583 = vmul.f32 %v4567, %v2397
      %v4584 = vmul.f32 %v4568, %v2397
      %v4585 = vmul.f32 %v4569, %v2397
      %v4586 = vmul.f32 %v4570, %v2397
      %v4587 = vmul.f32 %v4571, %v2397
      %v4588 = vmul.f32 %v4572, %v2397
      %v4589 = vmul.f32 %v4573, %v2397
      %v4590 = vmul.f32 %v4574, %v2397
      %v4591 = vmul.f32 %v4575, %v2397
      %v4592 = vmul.f32 %v4576, %v2397
      %v4593 = vmul.f32 %v4577, %v2397
      %v4594 = vmul.f32 %v4578, %v2397
      %v4595 = vmul.f32 %v4579, %v2397
      %v4596 = vmul.f32 %v4580, %v2397
      %v4597 = vmul.f32 %v4581, %v2397
      %v4598 = vmul.f32 %v4582, %v2397
      %v4599 = vadd.f32 %v4550, %v4583
      %v4600 = vadd.f32 %v4551, %v4584
      %v4601 = vadd.f32 %v4552, %v4585
      %v4602 = vadd.f32 %v4553, %v4586
      %v4603 = vadd.f32 %v4554, %v4587
      %v4604 = vadd.f32 %v4555, %v4588
      %v4605 = vadd.f32 %v4556, %v4589
      %v4606 = vadd.f32 %v4557, %v4590
      %v4607 = vadd.f32 %v4558, %v4591
      %v4608 = vadd.f32 %v4559, %v4592
      %v4609 = vadd.f32 %v4560, %v4593
      %v4610 = vadd.f32 %v4561, %v4594
      %v4611 = vadd.f32 %v4562, %v4595
      %v4612 = vadd.f32 %v4563, %v4596
      %v4613 = vadd.f32 %v4564, %v4597
      %v4614 = vadd.f32 %v4565, %v4598
      %v4615 = vld [vmem:[%s4566 + $0x1] sm:$0xff]
      %v4616 = vld [vmem:[%s4566 + $0x9] sm:$0xff]
      %v4617 = vld [vmem:[%s4566 + $0x11] sm:$0xff]
      %v4618 = vld [vmem:[%s4566 + $0x19] sm:$0xff]
      %v4619 = vld [vmem:[%s4566 + $0x29] sm:$0xff]
      %v4620 = vld [vmem:[%s4566 + $0x31] sm:$0xff]
      %v4621 = vld [vmem:[%s4566 + $0x39] sm:$0xff]
      %v4622 = vld [vmem:[%s4566 + $0x41] sm:$0xff]
      %v4623 = vld [vmem:[%s4566 + $0x51] sm:$0xff]
      %v4624 = vld [vmem:[%s4566 + $0x59] sm:$0xff]
      %v4625 = vld [vmem:[%s4566 + $0x61] sm:$0xff]
      %v4626 = vld [vmem:[%s4566 + $0x69] sm:$0xff]
      %v4627 = vld [vmem:[%s4566 + $0x79] sm:$0xff]
      %v4628 = vld [vmem:[%s4566 + $0x81] sm:$0xff]
      %v4629 = vld [vmem:[%s4566 + $0x89] sm:$0xff]
      %v4630 = vld [vmem:[%s4566 + $0x91] sm:$0xff]
      %v4631 = vmul.f32 %v4615, %v2449
      %v4632 = vmul.f32 %v4616, %v2449
      %v4633 = vmul.f32 %v4617, %v2449
      %v4634 = vmul.f32 %v4618, %v2449
      %v4635 = vmul.f32 %v4619, %v2449
      %v4636 = vmul.f32 %v4620, %v2449
      %v4637 = vmul.f32 %v4621, %v2449
      %v4638 = vmul.f32 %v4622, %v2449
      %v4639 = vmul.f32 %v4623, %v2449
      %v4640 = vmul.f32 %v4624, %v2449
      %v4641 = vmul.f32 %v4625, %v2449
      %v4642 = vmul.f32 %v4626, %v2449
      %v4643 = vmul.f32 %v4627, %v2449
      %v4644 = vmul.f32 %v4628, %v2449
      %v4645 = vmul.f32 %v4629, %v2449
      %v4646 = vmul.f32 %v4630, %v2449
      %v4647 = vadd.f32 %v4599, %v4631
      %v4648 = vadd.f32 %v4600, %v4632
      %v4649 = vadd.f32 %v4601, %v4633
      %v4650 = vadd.f32 %v4602, %v4634
      %v4651 = vadd.f32 %v4603, %v4635
      %v4652 = vadd.f32 %v4604, %v4636
      %v4653 = vadd.f32 %v4605, %v4637
      %v4654 = vadd.f32 %v4606, %v4638
      %v4655 = vadd.f32 %v4607, %v4639
      %v4656 = vadd.f32 %v4608, %v4640
      %v4657 = vadd.f32 %v4609, %v4641
      %v4658 = vadd.f32 %v4610, %v4642
      %v4659 = vadd.f32 %v4611, %v4643
      %v4660 = vadd.f32 %v4612, %v4644
      %v4661 = vadd.f32 %v4613, %v4645
      %v4662 = vadd.f32 %v4614, %v4646
      %v4663 = vld [vmem:[%s4566 + $0x2] sm:$0xff]
      %v4664 = vld [vmem:[%s4566 + $0xa] sm:$0xff]
      %v4665 = vld [vmem:[%s4566 + $0x12] sm:$0xff]
      %v4666 = vld [vmem:[%s4566 + $0x1a] sm:$0xff]
      %v4667 = vld [vmem:[%s4566 + $0x2a] sm:$0xff]
      %v4668 = vld [vmem:[%s4566 + $0x32] sm:$0xff]
      %v4669 = vld [vmem:[%s4566 + $0x3a] sm:$0xff]
      %v4670 = vld [vmem:[%s4566 + $0x42] sm:$0xff]
      %v4671 = vld [vmem:[%s4566 + $0x52] sm:$0xff]
      %v4672 = vld [vmem:[%s4566 + $0x5a] sm:$0xff]
      %v4673 = vld [vmem:[%s4566 + $0x62] sm:$0xff]
      %v4674 = vld [vmem:[%s4566 + $0x6a] sm:$0xff]
      %v4675 = vld [vmem:[%s4566 + $0x7a] sm:$0xff]
      %v4676 = vld [vmem:[%s4566 + $0x82] sm:$0xff]
      %v4677 = vld [vmem:[%s4566 + $0x8a] sm:$0xff]
      %v4678 = vld [vmem:[%s4566 + $0x92] sm:$0xff]
      %v4679 = vmul.f32 %v4663, %v2501
      %v4680 = vmul.f32 %v4664, %v2501
      %v4681 = vmul.f32 %v4665, %v2501
      %v4682 = vmul.f32 %v4666, %v2501
      %v4683 = vmul.f32 %v4667, %v2501
      %v4684 = vmul.f32 %v4668, %v2501
      %v4685 = vmul.f32 %v4669, %v2501
      %v4686 = vmul.f32 %v4670, %v2501
      %v4687 = vmul.f32 %v4671, %v2501
      %v4688 = vmul.f32 %v4672, %v2501
      %v4689 = vmul.f32 %v4673, %v2501
      %v4690 = vmul.f32 %v4674, %v2501
      %v4691 = vmul.f32 %v4675, %v2501
      %v4692 = vmul.f32 %v4676, %v2501
      %v4693 = vmul.f32 %v4677, %v2501
      %v4694 = vmul.f32 %v4678, %v2501
      %v4695 = vadd.f32 %v4647, %v4679
      %v4696 = vadd.f32 %v4648, %v4680
      %v4697 = vadd.f32 %v4649, %v4681
      %v4698 = vadd.f32 %v4650, %v4682
      %v4699 = vadd.f32 %v4651, %v4683
      %v4700 = vadd.f32 %v4652, %v4684
      %v4701 = vadd.f32 %v4653, %v4685
      %v4702 = vadd.f32 %v4654, %v4686
      %v4703 = vadd.f32 %v4655, %v4687
      %v4704 = vadd.f32 %v4656, %v4688
      %v4705 = vadd.f32 %v4657, %v4689
      %v4706 = vadd.f32 %v4658, %v4690
      %v4707 = vadd.f32 %v4659, %v4691
      %v4708 = vadd.f32 %v4660, %v4692
      %v4709 = vadd.f32 %v4661, %v4693
      %v4710 = vadd.f32 %v4662, %v4694
      %v4711 = vmul.f32 %v4695, 0.5
      %v4712 = vmul.f32 %v4696, 0.5
      %v4713 = vmul.f32 %v4697, 0.5
      %v4714 = vmul.f32 %v4698, 0.5
      %v4715 = vmul.f32 %v4699, 0.5
      %v4716 = vmul.f32 %v4700, 0.5
      %v4717 = vmul.f32 %v4701, 0.5
      %v4718 = vmul.f32 %v4702, 0.5
      %v4719 = vmul.f32 %v4703, 0.5
      %v4720 = vmul.f32 %v4704, 0.5
      %v4721 = vmul.f32 %v4705, 0.5
      %v4722 = vmul.f32 %v4706, 0.5
      %v4723 = vmul.f32 %v4707, 0.5
      %v4724 = vmul.f32 %v4708, 0.5
      %v4725 = vmul.f32 %v4709, 0.5
      %v4726 = vmul.f32 %v4710, 0.5
      %v4727 = vmul.f32 %v4695, 0.70710677
      %v4728 = vmul.f32 %v4696, 0.70710677
      %v4729 = vmul.f32 %v4697, 0.70710677
      %v4730 = vmul.f32 %v4698, 0.70710677
      %v4731 = vmul.f32 %v4699, 0.70710677
      %v4732 = vmul.f32 %v4700, 0.70710677
      %v4733 = vmul.f32 %v4701, 0.70710677
      %v4734 = vmul.f32 %v4702, 0.70710677
      %v4735 = vmul.f32 %v4703, 0.70710677
      %v4736 = vmul.f32 %v4704, 0.70710677
      %v4737 = vmul.f32 %v4705, 0.70710677
      %v4738 = vmul.f32 %v4706, 0.70710677
      %v4739 = vmul.f32 %v4707, 0.70710677
      %v4740 = vmul.f32 %v4708, 0.70710677
      %v4741 = vmul.f32 %v4709, 0.70710677
      %v4742 = vmul.f32 %v4710, 0.70710677
      %v4743 = verf.f32.pop %v4727
      %v4744 = verf.f32.pop %v4728
      %v4745 = verf.f32.pop %v4729
      %v4746 = verf.f32.pop %v4730
      %v4747 = verf.f32.pop %v4731
      %v4748 = verf.f32.pop %v4732
      %v4749 = verf.f32.pop %v4733
      %v4750 = verf.f32.pop %v4734
      %v4751 = verf.f32.pop %v4735
      %v4752 = verf.f32.pop %v4736
      %v4753 = verf.f32.pop %v4737
      %v4754 = verf.f32.pop %v4738
      %v4755 = verf.f32.pop %v4739
      %v4756 = verf.f32.pop %v4740
      %v4757 = verf.f32.pop %v4741
      %v4758 = verf.f32.pop %v4742
      %v4759 = vadd.f32 %v4743, 1.0
      %v4760 = vadd.f32 %v4744, 1.0
      %v4761 = vadd.f32 %v4745, 1.0
      %v4762 = vadd.f32 %v4746, 1.0
      %v4763 = vadd.f32 %v4747, 1.0
      %v4764 = vadd.f32 %v4748, 1.0
      %v4765 = vadd.f32 %v4749, 1.0
      %v4766 = vadd.f32 %v4750, 1.0
      %v4767 = vadd.f32 %v4751, 1.0
      %v4768 = vadd.f32 %v4752, 1.0
      %v4769 = vadd.f32 %v4753, 1.0
      %v4770 = vadd.f32 %v4754, 1.0
      %v4771 = vadd.f32 %v4755, 1.0
      %v4772 = vadd.f32 %v4756, 1.0
      %v4773 = vadd.f32 %v4757, 1.0
      %v4774 = vadd.f32 %v4758, 1.0
      %v4775 = vmul.f32 %v4711, %v4759
      %v4776 = vmul.f32 %v4712, %v4760
      %v4777 = vmul.f32 %v4713, %v4761
      %v4778 = vmul.f32 %v4714, %v4762
      %v4779 = vmul.f32 %v4715, %v4763
      %v4780 = vmul.f32 %v4716, %v4764
      %v4781 = vmul.f32 %v4717, %v4765
      %v4782 = vmul.f32 %v4718, %v4766
      %v4783 = vmul.f32 %v4719, %v4767
      %v4784 = vmul.f32 %v4720, %v4768
      %v4785 = vmul.f32 %v4721, %v4769
      %v4786 = vmul.f32 %v4722, %v4770
      %v4787 = vmul.f32 %v4723, %v4771
      %v4788 = vmul.f32 %v4724, %v4772
      %v4789 = vmul.f32 %v4725, %v4773
      %v4790 = vmul.f32 %v4726, %v4774
      %4807 = vrot.lane.b32.xlu0 %v4695, 96
      %v4808 = vpop.permute.xlu0 %4807
      %4809 = vrot.lane.b32.xlu0 %v4696, 96
      %v4810 = vpop.permute.xlu0 %4809
      %4811 = vrot.lane.b32.xlu0 %v4697, 96
      %v4812 = vpop.permute.xlu0 %4811
      %4813 = vrot.lane.b32.xlu0 %v4698, 96
      %v4814 = vpop.permute.xlu0 %4813
      %4815 = vrot.lane.b32.xlu0 %v4699, 96
      %v4816 = vpop.permute.xlu0 %4815
      %4817 = vrot.lane.b32.xlu0 %v4700, 96
      %v4818 = vpop.permute.xlu0 %4817
      %4819 = vrot.lane.b32.xlu0 %v4701, 96
      %v4820 = vpop.permute.xlu0 %4819
      %4821 = vrot.lane.b32.xlu0 %v4702, 96
      %v4822 = vpop.permute.xlu0 %4821
      %4823 = vrot.lane.b32.xlu0 %v4703, 96
      %v4824 = vpop.permute.xlu0 %4823
      %4825 = vrot.lane.b32.xlu0 %v4704, 96
      %v4826 = vpop.permute.xlu0 %4825
      %4827 = vrot.lane.b32.xlu0 %v4705, 96
      %v4828 = vpop.permute.xlu0 %4827
      %4829 = vrot.lane.b32.xlu0 %v4706, 96
      %v4830 = vpop.permute.xlu0 %4829
      %4831 = vrot.lane.b32.xlu0 %v4707, 96
      %v4832 = vpop.permute.xlu0 %4831
      %4833 = vrot.lane.b32.xlu0 %v4708, 96
      %v4834 = vpop.permute.xlu0 %4833
      %4835 = vrot.lane.b32.xlu0 %v4709, 96
      %v4836 = vpop.permute.xlu0 %4835
      %4837 = vrot.lane.b32.xlu0 %v4710, 96
      %v4838 = vpop.permute.xlu0 %4837
      %v4855 = vmul.f32 %v4775, %v4808
      %v4856 = vmul.f32 %v4776, %v4810
      %v4857 = vmul.f32 %v4777, %v4812
      %v4858 = vmul.f32 %v4778, %v4814
      %v4859 = vmul.f32 %v4779, %v4816
      %v4860 = vmul.f32 %v4780, %v4818
      %v4861 = vmul.f32 %v4781, %v4820
      %v4862 = vmul.f32 %v4782, %v4822
      %v4863 = vmul.f32 %v4783, %v4824
      %v4864 = vmul.f32 %v4784, %v4826
      %v4865 = vmul.f32 %v4785, %v4828
      %v4866 = vmul.f32 %v4786, %v4830
      %v4867 = vmul.f32 %v4787, %v4832
      %v4868 = vmul.f32 %v4788, %v4834
      %v4869 = vmul.f32 %v4789, %v4836
      %v4870 = vmul.f32 %v4790, %v4838
      %v4872 = vsel %vm2704, %v4855, 0
      %v4875 = vsel %vm2704, %v4856, 0
      %v4878 = vsel %vm2704, %v4857, 0
      %v4881 = vsel %vm2704, %v4858, 0
      %v4884 = vsel %vm2704, %v4859, 0
      %v4887 = vsel %vm2704, %v4860, 0
      %v4890 = vsel %vm2704, %v4861, 0
      %v4893 = vsel %vm2704, %v4862, 0
      %v4896 = vsel %vm2704, %v4863, 0
      %v4899 = vsel %vm2704, %v4864, 0
      %v4902 = vsel %vm2704, %v4865, 0
      %v4905 = vsel %vm2704, %v4866, 0
      %v4908 = vsel %vm2704, %v4867, 0
      %v4911 = vsel %vm2704, %v4868, 0
      %v4914 = vsel %vm2704, %v4869, 0
      %v4917 = vsel %vm2704, %v4870, 0
      %4919 = vmatprep.subr.mxu0 0.0
      %4920 = vmatpush1.xpose.msra.mxu0 %v4872
      %4921 = vmatprep.subr.mxu0 0.0
      %4922 = vmatpush1.xpose.msra.mxu0 %v4875
      %4923 = vmatprep.subr.mxu0 0.0
      %4924 = vmatpush1.xpose.msra.mxu0 %v4878
      %4925 = vmatprep.subr.mxu0 0.0
      %4926 = vmatpush1.xpose.msra.mxu0 %v4881
      %4927 = vmatprep.subr.mxu0 0.0
      %4928 = vmatpush1.xpose.msra.mxu0 %v4884
      %4929 = vmatprep.subr.mxu0 0.0
      %4930 = vmatpush1.xpose.msra.mxu0 %v4887
      %4931 = vmatprep.subr.mxu0 0.0
      %4932 = vmatpush1.xpose.msra.mxu0 %v4890
      %4933 = vmatprep.subr.mxu0 0.0
      %4934 = vmatpush1.xpose.msra.mxu0 %v4893
      %4935 = vmatprep.subr.mxu0 0.0
      %4936 = vmatpush1.xpose.msra.mxu0 %v4896
      %4937 = vmatprep.subr.mxu0 0.0
      %4938 = vmatpush1.xpose.msra.mxu0 %v4899
      %4939 = vmatprep.subr.mxu0 0.0
      %4940 = vmatpush1.xpose.msra.mxu0 %v4902
      %4941 = vmatprep.subr.mxu0 0.0
      %4942 = vmatpush1.xpose.msra.mxu0 %v4905
      %4943 = vmatprep.subr.mxu0 0.0
      %4944 = vmatpush1.xpose.msra.mxu0 %v4908
      %4945 = vmatprep.subr.mxu0 0.0
      %4946 = vmatpush1.xpose.msra.mxu0 %v4911
      %4947 = vmatprep.subr.mxu0 0.0
      %4948 = vmatpush1.xpose.msra.mxu0 %v4914
      %4949 = vmatprep.subr.mxu0 0.0
      %4950 = vmatpush1.xpose.msra.mxu0 %v4917
      %4951 = vmatprep.subr.mxu0 0.0
      %4952 = vmatpush1.xpose.msra.mxu0 0.0
      %4953 = vmatprep.subr.mxu0 0.0
      %4954 = vmatpush1.xpose.msra.mxu0 0.0
      %4955 = vmatprep.subr.mxu0 0.0
      %4956 = vmatpush1.xpose.msra.mxu0 0.0
      %4957 = vmatprep.subr.mxu0 0.0
      %4958 = vmatpush1.xpose.msra.mxu0 0.0
      %4959 = vmatprep.subr.mxu0 0.0
      %4960 = vmatpush1.xpose.msra.mxu0 0.0
      %4961 = vmatprep.subr.mxu0 0.0
      %4962 = vmatpush1.xpose.msra.mxu0 0.0
      %4963 = vmatprep.subr.mxu0 0.0
      %4964 = vmatpush1.xpose.msra.mxu0 0.0
      %4965 = vmatprep.subr.mxu0 0.0
      %4966 = vmatpush1.xpose.msra.mxu0 0.0
      %4967 = vmatprep.subr.mxu0 0.0
      %4968 = vmatpush1.xpose.msra.mxu0 0.0
      %4969 = vmatprep.subr.mxu0 0.0
      %4970 = vmatpush1.xpose.msra.mxu0 0.0
      %4971 = vmatprep.subr.mxu0 0.0
      %4972 = vmatpush1.xpose.msra.mxu0 0.0
      %4973 = vmatprep.subr.mxu0 0.0
      %4974 = vmatpush1.xpose.msra.mxu0 0.0
      %4975 = vmatprep.subr.mxu0 0.0
      %4976 = vmatpush1.xpose.msra.mxu0 0.0
      %4977 = vmatprep.subr.mxu0 0.0
      %4978 = vmatpush1.xpose.msra.mxu0 0.0
      %4979 = vmatprep.subr.mxu0 0.0
      %4980 = vmatpush1.xpose.msra.mxu0 0.0
      %4981 = vmatprep.subr.mxu0 0.0
      %4982 = vmatpush1.xpose.msra.mxu0 0.0
      %4983 = vmatprep.mubr.f32.mxu0 0.0
      %4984 = vmatmul.mubr.f32.gmra.mrb[0].mxu0 %v2706
      %v4985 = vpop.f32.mrb[0].mxu0
      %v4986 = vadd.f32 %v2697, %v4985
      %v4987 = vpop.f32.mrb[0].mxu0
      %4988 = vmatprep.mubr.f32.mxu0 0.0
      %4989 = vmatmul.mubr.f32.gmra.mrb[0].mxu0 %v2709
      %v4990 = vpop.f32.mrb[0].mxu0
      %v4991 = vadd.f32 %v2702, %v4990
      %v4992 = vpop.f32.mrb[0].mxu0
      %4993 = vdwg.mxu0
      %4994 = vst [vmem:[%s497 + $0x18] sm:$0xff] %v4986
      %4995 = vst [vmem:[%s497 + $0x58] sm:$0xff] %v4991
      %s4996 = scalar_lea.vmem [#allocation2], 640
      %v4997 = vld [vmem:[%s4996] sm:$0xff]
      %v4998 = vld [vmem:[%s4996 + $0x8] sm:$0xff]
      %v4999 = vld [vmem:[%s4996 + $0x10] sm:$0xff]
      %v5000 = vld [vmem:[%s4996 + $0x18] sm:$0xff]
      %v5001 = vld [vmem:[%s4996 + $0x28] sm:$0xff]
      %v5002 = vld [vmem:[%s4996 + $0x30] sm:$0xff]
      %v5003 = vld [vmem:[%s4996 + $0x38] sm:$0xff]
      %v5004 = vld [vmem:[%s4996 + $0x40] sm:$0xff]
      %v5005 = vld [vmem:[%s4996 + $0x50] sm:$0xff]
      %v5006 = vld [vmem:[%s4996 + $0x58] sm:$0xff]
      %v5007 = vld [vmem:[%s4996 + $0x60] sm:$0xff]
      %v5008 = vld [vmem:[%s4996 + $0x68] sm:$0xff]
      %v5009 = vld [vmem:[%s4996 + $0x78] sm:$0xff]
      %v5010 = vld [vmem:[%s4996 + $0x80] sm:$0xff]
      %v5011 = vld [vmem:[%s4996 + $0x88] sm:$0xff]
      %v5012 = vld [vmem:[%s4996 + $0x90] sm:$0xff]
      %v5013 = vmul.f32 %v4997, %v2083
      %v5014 = vmul.f32 %v4998, %v2083
      %v5015 = vmul.f32 %v4999, %v2083
      %v5016 = vmul.f32 %v5000, %v2083
      %v5017 = vmul.f32 %v5001, %v2083
      %v5018 = vmul.f32 %v5002, %v2083
      %v5019 = vmul.f32 %v5003, %v2083
      %v5020 = vmul.f32 %v5004, %v2083
      %v5021 = vmul.f32 %v5005, %v2083
      %v5022 = vmul.f32 %v5006, %v2083
      %v5023 = vmul.f32 %v5007, %v2083
      %v5024 = vmul.f32 %v5008, %v2083
      %v5025 = vmul.f32 %v5009, %v2083
      %v5026 = vmul.f32 %v5010, %v2083
      %v5027 = vmul.f32 %v5011, %v2083
      %v5028 = vmul.f32 %v5012, %v2083
      %v5029 = vadd.f32 %v2063, %v5013
      %v5030 = vadd.f32 %v2063, %v5014
      %v5031 = vadd.f32 %v2063, %v5015
      %v5032 = vadd.f32 %v2063, %v5016
      %v5033 = vadd.f32 %v2063, %v5017
      %v5034 = vadd.f32 %v2063, %v5018
      %v5035 = vadd.f32 %v2063, %v5019
      %v5036 = vadd.f32 %v2063, %v5020
      %v5037 = vadd.f32 %v2063, %v5021
      %v5038 = vadd.f32 %v2063, %v5022
      %v5039 = vadd.f32 %v2063, %v5023
      %v5040 = vadd.f32 %v2063, %v5024
      %v5041 = vadd.f32 %v2063, %v5025
      %v5042 = vadd.f32 %v2063, %v5026
      %v5043 = vadd.f32 %v2063, %v5027
      %v5044 = vadd.f32 %v2063, %v5028
      %v5045 = vld [vmem:[%s4996 + $0x1] sm:$0xff]
      %v5046 = vld [vmem:[%s4996 + $0x9] sm:$0xff]
      %v5047 = vld [vmem:[%s4996 + $0x11] sm:$0xff]
      %v5048 = vld [vmem:[%s4996 + $0x19] sm:$0xff]
      %v5049 = vld [vmem:[%s4996 + $0x29] sm:$0xff]
      %v5050 = vld [vmem:[%s4996 + $0x31] sm:$0xff]
      %v5051 = vld [vmem:[%s4996 + $0x39] sm:$0xff]
      %v5052 = vld [vmem:[%s4996 + $0x41] sm:$0xff]
      %v5053 = vld [vmem:[%s4996 + $0x51] sm:$0xff]
      %v5054 = vld [vmem:[%s4996 + $0x59] sm:$0xff]
      %v5055 = vld [vmem:[%s4996 + $0x61] sm:$0xff]
      %v5056 = vld [vmem:[%s4996 + $0x69] sm:$0xff]
      %v5057 = vld [vmem:[%s4996 + $0x79] sm:$0xff]
      %v5058 = vld [vmem:[%s4996 + $0x81] sm:$0xff]
      %v5059 = vld [vmem:[%s4996 + $0x89] sm:$0xff]
      %v5060 = vld [vmem:[%s4996 + $0x91] sm:$0xff]
      %v5061 = vmul.f32 %v5045, %v2135
      %v5062 = vmul.f32 %v5046, %v2135
      %v5063 = vmul.f32 %v5047, %v2135
      %v5064 = vmul.f32 %v5048, %v2135
      %v5065 = vmul.f32 %v5049, %v2135
      %v5066 = vmul.f32 %v5050, %v2135
      %v5067 = vmul.f32 %v5051, %v2135
      %v5068 = vmul.f32 %v5052, %v2135
      %v5069 = vmul.f32 %v5053, %v2135
      %v5070 = vmul.f32 %v5054, %v2135
      %v5071 = vmul.f32 %v5055, %v2135
      %v5072 = vmul.f32 %v5056, %v2135
      %v5073 = vmul.f32 %v5057, %v2135
      %v5074 = vmul.f32 %v5058, %v2135
      %v5075 = vmul.f32 %v5059, %v2135
      %v5076 = vmul.f32 %v5060, %v2135
      %v5077 = vadd.f32 %v5029, %v5061
      %v5078 = vadd.f32 %v5030, %v5062
      %v5079 = vadd.f32 %v5031, %v5063
      %v5080 = vadd.f32 %v5032, %v5064
      %v5081 = vadd.f32 %v5033, %v5065
      %v5082 = vadd.f32 %v5034, %v5066
      %v5083 = vadd.f32 %v5035, %v5067
      %v5084 = vadd.f32 %v5036, %v5068
      %v5085 = vadd.f32 %v5037, %v5069
      %v5086 = vadd.f32 %v5038, %v5070
      %v5087 = vadd.f32 %v5039, %v5071
      %v5088 = vadd.f32 %v5040, %v5072
      %v5089 = vadd.f32 %v5041, %v5073
      %v5090 = vadd.f32 %v5042, %v5074
      %v5091 = vadd.f32 %v5043, %v5075
      %v5092 = vadd.f32 %v5044, %v5076
      %v5093 = vld [vmem:[%s4996 + $0x2] sm:$0xff]
      %v5094 = vld [vmem:[%s4996 + $0xa] sm:$0xff]
      %v5095 = vld [vmem:[%s4996 + $0x12] sm:$0xff]
      %v5096 = vld [vmem:[%s4996 + $0x1a] sm:$0xff]
      %v5097 = vld [vmem:[%s4996 + $0x2a] sm:$0xff]
      %v5098 = vld [vmem:[%s4996 + $0x32] sm:$0xff]
      %v5099 = vld [vmem:[%s4996 + $0x3a] sm:$0xff]
      %v5100 = vld [vmem:[%s4996 + $0x42] sm:$0xff]
      %v5101 = vld [vmem:[%s4996 + $0x52] sm:$0xff]
      %v5102 = vld [vmem:[%s4996 + $0x5a] sm:$0xff]
      %v5103 = vld [vmem:[%s4996 + $0x62] sm:$0xff]
      %v5104 = vld [vmem:[%s4996 + $0x6a] sm:$0xff]
      %v5105 = vld [vmem:[%s4996 + $0x7a] sm:$0xff]
      %v5106 = vld [vmem:[%s4996 + $0x82] sm:$0xff]
      %v5107 = vld [vmem:[%s4996 + $0x8a] sm:$0xff]
      %v5108 = vld [vmem:[%s4996 + $0x92] sm:$0xff]
      %v5109 = vmul.f32 %v5093, %v2187
      %v5110 = vmul.f32 %v5094, %v2187
      %v5111 = vmul.f32 %v5095, %v2187
      %v5112 = vmul.f32 %v5096, %v2187
      %v5113 = vmul.f32 %v5097, %v2187
      %v5114 = vmul.f32 %v5098, %v2187
      %v5115 = vmul.f32 %v5099, %v2187
      %v5116 = vmul.f32 %v5100, %v2187
      %v5117 = vmul.f32 %v5101, %v2187
      %v5118 = vmul.f32 %v5102, %v2187
      %v5119 = vmul.f32 %v5103, %v2187
      %v5120 = vmul.f32 %v5104, %v2187
      %v5121 = vmul.f32 %v5105, %v2187
      %v5122 = vmul.f32 %v5106, %v2187
      %v5123 = vmul.f32 %v5107, %v2187
      %v5124 = vmul.f32 %v5108, %v2187
      %v5125 = vadd.f32 %v5077, %v5109
      %v5126 = vadd.f32 %v5078, %v5110
      %v5127 = vadd.f32 %v5079, %v5111
      %v5128 = vadd.f32 %v5080, %v5112
      %v5129 = vadd.f32 %v5081, %v5113
      %v5130 = vadd.f32 %v5082, %v5114
      %v5131 = vadd.f32 %v5083, %v5115
      %v5132 = vadd.f32 %v5084, %v5116
      %v5133 = vadd.f32 %v5085, %v5117
      %v5134 = vadd.f32 %v5086, %v5118
      %v5135 = vadd.f32 %v5087, %v5119
      %v5136 = vadd.f32 %v5088, %v5120
      %v5137 = vadd.f32 %v5089, %v5121
      %v5138 = vadd.f32 %v5090, %v5122
      %v5139 = vadd.f32 %v5091, %v5123
      %v5140 = vadd.f32 %v5092, %v5124
      %s5141 = scalar_lea.vmem [#allocation2], 680
      %v5142 = vld [vmem:[%s5141] sm:$0xff]
      %v5143 = vld [vmem:[%s5141 + $0x8] sm:$0xff]
      %v5144 = vld [vmem:[%s5141 + $0x10] sm:$0xff]
      %v5145 = vld [vmem:[%s5141 + $0x18] sm:$0xff]
      %v5146 = vld [vmem:[%s5141 + $0x28] sm:$0xff]
      %v5147 = vld [vmem:[%s5141 + $0x30] sm:$0xff]
      %v5148 = vld [vmem:[%s5141 + $0x38] sm:$0xff]
      %v5149 = vld [vmem:[%s5141 + $0x40] sm:$0xff]
      %v5150 = vld [vmem:[%s5141 + $0x50] sm:$0xff]
      %v5151 = vld [vmem:[%s5141 + $0x58] sm:$0xff]
      %v5152 = vld [vmem:[%s5141 + $0x60] sm:$0xff]
      %v5153 = vld [vmem:[%s5141 + $0x68] sm:$0xff]
      %v5154 = vld [vmem:[%s5141 + $0x78] sm:$0xff]
      %v5155 = vld [vmem:[%s5141 + $0x80] sm:$0xff]
      %v5156 = vld [vmem:[%s5141 + $0x88] sm:$0xff]
      %v5157 = vld [vmem:[%s5141 + $0x90] sm:$0xff]
      %v5158 = vmul.f32 %v5142, %v2240
      %v5159 = vmul.f32 %v5143, %v2240
      %v5160 = vmul.f32 %v5144, %v2240
      %v5161 = vmul.f32 %v5145, %v2240
      %v5162 = vmul.f32 %v5146, %v2240
      %v5163 = vmul.f32 %v5147, %v2240
      %v5164 = vmul.f32 %v5148, %v2240
      %v5165 = vmul.f32 %v5149, %v2240
      %v5166 = vmul.f32 %v5150, %v2240
      %v5167 = vmul.f32 %v5151, %v2240
      %v5168 = vmul.f32 %v5152, %v2240
      %v5169 = vmul.f32 %v5153, %v2240
      %v5170 = vmul.f32 %v5154, %v2240
      %v5171 = vmul.f32 %v5155, %v2240
      %v5172 = vmul.f32 %v5156, %v2240
      %v5173 = vmul.f32 %v5157, %v2240
      %v5174 = vadd.f32 %v5125, %v5158
      %v5175 = vadd.f32 %v5126, %v5159
      %v5176 = vadd.f32 %v5127, %v5160
      %v5177 = vadd.f32 %v5128, %v5161
      %v5178 = vadd.f32 %v5129, %v5162
      %v5179 = vadd.f32 %v5130, %v5163
      %v5180 = vadd.f32 %v5131, %v5164
      %v5181 = vadd.f32 %v5132, %v5165
      %v5182 = vadd.f32 %v5133, %v5166
      %v5183 = vadd.f32 %v5134, %v5167
      %v5184 = vadd.f32 %v5135, %v5168
      %v5185 = vadd.f32 %v5136, %v5169
      %v5186 = vadd.f32 %v5137, %v5170
      %v5187 = vadd.f32 %v5138, %v5171
      %v5188 = vadd.f32 %v5139, %v5172
      %v5189 = vadd.f32 %v5140, %v5173
      %v5190 = vld [vmem:[%s5141 + $0x1] sm:$0xff]
      %v5191 = vld [vmem:[%s5141 + $0x9] sm:$0xff]
      %v5192 = vld [vmem:[%s5141 + $0x11] sm:$0xff]
      %v5193 = vld [vmem:[%s5141 + $0x19] sm:$0xff]
      %v5194 = vld [vmem:[%s5141 + $0x29] sm:$0xff]
      %v5195 = vld [vmem:[%s5141 + $0x31] sm:$0xff]
      %v5196 = vld [vmem:[%s5141 + $0x39] sm:$0xff]
      %v5197 = vld [vmem:[%s5141 + $0x41] sm:$0xff]
      %v5198 = vld [vmem:[%s5141 + $0x51] sm:$0xff]
      %v5199 = vld [vmem:[%s5141 + $0x59] sm:$0xff]
      %v5200 = vld [vmem:[%s5141 + $0x61] sm:$0xff]
      %v5201 = vld [vmem:[%s5141 + $0x69] sm:$0xff]
      %v5202 = vld [vmem:[%s5141 + $0x79] sm:$0xff]
      %v5203 = vld [vmem:[%s5141 + $0x81] sm:$0xff]
      %v5204 = vld [vmem:[%s5141 + $0x89] sm:$0xff]
      %v5205 = vld [vmem:[%s5141 + $0x91] sm:$0xff]
      %v5206 = vmul.f32 %v5190, %v2292
      %v5207 = vmul.f32 %v5191, %v2292
      %v5208 = vmul.f32 %v5192, %v2292
      %v5209 = vmul.f32 %v5193, %v2292
      %v5210 = vmul.f32 %v5194, %v2292
      %v5211 = vmul.f32 %v5195, %v2292
      %v5212 = vmul.f32 %v5196, %v2292
      %v5213 = vmul.f32 %v5197, %v2292
      %v5214 = vmul.f32 %v5198, %v2292
      %v5215 = vmul.f32 %v5199, %v2292
      %v5216 = vmul.f32 %v5200, %v2292
      %v5217 = vmul.f32 %v5201, %v2292
      %v5218 = vmul.f32 %v5202, %v2292
      %v5219 = vmul.f32 %v5203, %v2292
      %v5220 = vmul.f32 %v5204, %v2292
      %v5221 = vmul.f32 %v5205, %v2292
      %v5222 = vadd.f32 %v5174, %v5206
      %v5223 = vadd.f32 %v5175, %v5207
      %v5224 = vadd.f32 %v5176, %v5208
      %v5225 = vadd.f32 %v5177, %v5209
      %v5226 = vadd.f32 %v5178, %v5210
      %v5227 = vadd.f32 %v5179, %v5211
      %v5228 = vadd.f32 %v5180, %v5212
      %v5229 = vadd.f32 %v5181, %v5213
      %v5230 = vadd.f32 %v5182, %v5214
      %v5231 = vadd.f32 %v5183, %v5215
      %v5232 = vadd.f32 %v5184, %v5216
      %v5233 = vadd.f32 %v5185, %v5217
      %v5234 = vadd.f32 %v5186, %v5218
      %v5235 = vadd.f32 %v5187, %v5219
      %v5236 = vadd.f32 %v5188, %v5220
      %v5237 = vadd.f32 %v5189, %v5221
      %v5238 = vld [vmem:[%s5141 + $0x2] sm:$0xff]
      %v5239 = vld [vmem:[%s5141 + $0xa] sm:$0xff]
      %v5240 = vld [vmem:[%s5141 + $0x12] sm:$0xff]
      %v5241 = vld [vmem:[%s5141 + $0x1a] sm:$0xff]
      %v5242 = vld [vmem:[%s5141 + $0x2a] sm:$0xff]
      %v5243 = vld [vmem:[%s5141 + $0x32] sm:$0xff]
      %v5244 = vld [vmem:[%s5141 + $0x3a] sm:$0xff]
      %v5245 = vld [vmem:[%s5141 + $0x42] sm:$0xff]
      %v5246 = vld [vmem:[%s5141 + $0x52] sm:$0xff]
      %v5247 = vld [vmem:[%s5141 + $0x5a] sm:$0xff]
      %v5248 = vld [vmem:[%s5141 + $0x62] sm:$0xff]
      %v5249 = vld [vmem:[%s5141 + $0x6a] sm:$0xff]
      %v5250 = vld [vmem:[%s5141 + $0x7a] sm:$0xff]
      %v5251 = vld [vmem:[%s5141 + $0x82] sm:$0xff]
      %v5252 = vld [vmem:[%s5141 + $0x8a] sm:$0xff]
      %v5253 = vld [vmem:[%s5141 + $0x92] sm:$0xff]
      %v5254 = vmul.f32 %v5238, %v2344
      %v5255 = vmul.f32 %v5239, %v2344
      %v5256 = vmul.f32 %v5240, %v2344
      %v5257 = vmul.f32 %v5241, %v2344
      %v5258 = vmul.f32 %v5242, %v2344
      %v5259 = vmul.f32 %v5243, %v2344
      %v5260 = vmul.f32 %v5244, %v2344
      %v5261 = vmul.f32 %v5245, %v2344
      %v5262 = vmul.f32 %v5246, %v2344
      %v5263 = vmul.f32 %v5247, %v2344
      %v5264 = vmul.f32 %v5248, %v2344
      %v5265 = vmul.f32 %v5249, %v2344
      %v5266 = vmul.f32 %v5250, %v2344
      %v5267 = vmul.f32 %v5251, %v2344
      %v5268 = vmul.f32 %v5252, %v2344
      %v5269 = vmul.f32 %v5253, %v2344
      %v5270 = vadd.f32 %v5222, %v5254
      %v5271 = vadd.f32 %v5223, %v5255
      %v5272 = vadd.f32 %v5224, %v5256
      %v5273 = vadd.f32 %v5225, %v5257
      %v5274 = vadd.f32 %v5226, %v5258
      %v5275 = vadd.f32 %v5227, %v5259
      %v5276 = vadd.f32 %v5228, %v5260
      %v5277 = vadd.f32 %v5229, %v5261
      %v5278 = vadd.f32 %v5230, %v5262
      %v5279 = vadd.f32 %v5231, %v5263
      %v5280 = vadd.f32 %v5232, %v5264
      %v5281 = vadd.f32 %v5233, %v5265
      %v5282 = vadd.f32 %v5234, %v5266
      %v5283 = vadd.f32 %v5235, %v5267
      %v5284 = vadd.f32 %v5236, %v5268
      %v5285 = vadd.f32 %v5237, %v5269
      %s5286 = scalar_lea.vmem [#allocation2], 720
      %v5287 = vld [vmem:[%s5286] sm:$0xff]
      %v5288 = vld [vmem:[%s5286 + $0x8] sm:$0xff]
      %v5289 = vld [vmem:[%s5286 + $0x10] sm:$0xff]
      %v5290 = vld [vmem:[%s5286 + $0x18] sm:$0xff]
      %v5291 = vld [vmem:[%s5286 + $0x28] sm:$0xff]
      %v5292 = vld [vmem:[%s5286 + $0x30] sm:$0xff]
      %v5293 = vld [vmem:[%s5286 + $0x38] sm:$0xff]
      %v5294 = vld [vmem:[%s5286 + $0x40] sm:$0xff]
      %v5295 = vld [vmem:[%s5286 + $0x50] sm:$0xff]
      %v5296 = vld [vmem:[%s5286 + $0x58] sm:$0xff]
      %v5297 = vld [vmem:[%s5286 + $0x60] sm:$0xff]
      %v5298 = vld [vmem:[%s5286 + $0x68] sm:$0xff]
      %v5299 = vld [vmem:[%s5286 + $0x78] sm:$0xff]
      %v5300 = vld [vmem:[%s5286 + $0x80] sm:$0xff]
      %v5301 = vld [vmem:[%s5286 + $0x88] sm:$0xff]
      %v5302 = vld [vmem:[%s5286 + $0x90] sm:$0xff]
      %v5303 = vmul.f32 %v5287, %v2397
      %v5304 = vmul.f32 %v5288, %v2397
      %v5305 = vmul.f32 %v5289, %v2397
      %v5306 = vmul.f32 %v5290, %v2397
      %v5307 = vmul.f32 %v5291, %v2397
      %v5308 = vmul.f32 %v5292, %v2397
      %v5309 = vmul.f32 %v5293, %v2397
      %v5310 = vmul.f32 %v5294, %v2397
      %v5311 = vmul.f32 %v5295, %v2397
      %v5312 = vmul.f32 %v5296, %v2397
      %v5313 = vmul.f32 %v5297, %v2397
      %v5314 = vmul.f32 %v5298, %v2397
      %v5315 = vmul.f32 %v5299, %v2397
      %v5316 = vmul.f32 %v5300, %v2397
      %v5317 = vmul.f32 %v5301, %v2397
      %v5318 = vmul.f32 %v5302, %v2397
      %v5319 = vadd.f32 %v5270, %v5303
      %v5320 = vadd.f32 %v5271, %v5304
      %v5321 = vadd.f32 %v5272, %v5305
      %v5322 = vadd.f32 %v5273, %v5306
      %v5323 = vadd.f32 %v5274, %v5307
      %v5324 = vadd.f32 %v5275, %v5308
      %v5325 = vadd.f32 %v5276, %v5309
      %v5326 = vadd.f32 %v5277, %v5310
      %v5327 = vadd.f32 %v5278, %v5311
      %v5328 = vadd.f32 %v5279, %v5312
      %v5329 = vadd.f32 %v5280, %v5313
      %v5330 = vadd.f32 %v5281, %v5314
      %v5331 = vadd.f32 %v5282, %v5315
      %v5332 = vadd.f32 %v5283, %v5316
      %v5333 = vadd.f32 %v5284, %v5317
      %v5334 = vadd.f32 %v5285, %v5318
      %v5335 = vld [vmem:[%s5286 + $0x1] sm:$0xff]
      %v5336 = vld [vmem:[%s5286 + $0x9] sm:$0xff]
      %v5337 = vld [vmem:[%s5286 + $0x11] sm:$0xff]
      %v5338 = vld [vmem:[%s5286 + $0x19] sm:$0xff]
      %v5339 = vld [vmem:[%s5286 + $0x29] sm:$0xff]
      %v5340 = vld [vmem:[%s5286 + $0x31] sm:$0xff]
      %v5341 = vld [vmem:[%s5286 + $0x39] sm:$0xff]
      %v5342 = vld [vmem:[%s5286 + $0x41] sm:$0xff]
      %v5343 = vld [vmem:[%s5286 + $0x51] sm:$0xff]
      %v5344 = vld [vmem:[%s5286 + $0x59] sm:$0xff]
      %v5345 = vld [vmem:[%s5286 + $0x61] sm:$0xff]
      %v5346 = vld [vmem:[%s5286 + $0x69] sm:$0xff]
      %v5347 = vld [vmem:[%s5286 + $0x79] sm:$0xff]
      %v5348 = vld [vmem:[%s5286 + $0x81] sm:$0xff]
      %v5349 = vld [vmem:[%s5286 + $0x89] sm:$0xff]
      %v5350 = vld [vmem:[%s5286 + $0x91] sm:$0xff]
      %v5351 = vmul.f32 %v5335, %v2449
      %v5352 = vmul.f32 %v5336, %v2449
      %v5353 = vmul.f32 %v5337, %v2449
      %v5354 = vmul.f32 %v5338, %v2449
      %v5355 = vmul.f32 %v5339, %v2449
      %v5356 = vmul.f32 %v5340, %v2449
      %v5357 = vmul.f32 %v5341, %v2449
      %v5358 = vmul.f32 %v5342, %v2449
      %v5359 = vmul.f32 %v5343, %v2449
      %v5360 = vmul.f32 %v5344, %v2449
      %v5361 = vmul.f32 %v5345, %v2449
      %v5362 = vmul.f32 %v5346, %v2449
      %v5363 = vmul.f32 %v5347, %v2449
      %v5364 = vmul.f32 %v5348, %v2449
      %v5365 = vmul.f32 %v5349, %v2449
      %v5366 = vmul.f32 %v5350, %v2449
      %v5367 = vadd.f32 %v5319, %v5351
      %v5368 = vadd.f32 %v5320, %v5352
      %v5369 = vadd.f32 %v5321, %v5353
      %v5370 = vadd.f32 %v5322, %v5354
      %v5371 = vadd.f32 %v5323, %v5355
      %v5372 = vadd.f32 %v5324, %v5356
      %v5373 = vadd.f32 %v5325, %v5357
      %v5374 = vadd.f32 %v5326, %v5358
      %v5375 = vadd.f32 %v5327, %v5359
      %v5376 = vadd.f32 %v5328, %v5360
      %v5377 = vadd.f32 %v5329, %v5361
      %v5378 = vadd.f32 %v5330, %v5362
      %v5379 = vadd.f32 %v5331, %v5363
      %v5380 = vadd.f32 %v5332, %v5364
      %v5381 = vadd.f32 %v5333, %v5365
      %v5382 = vadd.f32 %v5334, %v5366
      %v5383 = vld [vmem:[%s5286 + $0x2] sm:$0xff]
      %v5384 = vld [vmem:[%s5286 + $0xa] sm:$0xff]
      %v5385 = vld [vmem:[%s5286 + $0x12] sm:$0xff]
      %v5386 = vld [vmem:[%s5286 + $0x1a] sm:$0xff]
      %v5387 = vld [vmem:[%s5286 + $0x2a] sm:$0xff]
      %v5388 = vld [vmem:[%s5286 + $0x32] sm:$0xff]
      %v5389 = vld [vmem:[%s5286 + $0x3a] sm:$0xff]
      %v5390 = vld [vmem:[%s5286 + $0x42] sm:$0xff]
      %v5391 = vld [vmem:[%s5286 + $0x52] sm:$0xff]
      %v5392 = vld [vmem:[%s5286 + $0x5a] sm:$0xff]
      %v5393 = vld [vmem:[%s5286 + $0x62] sm:$0xff]
      %v5394 = vld [vmem:[%s5286 + $0x6a] sm:$0xff]
      %v5395 = vld [vmem:[%s5286 + $0x7a] sm:$0xff]
      %v5396 = vld [vmem:[%s5286 + $0x82] sm:$0xff]
      %v5397 = vld [vmem:[%s5286 + $0x8a] sm:$0xff]
      %v5398 = vld [vmem:[%s5286 + $0x92] sm:$0xff]
      %v5399 = vmul.f32 %v5383, %v2501
      %v5400 = vmul.f32 %v5384, %v2501
      %v5401 = vmul.f32 %v5385, %v2501
      %v5402 = vmul.f32 %v5386, %v2501
      %v5403 = vmul.f32 %v5387, %v2501
      %v5404 = vmul.f32 %v5388, %v2501
      %v5405 = vmul.f32 %v5389, %v2501
      %v5406 = vmul.f32 %v5390, %v2501
      %v5407 = vmul.f32 %v5391, %v2501
      %v5408 = vmul.f32 %v5392, %v2501
      %v5409 = vmul.f32 %v5393, %v2501
      %v5410 = vmul.f32 %v5394, %v2501
      %v5411 = vmul.f32 %v5395, %v2501
      %v5412 = vmul.f32 %v5396, %v2501
      %v5413 = vmul.f32 %v5397, %v2501
      %v5414 = vmul.f32 %v5398, %v2501
      %v5415 = vadd.f32 %v5367, %v5399
      %v5416 = vadd.f32 %v5368, %v5400
      %v5417 = vadd.f32 %v5369, %v5401
      %v5418 = vadd.f32 %v5370, %v5402
      %v5419 = vadd.f32 %v5371, %v5403
      %v5420 = vadd.f32 %v5372, %v5404
      %v5421 = vadd.f32 %v5373, %v5405
      %v5422 = vadd.f32 %v5374, %v5406
      %v5423 = vadd.f32 %v5375, %v5407
      %v5424 = vadd.f32 %v5376, %v5408
      %v5425 = vadd.f32 %v5377, %v5409
      %v5426 = vadd.f32 %v5378, %v5410
      %v5427 = vadd.f32 %v5379, %v5411
      %v5428 = vadd.f32 %v5380, %v5412
      %v5429 = vadd.f32 %v5381, %v5413
      %v5430 = vadd.f32 %v5382, %v5414
      %v5431 = vmul.f32 %v5415, 0.5
      %v5432 = vmul.f32 %v5416, 0.5
      %v5433 = vmul.f32 %v5417, 0.5
      %v5434 = vmul.f32 %v5418, 0.5
      %v5435 = vmul.f32 %v5419, 0.5
      %v5436 = vmul.f32 %v5420, 0.5
      %v5437 = vmul.f32 %v5421, 0.5
      %v5438 = vmul.f32 %v5422, 0.5
      %v5439 = vmul.f32 %v5423, 0.5
      %v5440 = vmul.f32 %v5424, 0.5
      %v5441 = vmul.f32 %v5425, 0.5
      %v5442 = vmul.f32 %v5426, 0.5
      %v5443 = vmul.f32 %v5427, 0.5
      %v5444 = vmul.f32 %v5428, 0.5
      %v5445 = vmul.f32 %v5429, 0.5
      %v5446 = vmul.f32 %v5430, 0.5
      %v5447 = vmul.f32 %v5415, 0.70710677
      %v5448 = vmul.f32 %v5416, 0.70710677
      %v5449 = vmul.f32 %v5417, 0.70710677
      %v5450 = vmul.f32 %v5418, 0.70710677
      %v5451 = vmul.f32 %v5419, 0.70710677
      %v5452 = vmul.f32 %v5420, 0.70710677
      %v5453 = vmul.f32 %v5421, 0.70710677
      %v5454 = vmul.f32 %v5422, 0.70710677
      %v5455 = vmul.f32 %v5423, 0.70710677
      %v5456 = vmul.f32 %v5424, 0.70710677
      %v5457 = vmul.f32 %v5425, 0.70710677
      %v5458 = vmul.f32 %v5426, 0.70710677
      %v5459 = vmul.f32 %v5427, 0.70710677
      %v5460 = vmul.f32 %v5428, 0.70710677
      %v5461 = vmul.f32 %v5429, 0.70710677
      %v5462 = vmul.f32 %v5430, 0.70710677
      %v5463 = verf.f32.pop %v5447
      %v5464 = verf.f32.pop %v5448
      %v5465 = verf.f32.pop %v5449
      %v5466 = verf.f32.pop %v5450
      %v5467 = verf.f32.pop %v5451
      %v5468 = verf.f32.pop %v5452
      %v5469 = verf.f32.pop %v5453
      %v5470 = verf.f32.pop %v5454
      %v5471 = verf.f32.pop %v5455
      %v5472 = verf.f32.pop %v5456
      %v5473 = verf.f32.pop %v5457
      %v5474 = verf.f32.pop %v5458
      %v5475 = verf.f32.pop %v5459
      %v5476 = verf.f32.pop %v5460
      %v5477 = verf.f32.pop %v5461
      %v5478 = verf.f32.pop %v5462
      %v5479 = vadd.f32 %v5463, 1.0
      %v5480 = vadd.f32 %v5464, 1.0
      %v5481 = vadd.f32 %v5465, 1.0
      %v5482 = vadd.f32 %v5466, 1.0
      %v5483 = vadd.f32 %v5467, 1.0
      %v5484 = vadd.f32 %v5468, 1.0
      %v5485 = vadd.f32 %v5469, 1.0
      %v5486 = vadd.f32 %v5470, 1.0
      %v5487 = vadd.f32 %v5471, 1.0
      %v5488 = vadd.f32 %v5472, 1.0
      %v5489 = vadd.f32 %v5473, 1.0
      %v5490 = vadd.f32 %v5474, 1.0
      %v5491 = vadd.f32 %v5475, 1.0
      %v5492 = vadd.f32 %v5476, 1.0
      %v5493 = vadd.f32 %v5477, 1.0
      %v5494 = vadd.f32 %v5478, 1.0
      %v5495 = vmul.f32 %v5431, %v5479
      %v5496 = vmul.f32 %v5432, %v5480
      %v5497 = vmul.f32 %v5433, %v5481
      %v5498 = vmul.f32 %v5434, %v5482
      %v5499 = vmul.f32 %v5435, %v5483
      %v5500 = vmul.f32 %v5436, %v5484
      %v5501 = vmul.f32 %v5437, %v5485
      %v5502 = vmul.f32 %v5438, %v5486
      %v5503 = vmul.f32 %v5439, %v5487
      %v5504 = vmul.f32 %v5440, %v5488
      %v5505 = vmul.f32 %v5441, %v5489
      %v5506 = vmul.f32 %v5442, %v5490
      %v5507 = vmul.f32 %v5443, %v5491
      %v5508 = vmul.f32 %v5444, %v5492
      %v5509 = vmul.f32 %v5445, %v5493
      %v5510 = vmul.f32 %v5446, %v5494
      %5527 = vrot.lane.b32.xlu0 %v5415, 96
      %v5528 = vpop.permute.xlu0 %5527
      %5529 = vrot.lane.b32.xlu0 %v5416, 96
      %v5530 = vpop.permute.xlu0 %5529
      %5531 = vrot.lane.b32.xlu0 %v5417, 96
      %v5532 = vpop.permute.xlu0 %5531
      %5533 = vrot.lane.b32.xlu0 %v5418, 96
      %v5534 = vpop.permute.xlu0 %5533
      %5535 = vrot.lane.b32.xlu0 %v5419, 96
      %v5536 = vpop.permute.xlu0 %5535
      %5537 = vrot.lane.b32.xlu0 %v5420, 96
      %v5538 = vpop.permute.xlu0 %5537
      %5539 = vrot.lane.b32.xlu0 %v5421, 96
      %v5540 = vpop.permute.xlu0 %5539
      %5541 = vrot.lane.b32.xlu0 %v5422, 96
      %v5542 = vpop.permute.xlu0 %5541
      %5543 = vrot.lane.b32.xlu0 %v5423, 96
      %v5544 = vpop.permute.xlu0 %5543
      %5545 = vrot.lane.b32.xlu0 %v5424, 96
      %v5546 = vpop.permute.xlu0 %5545
      %5547 = vrot.lane.b32.xlu0 %v5425, 96
      %v5548 = vpop.permute.xlu0 %5547
      %5549 = vrot.lane.b32.xlu0 %v5426, 96
      %v5550 = vpop.permute.xlu0 %5549
      %5551 = vrot.lane.b32.xlu0 %v5427, 96
      %v5552 = vpop.permute.xlu0 %5551
      %5553 = vrot.lane.b32.xlu0 %v5428, 96
      %v5554 = vpop.permute.xlu0 %5553
      %5555 = vrot.lane.b32.xlu0 %v5429, 96
      %v5556 = vpop.permute.xlu0 %5555
      %5557 = vrot.lane.b32.xlu0 %v5430, 96
      %v5558 = vpop.permute.xlu0 %5557
      %v5575 = vmul.f32 %v5495, %v5528
      %v5576 = vmul.f32 %v5496, %v5530
      %v5577 = vmul.f32 %v5497, %v5532
      %v5578 = vmul.f32 %v5498, %v5534
      %v5579 = vmul.f32 %v5499, %v5536
      %v5580 = vmul.f32 %v5500, %v5538
      %v5581 = vmul.f32 %v5501, %v5540
      %v5582 = vmul.f32 %v5502, %v5542
      %v5583 = vmul.f32 %v5503, %v5544
      %v5584 = vmul.f32 %v5504, %v5546
      %v5585 = vmul.f32 %v5505, %v5548
      %v5586 = vmul.f32 %v5506, %v5550
      %v5587 = vmul.f32 %v5507, %v5552
      %v5588 = vmul.f32 %v5508, %v5554
      %v5589 = vmul.f32 %v5509, %v5556
      %v5590 = vmul.f32 %v5510, %v5558
      %v5592 = vsel %vm2704, %v5575, 0
      %v5595 = vsel %vm2704, %v5576, 0
      %v5598 = vsel %vm2704, %v5577, 0
      %v5601 = vsel %vm2704, %v5578, 0
      %v5604 = vsel %vm2704, %v5579, 0
      %v5607 = vsel %vm2704, %v5580, 0
      %v5610 = vsel %vm2704, %v5581, 0
      %v5613 = vsel %vm2704, %v5582, 0
      %v5616 = vsel %vm2704, %v5583, 0
      %v5619 = vsel %vm2704, %v5584, 0
      %v5622 = vsel %vm2704, %v5585, 0
      %v5625 = vsel %vm2704, %v5586, 0
      %v5628 = vsel %vm2704, %v5587, 0
      %v5631 = vsel %vm2704, %v5588, 0
      %v5634 = vsel %vm2704, %v5589, 0
      %v5637 = vsel %vm2704, %v5590, 0
      %5639 = vmatprep.subr.mxu0 0.0
      %5640 = vmatpush1.xpose.msra.mxu0 %v5592
      %5641 = vmatprep.subr.mxu0 0.0
      %5642 = vmatpush1.xpose.msra.mxu0 %v5595
      %5643 = vmatprep.subr.mxu0 0.0
      %5644 = vmatpush1.xpose.msra.mxu0 %v5598
      %5645 = vmatprep.subr.mxu0 0.0
      %5646 = vmatpush1.xpose.msra.mxu0 %v5601
      %5647 = vmatprep.subr.mxu0 0.0
      %5648 = vmatpush1.xpose.msra.mxu0 %v5604
      %5649 = vmatprep.subr.mxu0 0.0
      %5650 = vmatpush1.xpose.msra.mxu0 %v5607
      %5651 = vmatprep.subr.mxu0 0.0
      %5652 = vmatpush1.xpose.msra.mxu0 %v5610
      %5653 = vmatprep.subr.mxu0 0.0
      %5654 = vmatpush1.xpose.msra.mxu0 %v5613
      %5655 = vmatprep.subr.mxu0 0.0
      %5656 = vmatpush1.xpose.msra.mxu0 %v5616
      %5657 = vmatprep.subr.mxu0 0.0
      %5658 = vmatpush1.xpose.msra.mxu0 %v5619
      %5659 = vmatprep.subr.mxu0 0.0
      %5660 = vmatpush1.xpose.msra.mxu0 %v5622
      %5661 = vmatprep.subr.mxu0 0.0
      %5662 = vmatpush1.xpose.msra.mxu0 %v5625
      %5663 = vmatprep.subr.mxu0 0.0
      %5664 = vmatpush1.xpose.msra.mxu0 %v5628
      %5665 = vmatprep.subr.mxu0 0.0
      %5666 = vmatpush1.xpose.msra.mxu0 %v5631
      %5667 = vmatprep.subr.mxu0 0.0
      %5668 = vmatpush1.xpose.msra.mxu0 %v5634
      %5669 = vmatprep.subr.mxu0 0.0
      %5670 = vmatpush1.xpose.msra.mxu0 %v5637
      %5671 = vmatprep.subr.mxu0 0.0
      %5672 = vmatpush1.xpose.msra.mxu0 0.0
      %5673 = vmatprep.subr.mxu0 0.0
      %5674 = vmatpush1.xpose.msra.mxu0 0.0
      %5675 = vmatprep.subr.mxu0 0.0
      %5676 = vmatpush1.xpose.msra.mxu0 0.0
      %5677 = vmatprep.subr.mxu0 0.0
      %5678 = vmatpush1.xpose.msra.mxu0 0.0
      %5679 = vmatprep.subr.mxu0 0.0
      %5680 = vmatpush1.xpose.msra.mxu0 0.0
      %5681 = vmatprep.subr.mxu0 0.0
      %5682 = vmatpush1.xpose.msra.mxu0 0.0
      %5683 = vmatprep.subr.mxu0 0.0
      %5684 = vmatpush1.xpose.msra.mxu0 0.0
      %5685 = vmatprep.subr.mxu0 0.0
      %5686 = vmatpush1.xpose.msra.mxu0 0.0
      %5687 = vmatprep.subr.mxu0 0.0
      %5688 = vmatpush1.xpose.msra.mxu0 0.0
      %5689 = vmatprep.subr.mxu0 0.0
      %5690 = vmatpush1.xpose.msra.mxu0 0.0
      %5691 = vmatprep.subr.mxu0 0.0
      %5692 = vmatpush1.xpose.msra.mxu0 0.0
      %5693 = vmatprep.subr.mxu0 0.0
      %5694 = vmatpush1.xpose.msra.mxu0 0.0
      %5695 = vmatprep.subr.mxu0 0.0
      %5696 = vmatpush1.xpose.msra.mxu0 0.0
      %5697 = vmatprep.subr.mxu0 0.0
      %5698 = vmatpush1.xpose.msra.mxu0 0.0
      %5699 = vmatprep.subr.mxu0 0.0
      %5700 = vmatpush1.xpose.msra.mxu0 0.0
      %5701 = vmatprep.subr.mxu0 0.0
      %5702 = vmatpush1.xpose.msra.mxu0 0.0
      %5703 = vmatprep.mubr.f32.mxu0 0.0
      %5704 = vmatmul.mubr.f32.gmra.mrb[0].mxu0 %v2706
      %v5705 = vpop.f32.mrb[0].mxu0
      %v5706 = vadd.f32 %v2697, %v5705
      %v5707 = vpop.f32.mrb[0].mxu0
      %5708 = vmatprep.mubr.f32.mxu0 0.0
      %5709 = vmatmul.mubr.f32.gmra.mrb[0].mxu0 %v2709
      %v5710 = vpop.f32.mrb[0].mxu0
      %v5711 = vadd.f32 %v2702, %v5710
      %v5712 = vpop.f32.mrb[0].mxu0
      %5713 = vdwg.mxu0
      %5714 = vst [vmem:[%s497 + $0x20] sm:$0xff] %v5706
      %5715 = vst [vmem:[%s497 + $0x60] sm:$0xff] %v5711
      %s5716 = scalar_lea.vmem [#allocation2], 800
      %v5717 = vld [vmem:[%s5716] sm:$0xff]
      %v5718 = vld [vmem:[%s5716 + $0x8] sm:$0xff]
      %v5719 = vld [vmem:[%s5716 + $0x10] sm:$0xff]
      %v5720 = vld [vmem:[%s5716 + $0x18] sm:$0xff]
      %v5721 = vld [vmem:[%s5716 + $0x28] sm:$0xff]
      %v5722 = vld [vmem:[%s5716 + $0x30] sm:$0xff]
      %v5723 = vld [vmem:[%s5716 + $0x38] sm:$0xff]
      %v5724 = vld [vmem:[%s5716 + $0x40] sm:$0xff]
      %v5725 = vld [vmem:[%s5716 + $0x50] sm:$0xff]
      %v5726 = vld [vmem:[%s5716 + $0x58] sm:$0xff]
      %v5727 = vld [vmem:[%s5716 + $0x60] sm:$0xff]
      %v5728 = vld [vmem:[%s5716 + $0x68] sm:$0xff]
      %v5729 = vld [vmem:[%s5716 + $0x78] sm:$0xff]
      %v5730 = vld [vmem:[%s5716 + $0x80] sm:$0xff]
      %v5731 = vld [vmem:[%s5716 + $0x88] sm:$0xff]
      %v5732 = vld [vmem:[%s5716 + $0x90] sm:$0xff]
      %v5733 = vmul.f32 %v5717, %v2083
      %v5734 = vmul.f32 %v5718, %v2083
      %v5735 = vmul.f32 %v5719, %v2083
      %v5736 = vmul.f32 %v5720, %v2083
      %v5737 = vmul.f32 %v5721, %v2083
      %v5738 = vmul.f32 %v5722, %v2083
      %v5739 = vmul.f32 %v5723, %v2083
      %v5740 = vmul.f32 %v5724, %v2083
      %v5741 = vmul.f32 %v5725, %v2083
      %v5742 = vmul.f32 %v5726, %v2083
      %v5743 = vmul.f32 %v5727, %v2083
      %v5744 = vmul.f32 %v5728, %v2083
      %v5745 = vmul.f32 %v5729, %v2083
      %v5746 = vmul.f32 %v5730, %v2083
      %v5747 = vmul.f32 %v5731, %v2083
      %v5748 = vmul.f32 %v5732, %v2083
      %v5749 = vadd.f32 %v2063, %v5733
      %v5750 = vadd.f32 %v2063, %v5734
      %v5751 = vadd.f32 %v2063, %v5735
      %v5752 = vadd.f32 %v2063, %v5736
      %v5753 = vadd.f32 %v2063, %v5737
      %v5754 = vadd.f32 %v2063, %v5738
      %v5755 = vadd.f32 %v2063, %v5739
      %v5756 = vadd.f32 %v2063, %v5740
      %v5757 = vadd.f32 %v2063, %v5741
      %v5758 = vadd.f32 %v2063, %v5742
      %v5759 = vadd.f32 %v2063, %v5743
      %v5760 = vadd.f32 %v2063, %v5744
      %v5761 = vadd.f32 %v2063, %v5745
      %v5762 = vadd.f32 %v2063, %v5746
      %v5763 = vadd.f32 %v2063, %v5747
      %v5764 = vadd.f32 %v2063, %v5748
      %v5765 = vld [vmem:[%s5716 + $0x1] sm:$0xff]
      %v5766 = vld [vmem:[%s5716 + $0x9] sm:$0xff]
      %v5767 = vld [vmem:[%s5716 + $0x11] sm:$0xff]
      %v5768 = vld [vmem:[%s5716 + $0x19] sm:$0xff]
      %v5769 = vld [vmem:[%s5716 + $0x29] sm:$0xff]
      %v5770 = vld [vmem:[%s5716 + $0x31] sm:$0xff]
      %v5771 = vld [vmem:[%s5716 + $0x39] sm:$0xff]
      %v5772 = vld [vmem:[%s5716 + $0x41] sm:$0xff]
      %v5773 = vld [vmem:[%s5716 + $0x51] sm:$0xff]
      %v5774 = vld [vmem:[%s5716 + $0x59] sm:$0xff]
      %v5775 = vld [vmem:[%s5716 + $0x61] sm:$0xff]
      %v5776 = vld [vmem:[%s5716 + $0x69] sm:$0xff]
      %v5777 = vld [vmem:[%s5716 + $0x79] sm:$0xff]
      %v5778 = vld [vmem:[%s5716 + $0x81] sm:$0xff]
      %v5779 = vld [vmem:[%s5716 + $0x89] sm:$0xff]
      %v5780 = vld [vmem:[%s5716 + $0x91] sm:$0xff]
      %v5781 = vmul.f32 %v5765, %v2135
      %v5782 = vmul.f32 %v5766, %v2135
      %v5783 = vmul.f32 %v5767, %v2135
      %v5784 = vmul.f32 %v5768, %v2135
      %v5785 = vmul.f32 %v5769, %v2135
      %v5786 = vmul.f32 %v5770, %v2135
      %v5787 = vmul.f32 %v5771, %v2135
      %v5788 = vmul.f32 %v5772, %v2135
      %v5789 = vmul.f32 %v5773, %v2135
      %v5790 = vmul.f32 %v5774, %v2135
      %v5791 = vmul.f32 %v5775, %v2135
      %v5792 = vmul.f32 %v5776, %v2135
      %v5793 = vmul.f32 %v5777, %v2135
      %v5794 = vmul.f32 %v5778, %v2135
      %v5795 = vmul.f32 %v5779, %v2135
      %v5796 = vmul.f32 %v5780, %v2135
      %v5797 = vadd.f32 %v5749, %v5781
      %v5798 = vadd.f32 %v5750, %v5782
      %v5799 = vadd.f32 %v5751, %v5783
      %v5800 = vadd.f32 %v5752, %v5784
      %v5801 = vadd.f32 %v5753, %v5785
      %v5802 = vadd.f32 %v5754, %v5786
      %v5803 = vadd.f32 %v5755, %v5787
      %v5804 = vadd.f32 %v5756, %v5788
      %v5805 = vadd.f32 %v5757, %v5789
      %v5806 = vadd.f32 %v5758, %v5790
      %v5807 = vadd.f32 %v5759, %v5791
      %v5808 = vadd.f32 %v5760, %v5792
      %v5809 = vadd.f32 %v5761, %v5793
      %v5810 = vadd.f32 %v5762, %v5794
      %v5811 = vadd.f32 %v5763, %v5795
      %v5812 = vadd.f32 %v5764, %v5796
      %v5813 = vld [vmem:[%s5716 + $0x2] sm:$0xff]
      %v5814 = vld [vmem:[%s5716 + $0xa] sm:$0xff]
      %v5815 = vld [vmem:[%s5716 + $0x12] sm:$0xff]
      %v5816 = vld [vmem:[%s5716 + $0x1a] sm:$0xff]
      %v5817 = vld [vmem:[%s5716 + $0x2a] sm:$0xff]
      %v5818 = vld [vmem:[%s5716 + $0x32] sm:$0xff]
      %v5819 = vld [vmem:[%s5716 + $0x3a] sm:$0xff]
      %v5820 = vld [vmem:[%s5716 + $0x42] sm:$0xff]
      %v5821 = vld [vmem:[%s5716 + $0x52] sm:$0xff]
      %v5822 = vld [vmem:[%s5716 + $0x5a] sm:$0xff]
      %v5823 = vld [vmem:[%s5716 + $0x62] sm:$0xff]
      %v5824 = vld [vmem:[%s5716 + $0x6a] sm:$0xff]
      %v5825 = vld [vmem:[%s5716 + $0x7a] sm:$0xff]
      %v5826 = vld [vmem:[%s5716 + $0x82] sm:$0xff]
      %v5827 = vld [vmem:[%s5716 + $0x8a] sm:$0xff]
      %v5828 = vld [vmem:[%s5716 + $0x92] sm:$0xff]
      %v5829 = vmul.f32 %v5813, %v2187
      %v5830 = vmul.f32 %v5814, %v2187
      %v5831 = vmul.f32 %v5815, %v2187
      %v5832 = vmul.f32 %v5816, %v2187
      %v5833 = vmul.f32 %v5817, %v2187
      %v5834 = vmul.f32 %v5818, %v2187
      %v5835 = vmul.f32 %v5819, %v2187
      %v5836 = vmul.f32 %v5820, %v2187
      %v5837 = vmul.f32 %v5821, %v2187
      %v5838 = vmul.f32 %v5822, %v2187
      %v5839 = vmul.f32 %v5823, %v2187
      %v5840 = vmul.f32 %v5824, %v2187
      %v5841 = vmul.f32 %v5825, %v2187
      %v5842 = vmul.f32 %v5826, %v2187
      %v5843 = vmul.f32 %v5827, %v2187
      %v5844 = vmul.f32 %v5828, %v2187
      %v5845 = vadd.f32 %v5797, %v5829
      %v5846 = vadd.f32 %v5798, %v5830
      %v5847 = vadd.f32 %v5799, %v5831
      %v5848 = vadd.f32 %v5800, %v5832
      %v5849 = vadd.f32 %v5801, %v5833
      %v5850 = vadd.f32 %v5802, %v5834
      %v5851 = vadd.f32 %v5803, %v5835
      %v5852 = vadd.f32 %v5804, %v5836
      %v5853 = vadd.f32 %v5805, %v5837
      %v5854 = vadd.f32 %v5806, %v5838
      %v5855 = vadd.f32 %v5807, %v5839
      %v5856 = vadd.f32 %v5808, %v5840
      %v5857 = vadd.f32 %v5809, %v5841
      %v5858 = vadd.f32 %v5810, %v5842
      %v5859 = vadd.f32 %v5811, %v5843
      %v5860 = vadd.f32 %v5812, %v5844
      %s5861 = scalar_lea.vmem [#allocation2], 840
      %v5862 = vld [vmem:[%s5861] sm:$0xff]
      %v5863 = vld [vmem:[%s5861 + $0x8] sm:$0xff]
      %v5864 = vld [vmem:[%s5861 + $0x10] sm:$0xff]
      %v5865 = vld [vmem:[%s5861 + $0x18] sm:$0xff]
      %v5866 = vld [vmem:[%s5861 + $0x28] sm:$0xff]
      %v5867 = vld [vmem:[%s5861 + $0x30] sm:$0xff]
      %v5868 = vld [vmem:[%s5861 + $0x38] sm:$0xff]
      %v5869 = vld [vmem:[%s5861 + $0x40] sm:$0xff]
      %v5870 = vld [vmem:[%s5861 + $0x50] sm:$0xff]
      %v5871 = vld [vmem:[%s5861 + $0x58] sm:$0xff]
      %v5872 = vld [vmem:[%s5861 + $0x60] sm:$0xff]
      %v5873 = vld [vmem:[%s5861 + $0x68] sm:$0xff]
      %v5874 = vld [vmem:[%s5861 + $0x78] sm:$0xff]
      %v5875 = vld [vmem:[%s5861 + $0x80] sm:$0xff]
      %v5876 = vld [vmem:[%s5861 + $0x88] sm:$0xff]
      %v5877 = vld [vmem:[%s5861 + $0x90] sm:$0xff]
      %v5878 = vmul.f32 %v5862, %v2240
      %v5879 = vmul.f32 %v5863, %v2240
      %v5880 = vmul.f32 %v5864, %v2240
      %v5881 = vmul.f32 %v5865, %v2240
      %v5882 = vmul.f32 %v5866, %v2240
      %v5883 = vmul.f32 %v5867, %v2240
      %v5884 = vmul.f32 %v5868, %v2240
      %v5885 = vmul.f32 %v5869, %v2240
      %v5886 = vmul.f32 %v5870, %v2240
      %v5887 = vmul.f32 %v5871, %v2240
      %v5888 = vmul.f32 %v5872, %v2240
      %v5889 = vmul.f32 %v5873, %v2240
      %v5890 = vmul.f32 %v5874, %v2240
      %v5891 = vmul.f32 %v5875, %v2240
      %v5892 = vmul.f32 %v5876, %v2240
      %v5893 = vmul.f32 %v5877, %v2240
      %v5894 = vadd.f32 %v5845, %v5878
      %v5895 = vadd.f32 %v5846, %v5879
      %v5896 = vadd.f32 %v5847, %v5880
      %v5897 = vadd.f32 %v5848, %v5881
      %v5898 = vadd.f32 %v5849, %v5882
      %v5899 = vadd.f32 %v5850, %v5883
      %v5900 = vadd.f32 %v5851, %v5884
      %v5901 = vadd.f32 %v5852, %v5885
      %v5902 = vadd.f32 %v5853, %v5886
      %v5903 = vadd.f32 %v5854, %v5887
      %v5904 = vadd.f32 %v5855, %v5888
      %v5905 = vadd.f32 %v5856, %v5889
      %v5906 = vadd.f32 %v5857, %v5890
      %v5907 = vadd.f32 %v5858, %v5891
      %v5908 = vadd.f32 %v5859, %v5892
      %v5909 = vadd.f32 %v5860, %v5893
      %v5910 = vld [vmem:[%s5861 + $0x1] sm:$0xff]
      %v5911 = vld [vmem:[%s5861 + $0x9] sm:$0xff]
      %v5912 = vld [vmem:[%s5861 + $0x11] sm:$0xff]
      %v5913 = vld [vmem:[%s5861 + $0x19] sm:$0xff]
      %v5914 = vld [vmem:[%s5861 + $0x29] sm:$0xff]
      %v5915 = vld [vmem:[%s5861 + $0x31] sm:$0xff]
      %v5916 = vld [vmem:[%s5861 + $0x39] sm:$0xff]
      %v5917 = vld [vmem:[%s5861 + $0x41] sm:$0xff]
      %v5918 = vld [vmem:[%s5861 + $0x51] sm:$0xff]
      %v5919 = vld [vmem:[%s5861 + $0x59] sm:$0xff]
      %v5920 = vld [vmem:[%s5861 + $0x61] sm:$0xff]
      %v5921 = vld [vmem:[%s5861 + $0x69] sm:$0xff]
      %v5922 = vld [vmem:[%s5861 + $0x79] sm:$0xff]
      %v5923 = vld [vmem:[%s5861 + $0x81] sm:$0xff]
      %v5924 = vld [vmem:[%s5861 + $0x89] sm:$0xff]
      %v5925 = vld [vmem:[%s5861 + $0x91] sm:$0xff]
      %v5926 = vmul.f32 %v5910, %v2292
      %v5927 = vmul.f32 %v5911, %v2292
      %v5928 = vmul.f32 %v5912, %v2292
      %v5929 = vmul.f32 %v5913, %v2292
      %v5930 = vmul.f32 %v5914, %v2292
      %v5931 = vmul.f32 %v5915, %v2292
      %v5932 = vmul.f32 %v5916, %v2292
      %v5933 = vmul.f32 %v5917, %v2292
      %v5934 = vmul.f32 %v5918, %v2292
      %v5935 = vmul.f32 %v5919, %v2292
      %v5936 = vmul.f32 %v5920, %v2292
      %v5937 = vmul.f32 %v5921, %v2292
      %v5938 = vmul.f32 %v5922, %v2292
      %v5939 = vmul.f32 %v5923, %v2292
      %v5940 = vmul.f32 %v5924, %v2292
      %v5941 = vmul.f32 %v5925, %v2292
      %v5942 = vadd.f32 %v5894, %v5926
      %v5943 = vadd.f32 %v5895, %v5927
      %v5944 = vadd.f32 %v5896, %v5928
      %v5945 = vadd.f32 %v5897, %v5929
      %v5946 = vadd.f32 %v5898, %v5930
      %v5947 = vadd.f32 %v5899, %v5931
      %v5948 = vadd.f32 %v5900, %v5932
      %v5949 = vadd.f32 %v5901, %v5933
      %v5950 = vadd.f32 %v5902, %v5934
      %v5951 = vadd.f32 %v5903, %v5935
      %v5952 = vadd.f32 %v5904, %v5936
      %v5953 = vadd.f32 %v5905, %v5937
      %v5954 = vadd.f32 %v5906, %v5938
      %v5955 = vadd.f32 %v5907, %v5939
      %v5956 = vadd.f32 %v5908, %v5940
      %v5957 = vadd.f32 %v5909, %v5941
      %v5958 = vld [vmem:[%s5861 + $0x2] sm:$0xff]
      %v5959 = vld [vmem:[%s5861 + $0xa] sm:$0xff]
      %v5960 = vld [vmem:[%s5861 + $0x12] sm:$0xff]
      %v5961 = vld [vmem:[%s5861 + $0x1a] sm:$0xff]
      %v5962 = vld [vmem:[%s5861 + $0x2a] sm:$0xff]
      %v5963 = vld [vmem:[%s5861 + $0x32] sm:$0xff]
      %v5964 = vld [vmem:[%s5861 + $0x3a] sm:$0xff]
      %v5965 = vld [vmem:[%s5861 + $0x42] sm:$0xff]
      %v5966 = vld [vmem:[%s5861 + $0x52] sm:$0xff]
      %v5967 = vld [vmem:[%s5861 + $0x5a] sm:$0xff]
      %v5968 = vld [vmem:[%s5861 + $0x62] sm:$0xff]
      %v5969 = vld [vmem:[%s5861 + $0x6a] sm:$0xff]
      %v5970 = vld [vmem:[%s5861 + $0x7a] sm:$0xff]
      %v5971 = vld [vmem:[%s5861 + $0x82] sm:$0xff]
      %v5972 = vld [vmem:[%s5861 + $0x8a] sm:$0xff]
      %v5973 = vld [vmem:[%s5861 + $0x92] sm:$0xff]
      %v5974 = vmul.f32 %v5958, %v2344
      %v5975 = vmul.f32 %v5959, %v2344
      %v5976 = vmul.f32 %v5960, %v2344
      %v5977 = vmul.f32 %v5961, %v2344
      %v5978 = vmul.f32 %v5962, %v2344
      %v5979 = vmul.f32 %v5963, %v2344
      %v5980 = vmul.f32 %v5964, %v2344
      %v5981 = vmul.f32 %v5965, %v2344
      %v5982 = vmul.f32 %v5966, %v2344
      %v5983 = vmul.f32 %v5967, %v2344
      %v5984 = vmul.f32 %v5968, %v2344
      %v5985 = vmul.f32 %v5969, %v2344
      %v5986 = vmul.f32 %v5970, %v2344
      %v5987 = vmul.f32 %v5971, %v2344
      %v5988 = vmul.f32 %v5972, %v2344
      %v5989 = vmul.f32 %v5973, %v2344
      %v5990 = vadd.f32 %v5942, %v5974
      %v5991 = vadd.f32 %v5943, %v5975
      %v5992 = vadd.f32 %v5944, %v5976
      %v5993 = vadd.f32 %v5945, %v5977
      %v5994 = vadd.f32 %v5946, %v5978
      %v5995 = vadd.f32 %v5947, %v5979
      %v5996 = vadd.f32 %v5948, %v5980
      %v5997 = vadd.f32 %v5949, %v5981
      %v5998 = vadd.f32 %v5950, %v5982
      %v5999 = vadd.f32 %v5951, %v5983
      %v6000 = vadd.f32 %v5952, %v5984
      %v6001 = vadd.f32 %v5953, %v5985
      %v6002 = vadd.f32 %v5954, %v5986
      %v6003 = vadd.f32 %v5955, %v5987
      %v6004 = vadd.f32 %v5956, %v5988
      %v6005 = vadd.f32 %v5957, %v5989
      %s6006 = scalar_lea.vmem [#allocation2], 880
      %v6007 = vld [vmem:[%s6006] sm:$0xff]
      %v6008 = vld [vmem:[%s6006 + $0x8] sm:$0xff]
      %v6009 = vld [vmem:[%s6006 + $0x10] sm:$0xff]
      %v6010 = vld [vmem:[%s6006 + $0x18] sm:$0xff]
      %v6011 = vld [vmem:[%s6006 + $0x28] sm:$0xff]
      %v6012 = vld [vmem:[%s6006 + $0x30] sm:$0xff]
      %v6013 = vld [vmem:[%s6006 + $0x38] sm:$0xff]
      %v6014 = vld [vmem:[%s6006 + $0x40] sm:$0xff]
      %v6015 = vld [vmem:[%s6006 + $0x50] sm:$0xff]
      %v6016 = vld [vmem:[%s6006 + $0x58] sm:$0xff]
      %v6017 = vld [vmem:[%s6006 + $0x60] sm:$0xff]
      %v6018 = vld [vmem:[%s6006 + $0x68] sm:$0xff]
      %v6019 = vld [vmem:[%s6006 + $0x78] sm:$0xff]
      %v6020 = vld [vmem:[%s6006 + $0x80] sm:$0xff]
      %v6021 = vld [vmem:[%s6006 + $0x88] sm:$0xff]
      %v6022 = vld [vmem:[%s6006 + $0x90] sm:$0xff]
      %v6023 = vmul.f32 %v6007, %v2397
      %v6024 = vmul.f32 %v6008, %v2397
      %v6025 = vmul.f32 %v6009, %v2397
      %v6026 = vmul.f32 %v6010, %v2397
      %v6027 = vmul.f32 %v6011, %v2397
      %v6028 = vmul.f32 %v6012, %v2397
      %v6029 = vmul.f32 %v6013, %v2397
      %v6030 = vmul.f32 %v6014, %v2397
      %v6031 = vmul.f32 %v6015, %v2397
      %v6032 = vmul.f32 %v6016, %v2397
      %v6033 = vmul.f32 %v6017, %v2397
      %v6034 = vmul.f32 %v6018, %v2397
      %v6035 = vmul.f32 %v6019, %v2397
      %v6036 = vmul.f32 %v6020, %v2397
      %v6037 = vmul.f32 %v6021, %v2397
      %v6038 = vmul.f32 %v6022, %v2397
      %v6039 = vadd.f32 %v5990, %v6023
      %v6040 = vadd.f32 %v5991, %v6024
      %v6041 = vadd.f32 %v5992, %v6025
      %v6042 = vadd.f32 %v5993, %v6026
      %v6043 = vadd.f32 %v5994, %v6027
      %v6044 = vadd.f32 %v5995, %v6028
      %v6045 = vadd.f32 %v5996, %v6029
      %v6046 = vadd.f32 %v5997, %v6030
      %v6047 = vadd.f32 %v5998, %v6031
      %v6048 = vadd.f32 %v5999, %v6032
      %v6049 = vadd.f32 %v6000, %v6033
      %v6050 = vadd.f32 %v6001, %v6034
      %v6051 = vadd.f32 %v6002, %v6035
      %v6052 = vadd.f32 %v6003, %v6036
      %v6053 = vadd.f32 %v6004, %v6037
      %v6054 = vadd.f32 %v6005, %v6038
      %v6055 = vld [vmem:[%s6006 + $0x1] sm:$0xff]
      %v6056 = vld [vmem:[%s6006 + $0x9] sm:$0xff]
      %v6057 = vld [vmem:[%s6006 + $0x11] sm:$0xff]
      %v6058 = vld [vmem:[%s6006 + $0x19] sm:$0xff]
      %v6059 = vld [vmem:[%s6006 + $0x29] sm:$0xff]
      %v6060 = vld [vmem:[%s6006 + $0x31] sm:$0xff]
      %v6061 = vld [vmem:[%s6006 + $0x39] sm:$0xff]
      %v6062 = vld [vmem:[%s6006 + $0x41] sm:$0xff]
      %v6063 = vld [vmem:[%s6006 + $0x51] sm:$0xff]
      %v6064 = vld [vmem:[%s6006 + $0x59] sm:$0xff]
      %v6065 = vld [vmem:[%s6006 + $0x61] sm:$0xff]
      %v6066 = vld [vmem:[%s6006 + $0x69] sm:$0xff]
      %v6067 = vld [vmem:[%s6006 + $0x79] sm:$0xff]
      %v6068 = vld [vmem:[%s6006 + $0x81] sm:$0xff]
      %v6069 = vld [vmem:[%s6006 + $0x89] sm:$0xff]
      %v6070 = vld [vmem:[%s6006 + $0x91] sm:$0xff]
      %v6071 = vmul.f32 %v6055, %v2449
      %v6072 = vmul.f32 %v6056, %v2449
      %v6073 = vmul.f32 %v6057, %v2449
      %v6074 = vmul.f32 %v6058, %v2449
      %v6075 = vmul.f32 %v6059, %v2449
      %v6076 = vmul.f32 %v6060, %v2449
      %v6077 = vmul.f32 %v6061, %v2449
      %v6078 = vmul.f32 %v6062, %v2449
      %v6079 = vmul.f32 %v6063, %v2449
      %v6080 = vmul.f32 %v6064, %v2449
      %v6081 = vmul.f32 %v6065, %v2449
      %v6082 = vmul.f32 %v6066, %v2449
      %v6083 = vmul.f32 %v6067, %v2449
      %v6084 = vmul.f32 %v6068, %v2449
      %v6085 = vmul.f32 %v6069, %v2449
      %v6086 = vmul.f32 %v6070, %v2449
      %v6087 = vadd.f32 %v6039, %v6071
      %v6088 = vadd.f32 %v6040, %v6072
      %v6089 = vadd.f32 %v6041, %v6073
      %v6090 = vadd.f32 %v6042, %v6074
      %v6091 = vadd.f32 %v6043, %v6075
      %v6092 = vadd.f32 %v6044, %v6076
      %v6093 = vadd.f32 %v6045, %v6077
      %v6094 = vadd.f32 %v6046, %v6078
      %v6095 = vadd.f32 %v6047, %v6079
      %v6096 = vadd.f32 %v6048, %v6080
      %v6097 = vadd.f32 %v6049, %v6081
      %v6098 = vadd.f32 %v6050, %v6082
      %v6099 = vadd.f32 %v6051, %v6083
      %v6100 = vadd.f32 %v6052, %v6084
      %v6101 = vadd.f32 %v6053, %v6085
      %v6102 = vadd.f32 %v6054, %v6086
      %v6103 = vld [vmem:[%s6006 + $0x2] sm:$0xff]
      %v6104 = vld [vmem:[%s6006 + $0xa] sm:$0xff]
      %v6105 = vld [vmem:[%s6006 + $0x12] sm:$0xff]
      %v6106 = vld [vmem:[%s6006 + $0x1a] sm:$0xff]
      %v6107 = vld [vmem:[%s6006 + $0x2a] sm:$0xff]
      %v6108 = vld [vmem:[%s6006 + $0x32] sm:$0xff]
      %v6109 = vld [vmem:[%s6006 + $0x3a] sm:$0xff]
      %v6110 = vld [vmem:[%s6006 + $0x42] sm:$0xff]
      %v6111 = vld [vmem:[%s6006 + $0x52] sm:$0xff]
      %v6112 = vld [vmem:[%s6006 + $0x5a] sm:$0xff]
      %v6113 = vld [vmem:[%s6006 + $0x62] sm:$0xff]
      %v6114 = vld [vmem:[%s6006 + $0x6a] sm:$0xff]
      %v6115 = vld [vmem:[%s6006 + $0x7a] sm:$0xff]
      %v6116 = vld [vmem:[%s6006 + $0x82] sm:$0xff]
      %v6117 = vld [vmem:[%s6006 + $0x8a] sm:$0xff]
      %v6118 = vld [vmem:[%s6006 + $0x92] sm:$0xff]
      %v6119 = vmul.f32 %v6103, %v2501
      %v6120 = vmul.f32 %v6104, %v2501
      %v6121 = vmul.f32 %v6105, %v2501
      %v6122 = vmul.f32 %v6106, %v2501
      %v6123 = vmul.f32 %v6107, %v2501
      %v6124 = vmul.f32 %v6108, %v2501
      %v6125 = vmul.f32 %v6109, %v2501
      %v6126 = vmul.f32 %v6110, %v2501
      %v6127 = vmul.f32 %v6111, %v2501
      %v6128 = vmul.f32 %v6112, %v2501
      %v6129 = vmul.f32 %v6113, %v2501
      %v6130 = vmul.f32 %v6114, %v2501
      %v6131 = vmul.f32 %v6115, %v2501
      %v6132 = vmul.f32 %v6116, %v2501
      %v6133 = vmul.f32 %v6117, %v2501
      %v6134 = vmul.f32 %v6118, %v2501
      %v6135 = vadd.f32 %v6087, %v6119
      %v6136 = vadd.f32 %v6088, %v6120
      %v6137 = vadd.f32 %v6089, %v6121
      %v6138 = vadd.f32 %v6090, %v6122
      %v6139 = vadd.f32 %v6091, %v6123
      %v6140 = vadd.f32 %v6092, %v6124
      %v6141 = vadd.f32 %v6093, %v6125
      %v6142 = vadd.f32 %v6094, %v6126
      %v6143 = vadd.f32 %v6095, %v6127
      %v6144 = vadd.f32 %v6096, %v6128
      %v6145 = vadd.f32 %v6097, %v6129
      %v6146 = vadd.f32 %v6098, %v6130
      %v6147 = vadd.f32 %v6099, %v6131
      %v6148 = vadd.f32 %v6100, %v6132
      %v6149 = vadd.f32 %v6101, %v6133
      %v6150 = vadd.f32 %v6102, %v6134
      %v6151 = vmul.f32 %v6135, 0.5
      %v6152 = vmul.f32 %v6136, 0.5
      %v6153 = vmul.f32 %v6137, 0.5
      %v6154 = vmul.f32 %v6138, 0.5
      %v6155 = vmul.f32 %v6139, 0.5
      %v6156 = vmul.f32 %v6140, 0.5
      %v6157 = vmul.f32 %v6141, 0.5
      %v6158 = vmul.f32 %v6142, 0.5
      %v6159 = vmul.f32 %v6143, 0.5
      %v6160 = vmul.f32 %v6144, 0.5
      %v6161 = vmul.f32 %v6145, 0.5
      %v6162 = vmul.f32 %v6146, 0.5
      %v6163 = vmul.f32 %v6147, 0.5
      %v6164 = vmul.f32 %v6148, 0.5
      %v6165 = vmul.f32 %v6149, 0.5
      %v6166 = vmul.f32 %v6150, 0.5
      %v6167 = vmul.f32 %v6135, 0.70710677
      %v6168 = vmul.f32 %v6136, 0.70710677
      %v6169 = vmul.f32 %v6137, 0.70710677
      %v6170 = vmul.f32 %v6138, 0.70710677
      %v6171 = vmul.f32 %v6139, 0.70710677
      %v6172 = vmul.f32 %v6140, 0.70710677
      %v6173 = vmul.f32 %v6141, 0.70710677
      %v6174 = vmul.f32 %v6142, 0.70710677
      %v6175 = vmul.f32 %v6143, 0.70710677
      %v6176 = vmul.f32 %v6144, 0.70710677
      %v6177 = vmul.f32 %v6145, 0.70710677
      %v6178 = vmul.f32 %v6146, 0.70710677
      %v6179 = vmul.f32 %v6147, 0.70710677
      %v6180 = vmul.f32 %v6148, 0.70710677
      %v6181 = vmul.f32 %v6149, 0.70710677
      %v6182 = vmul.f32 %v6150, 0.70710677
      %v6183 = verf.f32.pop %v6167
      %v6184 = verf.f32.pop %v6168
      %v6185 = verf.f32.pop %v6169
      %v6186 = verf.f32.pop %v6170
      %v6187 = verf.f32.pop %v6171
      %v6188 = verf.f32.pop %v6172
      %v6189 = verf.f32.pop %v6173
      %v6190 = verf.f32.pop %v6174
      %v6191 = verf.f32.pop %v6175
      %v6192 = verf.f32.pop %v6176
      %v6193 = verf.f32.pop %v6177
      %v6194 = verf.f32.pop %v6178
      %v6195 = verf.f32.pop %v6179
      %v6196 = verf.f32.pop %v6180
      %v6197 = verf.f32.pop %v6181
      %v6198 = verf.f32.pop %v6182
      %v6199 = vadd.f32 %v6183, 1.0
      %v6200 = vadd.f32 %v6184, 1.0
      %v6201 = vadd.f32 %v6185, 1.0
      %v6202 = vadd.f32 %v6186, 1.0
      %v6203 = vadd.f32 %v6187, 1.0
      %v6204 = vadd.f32 %v6188, 1.0
      %v6205 = vadd.f32 %v6189, 1.0
      %v6206 = vadd.f32 %v6190, 1.0
      %v6207 = vadd.f32 %v6191, 1.0
      %v6208 = vadd.f32 %v6192, 1.0
      %v6209 = vadd.f32 %v6193, 1.0
      %v6210 = vadd.f32 %v6194, 1.0
      %v6211 = vadd.f32 %v6195, 1.0
      %v6212 = vadd.f32 %v6196, 1.0
      %v6213 = vadd.f32 %v6197, 1.0
      %v6214 = vadd.f32 %v6198, 1.0
      %v6215 = vmul.f32 %v6151, %v6199
      %v6216 = vmul.f32 %v6152, %v6200
      %v6217 = vmul.f32 %v6153, %v6201
      %v6218 = vmul.f32 %v6154, %v6202
      %v6219 = vmul.f32 %v6155, %v6203
      %v6220 = vmul.f32 %v6156, %v6204
      %v6221 = vmul.f32 %v6157, %v6205
      %v6222 = vmul.f32 %v6158, %v6206
      %v6223 = vmul.f32 %v6159, %v6207
      %v6224 = vmul.f32 %v6160, %v6208
      %v6225 = vmul.f32 %v6161, %v6209
      %v6226 = vmul.f32 %v6162, %v6210
      %v6227 = vmul.f32 %v6163, %v6211
      %v6228 = vmul.f32 %v6164, %v6212
      %v6229 = vmul.f32 %v6165, %v6213
      %v6230 = vmul.f32 %v6166, %v6214
      %6247 = vrot.lane.b32.xlu0 %v6135, 96
      %v6248 = vpop.permute.xlu0 %6247
      %6249 = vrot.lane.b32.xlu0 %v6136, 96
      %v6250 = vpop.permute.xlu0 %6249
      %6251 = vrot.lane.b32.xlu0 %v6137, 96
      %v6252 = vpop.permute.xlu0 %6251
      %6253 = vrot.lane.b32.xlu0 %v6138, 96
      %v6254 = vpop.permute.xlu0 %6253
      %6255 = vrot.lane.b32.xlu0 %v6139, 96
      %v6256 = vpop.permute.xlu0 %6255
      %6257 = vrot.lane.b32.xlu0 %v6140, 96
      %v6258 = vpop.permute.xlu0 %6257
      %6259 = vrot.lane.b32.xlu0 %v6141, 96
      %v6260 = vpop.permute.xlu0 %6259
      %6261 = vrot.lane.b32.xlu0 %v6142, 96
      %v6262 = vpop.permute.xlu0 %6261
      %6263 = vrot.lane.b32.xlu0 %v6143, 96
      %v6264 = vpop.permute.xlu0 %6263
      %6265 = vrot.lane.b32.xlu0 %v6144, 96
      %v6266 = vpop.permute.xlu0 %6265
      %6267 = vrot.lane.b32.xlu0 %v6145, 96
      %v6268 = vpop.permute.xlu0 %6267
      %6269 = vrot.lane.b32.xlu0 %v6146, 96
      %v6270 = vpop.permute.xlu0 %6269
      %6271 = vrot.lane.b32.xlu0 %v6147, 96
      %v6272 = vpop.permute.xlu0 %6271
      %6273 = vrot.lane.b32.xlu0 %v6148, 96
      %v6274 = vpop.permute.xlu0 %6273
      %6275 = vrot.lane.b32.xlu0 %v6149, 96
      %v6276 = vpop.permute.xlu0 %6275
      %6277 = vrot.lane.b32.xlu0 %v6150, 96
      %v6278 = vpop.permute.xlu0 %6277
      %v6295 = vmul.f32 %v6215, %v6248
      %v6296 = vmul.f32 %v6216, %v6250
      %v6297 = vmul.f32 %v6217, %v6252
      %v6298 = vmul.f32 %v6218, %v6254
      %v6299 = vmul.f32 %v6219, %v6256
      %v6300 = vmul.f32 %v6220, %v6258
      %v6301 = vmul.f32 %v6221, %v6260
      %v6302 = vmul.f32 %v6222, %v6262
      %v6303 = vmul.f32 %v6223, %v6264
      %v6304 = vmul.f32 %v6224, %v6266
      %v6305 = vmul.f32 %v6225, %v6268
      %v6306 = vmul.f32 %v6226, %v6270
      %v6307 = vmul.f32 %v6227, %v6272
      %v6308 = vmul.f32 %v6228, %v6274
      %v6309 = vmul.f32 %v6229, %v6276
      %v6310 = vmul.f32 %v6230, %v6278
      %v6312 = vsel %vm2704, %v6295, 0
      %v6315 = vsel %vm2704, %v6296, 0
      %v6318 = vsel %vm2704, %v6297, 0
      %v6321 = vsel %vm2704, %v6298, 0
      %v6324 = vsel %vm2704, %v6299, 0
      %v6327 = vsel %vm2704, %v6300, 0
      %v6330 = vsel %vm2704, %v6301, 0
      %v6333 = vsel %vm2704, %v6302, 0
      %v6336 = vsel %vm2704, %v6303, 0
      %v6339 = vsel %vm2704, %v6304, 0
      %v6342 = vsel %vm2704, %v6305, 0
      %v6345 = vsel %vm2704, %v6306, 0
      %v6348 = vsel %vm2704, %v6307, 0
      %v6351 = vsel %vm2704, %v6308, 0
      %v6354 = vsel %vm2704, %v6309, 0
      %v6357 = vsel %vm2704, %v6310, 0
      %6359 = vmatprep.subr.mxu0 0.0
      %6360 = vmatpush1.xpose.msra.mxu0 %v6312
      %6361 = vmatprep.subr.mxu0 0.0
      %6362 = vmatpush1.xpose.msra.mxu0 %v6315
      %6363 = vmatprep.subr.mxu0 0.0
      %6364 = vmatpush1.xpose.msra.mxu0 %v6318
      %6365 = vmatprep.subr.mxu0 0.0
      %6366 = vmatpush1.xpose.msra.mxu0 %v6321
      %6367 = vmatprep.subr.mxu0 0.0
      %6368 = vmatpush1.xpose.msra.mxu0 %v6324
      %6369 = vmatprep.subr.mxu0 0.0
      %6370 = vmatpush1.xpose.msra.mxu0 %v6327
      %6371 = vmatprep.subr.mxu0 0.0
      %6372 = vmatpush1.xpose.msra.mxu0 %v6330
      %6373 = vmatprep.subr.mxu0 0.0
      %6374 = vmatpush1.xpose.msra.mxu0 %v6333
      %6375 = vmatprep.subr.mxu0 0.0
      %6376 = vmatpush1.xpose.msra.mxu0 %v6336
      %6377 = vmatprep.subr.mxu0 0.0
      %6378 = vmatpush1.xpose.msra.mxu0 %v6339
      %6379 = vmatprep.subr.mxu0 0.0
      %6380 = vmatpush1.xpose.msra.mxu0 %v6342
      %6381 = vmatprep.subr.mxu0 0.0
      %6382 = vmatpush1.xpose.msra.mxu0 %v6345
      %6383 = vmatprep.subr.mxu0 0.0
      %6384 = vmatpush1.xpose.msra.mxu0 %v6348
      %6385 = vmatprep.subr.mxu0 0.0
      %6386 = vmatpush1.xpose.msra.mxu0 %v6351
      %6387 = vmatprep.subr.mxu0 0.0
      %6388 = vmatpush1.xpose.msra.mxu0 %v6354
      %6389 = vmatprep.subr.mxu0 0.0
      %6390 = vmatpush1.xpose.msra.mxu0 %v6357
      %6391 = vmatprep.subr.mxu0 0.0
      %6392 = vmatpush1.xpose.msra.mxu0 0.0
      %6393 = vmatprep.subr.mxu0 0.0
      %6394 = vmatpush1.xpose.msra.mxu0 0.0
      %6395 = vmatprep.subr.mxu0 0.0
      %6396 = vmatpush1.xpose.msra.mxu0 0.0
      %6397 = vmatprep.subr.mxu0 0.0
      %6398 = vmatpush1.xpose.msra.mxu0 0.0
      %6399 = vmatprep.subr.mxu0 0.0
      %6400 = vmatpush1.xpose.msra.mxu0 0.0
      %6401 = vmatprep.subr.mxu0 0.0
      %6402 = vmatpush1.xpose.msra.mxu0 0.0
      %6403 = vmatprep.subr.mxu0 0.0
      %6404 = vmatpush1.xpose.msra.mxu0 0.0
      %6405 = vmatprep.subr.mxu0 0.0
      %6406 = vmatpush1.xpose.msra.mxu0 0.0
      %6407 = vmatprep.subr.mxu0 0.0
      %6408 = vmatpush1.xpose.msra.mxu0 0.0
      %6409 = vmatprep.subr.mxu0 0.0
      %6410 = vmatpush1.xpose.msra.mxu0 0.0
      %6411 = vmatprep.subr.mxu0 0.0
      %6412 = vmatpush1.xpose.msra.mxu0 0.0
      %6413 = vmatprep.subr.mxu0 0.0
      %6414 = vmatpush1.xpose.msra.mxu0 0.0
      %6415 = vmatprep.subr.mxu0 0.0
      %6416 = vmatpush1.xpose.msra.mxu0 0.0
      %6417 = vmatprep.subr.mxu0 0.0
      %6418 = vmatpush1.xpose.msra.mxu0 0.0
      %6419 = vmatprep.subr.mxu0 0.0
      %6420 = vmatpush1.xpose.msra.mxu0 0.0
      %6421 = vmatprep.subr.mxu0 0.0
      %6422 = vmatpush1.xpose.msra.mxu0 0.0
      %6423 = vmatprep.mubr.f32.mxu0 0.0
      %6424 = vmatmul.mubr.f32.gmra.mrb[0].mxu0 %v2706
      %v6425 = vpop.f32.mrb[0].mxu0
      %v6426 = vadd.f32 %v2697, %v6425
      %v6427 = vpop.f32.mrb[0].mxu0
      %6428 = vmatprep.mubr.f32.mxu0 0.0
      %6429 = vmatmul.mubr.f32.gmra.mrb[0].mxu0 %v2709
      %v6430 = vpop.f32.mrb[0].mxu0
      %v6431 = vadd.f32 %v2702, %v6430
      %v6432 = vpop.f32.mrb[0].mxu0
      %6433 = vdwg.mxu0
      %6434 = vst [vmem:[%s497 + $0x28] sm:$0xff] %v6426
      %6435 = vst [vmem:[%s497 + $0x68] sm:$0xff] %v6431
      %s6436 = scalar_lea.vmem [#allocation2], 960
      %v6437 = vld [vmem:[%s6436] sm:$0xff]
      %v6438 = vld [vmem:[%s6436 + $0x8] sm:$0xff]
      %v6439 = vld [vmem:[%s6436 + $0x10] sm:$0xff]
      %v6440 = vld [vmem:[%s6436 + $0x18] sm:$0xff]
      %v6441 = vld [vmem:[%s6436 + $0x28] sm:$0xff]
      %v6442 = vld [vmem:[%s6436 + $0x30] sm:$0xff]
      %v6443 = vld [vmem:[%s6436 + $0x38] sm:$0xff]
      %v6444 = vld [vmem:[%s6436 + $0x40] sm:$0xff]
      %v6445 = vld [vmem:[%s6436 + $0x50] sm:$0xff]
      %v6446 = vld [vmem:[%s6436 + $0x58] sm:$0xff]
      %v6447 = vld [vmem:[%s6436 + $0x60] sm:$0xff]
      %v6448 = vld [vmem:[%s6436 + $0x68] sm:$0xff]
      %v6449 = vld [vmem:[%s6436 + $0x78] sm:$0xff]
      %v6450 = vld [vmem:[%s6436 + $0x80] sm:$0xff]
      %v6451 = vld [vmem:[%s6436 + $0x88] sm:$0xff]
      %v6452 = vld [vmem:[%s6436 + $0x90] sm:$0xff]
      %v6453 = vmul.f32 %v6437, %v2083
      %v6454 = vmul.f32 %v6438, %v2083
      %v6455 = vmul.f32 %v6439, %v2083
      %v6456 = vmul.f32 %v6440, %v2083
      %v6457 = vmul.f32 %v6441, %v2083
      %v6458 = vmul.f32 %v6442, %v2083
      %v6459 = vmul.f32 %v6443, %v2083
      %v6460 = vmul.f32 %v6444, %v2083
      %v6461 = vmul.f32 %v6445, %v2083
      %v6462 = vmul.f32 %v6446, %v2083
      %v6463 = vmul.f32 %v6447, %v2083
      %v6464 = vmul.f32 %v6448, %v2083
      %v6465 = vmul.f32 %v6449, %v2083
      %v6466 = vmul.f32 %v6450, %v2083
      %v6467 = vmul.f32 %v6451, %v2083
      %v6468 = vmul.f32 %v6452, %v2083
      %v6469 = vadd.f32 %v2063, %v6453
      %v6470 = vadd.f32 %v2063, %v6454
      %v6471 = vadd.f32 %v2063, %v6455
      %v6472 = vadd.f32 %v2063, %v6456
      %v6473 = vadd.f32 %v2063, %v6457
      %v6474 = vadd.f32 %v2063, %v6458
      %v6475 = vadd.f32 %v2063, %v6459
      %v6476 = vadd.f32 %v2063, %v6460
      %v6477 = vadd.f32 %v2063, %v6461
      %v6478 = vadd.f32 %v2063, %v6462
      %v6479 = vadd.f32 %v2063, %v6463
      %v6480 = vadd.f32 %v2063, %v6464
      %v6481 = vadd.f32 %v2063, %v6465
      %v6482 = vadd.f32 %v2063, %v6466
      %v6483 = vadd.f32 %v2063, %v6467
      %v6484 = vadd.f32 %v2063, %v6468
      %v6485 = vld [vmem:[%s6436 + $0x1] sm:$0xff]
      %v6486 = vld [vmem:[%s6436 + $0x9] sm:$0xff]
      %v6487 = vld [vmem:[%s6436 + $0x11] sm:$0xff]
      %v6488 = vld [vmem:[%s6436 + $0x19] sm:$0xff]
      %v6489 = vld [vmem:[%s6436 + $0x29] sm:$0xff]
      %v6490 = vld [vmem:[%s6436 + $0x31] sm:$0xff]
      %v6491 = vld [vmem:[%s6436 + $0x39] sm:$0xff]
      %v6492 = vld [vmem:[%s6436 + $0x41] sm:$0xff]
      %v6493 = vld [vmem:[%s6436 + $0x51] sm:$0xff]
      %v6494 = vld [vmem:[%s6436 + $0x59] sm:$0xff]
      %v6495 = vld [vmem:[%s6436 + $0x61] sm:$0xff]
      %v6496 = vld [vmem:[%s6436 + $0x69] sm:$0xff]
      %v6497 = vld [vmem:[%s6436 + $0x79] sm:$0xff]
      %v6498 = vld [vmem:[%s6436 + $0x81] sm:$0xff]
      %v6499 = vld [vmem:[%s6436 + $0x89] sm:$0xff]
      %v6500 = vld [vmem:[%s6436 + $0x91] sm:$0xff]
      %v6501 = vmul.f32 %v6485, %v2135
      %v6502 = vmul.f32 %v6486, %v2135
      %v6503 = vmul.f32 %v6487, %v2135
      %v6504 = vmul.f32 %v6488, %v2135
      %v6505 = vmul.f32 %v6489, %v2135
      %v6506 = vmul.f32 %v6490, %v2135
      %v6507 = vmul.f32 %v6491, %v2135
      %v6508 = vmul.f32 %v6492, %v2135
      %v6509 = vmul.f32 %v6493, %v2135
      %v6510 = vmul.f32 %v6494, %v2135
      %v6511 = vmul.f32 %v6495, %v2135
      %v6512 = vmul.f32 %v6496, %v2135
      %v6513 = vmul.f32 %v6497, %v2135
      %v6514 = vmul.f32 %v6498, %v2135
      %v6515 = vmul.f32 %v6499, %v2135
      %v6516 = vmul.f32 %v6500, %v2135
      %v6517 = vadd.f32 %v6469, %v6501
      %v6518 = vadd.f32 %v6470, %v6502
      %v6519 = vadd.f32 %v6471, %v6503
      %v6520 = vadd.f32 %v6472, %v6504
      %v6521 = vadd.f32 %v6473, %v6505
      %v6522 = vadd.f32 %v6474, %v6506
      %v6523 = vadd.f32 %v6475, %v6507
      %v6524 = vadd.f32 %v6476, %v6508
      %v6525 = vadd.f32 %v6477, %v6509
      %v6526 = vadd.f32 %v6478, %v6510
      %v6527 = vadd.f32 %v6479, %v6511
      %v6528 = vadd.f32 %v6480, %v6512
      %v6529 = vadd.f32 %v6481, %v6513
      %v6530 = vadd.f32 %v6482, %v6514
      %v6531 = vadd.f32 %v6483, %v6515
      %v6532 = vadd.f32 %v6484, %v6516
      %v6533 = vld [vmem:[%s6436 + $0x2] sm:$0xff]
      %v6534 = vld [vmem:[%s6436 + $0xa] sm:$0xff]
      %v6535 = vld [vmem:[%s6436 + $0x12] sm:$0xff]
      %v6536 = vld [vmem:[%s6436 + $0x1a] sm:$0xff]
      %v6537 = vld [vmem:[%s6436 + $0x2a] sm:$0xff]
      %v6538 = vld [vmem:[%s6436 + $0x32] sm:$0xff]
      %v6539 = vld [vmem:[%s6436 + $0x3a] sm:$0xff]
      %v6540 = vld [vmem:[%s6436 + $0x42] sm:$0xff]
      %v6541 = vld [vmem:[%s6436 + $0x52] sm:$0xff]
      %v6542 = vld [vmem:[%s6436 + $0x5a] sm:$0xff]
      %v6543 = vld [vmem:[%s6436 + $0x62] sm:$0xff]
      %v6544 = vld [vmem:[%s6436 + $0x6a] sm:$0xff]
      %v6545 = vld [vmem:[%s6436 + $0x7a] sm:$0xff]
      %v6546 = vld [vmem:[%s6436 + $0x82] sm:$0xff]
      %v6547 = vld [vmem:[%s6436 + $0x8a] sm:$0xff]
      %v6548 = vld [vmem:[%s6436 + $0x92] sm:$0xff]
      %v6549 = vmul.f32 %v6533, %v2187
      %v6550 = vmul.f32 %v6534, %v2187
      %v6551 = vmul.f32 %v6535, %v2187
      %v6552 = vmul.f32 %v6536, %v2187
      %v6553 = vmul.f32 %v6537, %v2187
      %v6554 = vmul.f32 %v6538, %v2187
      %v6555 = vmul.f32 %v6539, %v2187
      %v6556 = vmul.f32 %v6540, %v2187
      %v6557 = vmul.f32 %v6541, %v2187
      %v6558 = vmul.f32 %v6542, %v2187
      %v6559 = vmul.f32 %v6543, %v2187
      %v6560 = vmul.f32 %v6544, %v2187
      %v6561 = vmul.f32 %v6545, %v2187
      %v6562 = vmul.f32 %v6546, %v2187
      %v6563 = vmul.f32 %v6547, %v2187
      %v6564 = vmul.f32 %v6548, %v2187
      %v6565 = vadd.f32 %v6517, %v6549
      %v6566 = vadd.f32 %v6518, %v6550
      %v6567 = vadd.f32 %v6519, %v6551
      %v6568 = vadd.f32 %v6520, %v6552
      %v6569 = vadd.f32 %v6521, %v6553
      %v6570 = vadd.f32 %v6522, %v6554
      %v6571 = vadd.f32 %v6523, %v6555
      %v6572 = vadd.f32 %v6524, %v6556
      %v6573 = vadd.f32 %v6525, %v6557
      %v6574 = vadd.f32 %v6526, %v6558
      %v6575 = vadd.f32 %v6527, %v6559
      %v6576 = vadd.f32 %v6528, %v6560
      %v6577 = vadd.f32 %v6529, %v6561
      %v6578 = vadd.f32 %v6530, %v6562
      %v6579 = vadd.f32 %v6531, %v6563
      %v6580 = vadd.f32 %v6532, %v6564
      %s6581 = scalar_lea.vmem [#allocation2], 1000
      %v6582 = vld [vmem:[%s6581] sm:$0xff]
      %v6583 = vld [vmem:[%s6581 + $0x8] sm:$0xff]
      %v6584 = vld [vmem:[%s6581 + $0x10] sm:$0xff]
      %v6585 = vld [vmem:[%s6581 + $0x18] sm:$0xff]
      %v6586 = vld [vmem:[%s6581 + $0x28] sm:$0xff]
      %v6587 = vld [vmem:[%s6581 + $0x30] sm:$0xff]
      %v6588 = vld [vmem:[%s6581 + $0x38] sm:$0xff]
      %v6589 = vld [vmem:[%s6581 + $0x40] sm:$0xff]
      %v6590 = vld [vmem:[%s6581 + $0x50] sm:$0xff]
      %v6591 = vld [vmem:[%s6581 + $0x58] sm:$0xff]
      %v6592 = vld [vmem:[%s6581 + $0x60] sm:$0xff]
      %v6593 = vld [vmem:[%s6581 + $0x68] sm:$0xff]
      %v6594 = vld [vmem:[%s6581 + $0x78] sm:$0xff]
      %v6595 = vld [vmem:[%s6581 + $0x80] sm:$0xff]
      %v6596 = vld [vmem:[%s6581 + $0x88] sm:$0xff]
      %v6597 = vld [vmem:[%s6581 + $0x90] sm:$0xff]
      %v6598 = vmul.f32 %v6582, %v2240
      %v6599 = vmul.f32 %v6583, %v2240
      %v6600 = vmul.f32 %v6584, %v2240
      %v6601 = vmul.f32 %v6585, %v2240
      %v6602 = vmul.f32 %v6586, %v2240
      %v6603 = vmul.f32 %v6587, %v2240
      %v6604 = vmul.f32 %v6588, %v2240
      %v6605 = vmul.f32 %v6589, %v2240
      %v6606 = vmul.f32 %v6590, %v2240
      %v6607 = vmul.f32 %v6591, %v2240
      %v6608 = vmul.f32 %v6592, %v2240
      %v6609 = vmul.f32 %v6593, %v2240
      %v6610 = vmul.f32 %v6594, %v2240
      %v6611 = vmul.f32 %v6595, %v2240
      %v6612 = vmul.f32 %v6596, %v2240
      %v6613 = vmul.f32 %v6597, %v2240
      %v6614 = vadd.f32 %v6565, %v6598
      %v6615 = vadd.f32 %v6566, %v6599
      %v6616 = vadd.f32 %v6567, %v6600
      %v6617 = vadd.f32 %v6568, %v6601
      %v6618 = vadd.f32 %v6569, %v6602
      %v6619 = vadd.f32 %v6570, %v6603
      %v6620 = vadd.f32 %v6571, %v6604
      %v6621 = vadd.f32 %v6572, %v6605
      %v6622 = vadd.f32 %v6573, %v6606
      %v6623 = vadd.f32 %v6574, %v6607
      %v6624 = vadd.f32 %v6575, %v6608
      %v6625 = vadd.f32 %v6576, %v6609
      %v6626 = vadd.f32 %v6577, %v6610
      %v6627 = vadd.f32 %v6578, %v6611
      %v6628 = vadd.f32 %v6579, %v6612
      %v6629 = vadd.f32 %v6580, %v6613
      %v6630 = vld [vmem:[%s6581 + $0x1] sm:$0xff]
      %v6631 = vld [vmem:[%s6581 + $0x9] sm:$0xff]
      %v6632 = vld [vmem:[%s6581 + $0x11] sm:$0xff]
      %v6633 = vld [vmem:[%s6581 + $0x19] sm:$0xff]
      %v6634 = vld [vmem:[%s6581 + $0x29] sm:$0xff]
      %v6635 = vld [vmem:[%s6581 + $0x31] sm:$0xff]
      %v6636 = vld [vmem:[%s6581 + $0x39] sm:$0xff]
      %v6637 = vld [vmem:[%s6581 + $0x41] sm:$0xff]
      %v6638 = vld [vmem:[%s6581 + $0x51] sm:$0xff]
      %v6639 = vld [vmem:[%s6581 + $0x59] sm:$0xff]
      %v6640 = vld [vmem:[%s6581 + $0x61] sm:$0xff]
      %v6641 = vld [vmem:[%s6581 + $0x69] sm:$0xff]
      %v6642 = vld [vmem:[%s6581 + $0x79] sm:$0xff]
      %v6643 = vld [vmem:[%s6581 + $0x81] sm:$0xff]
      %v6644 = vld [vmem:[%s6581 + $0x89] sm:$0xff]
      %v6645 = vld [vmem:[%s6581 + $0x91] sm:$0xff]
      %v6646 = vmul.f32 %v6630, %v2292
      %v6647 = vmul.f32 %v6631, %v2292
      %v6648 = vmul.f32 %v6632, %v2292
      %v6649 = vmul.f32 %v6633, %v2292
      %v6650 = vmul.f32 %v6634, %v2292
      %v6651 = vmul.f32 %v6635, %v2292
      %v6652 = vmul.f32 %v6636, %v2292
      %v6653 = vmul.f32 %v6637, %v2292
      %v6654 = vmul.f32 %v6638, %v2292
      %v6655 = vmul.f32 %v6639, %v2292
      %v6656 = vmul.f32 %v6640, %v2292
      %v6657 = vmul.f32 %v6641, %v2292
      %v6658 = vmul.f32 %v6642, %v2292
      %v6659 = vmul.f32 %v6643, %v2292
      %v6660 = vmul.f32 %v6644, %v2292
      %v6661 = vmul.f32 %v6645, %v2292
      %v6662 = vadd.f32 %v6614, %v6646
      %v6663 = vadd.f32 %v6615, %v6647
      %v6664 = vadd.f32 %v6616, %v6648
      %v6665 = vadd.f32 %v6617, %v6649
      %v6666 = vadd.f32 %v6618, %v6650
      %v6667 = vadd.f32 %v6619, %v6651
      %v6668 = vadd.f32 %v6620, %v6652
      %v6669 = vadd.f32 %v6621, %v6653
      %v6670 = vadd.f32 %v6622, %v6654
      %v6671 = vadd.f32 %v6623, %v6655
      %v6672 = vadd.f32 %v6624, %v6656
      %v6673 = vadd.f32 %v6625, %v6657
      %v6674 = vadd.f32 %v6626, %v6658
      %v6675 = vadd.f32 %v6627, %v6659
      %v6676 = vadd.f32 %v6628, %v6660
      %v6677 = vadd.f32 %v6629, %v6661
      %v6678 = vld [vmem:[%s6581 + $0x2] sm:$0xff]
      %v6679 = vld [vmem:[%s6581 + $0xa] sm:$0xff]
      %v6680 = vld [vmem:[%s6581 + $0x12] sm:$0xff]
      %v6681 = vld [vmem:[%s6581 + $0x1a] sm:$0xff]
      %v6682 = vld [vmem:[%s6581 + $0x2a] sm:$0xff]
      %v6683 = vld [vmem:[%s6581 + $0x32] sm:$0xff]
      %v6684 = vld [vmem:[%s6581 + $0x3a] sm:$0xff]
      %v6685 = vld [vmem:[%s6581 + $0x42] sm:$0xff]
      %v6686 = vld [vmem:[%s6581 + $0x52] sm:$0xff]
      %v6687 = vld [vmem:[%s6581 + $0x5a] sm:$0xff]
      %v6688 = vld [vmem:[%s6581 + $0x62] sm:$0xff]
      %v6689 = vld [vmem:[%s6581 + $0x6a] sm:$0xff]
      %v6690 = vld [vmem:[%s6581 + $0x7a] sm:$0xff]
      %v6691 = vld [vmem:[%s6581 + $0x82] sm:$0xff]
      %v6692 = vld [vmem:[%s6581 + $0x8a] sm:$0xff]
      %v6693 = vld [vmem:[%s6581 + $0x92] sm:$0xff]
      %v6694 = vmul.f32 %v6678, %v2344
      %v6695 = vmul.f32 %v6679, %v2344
      %v6696 = vmul.f32 %v6680, %v2344
      %v6697 = vmul.f32 %v6681, %v2344
      %v6698 = vmul.f32 %v6682, %v2344
      %v6699 = vmul.f32 %v6683, %v2344
      %v6700 = vmul.f32 %v6684, %v2344
      %v6701 = vmul.f32 %v6685, %v2344
      %v6702 = vmul.f32 %v6686, %v2344
      %v6703 = vmul.f32 %v6687, %v2344
      %v6704 = vmul.f32 %v6688, %v2344
      %v6705 = vmul.f32 %v6689, %v2344
      %v6706 = vmul.f32 %v6690, %v2344
      %v6707 = vmul.f32 %v6691, %v2344
      %v6708 = vmul.f32 %v6692, %v2344
      %v6709 = vmul.f32 %v6693, %v2344
      %v6710 = vadd.f32 %v6662, %v6694
      %v6711 = vadd.f32 %v6663, %v6695
      %v6712 = vadd.f32 %v6664, %v6696
      %v6713 = vadd.f32 %v6665, %v6697
      %v6714 = vadd.f32 %v6666, %v6698
      %v6715 = vadd.f32 %v6667, %v6699
      %v6716 = vadd.f32 %v6668, %v6700
      %v6717 = vadd.f32 %v6669, %v6701
      %v6718 = vadd.f32 %v6670, %v6702
      %v6719 = vadd.f32 %v6671, %v6703
      %v6720 = vadd.f32 %v6672, %v6704
      %v6721 = vadd.f32 %v6673, %v6705
      %v6722 = vadd.f32 %v6674, %v6706
      %v6723 = vadd.f32 %v6675, %v6707
      %v6724 = vadd.f32 %v6676, %v6708
      %v6725 = vadd.f32 %v6677, %v6709
      %s6726 = scalar_lea.vmem [#allocation2], 1040
      %v6727 = vld [vmem:[%s6726] sm:$0xff]
      %v6728 = vld [vmem:[%s6726 + $0x8] sm:$0xff]
      %v6729 = vld [vmem:[%s6726 + $0x10] sm:$0xff]
      %v6730 = vld [vmem:[%s6726 + $0x18] sm:$0xff]
      %v6731 = vld [vmem:[%s6726 + $0x28] sm:$0xff]
      %v6732 = vld [vmem:[%s6726 + $0x30] sm:$0xff]
      %v6733 = vld [vmem:[%s6726 + $0x38] sm:$0xff]
      %v6734 = vld [vmem:[%s6726 + $0x40] sm:$0xff]
      %v6735 = vld [vmem:[%s6726 + $0x50] sm:$0xff]
      %v6736 = vld [vmem:[%s6726 + $0x58] sm:$0xff]
      %v6737 = vld [vmem:[%s6726 + $0x60] sm:$0xff]
      %v6738 = vld [vmem:[%s6726 + $0x68] sm:$0xff]
      %v6739 = vld [vmem:[%s6726 + $0x78] sm:$0xff]
      %v6740 = vld [vmem:[%s6726 + $0x80] sm:$0xff]
      %v6741 = vld [vmem:[%s6726 + $0x88] sm:$0xff]
      %v6742 = vld [vmem:[%s6726 + $0x90] sm:$0xff]
      %v6743 = vmul.f32 %v6727, %v2397
      %v6744 = vmul.f32 %v6728, %v2397
      %v6745 = vmul.f32 %v6729, %v2397
      %v6746 = vmul.f32 %v6730, %v2397
      %v6747 = vmul.f32 %v6731, %v2397
      %v6748 = vmul.f32 %v6732, %v2397
      %v6749 = vmul.f32 %v6733, %v2397
      %v6750 = vmul.f32 %v6734, %v2397
      %v6751 = vmul.f32 %v6735, %v2397
      %v6752 = vmul.f32 %v6736, %v2397
      %v6753 = vmul.f32 %v6737, %v2397
      %v6754 = vmul.f32 %v6738, %v2397
      %v6755 = vmul.f32 %v6739, %v2397
      %v6756 = vmul.f32 %v6740, %v2397
      %v6757 = vmul.f32 %v6741, %v2397
      %v6758 = vmul.f32 %v6742, %v2397
      %v6759 = vadd.f32 %v6710, %v6743
      %v6760 = vadd.f32 %v6711, %v6744
      %v6761 = vadd.f32 %v6712, %v6745
      %v6762 = vadd.f32 %v6713, %v6746
      %v6763 = vadd.f32 %v6714, %v6747
      %v6764 = vadd.f32 %v6715, %v6748
      %v6765 = vadd.f32 %v6716, %v6749
      %v6766 = vadd.f32 %v6717, %v6750
      %v6767 = vadd.f32 %v6718, %v6751
      %v6768 = vadd.f32 %v6719, %v6752
      %v6769 = vadd.f32 %v6720, %v6753
      %v6770 = vadd.f32 %v6721, %v6754
      %v6771 = vadd.f32 %v6722, %v6755
      %v6772 = vadd.f32 %v6723, %v6756
      %v6773 = vadd.f32 %v6724, %v6757
      %v6774 = vadd.f32 %v6725, %v6758
      %v6775 = vld [vmem:[%s6726 + $0x1] sm:$0xff]
      %v6776 = vld [vmem:[%s6726 + $0x9] sm:$0xff]
      %v6777 = vld [vmem:[%s6726 + $0x11] sm:$0xff]
      %v6778 = vld [vmem:[%s6726 + $0x19] sm:$0xff]
      %v6779 = vld [vmem:[%s6726 + $0x29] sm:$0xff]
      %v6780 = vld [vmem:[%s6726 + $0x31] sm:$0xff]
      %v6781 = vld [vmem:[%s6726 + $0x39] sm:$0xff]
      %v6782 = vld [vmem:[%s6726 + $0x41] sm:$0xff]
      %v6783 = vld [vmem:[%s6726 + $0x51] sm:$0xff]
      %v6784 = vld [vmem:[%s6726 + $0x59] sm:$0xff]
      %v6785 = vld [vmem:[%s6726 + $0x61] sm:$0xff]
      %v6786 = vld [vmem:[%s6726 + $0x69] sm:$0xff]
      %v6787 = vld [vmem:[%s6726 + $0x79] sm:$0xff]
      %v6788 = vld [vmem:[%s6726 + $0x81] sm:$0xff]
      %v6789 = vld [vmem:[%s6726 + $0x89] sm:$0xff]
      %v6790 = vld [vmem:[%s6726 + $0x91] sm:$0xff]
      %v6791 = vmul.f32 %v6775, %v2449
      %v6792 = vmul.f32 %v6776, %v2449
      %v6793 = vmul.f32 %v6777, %v2449
      %v6794 = vmul.f32 %v6778, %v2449
      %v6795 = vmul.f32 %v6779, %v2449
      %v6796 = vmul.f32 %v6780, %v2449
      %v6797 = vmul.f32 %v6781, %v2449
      %v6798 = vmul.f32 %v6782, %v2449
      %v6799 = vmul.f32 %v6783, %v2449
      %v6800 = vmul.f32 %v6784, %v2449
      %v6801 = vmul.f32 %v6785, %v2449
      %v6802 = vmul.f32 %v6786, %v2449
      %v6803 = vmul.f32 %v6787, %v2449
      %v6804 = vmul.f32 %v6788, %v2449
      %v6805 = vmul.f32 %v6789, %v2449
      %v6806 = vmul.f32 %v6790, %v2449
      %v6807 = vadd.f32 %v6759, %v6791
      %v6808 = vadd.f32 %v6760, %v6792
      %v6809 = vadd.f32 %v6761, %v6793
      %v6810 = vadd.f32 %v6762, %v6794
      %v6811 = vadd.f32 %v6763, %v6795
      %v6812 = vadd.f32 %v6764, %v6796
      %v6813 = vadd.f32 %v6765, %v6797
      %v6814 = vadd.f32 %v6766, %v6798
      %v6815 = vadd.f32 %v6767, %v6799
      %v6816 = vadd.f32 %v6768, %v6800
      %v6817 = vadd.f32 %v6769, %v6801
      %v6818 = vadd.f32 %v6770, %v6802
      %v6819 = vadd.f32 %v6771, %v6803
      %v6820 = vadd.f32 %v6772, %v6804
      %v6821 = vadd.f32 %v6773, %v6805
      %v6822 = vadd.f32 %v6774, %v6806
      %v6823 = vld [vmem:[%s6726 + $0x2] sm:$0xff]
      %v6824 = vld [vmem:[%s6726 + $0xa] sm:$0xff]
      %v6825 = vld [vmem:[%s6726 + $0x12] sm:$0xff]
      %v6826 = vld [vmem:[%s6726 + $0x1a] sm:$0xff]
      %v6827 = vld [vmem:[%s6726 + $0x2a] sm:$0xff]
      %v6828 = vld [vmem:[%s6726 + $0x32] sm:$0xff]
      %v6829 = vld [vmem:[%s6726 + $0x3a] sm:$0xff]
      %v6830 = vld [vmem:[%s6726 + $0x42] sm:$0xff]
      %v6831 = vld [vmem:[%s6726 + $0x52] sm:$0xff]
      %v6832 = vld [vmem:[%s6726 + $0x5a] sm:$0xff]
      %v6833 = vld [vmem:[%s6726 + $0x62] sm:$0xff]
      %v6834 = vld [vmem:[%s6726 + $0x6a] sm:$0xff]
      %v6835 = vld [vmem:[%s6726 + $0x7a] sm:$0xff]
      %v6836 = vld [vmem:[%s6726 + $0x82] sm:$0xff]
      %v6837 = vld [vmem:[%s6726 + $0x8a] sm:$0xff]
      %v6838 = vld [vmem:[%s6726 + $0x92] sm:$0xff]
      %v6839 = vmul.f32 %v6823, %v2501
      %v6840 = vmul.f32 %v6824, %v2501
      %v6841 = vmul.f32 %v6825, %v2501
      %v6842 = vmul.f32 %v6826, %v2501
      %v6843 = vmul.f32 %v6827, %v2501
      %v6844 = vmul.f32 %v6828, %v2501
      %v6845 = vmul.f32 %v6829, %v2501
      %v6846 = vmul.f32 %v6830, %v2501
      %v6847 = vmul.f32 %v6831, %v2501
      %v6848 = vmul.f32 %v6832, %v2501
      %v6849 = vmul.f32 %v6833, %v2501
      %v6850 = vmul.f32 %v6834, %v2501
      %v6851 = vmul.f32 %v6835, %v2501
      %v6852 = vmul.f32 %v6836, %v2501
      %v6853 = vmul.f32 %v6837, %v2501
      %v6854 = vmul.f32 %v6838, %v2501
      %v6855 = vadd.f32 %v6807, %v6839
      %v6856 = vadd.f32 %v6808, %v6840
      %v6857 = vadd.f32 %v6809, %v6841
      %v6858 = vadd.f32 %v6810, %v6842
      %v6859 = vadd.f32 %v6811, %v6843
      %v6860 = vadd.f32 %v6812, %v6844
      %v6861 = vadd.f32 %v6813, %v6845
      %v6862 = vadd.f32 %v6814, %v6846
      %v6863 = vadd.f32 %v6815, %v6847
      %v6864 = vadd.f32 %v6816, %v6848
      %v6865 = vadd.f32 %v6817, %v6849
      %v6866 = vadd.f32 %v6818, %v6850
      %v6867 = vadd.f32 %v6819, %v6851
      %v6868 = vadd.f32 %v6820, %v6852
      %v6869 = vadd.f32 %v6821, %v6853
      %v6870 = vadd.f32 %v6822, %v6854
      %v6871 = vmul.f32 %v6855, 0.5
      %v6872 = vmul.f32 %v6856, 0.5
      %v6873 = vmul.f32 %v6857, 0.5
      %v6874 = vmul.f32 %v6858, 0.5
      %v6875 = vmul.f32 %v6859, 0.5
      %v6876 = vmul.f32 %v6860, 0.5
      %v6877 = vmul.f32 %v6861, 0.5
      %v6878 = vmul.f32 %v6862, 0.5
      %v6879 = vmul.f32 %v6863, 0.5
      %v6880 = vmul.f32 %v6864, 0.5
      %v6881 = vmul.f32 %v6865, 0.5
      %v6882 = vmul.f32 %v6866, 0.5
      %v6883 = vmul.f32 %v6867, 0.5
      %v6884 = vmul.f32 %v6868, 0.5
      %v6885 = vmul.f32 %v6869, 0.5
      %v6886 = vmul.f32 %v6870, 0.5
      %v6887 = vmul.f32 %v6855, 0.70710677
      %v6888 = vmul.f32 %v6856, 0.70710677
      %v6889 = vmul.f32 %v6857, 0.70710677
      %v6890 = vmul.f32 %v6858, 0.70710677
      %v6891 = vmul.f32 %v6859, 0.70710677
      %v6892 = vmul.f32 %v6860, 0.70710677
      %v6893 = vmul.f32 %v6861, 0.70710677
      %v6894 = vmul.f32 %v6862, 0.70710677
      %v6895 = vmul.f32 %v6863, 0.70710677
      %v6896 = vmul.f32 %v6864, 0.70710677
      %v6897 = vmul.f32 %v6865, 0.70710677
      %v6898 = vmul.f32 %v6866, 0.70710677
      %v6899 = vmul.f32 %v6867, 0.70710677
      %v6900 = vmul.f32 %v6868, 0.70710677
      %v6901 = vmul.f32 %v6869, 0.70710677
      %v6902 = vmul.f32 %v6870, 0.70710677
      %v6903 = verf.f32.pop %v6887
      %v6904 = verf.f32.pop %v6888
      %v6905 = verf.f32.pop %v6889
      %v6906 = verf.f32.pop %v6890
      %v6907 = verf.f32.pop %v6891
      %v6908 = verf.f32.pop %v6892
      %v6909 = verf.f32.pop %v6893
      %v6910 = verf.f32.pop %v6894
      %v6911 = verf.f32.pop %v6895
      %v6912 = verf.f32.pop %v6896
      %v6913 = verf.f32.pop %v6897
      %v6914 = verf.f32.pop %v6898
      %v6915 = verf.f32.pop %v6899
      %v6916 = verf.f32.pop %v6900
      %v6917 = verf.f32.pop %v6901
      %v6918 = verf.f32.pop %v6902
      %v6919 = vadd.f32 %v6903, 1.0
      %v6920 = vadd.f32 %v6904, 1.0
      %v6921 = vadd.f32 %v6905, 1.0
      %v6922 = vadd.f32 %v6906, 1.0
      %v6923 = vadd.f32 %v6907, 1.0
      %v6924 = vadd.f32 %v6908, 1.0
      %v6925 = vadd.f32 %v6909, 1.0
      %v6926 = vadd.f32 %v6910, 1.0
      %v6927 = vadd.f32 %v6911, 1.0
      %v6928 = vadd.f32 %v6912, 1.0
      %v6929 = vadd.f32 %v6913, 1.0
      %v6930 = vadd.f32 %v6914, 1.0
      %v6931 = vadd.f32 %v6915, 1.0
      %v6932 = vadd.f32 %v6916, 1.0
      %v6933 = vadd.f32 %v6917, 1.0
      %v6934 = vadd.f32 %v6918, 1.0
      %v6935 = vmul.f32 %v6871, %v6919
      %v6936 = vmul.f32 %v6872, %v6920
      %v6937 = vmul.f32 %v6873, %v6921
      %v6938 = vmul.f32 %v6874, %v6922
      %v6939 = vmul.f32 %v6875, %v6923
      %v6940 = vmul.f32 %v6876, %v6924
      %v6941 = vmul.f32 %v6877, %v6925
      %v6942 = vmul.f32 %v6878, %v6926
      %v6943 = vmul.f32 %v6879, %v6927
      %v6944 = vmul.f32 %v6880, %v6928
      %v6945 = vmul.f32 %v6881, %v6929
      %v6946 = vmul.f32 %v6882, %v6930
      %v6947 = vmul.f32 %v6883, %v6931
      %v6948 = vmul.f32 %v6884, %v6932
      %v6949 = vmul.f32 %v6885, %v6933
      %v6950 = vmul.f32 %v6886, %v6934
      %6967 = vrot.lane.b32.xlu0 %v6855, 96
      %v6968 = vpop.permute.xlu0 %6967
      %6969 = vrot.lane.b32.xlu0 %v6856, 96
      %v6970 = vpop.permute.xlu0 %6969
      %6971 = vrot.lane.b32.xlu0 %v6857, 96
      %v6972 = vpop.permute.xlu0 %6971
      %6973 = vrot.lane.b32.xlu0 %v6858, 96
      %v6974 = vpop.permute.xlu0 %6973
      %6975 = vrot.lane.b32.xlu0 %v6859, 96
      %v6976 = vpop.permute.xlu0 %6975
      %6977 = vrot.lane.b32.xlu0 %v6860, 96
      %v6978 = vpop.permute.xlu0 %6977
      %6979 = vrot.lane.b32.xlu0 %v6861, 96
      %v6980 = vpop.permute.xlu0 %6979
      %6981 = vrot.lane.b32.xlu0 %v6862, 96
      %v6982 = vpop.permute.xlu0 %6981
      %6983 = vrot.lane.b32.xlu0 %v6863, 96
      %v6984 = vpop.permute.xlu0 %6983
      %6985 = vrot.lane.b32.xlu0 %v6864, 96
      %v6986 = vpop.permute.xlu0 %6985
      %6987 = vrot.lane.b32.xlu0 %v6865, 96
      %v6988 = vpop.permute.xlu0 %6987
      %6989 = vrot.lane.b32.xlu0 %v6866, 96
      %v6990 = vpop.permute.xlu0 %6989
      %6991 = vrot.lane.b32.xlu0 %v6867, 96
      %v6992 = vpop.permute.xlu0 %6991
      %6993 = vrot.lane.b32.xlu0 %v6868, 96
      %v6994 = vpop.permute.xlu0 %6993
      %6995 = vrot.lane.b32.xlu0 %v6869, 96
      %v6996 = vpop.permute.xlu0 %6995
      %6997 = vrot.lane.b32.xlu0 %v6870, 96
      %v6998 = vpop.permute.xlu0 %6997
      %v7015 = vmul.f32 %v6935, %v6968
      %v7016 = vmul.f32 %v6936, %v6970
      %v7017 = vmul.f32 %v6937, %v6972
      %v7018 = vmul.f32 %v6938, %v6974
      %v7019 = vmul.f32 %v6939, %v6976
      %v7020 = vmul.f32 %v6940, %v6978
      %v7021 = vmul.f32 %v6941, %v6980
      %v7022 = vmul.f32 %v6942, %v6982
      %v7023 = vmul.f32 %v6943, %v6984
      %v7024 = vmul.f32 %v6944, %v6986
      %v7025 = vmul.f32 %v6945, %v6988
      %v7026 = vmul.f32 %v6946, %v6990
      %v7027 = vmul.f32 %v6947, %v6992
      %v7028 = vmul.f32 %v6948, %v6994
      %v7029 = vmul.f32 %v6949, %v6996
      %v7030 = vmul.f32 %v6950, %v6998
      %v7032 = vsel %vm2704, %v7015, 0
      %v7035 = vsel %vm2704, %v7016, 0
      %v7038 = vsel %vm2704, %v7017, 0
      %v7041 = vsel %vm2704, %v7018, 0
      %v7044 = vsel %vm2704, %v7019, 0
      %v7047 = vsel %vm2704, %v7020, 0
      %v7050 = vsel %vm2704, %v7021, 0
      %v7053 = vsel %vm2704, %v7022, 0
      %v7056 = vsel %vm2704, %v7023, 0
      %v7059 = vsel %vm2704, %v7024, 0
      %v7062 = vsel %vm2704, %v7025, 0
      %v7065 = vsel %vm2704, %v7026, 0
      %v7068 = vsel %vm2704, %v7027, 0
      %v7071 = vsel %vm2704, %v7028, 0
      %v7074 = vsel %vm2704, %v7029, 0
      %v7077 = vsel %vm2704, %v7030, 0
      %7079 = vmatprep.subr.mxu0 0.0
      %7080 = vmatpush1.xpose.msra.mxu0 %v7032
      %7081 = vmatprep.subr.mxu0 0.0
      %7082 = vmatpush1.xpose.msra.mxu0 %v7035
      %7083 = vmatprep.subr.mxu0 0.0
      %7084 = vmatpush1.xpose.msra.mxu0 %v7038
      %7085 = vmatprep.subr.mxu0 0.0
      %7086 = vmatpush1.xpose.msra.mxu0 %v7041
      %7087 = vmatprep.subr.mxu0 0.0
      %7088 = vmatpush1.xpose.msra.mxu0 %v7044
      %7089 = vmatprep.subr.mxu0 0.0
      %7090 = vmatpush1.xpose.msra.mxu0 %v7047
      %7091 = vmatprep.subr.mxu0 0.0
      %7092 = vmatpush1.xpose.msra.mxu0 %v7050
      %7093 = vmatprep.subr.mxu0 0.0
      %7094 = vmatpush1.xpose.msra.mxu0 %v7053
      %7095 = vmatprep.subr.mxu0 0.0
      %7096 = vmatpush1.xpose.msra.mxu0 %v7056
      %7097 = vmatprep.subr.mxu0 0.0
      %7098 = vmatpush1.xpose.msra.mxu0 %v7059
      %7099 = vmatprep.subr.mxu0 0.0
      %7100 = vmatpush1.xpose.msra.mxu0 %v7062
      %7101 = vmatprep.subr.mxu0 0.0
      %7102 = vmatpush1.xpose.msra.mxu0 %v7065
      %7103 = vmatprep.subr.mxu0 0.0
      %7104 = vmatpush1.xpose.msra.mxu0 %v7068
      %7105 = vmatprep.subr.mxu0 0.0
      %7106 = vmatpush1.xpose.msra.mxu0 %v7071
      %7107 = vmatprep.subr.mxu0 0.0
      %7108 = vmatpush1.xpose.msra.mxu0 %v7074
      %7109 = vmatprep.subr.mxu0 0.0
      %7110 = vmatpush1.xpose.msra.mxu0 %v7077
      %7111 = vmatprep.subr.mxu0 0.0
      %7112 = vmatpush1.xpose.msra.mxu0 0.0
      %7113 = vmatprep.subr.mxu0 0.0
      %7114 = vmatpush1.xpose.msra.mxu0 0.0
      %7115 = vmatprep.subr.mxu0 0.0
      %7116 = vmatpush1.xpose.msra.mxu0 0.0
      %7117 = vmatprep.subr.mxu0 0.0
      %7118 = vmatpush1.xpose.msra.mxu0 0.0
      %7119 = vmatprep.subr.mxu0 0.0
      %7120 = vmatpush1.xpose.msra.mxu0 0.0
      %7121 = vmatprep.subr.mxu0 0.0
      %7122 = vmatpush1.xpose.msra.mxu0 0.0
      %7123 = vmatprep.subr.mxu0 0.0
      %7124 = vmatpush1.xpose.msra.mxu0 0.0
      %7125 = vmatprep.subr.mxu0 0.0
      %7126 = vmatpush1.xpose.msra.mxu0 0.0
      %7127 = vmatprep.subr.mxu0 0.0
      %7128 = vmatpush1.xpose.msra.mxu0 0.0
      %7129 = vmatprep.subr.mxu0 0.0
      %7130 = vmatpush1.xpose.msra.mxu0 0.0
      %7131 = vmatprep.subr.mxu0 0.0
      %7132 = vmatpush1.xpose.msra.mxu0 0.0
      %7133 = vmatprep.subr.mxu0 0.0
      %7134 = vmatpush1.xpose.msra.mxu0 0.0
      %7135 = vmatprep.subr.mxu0 0.0
      %7136 = vmatpush1.xpose.msra.mxu0 0.0
      %7137 = vmatprep.subr.mxu0 0.0
      %7138 = vmatpush1.xpose.msra.mxu0 0.0
      %7139 = vmatprep.subr.mxu0 0.0
      %7140 = vmatpush1.xpose.msra.mxu0 0.0
      %7141 = vmatprep.subr.mxu0 0.0
      %7142 = vmatpush1.xpose.msra.mxu0 0.0
      %7143 = vmatprep.mubr.f32.mxu0 0.0
      %7144 = vmatmul.mubr.f32.gmra.mrb[0].mxu0 %v2706
      %v7145 = vpop.f32.mrb[0].mxu0
      %v7146 = vadd.f32 %v2697, %v7145
      %v7147 = vpop.f32.mrb[0].mxu0
      %7148 = vmatprep.mubr.f32.mxu0 0.0
      %7149 = vmatmul.mubr.f32.gmra.mrb[0].mxu0 %v2709
      %v7150 = vpop.f32.mrb[0].mxu0
      %v7151 = vadd.f32 %v2702, %v7150
      %v7152 = vpop.f32.mrb[0].mxu0
      %7153 = vdwg.mxu0
      %7154 = vst [vmem:[%s497 + $0x30] sm:$0xff] %v7146
      %7155 = vst [vmem:[%s497 + $0x70] sm:$0xff] %v7151
      %s7156 = scalar_lea.vmem [#allocation2], 1120
      %v7157 = vld [vmem:[%s7156] sm:$0xff]
      %v7158 = vld [vmem:[%s7156 + $0x8] sm:$0xff]
      %v7159 = vld [vmem:[%s7156 + $0x10] sm:$0xff]
      %v7160 = vld [vmem:[%s7156 + $0x18] sm:$0xff]
      %v7161 = vld [vmem:[%s7156 + $0x28] sm:$0xff]
      %v7162 = vld [vmem:[%s7156 + $0x30] sm:$0xff]
      %v7163 = vld [vmem:[%s7156 + $0x38] sm:$0xff]
      %v7164 = vld [vmem:[%s7156 + $0x40] sm:$0xff]
      %v7165 = vld [vmem:[%s7156 + $0x50] sm:$0xff]
      %v7166 = vld [vmem:[%s7156 + $0x58] sm:$0xff]
      %v7167 = vld [vmem:[%s7156 + $0x60] sm:$0xff]
      %v7168 = vld [vmem:[%s7156 + $0x68] sm:$0xff]
      %v7169 = vld [vmem:[%s7156 + $0x78] sm:$0xff]
      %v7170 = vld [vmem:[%s7156 + $0x80] sm:$0xff]
      %v7171 = vld [vmem:[%s7156 + $0x88] sm:$0xff]
      %v7172 = vld [vmem:[%s7156 + $0x90] sm:$0xff]
      %v7173 = vmul.f32 %v7157, %v2083
      %v7174 = vmul.f32 %v7158, %v2083
      %v7175 = vmul.f32 %v7159, %v2083
      %v7176 = vmul.f32 %v7160, %v2083
      %v7177 = vmul.f32 %v7161, %v2083
      %v7178 = vmul.f32 %v7162, %v2083
      %v7179 = vmul.f32 %v7163, %v2083
      %v7180 = vmul.f32 %v7164, %v2083
      %v7181 = vmul.f32 %v7165, %v2083
      %v7182 = vmul.f32 %v7166, %v2083
      %v7183 = vmul.f32 %v7167, %v2083
      %v7184 = vmul.f32 %v7168, %v2083
      %v7185 = vmul.f32 %v7169, %v2083
      %v7186 = vmul.f32 %v7170, %v2083
      %v7187 = vmul.f32 %v7171, %v2083
      %v7188 = vmul.f32 %v7172, %v2083
      %v7189 = vadd.f32 %v2063, %v7173
      %v7190 = vadd.f32 %v2063, %v7174
      %v7191 = vadd.f32 %v2063, %v7175
      %v7192 = vadd.f32 %v2063, %v7176
      %v7193 = vadd.f32 %v2063, %v7177
      %v7194 = vadd.f32 %v2063, %v7178
      %v7195 = vadd.f32 %v2063, %v7179
      %v7196 = vadd.f32 %v2063, %v7180
      %v7197 = vadd.f32 %v2063, %v7181
      %v7198 = vadd.f32 %v2063, %v7182
      %v7199 = vadd.f32 %v2063, %v7183
      %v7200 = vadd.f32 %v2063, %v7184
      %v7201 = vadd.f32 %v2063, %v7185
      %v7202 = vadd.f32 %v2063, %v7186
      %v7203 = vadd.f32 %v2063, %v7187
      %v7204 = vadd.f32 %v2063, %v7188
      %v7205 = vld [vmem:[%s7156 + $0x1] sm:$0xff]
      %v7206 = vld [vmem:[%s7156 + $0x9] sm:$0xff]
      %v7207 = vld [vmem:[%s7156 + $0x11] sm:$0xff]
      %v7208 = vld [vmem:[%s7156 + $0x19] sm:$0xff]
      %v7209 = vld [vmem:[%s7156 + $0x29] sm:$0xff]
      %v7210 = vld [vmem:[%s7156 + $0x31] sm:$0xff]
      %v7211 = vld [vmem:[%s7156 + $0x39] sm:$0xff]
      %v7212 = vld [vmem:[%s7156 + $0x41] sm:$0xff]
      %v7213 = vld [vmem:[%s7156 + $0x51] sm:$0xff]
      %v7214 = vld [vmem:[%s7156 + $0x59] sm:$0xff]
      %v7215 = vld [vmem:[%s7156 + $0x61] sm:$0xff]
      %v7216 = vld [vmem:[%s7156 + $0x69] sm:$0xff]
      %v7217 = vld [vmem:[%s7156 + $0x79] sm:$0xff]
      %v7218 = vld [vmem:[%s7156 + $0x81] sm:$0xff]
      %v7219 = vld [vmem:[%s7156 + $0x89] sm:$0xff]
      %v7220 = vld [vmem:[%s7156 + $0x91] sm:$0xff]
      %v7221 = vmul.f32 %v7205, %v2135
      %v7222 = vmul.f32 %v7206, %v2135
      %v7223 = vmul.f32 %v7207, %v2135
      %v7224 = vmul.f32 %v7208, %v2135
      %v7225 = vmul.f32 %v7209, %v2135
      %v7226 = vmul.f32 %v7210, %v2135
      %v7227 = vmul.f32 %v7211, %v2135
      %v7228 = vmul.f32 %v7212, %v2135
      %v7229 = vmul.f32 %v7213, %v2135
      %v7230 = vmul.f32 %v7214, %v2135
      %v7231 = vmul.f32 %v7215, %v2135
      %v7232 = vmul.f32 %v7216, %v2135
      %v7233 = vmul.f32 %v7217, %v2135
      %v7234 = vmul.f32 %v7218, %v2135
      %v7235 = vmul.f32 %v7219, %v2135
      %v7236 = vmul.f32 %v7220, %v2135
      %v7237 = vadd.f32 %v7189, %v7221
      %v7238 = vadd.f32 %v7190, %v7222
      %v7239 = vadd.f32 %v7191, %v7223
      %v7240 = vadd.f32 %v7192, %v7224
      %v7241 = vadd.f32 %v7193, %v7225
      %v7242 = vadd.f32 %v7194, %v7226
      %v7243 = vadd.f32 %v7195, %v7227
      %v7244 = vadd.f32 %v7196, %v7228
      %v7245 = vadd.f32 %v7197, %v7229
      %v7246 = vadd.f32 %v7198, %v7230
      %v7247 = vadd.f32 %v7199, %v7231
      %v7248 = vadd.f32 %v7200, %v7232
      %v7249 = vadd.f32 %v7201, %v7233
      %v7250 = vadd.f32 %v7202, %v7234
      %v7251 = vadd.f32 %v7203, %v7235
      %v7252 = vadd.f32 %v7204, %v7236
      %v7253 = vld [vmem:[%s7156 + $0x2] sm:$0xff]
      %v7254 = vld [vmem:[%s7156 + $0xa] sm:$0xff]
      %v7255 = vld [vmem:[%s7156 + $0x12] sm:$0xff]
      %v7256 = vld [vmem:[%s7156 + $0x1a] sm:$0xff]
      %v7257 = vld [vmem:[%s7156 + $0x2a] sm:$0xff]
      %v7258 = vld [vmem:[%s7156 + $0x32] sm:$0xff]
      %v7259 = vld [vmem:[%s7156 + $0x3a] sm:$0xff]
      %v7260 = vld [vmem:[%s7156 + $0x42] sm:$0xff]
      %v7261 = vld [vmem:[%s7156 + $0x52] sm:$0xff]
      %v7262 = vld [vmem:[%s7156 + $0x5a] sm:$0xff]
      %v7263 = vld [vmem:[%s7156 + $0x62] sm:$0xff]
      %v7264 = vld [vmem:[%s7156 + $0x6a] sm:$0xff]
      %v7265 = vld [vmem:[%s7156 + $0x7a] sm:$0xff]
      %v7266 = vld [vmem:[%s7156 + $0x82] sm:$0xff]
      %v7267 = vld [vmem:[%s7156 + $0x8a] sm:$0xff]
      %v7268 = vld [vmem:[%s7156 + $0x92] sm:$0xff]
      %v7269 = vmul.f32 %v7253, %v2187
      %v7270 = vmul.f32 %v7254, %v2187
      %v7271 = vmul.f32 %v7255, %v2187
      %v7272 = vmul.f32 %v7256, %v2187
      %v7273 = vmul.f32 %v7257, %v2187
      %v7274 = vmul.f32 %v7258, %v2187
      %v7275 = vmul.f32 %v7259, %v2187
      %v7276 = vmul.f32 %v7260, %v2187
      %v7277 = vmul.f32 %v7261, %v2187
      %v7278 = vmul.f32 %v7262, %v2187
      %v7279 = vmul.f32 %v7263, %v2187
      %v7280 = vmul.f32 %v7264, %v2187
      %v7281 = vmul.f32 %v7265, %v2187
      %v7282 = vmul.f32 %v7266, %v2187
      %v7283 = vmul.f32 %v7267, %v2187
      %v7284 = vmul.f32 %v7268, %v2187
      %v7285 = vadd.f32 %v7237, %v7269
      %v7286 = vadd.f32 %v7238, %v7270
      %v7287 = vadd.f32 %v7239, %v7271
      %v7288 = vadd.f32 %v7240, %v7272
      %v7289 = vadd.f32 %v7241, %v7273
      %v7290 = vadd.f32 %v7242, %v7274
      %v7291 = vadd.f32 %v7243, %v7275
      %v7292 = vadd.f32 %v7244, %v7276
      %v7293 = vadd.f32 %v7245, %v7277
      %v7294 = vadd.f32 %v7246, %v7278
      %v7295 = vadd.f32 %v7247, %v7279
      %v7296 = vadd.f32 %v7248, %v7280
      %v7297 = vadd.f32 %v7249, %v7281
      %v7298 = vadd.f32 %v7250, %v7282
      %v7299 = vadd.f32 %v7251, %v7283
      %v7300 = vadd.f32 %v7252, %v7284
      %s7301 = scalar_lea.vmem [#allocation2], 1160
      %v7302 = vld [vmem:[%s7301] sm:$0xff]
      %v7303 = vld [vmem:[%s7301 + $0x8] sm:$0xff]
      %v7304 = vld [vmem:[%s7301 + $0x10] sm:$0xff]
      %v7305 = vld [vmem:[%s7301 + $0x18] sm:$0xff]
      %v7306 = vld [vmem:[%s7301 + $0x28] sm:$0xff]
      %v7307 = vld [vmem:[%s7301 + $0x30] sm:$0xff]
      %v7308 = vld [vmem:[%s7301 + $0x38] sm:$0xff]
      %v7309 = vld [vmem:[%s7301 + $0x40] sm:$0xff]
      %v7310 = vld [vmem:[%s7301 + $0x50] sm:$0xff]
      %v7311 = vld [vmem:[%s7301 + $0x58] sm:$0xff]
      %v7312 = vld [vmem:[%s7301 + $0x60] sm:$0xff]
      %v7313 = vld [vmem:[%s7301 + $0x68] sm:$0xff]
      %v7314 = vld [vmem:[%s7301 + $0x78] sm:$0xff]
      %v7315 = vld [vmem:[%s7301 + $0x80] sm:$0xff]
      %v7316 = vld [vmem:[%s7301 + $0x88] sm:$0xff]
      %v7317 = vld [vmem:[%s7301 + $0x90] sm:$0xff]
      %v7318 = vmul.f32 %v7302, %v2240
      %v7319 = vmul.f32 %v7303, %v2240
      %v7320 = vmul.f32 %v7304, %v2240
      %v7321 = vmul.f32 %v7305, %v2240
      %v7322 = vmul.f32 %v7306, %v2240
      %v7323 = vmul.f32 %v7307, %v2240
      %v7324 = vmul.f32 %v7308, %v2240
      %v7325 = vmul.f32 %v7309, %v2240
      %v7326 = vmul.f32 %v7310, %v2240
      %v7327 = vmul.f32 %v7311, %v2240
      %v7328 = vmul.f32 %v7312, %v2240
      %v7329 = vmul.f32 %v7313, %v2240
      %v7330 = vmul.f32 %v7314, %v2240
      %v7331 = vmul.f32 %v7315, %v2240
      %v7332 = vmul.f32 %v7316, %v2240
      %v7333 = vmul.f32 %v7317, %v2240
      %v7334 = vadd.f32 %v7285, %v7318
      %v7335 = vadd.f32 %v7286, %v7319
      %v7336 = vadd.f32 %v7287, %v7320
      %v7337 = vadd.f32 %v7288, %v7321
      %v7338 = vadd.f32 %v7289, %v7322
      %v7339 = vadd.f32 %v7290, %v7323
      %v7340 = vadd.f32 %v7291, %v7324
      %v7341 = vadd.f32 %v7292, %v7325
      %v7342 = vadd.f32 %v7293, %v7326
      %v7343 = vadd.f32 %v7294, %v7327
      %v7344 = vadd.f32 %v7295, %v7328
      %v7345 = vadd.f32 %v7296, %v7329
      %v7346 = vadd.f32 %v7297, %v7330
      %v7347 = vadd.f32 %v7298, %v7331
      %v7348 = vadd.f32 %v7299, %v7332
      %v7349 = vadd.f32 %v7300, %v7333
      %v7350 = vld [vmem:[%s7301 + $0x1] sm:$0xff]
      %v7351 = vld [vmem:[%s7301 + $0x9] sm:$0xff]
      %v7352 = vld [vmem:[%s7301 + $0x11] sm:$0xff]
      %v7353 = vld [vmem:[%s7301 + $0x19] sm:$0xff]
      %v7354 = vld [vmem:[%s7301 + $0x29] sm:$0xff]
      %v7355 = vld [vmem:[%s7301 + $0x31] sm:$0xff]
      %v7356 = vld [vmem:[%s7301 + $0x39] sm:$0xff]
      %v7357 = vld [vmem:[%s7301 + $0x41] sm:$0xff]
      %v7358 = vld [vmem:[%s7301 + $0x51] sm:$0xff]
      %v7359 = vld [vmem:[%s7301 + $0x59] sm:$0xff]
      %v7360 = vld [vmem:[%s7301 + $0x61] sm:$0xff]
      %v7361 = vld [vmem:[%s7301 + $0x69] sm:$0xff]
      %v7362 = vld [vmem:[%s7301 + $0x79] sm:$0xff]
      %v7363 = vld [vmem:[%s7301 + $0x81] sm:$0xff]
      %v7364 = vld [vmem:[%s7301 + $0x89] sm:$0xff]
      %v7365 = vld [vmem:[%s7301 + $0x91] sm:$0xff]
      %v7366 = vmul.f32 %v7350, %v2292
      %v7367 = vmul.f32 %v7351, %v2292
      %v7368 = vmul.f32 %v7352, %v2292
      %v7369 = vmul.f32 %v7353, %v2292
      %v7370 = vmul.f32 %v7354, %v2292
      %v7371 = vmul.f32 %v7355, %v2292
      %v7372 = vmul.f32 %v7356, %v2292
      %v7373 = vmul.f32 %v7357, %v2292
      %v7374 = vmul.f32 %v7358, %v2292
      %v7375 = vmul.f32 %v7359, %v2292
      %v7376 = vmul.f32 %v7360, %v2292
      %v7377 = vmul.f32 %v7361, %v2292
      %v7378 = vmul.f32 %v7362, %v2292
      %v7379 = vmul.f32 %v7363, %v2292
      %v7380 = vmul.f32 %v7364, %v2292
      %v7381 = vmul.f32 %v7365, %v2292
      %v7382 = vadd.f32 %v7334, %v7366
      %v7383 = vadd.f32 %v7335, %v7367
      %v7384 = vadd.f32 %v7336, %v7368
      %v7385 = vadd.f32 %v7337, %v7369
      %v7386 = vadd.f32 %v7338, %v7370
      %v7387 = vadd.f32 %v7339, %v7371
      %v7388 = vadd.f32 %v7340, %v7372
      %v7389 = vadd.f32 %v7341, %v7373
      %v7390 = vadd.f32 %v7342, %v7374
      %v7391 = vadd.f32 %v7343, %v7375
      %v7392 = vadd.f32 %v7344, %v7376
      %v7393 = vadd.f32 %v7345, %v7377
      %v7394 = vadd.f32 %v7346, %v7378
      %v7395 = vadd.f32 %v7347, %v7379
      %v7396 = vadd.f32 %v7348, %v7380
      %v7397 = vadd.f32 %v7349, %v7381
      %v7398 = vld [vmem:[%s7301 + $0x2] sm:$0xff]
      %v7399 = vld [vmem:[%s7301 + $0xa] sm:$0xff]
      %v7400 = vld [vmem:[%s7301 + $0x12] sm:$0xff]
      %v7401 = vld [vmem:[%s7301 + $0x1a] sm:$0xff]
      %v7402 = vld [vmem:[%s7301 + $0x2a] sm:$0xff]
      %v7403 = vld [vmem:[%s7301 + $0x32] sm:$0xff]
      %v7404 = vld [vmem:[%s7301 + $0x3a] sm:$0xff]
      %v7405 = vld [vmem:[%s7301 + $0x42] sm:$0xff]
      %v7406 = vld [vmem:[%s7301 + $0x52] sm:$0xff]
      %v7407 = vld [vmem:[%s7301 + $0x5a] sm:$0xff]
      %v7408 = vld [vmem:[%s7301 + $0x62] sm:$0xff]
      %v7409 = vld [vmem:[%s7301 + $0x6a] sm:$0xff]
      %v7410 = vld [vmem:[%s7301 + $0x7a] sm:$0xff]
      %v7411 = vld [vmem:[%s7301 + $0x82] sm:$0xff]
      %v7412 = vld [vmem:[%s7301 + $0x8a] sm:$0xff]
      %v7413 = vld [vmem:[%s7301 + $0x92] sm:$0xff]
      %v7414 = vmul.f32 %v7398, %v2344
      %v7415 = vmul.f32 %v7399, %v2344
      %v7416 = vmul.f32 %v7400, %v2344
      %v7417 = vmul.f32 %v7401, %v2344
      %v7418 = vmul.f32 %v7402, %v2344
      %v7419 = vmul.f32 %v7403, %v2344
      %v7420 = vmul.f32 %v7404, %v2344
      %v7421 = vmul.f32 %v7405, %v2344
      %v7422 = vmul.f32 %v7406, %v2344
      %v7423 = vmul.f32 %v7407, %v2344
      %v7424 = vmul.f32 %v7408, %v2344
      %v7425 = vmul.f32 %v7409, %v2344
      %v7426 = vmul.f32 %v7410, %v2344
      %v7427 = vmul.f32 %v7411, %v2344
      %v7428 = vmul.f32 %v7412, %v2344
      %v7429 = vmul.f32 %v7413, %v2344
      %v7430 = vadd.f32 %v7382, %v7414
      %v7431 = vadd.f32 %v7383, %v7415
      %v7432 = vadd.f32 %v7384, %v7416
      %v7433 = vadd.f32 %v7385, %v7417
      %v7434 = vadd.f32 %v7386, %v7418
      %v7435 = vadd.f32 %v7387, %v7419
      %v7436 = vadd.f32 %v7388, %v7420
      %v7437 = vadd.f32 %v7389, %v7421
      %v7438 = vadd.f32 %v7390, %v7422
      %v7439 = vadd.f32 %v7391, %v7423
      %v7440 = vadd.f32 %v7392, %v7424
      %v7441 = vadd.f32 %v7393, %v7425
      %v7442 = vadd.f32 %v7394, %v7426
      %v7443 = vadd.f32 %v7395, %v7427
      %v7444 = vadd.f32 %v7396, %v7428
      %v7445 = vadd.f32 %v7397, %v7429
      %s7446 = scalar_lea.vmem [#allocation2], 1200
      %v7447 = vld [vmem:[%s7446] sm:$0xff]
      %v7448 = vld [vmem:[%s7446 + $0x8] sm:$0xff]
      %v7449 = vld [vmem:[%s7446 + $0x10] sm:$0xff]
      %v7450 = vld [vmem:[%s7446 + $0x18] sm:$0xff]
      %v7451 = vld [vmem:[%s7446 + $0x28] sm:$0xff]
      %v7452 = vld [vmem:[%s7446 + $0x30] sm:$0xff]
      %v7453 = vld [vmem:[%s7446 + $0x38] sm:$0xff]
      %v7454 = vld [vmem:[%s7446 + $0x40] sm:$0xff]
      %v7455 = vld [vmem:[%s7446 + $0x50] sm:$0xff]
      %v7456 = vld [vmem:[%s7446 + $0x58] sm:$0xff]
      %v7457 = vld [vmem:[%s7446 + $0x60] sm:$0xff]
      %v7458 = vld [vmem:[%s7446 + $0x68] sm:$0xff]
      %v7459 = vld [vmem:[%s7446 + $0x78] sm:$0xff]
      %v7460 = vld [vmem:[%s7446 + $0x80] sm:$0xff]
      %v7461 = vld [vmem:[%s7446 + $0x88] sm:$0xff]
      %v7462 = vld [vmem:[%s7446 + $0x90] sm:$0xff]
      %v7463 = vmul.f32 %v7447, %v2397
      %v7464 = vmul.f32 %v7448, %v2397
      %v7465 = vmul.f32 %v7449, %v2397
      %v7466 = vmul.f32 %v7450, %v2397
      %v7467 = vmul.f32 %v7451, %v2397
      %v7468 = vmul.f32 %v7452, %v2397
      %v7469 = vmul.f32 %v7453, %v2397
      %v7470 = vmul.f32 %v7454, %v2397
      %v7471 = vmul.f32 %v7455, %v2397
      %v7472 = vmul.f32 %v7456, %v2397
      %v7473 = vmul.f32 %v7457, %v2397
      %v7474 = vmul.f32 %v7458, %v2397
      %v7475 = vmul.f32 %v7459, %v2397
      %v7476 = vmul.f32 %v7460, %v2397
      %v7477 = vmul.f32 %v7461, %v2397
      %v7478 = vmul.f32 %v7462, %v2397
      %v7479 = vadd.f32 %v7430, %v7463
      %v7480 = vadd.f32 %v7431, %v7464
      %v7481 = vadd.f32 %v7432, %v7465
      %v7482 = vadd.f32 %v7433, %v7466
      %v7483 = vadd.f32 %v7434, %v7467
      %v7484 = vadd.f32 %v7435, %v7468
      %v7485 = vadd.f32 %v7436, %v7469
      %v7486 = vadd.f32 %v7437, %v7470
      %v7487 = vadd.f32 %v7438, %v7471
      %v7488 = vadd.f32 %v7439, %v7472
      %v7489 = vadd.f32 %v7440, %v7473
      %v7490 = vadd.f32 %v7441, %v7474
      %v7491 = vadd.f32 %v7442, %v7475
      %v7492 = vadd.f32 %v7443, %v7476
      %v7493 = vadd.f32 %v7444, %v7477
      %v7494 = vadd.f32 %v7445, %v7478
      %v7495 = vld [vmem:[%s7446 + $0x1] sm:$0xff]
      %v7496 = vld [vmem:[%s7446 + $0x9] sm:$0xff]
      %v7497 = vld [vmem:[%s7446 + $0x11] sm:$0xff]
      %v7498 = vld [vmem:[%s7446 + $0x19] sm:$0xff]
      %v7499 = vld [vmem:[%s7446 + $0x29] sm:$0xff]
      %v7500 = vld [vmem:[%s7446 + $0x31] sm:$0xff]
      %v7501 = vld [vmem:[%s7446 + $0x39] sm:$0xff]
      %v7502 = vld [vmem:[%s7446 + $0x41] sm:$0xff]
      %v7503 = vld [vmem:[%s7446 + $0x51] sm:$0xff]
      %v7504 = vld [vmem:[%s7446 + $0x59] sm:$0xff]
      %v7505 = vld [vmem:[%s7446 + $0x61] sm:$0xff]
      %v7506 = vld [vmem:[%s7446 + $0x69] sm:$0xff]
      %v7507 = vld [vmem:[%s7446 + $0x79] sm:$0xff]
      %v7508 = vld [vmem:[%s7446 + $0x81] sm:$0xff]
      %v7509 = vld [vmem:[%s7446 + $0x89] sm:$0xff]
      %v7510 = vld [vmem:[%s7446 + $0x91] sm:$0xff]
      %v7511 = vmul.f32 %v7495, %v2449
      %v7512 = vmul.f32 %v7496, %v2449
      %v7513 = vmul.f32 %v7497, %v2449
      %v7514 = vmul.f32 %v7498, %v2449
      %v7515 = vmul.f32 %v7499, %v2449
      %v7516 = vmul.f32 %v7500, %v2449
      %v7517 = vmul.f32 %v7501, %v2449
      %v7518 = vmul.f32 %v7502, %v2449
      %v7519 = vmul.f32 %v7503, %v2449
      %v7520 = vmul.f32 %v7504, %v2449
      %v7521 = vmul.f32 %v7505, %v2449
      %v7522 = vmul.f32 %v7506, %v2449
      %v7523 = vmul.f32 %v7507, %v2449
      %v7524 = vmul.f32 %v7508, %v2449
      %v7525 = vmul.f32 %v7509, %v2449
      %v7526 = vmul.f32 %v7510, %v2449
      %v7527 = vadd.f32 %v7479, %v7511
      %v7528 = vadd.f32 %v7480, %v7512
      %v7529 = vadd.f32 %v7481, %v7513
      %v7530 = vadd.f32 %v7482, %v7514
      %v7531 = vadd.f32 %v7483, %v7515
      %v7532 = vadd.f32 %v7484, %v7516
      %v7533 = vadd.f32 %v7485, %v7517
      %v7534 = vadd.f32 %v7486, %v7518
      %v7535 = vadd.f32 %v7487, %v7519
      %v7536 = vadd.f32 %v7488, %v7520
      %v7537 = vadd.f32 %v7489, %v7521
      %v7538 = vadd.f32 %v7490, %v7522
      %v7539 = vadd.f32 %v7491, %v7523
      %v7540 = vadd.f32 %v7492, %v7524
      %v7541 = vadd.f32 %v7493, %v7525
      %v7542 = vadd.f32 %v7494, %v7526
      %v7543 = vld [vmem:[%s7446 + $0x2] sm:$0xff]
      %v7544 = vld [vmem:[%s7446 + $0xa] sm:$0xff]
      %v7545 = vld [vmem:[%s7446 + $0x12] sm:$0xff]
      %v7546 = vld [vmem:[%s7446 + $0x1a] sm:$0xff]
      %v7547 = vld [vmem:[%s7446 + $0x2a] sm:$0xff]
      %v7548 = vld [vmem:[%s7446 + $0x32] sm:$0xff]
      %v7549 = vld [vmem:[%s7446 + $0x3a] sm:$0xff]
      %v7550 = vld [vmem:[%s7446 + $0x42] sm:$0xff]
      %v7551 = vld [vmem:[%s7446 + $0x52] sm:$0xff]
      %v7552 = vld [vmem:[%s7446 + $0x5a] sm:$0xff]
      %v7553 = vld [vmem:[%s7446 + $0x62] sm:$0xff]
      %v7554 = vld [vmem:[%s7446 + $0x6a] sm:$0xff]
      %v7555 = vld [vmem:[%s7446 + $0x7a] sm:$0xff]
      %v7556 = vld [vmem:[%s7446 + $0x82] sm:$0xff]
      %v7557 = vld [vmem:[%s7446 + $0x8a] sm:$0xff]
      %v7558 = vld [vmem:[%s7446 + $0x92] sm:$0xff]
      %v7559 = vmul.f32 %v7543, %v2501
      %v7560 = vmul.f32 %v7544, %v2501
      %v7561 = vmul.f32 %v7545, %v2501
      %v7562 = vmul.f32 %v7546, %v2501
      %v7563 = vmul.f32 %v7547, %v2501
      %v7564 = vmul.f32 %v7548, %v2501
      %v7565 = vmul.f32 %v7549, %v2501
      %v7566 = vmul.f32 %v7550, %v2501
      %v7567 = vmul.f32 %v7551, %v2501
      %v7568 = vmul.f32 %v7552, %v2501
      %v7569 = vmul.f32 %v7553, %v2501
      %v7570 = vmul.f32 %v7554, %v2501
      %v7571 = vmul.f32 %v7555, %v2501
      %v7572 = vmul.f32 %v7556, %v2501
      %v7573 = vmul.f32 %v7557, %v2501
      %v7574 = vmul.f32 %v7558, %v2501
      %v7575 = vadd.f32 %v7527, %v7559
      %v7576 = vadd.f32 %v7528, %v7560
      %v7577 = vadd.f32 %v7529, %v7561
      %v7578 = vadd.f32 %v7530, %v7562
      %v7579 = vadd.f32 %v7531, %v7563
      %v7580 = vadd.f32 %v7532, %v7564
      %v7581 = vadd.f32 %v7533, %v7565
      %v7582 = vadd.f32 %v7534, %v7566
      %v7583 = vadd.f32 %v7535, %v7567
      %v7584 = vadd.f32 %v7536, %v7568
      %v7585 = vadd.f32 %v7537, %v7569
      %v7586 = vadd.f32 %v7538, %v7570
      %v7587 = vadd.f32 %v7539, %v7571
      %v7588 = vadd.f32 %v7540, %v7572
      %v7589 = vadd.f32 %v7541, %v7573
      %v7590 = vadd.f32 %v7542, %v7574
      %v7591 = vmul.f32 %v7575, 0.5
      %v7592 = vmul.f32 %v7576, 0.5
      %v7593 = vmul.f32 %v7577, 0.5
      %v7594 = vmul.f32 %v7578, 0.5
      %v7595 = vmul.f32 %v7579, 0.5
      %v7596 = vmul.f32 %v7580, 0.5
      %v7597 = vmul.f32 %v7581, 0.5
      %v7598 = vmul.f32 %v7582, 0.5
      %v7599 = vmul.f32 %v7583, 0.5
      %v7600 = vmul.f32 %v7584, 0.5
      %v7601 = vmul.f32 %v7585, 0.5
      %v7602 = vmul.f32 %v7586, 0.5
      %v7603 = vmul.f32 %v7587, 0.5
      %v7604 = vmul.f32 %v7588, 0.5
      %v7605 = vmul.f32 %v7589, 0.5
      %v7606 = vmul.f32 %v7590, 0.5
      %v7607 = vmul.f32 %v7575, 0.70710677
      %v7608 = vmul.f32 %v7576, 0.70710677
      %v7609 = vmul.f32 %v7577, 0.70710677
      %v7610 = vmul.f32 %v7578, 0.70710677
      %v7611 = vmul.f32 %v7579, 0.70710677
      %v7612 = vmul.f32 %v7580, 0.70710677
      %v7613 = vmul.f32 %v7581, 0.70710677
      %v7614 = vmul.f32 %v7582, 0.70710677
      %v7615 = vmul.f32 %v7583, 0.70710677
      %v7616 = vmul.f32 %v7584, 0.70710677
      %v7617 = vmul.f32 %v7585, 0.70710677
      %v7618 = vmul.f32 %v7586, 0.70710677
      %v7619 = vmul.f32 %v7587, 0.70710677
      %v7620 = vmul.f32 %v7588, 0.70710677
      %v7621 = vmul.f32 %v7589, 0.70710677
      %v7622 = vmul.f32 %v7590, 0.70710677
      %v7623 = verf.f32.pop %v7607
      %v7624 = verf.f32.pop %v7608
      %v7625 = verf.f32.pop %v7609
      %v7626 = verf.f32.pop %v7610
      %v7627 = verf.f32.pop %v7611
      %v7628 = verf.f32.pop %v7612
      %v7629 = verf.f32.pop %v7613
      %v7630 = verf.f32.pop %v7614
      %v7631 = verf.f32.pop %v7615
      %v7632 = verf.f32.pop %v7616
      %v7633 = verf.f32.pop %v7617
      %v7634 = verf.f32.pop %v7618
      %v7635 = verf.f32.pop %v7619
      %v7636 = verf.f32.pop %v7620
      %v7637 = verf.f32.pop %v7621
      %v7638 = verf.f32.pop %v7622
      %v7639 = vadd.f32 %v7623, 1.0
      %v7640 = vadd.f32 %v7624, 1.0
      %v7641 = vadd.f32 %v7625, 1.0
      %v7642 = vadd.f32 %v7626, 1.0
      %v7643 = vadd.f32 %v7627, 1.0
      %v7644 = vadd.f32 %v7628, 1.0
      %v7645 = vadd.f32 %v7629, 1.0
      %v7646 = vadd.f32 %v7630, 1.0
      %v7647 = vadd.f32 %v7631, 1.0
      %v7648 = vadd.f32 %v7632, 1.0
      %v7649 = vadd.f32 %v7633, 1.0
      %v7650 = vadd.f32 %v7634, 1.0
      %v7651 = vadd.f32 %v7635, 1.0
      %v7652 = vadd.f32 %v7636, 1.0
      %v7653 = vadd.f32 %v7637, 1.0
      %v7654 = vadd.f32 %v7638, 1.0
      %v7655 = vmul.f32 %v7591, %v7639
      %v7656 = vmul.f32 %v7592, %v7640
      %v7657 = vmul.f32 %v7593, %v7641
      %v7658 = vmul.f32 %v7594, %v7642
      %v7659 = vmul.f32 %v7595, %v7643
      %v7660 = vmul.f32 %v7596, %v7644
      %v7661 = vmul.f32 %v7597, %v7645
      %v7662 = vmul.f32 %v7598, %v7646
      %v7663 = vmul.f32 %v7599, %v7647
      %v7664 = vmul.f32 %v7600, %v7648
      %v7665 = vmul.f32 %v7601, %v7649
      %v7666 = vmul.f32 %v7602, %v7650
      %v7667 = vmul.f32 %v7603, %v7651
      %v7668 = vmul.f32 %v7604, %v7652
      %v7669 = vmul.f32 %v7605, %v7653
      %v7670 = vmul.f32 %v7606, %v7654
      %7687 = vrot.lane.b32.xlu0 %v7575, 96
      %v7688 = vpop.permute.xlu0 %7687
      %7689 = vrot.lane.b32.xlu0 %v7576, 96
      %v7690 = vpop.permute.xlu0 %7689
      %7691 = vrot.lane.b32.xlu0 %v7577, 96
      %v7692 = vpop.permute.xlu0 %7691
      %7693 = vrot.lane.b32.xlu0 %v7578, 96
      %v7694 = vpop.permute.xlu0 %7693
      %7695 = vrot.lane.b32.xlu0 %v7579, 96
      %v7696 = vpop.permute.xlu0 %7695
      %7697 = vrot.lane.b32.xlu0 %v7580, 96
      %v7698 = vpop.permute.xlu0 %7697
      %7699 = vrot.lane.b32.xlu0 %v7581, 96
      %v7700 = vpop.permute.xlu0 %7699
      %7701 = vrot.lane.b32.xlu0 %v7582, 96
      %v7702 = vpop.permute.xlu0 %7701
      %7703 = vrot.lane.b32.xlu0 %v7583, 96
      %v7704 = vpop.permute.xlu0 %7703
      %7705 = vrot.lane.b32.xlu0 %v7584, 96
      %v7706 = vpop.permute.xlu0 %7705
      %7707 = vrot.lane.b32.xlu0 %v7585, 96
      %v7708 = vpop.permute.xlu0 %7707
      %7709 = vrot.lane.b32.xlu0 %v7586, 96
      %v7710 = vpop.permute.xlu0 %7709
      %7711 = vrot.lane.b32.xlu0 %v7587, 96
      %v7712 = vpop.permute.xlu0 %7711
      %7713 = vrot.lane.b32.xlu0 %v7588, 96
      %v7714 = vpop.permute.xlu0 %7713
      %7715 = vrot.lane.b32.xlu0 %v7589, 96
      %v7716 = vpop.permute.xlu0 %7715
      %7717 = vrot.lane.b32.xlu0 %v7590, 96
      %v7718 = vpop.permute.xlu0 %7717
      %v7735 = vmul.f32 %v7655, %v7688
      %v7736 = vmul.f32 %v7656, %v7690
      %v7737 = vmul.f32 %v7657, %v7692
      %v7738 = vmul.f32 %v7658, %v7694
      %v7739 = vmul.f32 %v7659, %v7696
      %v7740 = vmul.f32 %v7660, %v7698
      %v7741 = vmul.f32 %v7661, %v7700
      %v7742 = vmul.f32 %v7662, %v7702
      %v7743 = vmul.f32 %v7663, %v7704
      %v7744 = vmul.f32 %v7664, %v7706
      %v7745 = vmul.f32 %v7665, %v7708
      %v7746 = vmul.f32 %v7666, %v7710
      %v7747 = vmul.f32 %v7667, %v7712
      %v7748 = vmul.f32 %v7668, %v7714
      %v7749 = vmul.f32 %v7669, %v7716
      %v7750 = vmul.f32 %v7670, %v7718
      %v7752 = vsel %vm2704, %v7735, 0
      %v7755 = vsel %vm2704, %v7736, 0
      %v7758 = vsel %vm2704, %v7737, 0
      %v7761 = vsel %vm2704, %v7738, 0
      %v7764 = vsel %vm2704, %v7739, 0
      %v7767 = vsel %vm2704, %v7740, 0
      %v7770 = vsel %vm2704, %v7741, 0
      %v7773 = vsel %vm2704, %v7742, 0
      %v7776 = vsel %vm2704, %v7743, 0
      %v7779 = vsel %vm2704, %v7744, 0
      %v7782 = vsel %vm2704, %v7745, 0
      %v7785 = vsel %vm2704, %v7746, 0
      %v7788 = vsel %vm2704, %v7747, 0
      %v7791 = vsel %vm2704, %v7748, 0
      %v7794 = vsel %vm2704, %v7749, 0
      %v7797 = vsel %vm2704, %v7750, 0
      %7799 = vmatprep.subr.mxu0 0.0
      %7800 = vmatpush1.xpose.msra.mxu0 %v7752
      %7801 = vmatprep.subr.mxu0 0.0
      %7802 = vmatpush1.xpose.msra.mxu0 %v7755
      %7803 = vmatprep.subr.mxu0 0.0
      %7804 = vmatpush1.xpose.msra.mxu0 %v7758
      %7805 = vmatprep.subr.mxu0 0.0
      %7806 = vmatpush1.xpose.msra.mxu0 %v7761
      %7807 = vmatprep.subr.mxu0 0.0
      %7808 = vmatpush1.xpose.msra.mxu0 %v7764
      %7809 = vmatprep.subr.mxu0 0.0
      %7810 = vmatpush1.xpose.msra.mxu0 %v7767
      %7811 = vmatprep.subr.mxu0 0.0
      %7812 = vmatpush1.xpose.msra.mxu0 %v7770
      %7813 = vmatprep.subr.mxu0 0.0
      %7814 = vmatpush1.xpose.msra.mxu0 %v7773
      %7815 = vmatprep.subr.mxu0 0.0
      %7816 = vmatpush1.xpose.msra.mxu0 %v7776
      %7817 = vmatprep.subr.mxu0 0.0
      %7818 = vmatpush1.xpose.msra.mxu0 %v7779
      %7819 = vmatprep.subr.mxu0 0.0
      %7820 = vmatpush1.xpose.msra.mxu0 %v7782
      %7821 = vmatprep.subr.mxu0 0.0
      %7822 = vmatpush1.xpose.msra.mxu0 %v7785
      %7823 = vmatprep.subr.mxu0 0.0
      %7824 = vmatpush1.xpose.msra.mxu0 %v7788
      %7825 = vmatprep.subr.mxu0 0.0
      %7826 = vmatpush1.xpose.msra.mxu0 %v7791
      %7827 = vmatprep.subr.mxu0 0.0
      %7828 = vmatpush1.xpose.msra.mxu0 %v7794
      %7829 = vmatprep.subr.mxu0 0.0
      %7830 = vmatpush1.xpose.msra.mxu0 %v7797
      %7831 = vmatprep.subr.mxu0 0.0
      %7832 = vmatpush1.xpose.msra.mxu0 0.0
      %7833 = vmatprep.subr.mxu0 0.0
      %7834 = vmatpush1.xpose.msra.mxu0 0.0
      %7835 = vmatprep.subr.mxu0 0.0
      %7836 = vmatpush1.xpose.msra.mxu0 0.0
      %7837 = vmatprep.subr.mxu0 0.0
      %7838 = vmatpush1.xpose.msra.mxu0 0.0
      %7839 = vmatprep.subr.mxu0 0.0
      %7840 = vmatpush1.xpose.msra.mxu0 0.0
      %7841 = vmatprep.subr.mxu0 0.0
      %7842 = vmatpush1.xpose.msra.mxu0 0.0
      %7843 = vmatprep.subr.mxu0 0.0
      %7844 = vmatpush1.xpose.msra.mxu0 0.0
      %7845 = vmatprep.subr.mxu0 0.0
      %7846 = vmatpush1.xpose.msra.mxu0 0.0
      %7847 = vmatprep.subr.mxu0 0.0
      %7848 = vmatpush1.xpose.msra.mxu0 0.0
      %7849 = vmatprep.subr.mxu0 0.0
      %7850 = vmatpush1.xpose.msra.mxu0 0.0
      %7851 = vmatprep.subr.mxu0 0.0
      %7852 = vmatpush1.xpose.msra.mxu0 0.0
      %7853 = vmatprep.subr.mxu0 0.0
      %7854 = vmatpush1.xpose.msra.mxu0 0.0
      %7855 = vmatprep.subr.mxu0 0.0
      %7856 = vmatpush1.xpose.msra.mxu0 0.0
      %7857 = vmatprep.subr.mxu0 0.0
      %7858 = vmatpush1.xpose.msra.mxu0 0.0
      %7859 = vmatprep.subr.mxu0 0.0
      %7860 = vmatpush1.xpose.msra.mxu0 0.0
      %7861 = vmatprep.subr.mxu0 0.0
      %7862 = vmatpush1.xpose.msra.mxu0 0.0
      %7863 = vmatprep.mubr.f32.mxu0 0.0
      %7864 = vmatmul.mubr.f32.gmra.mrb[0].mxu0 %v2706
      %v7865 = vpop.f32.mrb[0].mxu0
      %v7866 = vadd.f32 %v2697, %v7865
      %v7867 = vpop.f32.mrb[0].mxu0
      %7868 = vmatprep.mubr.f32.mxu0 0.0
      %7869 = vmatmul.mubr.f32.gmra.mrb[0].mxu0 %v2709
      %v7870 = vpop.f32.mrb[0].mxu0
      %v7871 = vadd.f32 %v2702, %v7870
      %v7872 = vpop.f32.mrb[0].mxu0
      %7873 = vdwg.mxu0
      %7874 = vst [vmem:[%s497 + $0x38] sm:$0xff] %v7866
      %7875 = vst [vmem:[%s497 + $0x78] sm:$0xff] %v7871
      %s7876 = smul.u32 8, %s25
      %p7877 = scmp.lt.s32.totalorder %s24, 1
      %s7878 = scalar_select %p7877, %s24, 1
      %p7879 = scmp.lt.s32.totalorder %s7876, 7
      %s7880 = scalar_select %p7879, %s7876, 7
      %s7881 = smul.addr %s7878, 16
      %s7882 = sadd.s32 %s7880, %s7881
      %s7883 = smul.addr %s7882, 8
      %s7884 = scalar_lea.vmem %s9, %s7883
      // Predicated region
      $region61: #{feed_forward.1} parent=55 // pred_check
        %p7885 = pneg %p278
      $region62: #{feed_forward.1} parent=55 // pred_check_branch
        %7887 = sbr.rel (%p7885) target = $region64
      $region63: #{feed_forward.1} parent=55 // pred_region
        %s7888 = smul.u32 8, %s25
      $region64: #{feed_forward.1} parent=55 // pred_fallthru
        _
    $region56: #{feed_forward.1} parent=5 // pred_fallthru
      _
    %p7889 = scmp.le.s32.totalorder 2, %s15
    // Predicated region
    $region65: #{feed_forward.1} parent=5 // pred_check
      %p7890 = pneg %p7889
    $region66: #{feed_forward.1} parent=5 // pred_check_branch
      %7892 = sbr.rel (%p7890) target = $region68
    $region67: #{feed_forward.1} parent=5 // pred_region
      %s7893 = ssub.s32 %s15, 2
      // Predicated region
      $region69: #{feed_forward.1} parent=67 // pred_check
        %p7894 = pneg %p284
      $region70: #{feed_forward.1} parent=67 // pred_check_branch
        %7896 = sbr.rel (%p7894) target = $region72
      $region71: #{feed_forward.1} parent=67 // pred_region
        %s7897 = smul.u32 8, %s27
        %p7898 = scmp.lt.s32.totalorder %s26, 1
        %s7899 = scalar_select %p7898, %s26, 1
        %p7900 = scmp.lt.s32.totalorder %s7897, 7
        %s7901 = scalar_select %p7900, %s7897, 7
        %s7902 = smul.addr %s7899, 16
        %s7903 = sadd.s32 %s7901, %s7902
        %s7904 = smul.addr %s7903, 8
        %s7905 = scalar_lea.vmem %s9, %s7904
      $region72: #{feed_forward.1} parent=67 // pred_fallthru
        _
    $region68: #{feed_forward.1} parent=5 // pred_fallthru
      _
  $region6: #{feed_forward.1} parent=0 // loop_footer
    %s19 = sadd.s32 1, %s15
  $region7: #{feed_forward.1} parent=0 // loop_footer_branch
    %14 = sbr.rel target = $region3
  $region8: #{feed_forward.1} parent=0 // loop_exit
    _

</llo_original>
